<compile_context>
chip_gen: v7x
topology: tpu7x:2x2x1
jax: 0.10.0
libtpu: 0.0.40
codegen_flags: <defaults>
</compile_context>

<pallas_src>
import functools

import jax
import jax.numpy as jnp
from jax.experimental import pallas as pl
from jax.experimental.pallas import tpu as pltpu


def _round_up(v, m):
    return (v + m - 1) // m * m


# ------------------------------ Pallas kernel -------------------------------

def _nasnet_cell_kernel(a_ref, w0_ref, b0_ref,
                        wj1_ref, b1_ref, wj2_ref, b2_ref,
                        skw_ref, skb_ref, fcw_ref, fcb_ref,
                        mask_ref, o_ref,
                        slab1_ref, slab2_ref, *, IMG, Wp, G, inv_hw):
    f32 = jnp.float32

    # Zero the guard rows above/below the per-image halo slab once; halo rows
    # and pad columns inside the image are zeroed via the interior mask below.
    z1 = jnp.zeros((G, slab1_ref.shape[1]), slab1_ref.dtype)
    slab1_ref[0:G, :] = z1
    slab1_ref[G + IMG:2 * G + IMG, :] = z1
    z2 = jnp.zeros((G, slab2_ref.shape[1]), slab2_ref.dtype)
    slab2_ref[0:G, :] = z2
    slab2_ref[G + IMG:2 * G + IMG, :] = z2

    mask = mask_ref[...]                                    # (IMG, 1) f32 interior mask

    # ---- stem: conv0 (im2col matmul, BN folded) + ReLU; zero halo rows -----
    h = jnp.dot(a_ref[...], w0_ref[...], preferred_element_type=f32)
    h = jnp.maximum(h + b0_ref[...], 0.0) * mask            # (IMG, C0) f32
    h16 = h.astype(slab1_ref.dtype)

    # ---- separable conv: 3x3 depthwise + 1x1 pointwise + BN, all folded into
    #      9 tap-weight matrices -> 9 shifted accumulating MXU matmuls over a
    #      zero-halo slab ------------------------------------------------------
    def sepconv(slab_ref, x16, wj_ref, b_ref):
        slab_ref[G:G + IMG, :] = x16
        acc = jnp.zeros((IMG, wj_ref.shape[2]), f32)
        for i in range(3):
            for j in range(3):
                off = G + (i - 1) * Wp + (j - 1)            # static offset
                acc = acc + jnp.dot(slab_ref[off:off + IMG, :],
                                    wj_ref[3 * i + j],
                                    preferred_element_type=f32)
        return acc + b_ref[...]

    y = jnp.maximum(sepconv(slab1_ref, h16, wj1_ref, b1_ref), 0.0) * mask
    y = sepconv(slab2_ref, y.astype(slab2_ref.dtype), wj2_ref, b2_ref)

    # ---- skip path (1x1 conv, BN folded) + cell add + final ReLU ------------
    s = jnp.dot(h16, skw_ref[...], preferred_element_type=f32) + skb_ref[...]
    feat = jnp.maximum(y + s, 0.0) * mask                   # (IMG, C1) f32, halo zeroed

    # ---- head: global average pool (sublane reduction) + linear -------------
    pooled = jnp.sum(feat, axis=0, keepdims=True) * inv_hw  # (1, C1)
    o_ref[0] = jnp.dot(pooled, fcw_ref[...], preferred_element_type=f32) + fcb_ref[...]


# ------------------------------- glue (JAX) ---------------------------------

def _im2col_nhwc(x, k, stride):
    """x: (N, H, W, C) -> (N, Ho, Wo, k*k*C) patches (stem conv only, tiny)."""
    n, Hh, Ww, c = x.shape
    ho = (Hh - k) // stride + 1
    wo = (Ww - k) // stride + 1
    taps = []
    for i in range(k):
        for j in range(k):
            taps.append(x[:, i:i + stride * (ho - 1) + 1:stride,
                          j:j + stride * (wo - 1) + 1:stride, :])
    return jnp.stack(taps, axis=3).reshape(n, ho, wo, k * k * c), ho, wo


def forward(x_nchw, params, *, eps=1e-3):
    # NCHW (PyTorch) -> NHWC (kernel layout)
    x = jnp.transpose(x_nchw, (0, 2, 3, 1)).astype(jnp.float32)
    N = x.shape[0]
    bf16 = jnp.bfloat16

    # stem conv geometry: 3x3, stride 2, no padding
    patches, H, W = _im2col_nhwc(x, k=3, stride=2)          # (N, H, W, 27)
    Kc = patches.shape[-1]

    # zero-halo per-image grid: (H+2) rows of width Wp (>= W+1, bf16-tile aligned)
    Wp = _round_up(W + 1, 16)
    G = _round_up(Wp + 1, 16)                               # guard rows around each image slab
    IMG = (H + 2) * Wp                                      # rows per image (multiple of 16)

    KcP = _round_up(Kc, 8)                                  # 27 -> 32
    C0 = params["conv0_w"].shape[-1]                        # 32 stem channels
    C1 = params["pw1_w"].shape[-1]                          # 44 cell channels
    C0P = _round_up(C0, 8)                                  # 32
    C1P = _round_up(C1, 64)                                 # 64 (half-lane, not 128)
    NOUT = 128                                              # lane-dense logits

    # stem patches scattered into the padded layout (halo rows/cols are zero)
    a = jnp.zeros((N, H + 2, Wp, KcP), jnp.float32)
    a = a.at[:, 1:H + 1, :W, :Kc].set(patches)
    a = a.reshape(N * IMG, KcP).astype(bf16)

    # interior mask: 1 at real pixels, 0 at halo rows / pad columns
    mask = jnp.zeros((N, H + 2, Wp, 1), jnp.float32)
    mask = mask.at[:, 1:H + 1, :W, :].set(1.0)
    mask = mask.reshape(N * IMG, 1)

    def fold(w2d, bn):                                      # exact eval-mode BN fold
        scale = bn["gamma"] * jax.lax.rsqrt(bn["var"] + eps)
        shift = bn["beta"] - bn["mean"] * scale
        return w2d * scale[None, :], shift

    # stem conv weights (BN0 folded)
    w0, b0 = fold(params["conv0_w"].reshape(-1, C0), params["bn0"])
    w0p = jnp.zeros((KcP, C0P), jnp.float32).at[:Kc, :C0].set(w0).astype(bf16)
    b0p = jnp.zeros((1, C0P), jnp.float32).at[0, :C0].set(b0)

    # separable conv 1: fold dw taps into the (BN-folded) pointwise weights
    pw1f, b1 = fold(params["pw1_w"], params["bn1"])
    wj1 = params["dw1_w"].reshape(9, C0)[:, :, None] * pw1f[None, :, :]      # (9, C0, C1)
    wj1p = jnp.zeros((9, C0P, C1P), jnp.float32).at[:, :C0, :C1].set(wj1).astype(bf16)
    b1p = jnp.zeros((1, C1P), jnp.float32).at[0, :C1].set(b1)

    # separable conv 2
    pw2f, b2 = fold(params["pw2_w"], params["bn2"])
    wj2 = params["dw2_w"].reshape(9, C1)[:, :, None] * pw2f[None, :, :]      # (9, C1, C1)
    wj2p = jnp.zeros((9, C1P, C1P), jnp.float32).at[:, :C1, :C1].set(wj2).astype(bf16)
    b2p = jnp.zeros((1, C1P), jnp.float32).at[0, :C1].set(b2)

    # skip 1x1 conv (BN folded)
    skwf, skb = fold(params["skip_w"], params["bn_skip"])
    skwp = jnp.zeros((C0P, C1P), jnp.float32).at[:C0, :C1].set(skwf).astype(bf16)
    skbp = jnp.zeros((1, C1P), jnp.float32).at[0, :C1].set(skb)

    # classifier head (logits padded to a lane-dense 128, sliced outside)
    ncls = params["fc_b"].shape[0]
    fcwp = jnp.zeros((C1P, NOUT), jnp.float32).at[:C1, :ncls].set(params["fc_w"])
    fcbp = jnp.zeros((1, NOUT), jnp.float32).at[0, :ncls].set(params["fc_b"])

    args = (a, w0p, b0p, wj1p, b1p, wj2p, b2p, skwp, skbp, fcwp, fcbp, mask)

    flops = N * (2 * IMG * KcP * C0P                        # stem matmul
                 + 9 * 2 * IMG * C0P * C1P                  # sepconv1 (9 tap matmuls)
                 + 9 * 2 * IMG * C1P * C1P                  # sepconv2 (9 tap matmuls)
                 + 2 * IMG * C0P * C1P                      # skip 1x1
                 + IMG * C1P + 2 * C1P * NOUT)              # pool + fc
    bytes_accessed = sum(int(t.size) * t.dtype.itemsize for t in args) + N * NOUT * 4

    grid_spec = pltpu.PrefetchScalarGridSpec(
        num_scalar_prefetch=0,
        grid=(N,),                                          # one image per program
        in_specs=[
            pl.BlockSpec((IMG, KcP), lambda n: (n, 0)),     # stem patches (per image)
            pl.BlockSpec((KcP, C0P), lambda n: (0, 0)),
            pl.BlockSpec((1, C0P), lambda n: (0, 0)),
            pl.BlockSpec((9, C0P, C1P), lambda n: (0, 0, 0)),
            pl.BlockSpec((1, C1P), lambda n: (0, 0)),
            pl.BlockSpec((9, C1P, C1P), lambda n: (0, 0, 0)),
            pl.BlockSpec((1, C1P), lambda n: (0, 0)),
            pl.BlockSpec((C0P, C1P), lambda n: (0, 0)),
            pl.BlockSpec((1, C1P), lambda n: (0, 0)),
            pl.BlockSpec((C1P, NOUT), lambda n: (0, 0)),
            pl.BlockSpec((1, NOUT), lambda n: (0, 0)),
            pl.BlockSpec((IMG, 1), lambda n: (n, 0)),       # interior mask (per image)
        ],
        out_specs=pl.BlockSpec((1, 1, NOUT), lambda n: (n, 0, 0)),
        scratch_shapes=[pltpu.VMEM((2 * G + IMG, C0P), bf16),   # halo slab for sepconv1 input
                        pltpu.VMEM((2 * G + IMG, C1P), bf16)],  # halo slab for sepconv2 input
    )

    out = pl.pallas_call(
        functools.partial(_nasnet_cell_kernel, IMG=IMG, Wp=Wp, G=G,
                          inv_hw=1.0 / float(H * W)),
        out_shape=jax.ShapeDtypeStruct((N, 1, NOUT), jnp.float32),
        grid_spec=grid_spec,
        compiler_params=pltpu.CompilerParams(
            dimension_semantics=("parallel",)),             # v7x: one image per TensorCore
        cost_estimate=pl.CostEstimate(flops=flops, transcendentals=0,
                                      bytes_accessed=bytes_accessed),
    )(*args)
    return out[:, 0, :ncls]


# --------------------------------- params -----------------------------------

def init_params(key):
    ks = jax.random.split(key, 12)

    def conv_init(k, shape, fan_in):
        return jax.random.normal(k, shape, jnp.float32) / jnp.sqrt(float(fan_in))

    def bn_init(k, c):
        k1, k2, k3, k4 = jax.random.split(k, 4)
        return {"gamma": 1.0 + 0.1 * jax.random.normal(k1, (c,), jnp.float32),
                "beta": 0.1 * jax.random.normal(k2, (c,), jnp.float32),
                "mean": 0.1 * jax.random.normal(k3, (c,), jnp.float32),
                "var": 1.0 + 0.1 * jnp.abs(jax.random.normal(k4, (c,), jnp.float32))}

    return {
        "conv0_w": conv_init(ks[0], (3, 3, 3, 32), 27),      # stem 3->32
        "bn0": bn_init(ks[1], 32),
        "dw1_w": conv_init(ks[2], (3, 3, 32), 9),
        "pw1_w": conv_init(ks[3], (32, 44), 32),             # filters = 1056 // 24 = 44
        "bn1": bn_init(ks[4], 44),
        "dw2_w": conv_init(ks[5], (3, 3, 44), 9),
        "pw2_w": conv_init(ks[6], (44, 44), 44),
        "bn2": bn_init(ks[7], 44),
        "skip_w": conv_init(ks[8], (32, 44), 32),
        "bn_skip": bn_init(ks[9], 44),
        "fc_w": conv_init(ks[10], (44, 6), 44),              # num_classes = 6
        "fc_b": 0.01 * jax.random.normal(ks[11], (6,), jnp.float32),
    }


if __name__ == "__main__":
    key = jax.random.PRNGKey(0)
    kx, kp = jax.random.split(key)
    x = jax.random.normal(kx, (2, 3, 32, 32), jnp.float32)   # NCHW like PyTorch
    params = init_params(kp)

    logits = jax.jit(forward)(x, params)
    logits = jax.block_until_ready(logits)
    assert logits.shape == (2, 6) and logits.dtype == jnp.float32
    assert bool(jnp.all(jnp.isfinite(logits)))
    print("KERNEL_OK")
</pallas_src>

<mosaic_0001>
module attributes {stable_mosaic.version = 11 : i64} {
  func.func @_nasnet_cell_kernel(%arg0: i32, %arg1: memref<272x32xbf16, #tpu.memory_space<vmem>>, %arg2: memref<32x32xbf16, #tpu.memory_space<vmem>>, %arg3: memref<1x32xf32, #tpu.memory_space<vmem>>, %arg4: memref<9x32x64xbf16, #tpu.memory_space<vmem>>, %arg5: memref<1x64xf32, #tpu.memory_space<vmem>>, %arg6: memref<9x64x64xbf16, #tpu.memory_space<vmem>>, %arg7: memref<1x64xf32, #tpu.memory_space<vmem>>, %arg8: memref<32x64xbf16, #tpu.memory_space<vmem>>, %arg9: memref<1x64xf32, #tpu.memory_space<vmem>>, %arg10: memref<64x128xf32, #tpu.memory_space<vmem>>, %arg11: memref<1x128xf32, #tpu.memory_space<vmem>>, %arg12: memref<272x1xf32, #tpu.memory_space<vmem>>, %arg13: memref<1x1x128xf32, #tpu.memory_space<vmem>>, %arg14: memref<336x32xbf16, #tpu.memory_space<vmem>>, %arg15: memref<336x64xbf16, #tpu.memory_space<vmem>>) attributes {dimension_semantics = [#tpu.dimension_semantics<parallel>], iteration_bounds = array<i64: 2>, scalar_prefetch = 0 : i64, scratch_operands = 2 : i64, tpu.core_type = #tpu.core_type<tc>, window_params = [{transform_indices = @transform_0, window_bounds = array<i64: 272, 32>}, {pipeline_mode = #tpu.pipeline_mode<synchronous>, transform_indices = @transform_1, window_bounds = array<i64: 32, 32>}, {pipeline_mode = #tpu.pipeline_mode<synchronous>, transform_indices = @transform_2, window_bounds = array<i64: 1, 32>}, {pipeline_mode = #tpu.pipeline_mode<synchronous>, transform_indices = @transform_3, window_bounds = array<i64: 9, 32, 64>}, {pipeline_mode = #tpu.pipeline_mode<synchronous>, transform_indices = @transform_4, window_bounds = array<i64: 1, 64>}, {pipeline_mode = #tpu.pipeline_mode<synchronous>, transform_indices = @transform_5, window_bounds = array<i64: 9, 64, 64>}, {pipeline_mode = #tpu.pipeline_mode<synchronous>, transform_indices = @transform_6, window_bounds = array<i64: 1, 64>}, {pipeline_mode = #tpu.pipeline_mode<synchronous>, transform_indices = @transform_7, window_bounds = array<i64: 32, 64>}, {pipeline_mode = #tpu.pipeline_mode<synchronous>, transform_indices = @transform_8, window_bounds = array<i64: 1, 64>}, {pipeline_mode = #tpu.pipeline_mode<synchronous>, transform_indices = @transform_9, window_bounds = array<i64: 64, 128>}, {pipeline_mode = #tpu.pipeline_mode<synchronous>, transform_indices = @transform_10, window_bounds = array<i64: 1, 128>}, {transform_indices = @transform_11, window_bounds = array<i64: 272, 1>}, {transform_indices = @transform_12, window_bounds = array<i64: 1, 1, 128>}]} {
    %cst = arith.constant 0.000000e+00 : bf16
    %0 = vector.broadcast %cst : bf16 to vector<32x32xbf16>
    %c0 = arith.constant 0 : index
    %c0_0 = arith.constant 0 : index
    %1 = vector.load %arg14[%c0, %c0_0] : memref<336x32xbf16, #tpu.memory_space<vmem>>, vector<32x32xbf16>
    tpu.vector_store %arg14[%c0, %c0_0], %0 {strides = array<i32>} : memref<336x32xbf16, #tpu.memory_space<vmem>>, vector<32x32xbf16>,
    %c304 = arith.constant 304 : index
    %c0_1 = arith.constant 0 : index
    %2 = vector.load %arg14[%c304, %c0_1] : memref<336x32xbf16, #tpu.memory_space<vmem>>, vector<32x32xbf16>
    tpu.vector_store %arg14[%c304, %c0_1], %0 {strides = array<i32>} : memref<336x32xbf16, #tpu.memory_space<vmem>>, vector<32x32xbf16>,
    %cst_2 = arith.constant 0.000000e+00 : bf16
    %3 = vector.broadcast %cst_2 : bf16 to vector<32x64xbf16>
    %c0_3 = arith.constant 0 : index
    %c0_4 = arith.constant 0 : index
    %4 = vector.load %arg15[%c0_3, %c0_4] : memref<336x64xbf16, #tpu.memory_space<vmem>>, vector<32x64xbf16>
    tpu.vector_store %arg15[%c0_3, %c0_4], %3 {strides = array<i32>} : memref<336x64xbf16, #tpu.memory_space<vmem>>, vector<32x64xbf16>,
    %c304_5 = arith.constant 304 : index
    %c0_6 = arith.constant 0 : index
    %5 = vector.load %arg15[%c304_5, %c0_6] : memref<336x64xbf16, #tpu.memory_space<vmem>>, vector<32x64xbf16>
    tpu.vector_store %arg15[%c304_5, %c0_6], %3 {strides = array<i32>} : memref<336x64xbf16, #tpu.memory_space<vmem>>, vector<32x64xbf16>,
    %c0_7 = arith.constant 0 : index
    %c0_8 = arith.constant 0 : index
    %6 = vector.load %arg12[%c0_7, %c0_8] : memref<272x1xf32, #tpu.memory_space<vmem>>, vector<272x1xf32>
    %c0_9 = arith.constant 0 : index
    %c0_10 = arith.constant 0 : index
    %7 = vector.load %arg1[%c0_9, %c0_10] : memref<272x32xbf16, #tpu.memory_space<vmem>>, vector<272x32xbf16>
    %c0_11 = arith.constant 0 : index
    %c0_12 = arith.constant 0 : index
    %8 = vector.load %arg2[%c0_11, %c0_12] : memref<32x32xbf16, #tpu.memory_space<vmem>>, vector<32x32xbf16>
    %cst_13 = arith.constant dense<0.000000e+00> : vector<272x32xf32>
    %9 = tpu.matmul %7, %8, %cst_13 {dimension_numbers = #tpu.dot_dimension_numbers<[1], [0], [0], [1], [0, 0, 1, 1], [], []>} : vector<272x32xbf16>, vector<32x32xbf16>, vector<272x32xf32> -> vector<272x32xf32>
    %c0_14 = arith.constant 0 : index
    %c0_15 = arith.constant 0 : index
    %10 = vector.load %arg3[%c0_14, %c0_15] : memref<1x32xf32, #tpu.memory_space<vmem>>, vector<1x32xf32>
    %11 = vector.broadcast %10 : vector<1x32xf32> to vector<272x32xf32>
    %12 = arith.addf %9, %11 : vector<272x32xf32>
    %cst_16 = arith.constant 0.000000e+00 : f32
    %13 = vector.broadcast %cst_16 : f32 to vector<272x32xf32>
    %14 = arith.maximumf %12, %13 : vector<272x32xf32>
    %15 = vector.broadcast %6 : vector<272x1xf32> to vector<272x32xf32>
    %16 = arith.mulf %14, %15 : vector<272x32xf32>
    %17 = arith.truncf %16 : vector<272x32xf32> to vector<272x32xbf16>
    %c32 = arith.constant 32 : index
    %c0_17 = arith.constant 0 : index
    %18 = vector.load %arg14[%c32, %c0_17] : memref<336x32xbf16, #tpu.memory_space<vmem>>, vector<272x32xbf16>
    tpu.vector_store %arg14[%c32, %c0_17], %17 {strides = array<i32>} : memref<336x32xbf16, #tpu.memory_space<vmem>>, vector<272x32xbf16>,
    %cst_18 = arith.constant 0.000000e+00 : f32
    %19 = vector.broadcast %cst_18 : f32 to vector<272x64xf32>
    %c15 = arith.constant 15 : index
    %c0_19 = arith.constant 0 : index
    %20 = vector.load %arg14[%c15, %c0_19] : memref<336x32xbf16, #tpu.memory_space<vmem>>, vector<272x32xbf16>
    %c0_20 = arith.constant 0 : index
    %c0_21 = arith.constant 0 : index
    %c0_22 = arith.constant 0 : index
    %21 = vector.load %arg4[%c0_20, %c0_21, %c0_22] : memref<9x32x64xbf16, #tpu.memory_space<vmem>>, vector<1x32x64xbf16>
    %22 = vector.shape_cast %21 : vector<1x32x64xbf16> to vector<32x64xbf16>
    %cst_23 = arith.constant dense<0.000000e+00> : vector<272x64xf32>
    %23 = tpu.matmul %20, %22, %cst_23 {dimension_numbers = #tpu.dot_dimension_numbers<[1], [0], [0], [1], [0, 0, 1, 1], [], []>} : vector<272x32xbf16>, vector<32x64xbf16>, vector<272x64xf32> -> vector<272x64xf32>
    %24 = arith.addf %19, %23 : vector<272x64xf32>
    %c16 = arith.constant 16 : index
    %c0_24 = arith.constant 0 : index
    %25 = vector.load %arg14[%c16, %c0_24] : memref<336x32xbf16, #tpu.memory_space<vmem>>, vector<272x32xbf16>
    %c1 = arith.constant 1 : index
    %c0_25 = arith.constant 0 : index
    %c0_26 = arith.constant 0 : index
    %26 = vector.load %arg4[%c1, %c0_25, %c0_26] : memref<9x32x64xbf16, #tpu.memory_space<vmem>>, vector<1x32x64xbf16>
    %27 = vector.shape_cast %26 : vector<1x32x64xbf16> to vector<32x64xbf16>
    %cst_27 = arith.constant dense<0.000000e+00> : vector<272x64xf32>
    %28 = tpu.matmul %25, %27, %cst_27 {dimension_numbers = #tpu.dot_dimension_numbers<[1], [0], [0], [1], [0, 0, 1, 1], [], []>} : vector<272x32xbf16>, vector<32x64xbf16>, vector<272x64xf32> -> vector<272x64xf32>
    %29 = arith.addf %24, %28 : vector<272x64xf32>
    %c17 = arith.constant 17 : index
    %c0_28 = arith.constant 0 : index
    %30 = vector.load %arg14[%c17, %c0_28] : memref<336x32xbf16, #tpu.memory_space<vmem>>, vector<272x32xbf16>
    %c2 = arith.constant 2 : index
    %c0_29 = arith.constant 0 : index
    %c0_30 = arith.constant 0 : index
    %31 = vector.load %arg4[%c2, %c0_29, %c0_30] : memref<9x32x64xbf16, #tpu.memory_space<vmem>>, vector<1x32x64xbf16>
    %32 = vector.shape_cast %31 : vector<1x32x64xbf16> to vector<32x64xbf16>
    %cst_31 = arith.constant dense<0.000000e+00> : vector<272x64xf32>
    %33 = tpu.matmul %30, %32, %cst_31 {dimension_numbers = #tpu.dot_dimension_numbers<[1], [0], [0], [1], [0, 0, 1, 1], [], []>} : vector<272x32xbf16>, vector<32x64xbf16>, vector<272x64xf32> -> vector<272x64xf32>
    %34 = arith.addf %29, %33 : vector<272x64xf32>
    %c31 = arith.constant 31 : index
    %c0_32 = arith.constant 0 : index
    %35 = vector.load %arg14[%c31, %c0_32] : memref<336x32xbf16, #tpu.memory_space<vmem>>, vector<272x32xbf16>
    %c3 = arith.constant 3 : index
    %c0_33 = arith.constant 0 : index
    %c0_34 = arith.constant 0 : index
    %36 = vector.load %arg4[%c3, %c0_33, %c0_34] : memref<9x32x64xbf16, #tpu.memory_space<vmem>>, vector<1x32x64xbf16>
    %37 = vector.shape_cast %36 : vector<1x32x64xbf16> to vector<32x64xbf16>
    %cst_35 = arith.constant dense<0.000000e+00> : vector<272x64xf32>
    %38 = tpu.matmul %35, %37, %cst_35 {dimension_numbers = #tpu.dot_dimension_numbers<[1], [0], [0], [1], [0, 0, 1, 1], [], []>} : vector<272x32xbf16>, vector<32x64xbf16>, vector<272x64xf32> -> vector<272x64xf32>
    %39 = arith.addf %34, %38 : vector<272x64xf32>
    %c32_36 = arith.constant 32 : index
    %c0_37 = arith.constant 0 : index
    %40 = vector.load %arg14[%c32_36, %c0_37] : memref<336x32xbf16, #tpu.memory_space<vmem>>, vector<272x32xbf16>
    %c4 = arith.constant 4 : index
    %c0_38 = arith.constant 0 : index
    %c0_39 = arith.constant 0 : index
    %41 = vector.load %arg4[%c4, %c0_38, %c0_39] : memref<9x32x64xbf16, #tpu.memory_space<vmem>>, vector<1x32x64xbf16>
    %42 = vector.shape_cast %41 : vector<1x32x64xbf16> to vector<32x64xbf16>
    %cst_40 = arith.constant dense<0.000000e+00> : vector<272x64xf32>
    %43 = tpu.matmul %40, %42, %cst_40 {dimension_numbers = #tpu.dot_dimension_numbers<[1], [0], [0], [1], [0, 0, 1, 1], [], []>} : vector<272x32xbf16>, vector<32x64xbf16>, vector<272x64xf32> -> vector<272x64xf32>
    %44 = arith.addf %39, %43 : vector<272x64xf32>
    %c33 = arith.constant 33 : index
    %c0_41 = arith.constant 0 : index
    %45 = vector.load %arg14[%c33, %c0_41] : memref<336x32xbf16, #tpu.memory_space<vmem>>, vector<272x32xbf16>
    %c5 = arith.constant 5 : index
    %c0_42 = arith.constant 0 : index
    %c0_43 = arith.constant 0 : index
    %46 = vector.load %arg4[%c5, %c0_42, %c0_43] : memref<9x32x64xbf16, #tpu.memory_space<vmem>>, vector<1x32x64xbf16>
    %47 = vector.shape_cast %46 : vector<1x32x64xbf16> to vector<32x64xbf16>
    %cst_44 = arith.constant dense<0.000000e+00> : vector<272x64xf32>
    %48 = tpu.matmul %45, %47, %cst_44 {dimension_numbers = #tpu.dot_dimension_numbers<[1], [0], [0], [1], [0, 0, 1, 1], [], []>} : vector<272x32xbf16>, vector<32x64xbf16>, vector<272x64xf32> -> vector<272x64xf32>
    %49 = arith.addf %44, %48 : vector<272x64xf32>
    %c47 = arith.constant 47 : index
    %c0_45 = arith.constant 0 : index
    %50 = vector.load %arg14[%c47, %c0_45] : memref<336x32xbf16, #tpu.memory_space<vmem>>, vector<272x32xbf16>
    %c6 = arith.constant 6 : index
    %c0_46 = arith.constant 0 : index
    %c0_47 = arith.constant 0 : index
    %51 = vector.load %arg4[%c6, %c0_46, %c0_47] : memref<9x32x64xbf16, #tpu.memory_space<vmem>>, vector<1x32x64xbf16>
    %52 = vector.shape_cast %51 : vector<1x32x64xbf16> to vector<32x64xbf16>
    %cst_48 = arith.constant dense<0.000000e+00> : vector<272x64xf32>
    %53 = tpu.matmul %50, %52, %cst_48 {dimension_numbers = #tpu.dot_dimension_numbers<[1], [0], [0], [1], [0, 0, 1, 1], [], []>} : vector<272x32xbf16>, vector<32x64xbf16>, vector<272x64xf32> -> vector<272x64xf32>
    %54 = arith.addf %49, %53 : vector<272x64xf32>
    %c48 = arith.constant 48 : index
    %c0_49 = arith.constant 0 : index
    %55 = vector.load %arg14[%c48, %c0_49] : memref<336x32xbf16, #tpu.memory_space<vmem>>, vector<272x32xbf16>
    %c7 = arith.constant 7 : index
    %c0_50 = arith.constant 0 : index
    %c0_51 = arith.constant 0 : index
    %56 = vector.load %arg4[%c7, %c0_50, %c0_51] : memref<9x32x64xbf16, #tpu.memory_space<vmem>>, vector<1x32x64xbf16>
    %57 = vector.shape_cast %56 : vector<1x32x64xbf16> to vector<32x64xbf16>
    %cst_52 = arith.constant dense<0.000000e+00> : vector<272x64xf32>
    %58 = tpu.matmul %55, %57, %cst_52 {dimension_numbers = #tpu.dot_dimension_numbers<[1], [0], [0], [1], [0, 0, 1, 1], [], []>} : vector<272x32xbf16>, vector<32x64xbf16>, vector<272x64xf32> -> vector<272x64xf32>
    %59 = arith.addf %54, %58 : vector<272x64xf32>
    %c49 = arith.constant 49 : index
    %c0_53 = arith.constant 0 : index
    %60 = vector.load %arg14[%c49, %c0_53] : memref<336x32xbf16, #tpu.memory_space<vmem>>, vector<272x32xbf16>
    %c8 = arith.constant 8 : index
    %c0_54 = arith.constant 0 : index
    %c0_55 = arith.constant 0 : index
    %61 = vector.load %arg4[%c8, %c0_54, %c0_55] : memref<9x32x64xbf16, #tpu.memory_space<vmem>>, vector<1x32x64xbf16>
    %62 = vector.shape_cast %61 : vector<1x32x64xbf16> to vector<32x64xbf16>
    %cst_56 = arith.constant dense<0.000000e+00> : vector<272x64xf32>
    %63 = tpu.matmul %60, %62, %cst_56 {dimension_numbers = #tpu.dot_dimension_numbers<[1], [0], [0], [1], [0, 0, 1, 1], [], []>} : vector<272x32xbf16>, vector<32x64xbf16>, vector<272x64xf32> -> vector<272x64xf32>
    %64 = arith.addf %59, %63 : vector<272x64xf32>
    %c0_57 = arith.constant 0 : index
    %c0_58 = arith.constant 0 : index
    %65 = vector.load %arg5[%c0_57, %c0_58] : memref<1x64xf32, #tpu.memory_space<vmem>>, vector<1x64xf32>
    %66 = vector.broadcast %65 : vector<1x64xf32> to vector<272x64xf32>
    %67 = arith.addf %64, %66 : vector<272x64xf32>
    %cst_59 = arith.constant 0.000000e+00 : f32
    %68 = vector.broadcast %cst_59 : f32 to vector<272x64xf32>
    %69 = arith.maximumf %67, %68 : vector<272x64xf32>
    %70 = vector.broadcast %6 : vector<272x1xf32> to vector<272x64xf32>
    %71 = arith.mulf %69, %70 : vector<272x64xf32>
    %72 = arith.truncf %71 : vector<272x64xf32> to vector<272x64xbf16>
    %c32_60 = arith.constant 32 : index
    %c0_61 = arith.constant 0 : index
    %73 = vector.load %arg15[%c32_60, %c0_61] : memref<336x64xbf16, #tpu.memory_space<vmem>>, vector<272x64xbf16>
    tpu.vector_store %arg15[%c32_60, %c0_61], %72 {strides = array<i32>} : memref<336x64xbf16, #tpu.memory_space<vmem>>, vector<272x64xbf16>,
    %cst_62 = arith.constant 0.000000e+00 : f32
    %74 = vector.broadcast %cst_62 : f32 to vector<272x64xf32>
    %c15_63 = arith.constant 15 : index
    %c0_64 = arith.constant 0 : index
    %75 = vector.load %arg15[%c15_63, %c0_64] : memref<336x64xbf16, #tpu.memory_space<vmem>>, vector<272x64xbf16>
    %c0_65 = arith.constant 0 : index
    %c0_66 = arith.constant 0 : index
    %c0_67 = arith.constant 0 : index
    %76 = vector.load %arg6[%c0_65, %c0_66, %c0_67] : memref<9x64x64xbf16, #tpu.memory_space<vmem>>, vector<1x64x64xbf16>
    %77 = vector.shape_cast %76 : vector<1x64x64xbf16> to vector<64x64xbf16>
    %cst_68 = arith.constant dense<0.000000e+00> : vector<272x64xf32>
    %78 = tpu.matmul %75, %77, %cst_68 {dimension_numbers = #tpu.dot_dimension_numbers<[1], [0], [0], [1], [0, 0, 1, 1], [], []>} : vector<272x64xbf16>, vector<64x64xbf16>, vector<272x64xf32> -> vector<272x64xf32>
    %79 = arith.addf %74, %78 : vector<272x64xf32>
    %c16_69 = arith.constant 16 : index
    %c0_70 = arith.constant 0 : index
    %80 = vector.load %arg15[%c16_69, %c0_70] : memref<336x64xbf16, #tpu.memory_space<vmem>>, vector<272x64xbf16>
    %c1_71 = arith.constant 1 : index
    %c0_72 = arith.constant 0 : index
    %c0_73 = arith.constant 0 : index
    %81 = vector.load %arg6[%c1_71, %c0_72, %c0_73] : memref<9x64x64xbf16, #tpu.memory_space<vmem>>, vector<1x64x64xbf16>
    %82 = vector.shape_cast %81 : vector<1x64x64xbf16> to vector<64x64xbf16>
    %cst_74 = arith.constant dense<0.000000e+00> : vector<272x64xf32>
    %83 = tpu.matmul %80, %82, %cst_74 {dimension_numbers = #tpu.dot_dimension_numbers<[1], [0], [0], [1], [0, 0, 1, 1], [], []>} : vector<272x64xbf16>, vector<64x64xbf16>, vector<272x64xf32> -> vector<272x64xf32>
    %84 = arith.addf %79, %83 : vector<272x64xf32>
    %c17_75 = arith.constant 17 : index
    %c0_76 = arith.constant 0 : index
    %85 = vector.load %arg15[%c17_75, %c0_76] : memref<336x64xbf16, #tpu.memory_space<vmem>>, vector<272x64xbf16>
    %c2_77 = arith.constant 2 : index
    %c0_78 = arith.constant 0 : index
    %c0_79 = arith.constant 0 : index
    %86 = vector.load %arg6[%c2_77, %c0_78, %c0_79] : memref<9x64x64xbf16, #tpu.memory_space<vmem>>, vector<1x64x64xbf16>
    %87 = vector.shape_cast %86 : vector<1x64x64xbf16> to vector<64x64xbf16>
    %cst_80 = arith.constant dense<0.000000e+00> : vector<272x64xf32>
    %88 = tpu.matmul %85, %87, %cst_80 {dimension_numbers = #tpu.dot_dimension_numbers<[1], [0], [0], [1], [0, 0, 1, 1], [], []>} : vector<272x64xbf16>, vector<64x64xbf16>, vector<272x64xf32> -> vector<272x64xf32>
    %89 = arith.addf %84, %88 : vector<272x64xf32>
    %c31_81 = arith.constant 31 : index
    %c0_82 = arith.constant 0 : index
    %90 = vector.load %arg15[%c31_81, %c0_82] : memref<336x64xbf16, #tpu.memory_space<vmem>>, vector<272x64xbf16>
    %c3_83 = arith.constant 3 : index
    %c0_84 = arith.constant 0 : index
    %c0_85 = arith.constant 0 : index
    %91 = vector.load %arg6[%c3_83, %c0_84, %c0_85] : memref<9x64x64xbf16, #tpu.memory_space<vmem>>, vector<1x64x64xbf16>
    %92 = vector.shape_cast %91 : vector<1x64x64xbf16> to vector<64x64xbf16>
    %cst_86 = arith.constant dense<0.000000e+00> : vector<272x64xf32>
    %93 = tpu.matmul %90, %92, %cst_86 {dimension_numbers = #tpu.dot_dimension_numbers<[1], [0], [0], [1], [0, 0, 1, 1], [], []>} : vector<272x64xbf16>, vector<64x64xbf16>, vector<272x64xf32> -> vector<272x64xf32>
    %94 = arith.addf %89, %93 : vector<272x64xf32>
    %c32_87 = arith.constant 32 : index
    %c0_88 = arith.constant 0 : index
    %95 = vector.load %arg15[%c32_87, %c0_88] : memref<336x64xbf16, #tpu.memory_space<vmem>>, vector<272x64xbf16>
    %c4_89 = arith.constant 4 : index
    %c0_90 = arith.constant 0 : index
    %c0_91 = arith.constant 0 : index
    %96 = vector.load %arg6[%c4_89, %c0_90, %c0_91] : memref<9x64x64xbf16, #tpu.memory_space<vmem>>, vector<1x64x64xbf16>
    %97 = vector.shape_cast %96 : vector<1x64x64xbf16> to vector<64x64xbf16>
    %cst_92 = arith.constant dense<0.000000e+00> : vector<272x64xf32>
    %98 = tpu.matmul %95, %97, %cst_92 {dimension_numbers = #tpu.dot_dimension_numbers<[1], [0], [0], [1], [0, 0, 1, 1], [], []>} : vector<272x64xbf16>, vector<64x64xbf16>, vector<272x64xf32> -> vector<272x64xf32>
    %99 = arith.addf %94, %98 : vector<272x64xf32>
    %c33_93 = arith.constant 33 : index
    %c0_94 = arith.constant 0 : index
    %100 = vector.load %arg15[%c33_93, %c0_94] : memref<336x64xbf16, #tpu.memory_space<vmem>>, vector<272x64xbf16>
    %c5_95 = arith.constant 5 : index
    %c0_96 = arith.constant 0 : index
    %c0_97 = arith.constant 0 : index
    %101 = vector.load %arg6[%c5_95, %c0_96, %c0_97] : memref<9x64x64xbf16, #tpu.memory_space<vmem>>, vector<1x64x64xbf16>
    %102 = vector.shape_cast %101 : vector<1x64x64xbf16> to vector<64x64xbf16>
    %cst_98 = arith.constant dense<0.000000e+00> : vector<272x64xf32>
    %103 = tpu.matmul %100, %102, %cst_98 {dimension_numbers = #tpu.dot_dimension_numbers<[1], [0], [0], [1], [0, 0, 1, 1], [], []>} : vector<272x64xbf16>, vector<64x64xbf16>, vector<272x64xf32> -> vector<272x64xf32>
    %104 = arith.addf %99, %103 : vector<272x64xf32>
    %c47_99 = arith.constant 47 : index
    %c0_100 = arith.constant 0 : index
    %105 = vector.load %arg15[%c47_99, %c0_100] : memref<336x64xbf16, #tpu.memory_space<vmem>>, vector<272x64xbf16>
    %c6_101 = arith.constant 6 : index
    %c0_102 = arith.constant 0 : index
    %c0_103 = arith.constant 0 : index
    %106 = vector.load %arg6[%c6_101, %c0_102, %c0_103] : memref<9x64x64xbf16, #tpu.memory_space<vmem>>, vector<1x64x64xbf16>
    %107 = vector.shape_cast %106 : vector<1x64x64xbf16> to vector<64x64xbf16>
    %cst_104 = arith.constant dense<0.000000e+00> : vector<272x64xf32>
    %108 = tpu.matmul %105, %107, %cst_104 {dimension_numbers = #tpu.dot_dimension_numbers<[1], [0], [0], [1], [0, 0, 1, 1], [], []>} : vector<272x64xbf16>, vector<64x64xbf16>, vector<272x64xf32> -> vector<272x64xf32>
    %109 = arith.addf %104, %108 : vector<272x64xf32>
    %c48_105 = arith.constant 48 : index
    %c0_106 = arith.constant 0 : index
    %110 = vector.load %arg15[%c48_105, %c0_106] : memref<336x64xbf16, #tpu.memory_space<vmem>>, vector<272x64xbf16>
    %c7_107 = arith.constant 7 : index
    %c0_108 = arith.constant 0 : index
    %c0_109 = arith.constant 0 : index
    %111 = vector.load %arg6[%c7_107, %c0_108, %c0_109] : memref<9x64x64xbf16, #tpu.memory_space<vmem>>, vector<1x64x64xbf16>
    %112 = vector.shape_cast %111 : vector<1x64x64xbf16> to vector<64x64xbf16>
    %cst_110 = arith.constant dense<0.000000e+00> : vector<272x64xf32>
    %113 = tpu.matmul %110, %112, %cst_110 {dimension_numbers = #tpu.dot_dimension_numbers<[1], [0], [0], [1], [0, 0, 1, 1], [], []>} : vector<272x64xbf16>, vector<64x64xbf16>, vector<272x64xf32> -> vector<272x64xf32>
    %114 = arith.addf %109, %113 : vector<272x64xf32>
    %c49_111 = arith.constant 49 : index
    %c0_112 = arith.constant 0 : index
    %115 = vector.load %arg15[%c49_111, %c0_112] : memref<336x64xbf16, #tpu.memory_space<vmem>>, vector<272x64xbf16>
    %c8_113 = arith.constant 8 : index
    %c0_114 = arith.constant 0 : index
    %c0_115 = arith.constant 0 : index
    %116 = vector.load %arg6[%c8_113, %c0_114, %c0_115] : memref<9x64x64xbf16, #tpu.memory_space<vmem>>, vector<1x64x64xbf16>
    %117 = vector.shape_cast %116 : vector<1x64x64xbf16> to vector<64x64xbf16>
    %cst_116 = arith.constant dense<0.000000e+00> : vector<272x64xf32>
    %118 = tpu.matmul %115, %117, %cst_116 {dimension_numbers = #tpu.dot_dimension_numbers<[1], [0], [0], [1], [0, 0, 1, 1], [], []>} : vector<272x64xbf16>, vector<64x64xbf16>, vector<272x64xf32> -> vector<272x64xf32>
    %119 = arith.addf %114, %118 : vector<272x64xf32>
    %c0_117 = arith.constant 0 : index
    %c0_118 = arith.constant 0 : index
    %120 = vector.load %arg7[%c0_117, %c0_118] : memref<1x64xf32, #tpu.memory_space<vmem>>, vector<1x64xf32>
    %121 = vector.broadcast %120 : vector<1x64xf32> to vector<272x64xf32>
    %122 = arith.addf %119, %121 : vector<272x64xf32>
    %c0_119 = arith.constant 0 : index
    %c0_120 = arith.constant 0 : index
    %123 = vector.load %arg8[%c0_119, %c0_120] : memref<32x64xbf16, #tpu.memory_space<vmem>>, vector<32x64xbf16>
    %cst_121 = arith.constant dense<0.000000e+00> : vector<272x64xf32>
    %124 = tpu.matmul %17, %123, %cst_121 {dimension_numbers = #tpu.dot_dimension_numbers<[1], [0], [0], [1], [0, 0, 1, 1], [], []>} : vector<272x32xbf16>, vector<32x64xbf16>, vector<272x64xf32> -> vector<272x64xf32>
    %c0_122 = arith.constant 0 : index
    %c0_123 = arith.constant 0 : index
    %125 = vector.load %arg9[%c0_122, %c0_123] : memref<1x64xf32, #tpu.memory_space<vmem>>, vector<1x64xf32>
    %126 = vector.broadcast %125 : vector<1x64xf32> to vector<272x64xf32>
    %127 = arith.addf %124, %126 : vector<272x64xf32>
    %128 = arith.addf %122, %127 : vector<272x64xf32>
    %cst_124 = arith.constant 0.000000e+00 : f32
    %129 = vector.broadcast %cst_124 : f32 to vector<272x64xf32>
    %130 = arith.maximumf %128, %129 : vector<272x64xf32>
    %131 = vector.broadcast %6 : vector<272x1xf32> to vector<272x64xf32>
    %132 = arith.mulf %130, %131 : vector<272x64xf32>
    %cst_125 = arith.constant dense<0.000000e+00> : vector<64xf32>
    %133 = vector.multi_reduction <add>, %132, %cst_125 [0] : vector<272x64xf32> to vector<64xf32>
    %134 = vector.shape_cast %133 : vector<64xf32> to vector<1x64xf32>
    %cst_126 = arith.constant 0.00444444455 : f32
    %135 = vector.broadcast %cst_126 : f32 to vector<1x64xf32>
    %136 = arith.mulf %134, %135 : vector<1x64xf32>
    %c0_127 = arith.constant 0 : index
    %c0_128 = arith.constant 0 : index
    %137 = vector.load %arg10[%c0_127, %c0_128] : memref<64x128xf32, #tpu.memory_space<vmem>>, vector<64x128xf32>
    %cst_129 = arith.constant dense<0.000000e+00> : vector<1x128xf32>
    %138 = tpu.matmul %136, %137, %cst_129 {dimension_numbers = #tpu.dot_dimension_numbers<[1], [0], [0], [1], [0, 0, 1, 1], [], []>} : vector<1x64xf32>, vector<64x128xf32>, vector<1x128xf32> -> vector<1x128xf32>
    %c0_130 = arith.constant 0 : index
    %c0_131 = arith.constant 0 : index
    %139 = vector.load %arg11[%c0_130, %c0_131] : memref<1x128xf32, #tpu.memory_space<vmem>>, vector<1x128xf32>
    %140 = arith.addf %138, %139 : vector<1x128xf32>
    %c0_132 = arith.constant 0 : index
    %c0_133 = arith.constant 0 : index
    %c0_134 = arith.constant 0 : index
    %141 = vector.load %arg13[%c0_132, %c0_133, %c0_134] : memref<1x1x128xf32, #tpu.memory_space<vmem>>, vector<1x1x128xf32>
    %142 = vector.shape_cast %141 : vector<1x1x128xf32> to vector<1x128xf32>
    %143 = vector.shape_cast %140 : vector<1x128xf32> to vector<1x1x128xf32>
    tpu.vector_store %arg13[%c0_132, %c0_133, %c0_134], %143 {strides = array<i32>} : memref<1x1x128xf32, #tpu.memory_space<vmem>>, vector<1x1x128xf32>,
    return
  }
  func.func @transform_0(%arg0: i32) -> (i32, i32) {
    %c0_i32 = arith.constant 0 : i32
    %c0_i32_0 = arith.constant 0 : i32
    return %arg0, %c0_i32 : i32, i32
  }
  func.func @transform_1(%arg0: i32) -> (i32, i32) {
    %c0_i32 = arith.constant 0 : i32
    %c0_i32_0 = arith.constant 0 : i32
    %c0_i32_1 = arith.constant 0 : i32
    return %c0_i32, %c0_i32_0 : i32, i32
  }
  func.func @transform_2(%arg0: i32) -> (i32, i32) {
    %c0_i32 = arith.constant 0 : i32
    %c0_i32_0 = arith.constant 0 : i32
    %c0_i32_1 = arith.constant 0 : i32
    return %c0_i32, %c0_i32_0 : i32, i32
  }
  func.func @transform_3(%arg0: i32) -> (i32, i32, i32) {
    %c0_i32 = arith.constant 0 : i32
    %c0_i32_0 = arith.constant 0 : i32
    %c0_i32_1 = arith.constant 0 : i32
    %c0_i32_2 = arith.constant 0 : i32
    return %c0_i32, %c0_i32_0, %c0_i32_1 : i32, i32, i32
  }
  func.func @transform_4(%arg0: i32) -> (i32, i32) {
    %c0_i32 = arith.constant 0 : i32
    %c0_i32_0 = arith.constant 0 : i32
    %c0_i32_1 = arith.constant 0 : i32
    return %c0_i32, %c0_i32_0 : i32, i32
  }
  func.func @transform_5(%arg0: i32) -> (i32, i32, i32) {
    %c0_i32 = arith.constant 0 : i32
    %c0_i32_0 = arith.constant 0 : i32
    %c0_i32_1 = arith.constant 0 : i32
    %c0_i32_2 = arith.constant 0 : i32
    return %c0_i32, %c0_i32_0, %c0_i32_1 : i32, i32, i32
  }
  func.func @transform_6(%arg0: i32) -> (i32, i32) {
    %c0_i32 = arith.constant 0 : i32
    %c0_i32_0 = arith.constant 0 : i32
    %c0_i32_1 = arith.constant 0 : i32
    return %c0_i32, %c0_i32_0 : i32, i32
  }
  func.func @transform_7(%arg0: i32) -> (i32, i32) {
    %c0_i32 = arith.constant 0 : i32
    %c0_i32_0 = arith.constant 0 : i32
    %c0_i32_1 = arith.constant 0 : i32
    return %c0_i32, %c0_i32_0 : i32, i32
  }
  func.func @transform_8(%arg0: i32) -> (i32, i32) {
    %c0_i32 = arith.constant 0 : i32
    %c0_i32_0 = arith.constant 0 : i32
    %c0_i32_1 = arith.constant 0 : i32
    return %c0_i32, %c0_i32_0 : i32, i32
  }
  func.func @transform_9(%arg0: i32) -> (i32, i32) {
    %c0_i32 = arith.constant 0 : i32
    %c0_i32_0 = arith.constant 0 : i32
    %c0_i32_1 = arith.constant 0 : i32
    return %c0_i32, %c0_i32_0 : i32, i32
  }
  func.func @transform_10(%arg0: i32) -> (i32, i32) {
    %c0_i32 = arith.constant 0 : i32
    %c0_i32_0 = arith.constant 0 : i32
    %c0_i32_1 = arith.constant 0 : i32
    return %c0_i32, %c0_i32_0 : i32, i32
  }
  func.func @transform_11(%arg0: i32) -> (i32, i32) {
    %c0_i32 = arith.constant 0 : i32
    %c0_i32_0 = arith.constant 0 : i32
    return %arg0, %c0_i32 : i32, i32
  }
  func.func @transform_12(%arg0: i32) -> (i32, i32, i32) {
    %c0_i32 = arith.constant 0 : i32
    %c0_i32_0 = arith.constant 0 : i32
    %c0_i32_1 = arith.constant 0 : i32
    return %arg0, %c0_i32, %c0_i32_0 : i32, i32, i32
  }
}

</mosaic_0001>

<llo_original>
// kernel: mul.64
$region0: #{mul.64}
  %s0 = inlined_call_operand.vmem [shape: f32[3,3,44], index: 0, kind: input, shape index: {}]
  %s1 = inlined_call_operand.vmem [shape: f32[9,44], index: 1, kind: output, shape index: {}]
  $region1: #{mul.64} parent=0
    #allocation0 [shape = 'u8[12288]{0}', space=vmem, size = 0x3000, scoped, tag = 'scoped mem for input reshape']
    %s3 = sshllo.u32 0, 4
    %s4 = smul.addr 4, 2
    %s5 = scalar_lea.vmem %s0, %s4
    %v6 = vld [vmem:[%s5] sm:%s3]
    %s7 = scalar_lea.vmem [#allocation0], 16
    %8 = vst [vmem:[%s7] sm:%s3] %v6
    %s9 = scalar_lea.vmem %s0, 4
    %v10 = vld [vmem:[%s9] sm:%s3]
    %s11 = scalar_lea.vmem [#allocation0], 8
    %12 = vst [vmem:[%s11] sm:%s3] %v10
    %v13 = vld [vmem:[%s0] sm:%s3]
    %14 = vst [vmem:[#allocation0] sm:%s3] %v13
    %v15 = vld [vmem:[#allocation0] sm:$0x7]
    %vm16 = vcmask 359424
    %17 = vst.msk [vmem:[%s1] sm:$0x7] %vm16, %v15
    %s18 = scalar_lea.vmem [#allocation0], 8
    %v19 = vld [vmem:[%s18] sm:$0x7]
    %vm20 = vcmask 359424
    %s21 = scalar_lea.vmem %s1, 3
    %22 = vst.msk [vmem:[%s21] sm:$0x7] %vm20, %v19
    %s23 = scalar_lea.vmem [#allocation0], 16
    %v24 = vld [vmem:[%s23] sm:$0x7]
    %vm25 = vcmask 359424
    %s26 = scalar_lea.vmem %s1, 6
    %27 = vst.msk [vmem:[%s26] sm:$0x7] %vm25, %v24

// kernel: mul.51
$region0: #{mul.51}
  %s0 = inlined_call_operand.vmem [shape: f32[3,3,32], index: 0, kind: input, shape index: {}]
  %s1 = inlined_call_operand.vmem [shape: f32[9,32], index: 1, kind: output, shape index: {}]
  $region1: #{mul.51} parent=0
    #allocation0 [shape = 'u8[12288]{0}', space=vmem, size = 0x3000, scoped, tag = 'scoped mem for input reshape']
    %s3 = sshllo.u32 0, 4
    %s4 = smul.addr 4, 2
    %s5 = scalar_lea.vmem %s0, %s4
    %v6 = vld [vmem:[%s5] sm:%s3]
    %s7 = scalar_lea.vmem [#allocation0], 16
    %8 = vst [vmem:[%s7] sm:%s3] %v6
    %s9 = scalar_lea.vmem %s0, 4
    %v10 = vld [vmem:[%s9] sm:%s3]
    %s11 = scalar_lea.vmem [#allocation0], 8
    %12 = vst [vmem:[%s11] sm:%s3] %v10
    %v13 = vld [vmem:[%s0] sm:%s3]
    %14 = vst [vmem:[#allocation0] sm:%s3] %v13
    %v15 = vld [vmem:[#allocation0] sm:$0x7]
    %vm16 = vcmask 261120
    %17 = vst.msk [vmem:[%s1] sm:$0x7] %vm16, %v15
    %s18 = scalar_lea.vmem [#allocation0], 8
    %v19 = vld [vmem:[%s18] sm:$0x7]
    %vm20 = vcmask 261120
    %s21 = scalar_lea.vmem %s1, 3
    %22 = vst.msk [vmem:[%s21] sm:$0x7] %vm20, %v19
    %s23 = scalar_lea.vmem [#allocation0], 16
    %v24 = vld [vmem:[%s23] sm:$0x7]
    %vm25 = vcmask 261120
    %s26 = scalar_lea.vmem %s1, 6
    %27 = vst.msk [vmem:[%s26] sm:$0x7] %vm25, %v24

// kernel: forward.1
$region0: #{forward.1}
  #allocation0 [shape = 'u32[]', space=smem, size = 0x4, offset = 0x4, fixed_abs, tag = 'smem constant byte address 0x4 - core index']
  #allocation1 [shape = 'u32[144,128]{1,0:T(1,128)}', space=vmem, size = 0x12000, scoped, tag = 'internal scratch']
  #allocation2 [shape = 'bf16[336,32]{1,0:T(16,128)(2,1)}', space=vmem, size = 0x15000, scoped, tag = 'scratch operand']
  #allocation3 [shape = 'bf16[336,64]{1,0:T(16,128)(2,1)}', space=vmem, size = 0x15000, scoped, tag = 'scratch operand']
  %s0 = inlined_call_operand.vmem [shape: bf16[544,32], index: 0, kind: input, shape index: {}]
  %s1 = inlined_call_operand.vmem [shape: bf16[32,32], index: 1, kind: input, shape index: {}]
  %s2 = inlined_call_operand.vmem [shape: f32[1,32], index: 2, kind: input, shape index: {}]
  %s3 = inlined_call_operand.vmem [shape: bf16[9,32,64], index: 3, kind: input, shape index: {}]
  %s4 = inlined_call_operand.vmem [shape: f32[1,64], index: 4, kind: input, shape index: {}]
  %s5 = inlined_call_operand.vmem [shape: bf16[9,64,64], index: 5, kind: input, shape index: {}]
  %s6 = inlined_call_operand.vmem [shape: f32[1,64], index: 6, kind: input, shape index: {}]
  %s7 = inlined_call_operand.vmem [shape: bf16[32,64], index: 7, kind: input, shape index: {}]
  %s8 = inlined_call_operand.vmem [shape: f32[1,64], index: 8, kind: input, shape index: {}]
  %s9 = inlined_call_operand.vmem [shape: f32[64,128], index: 9, kind: input, shape index: {}]
  %s10 = inlined_call_operand.vmem [shape: f32[1,128], index: 10, kind: input, shape index: {}]
  %s11 = inlined_call_operand.vmem [shape: f32[544,1], index: 11, kind: input, shape index: {}]
  %s12 = inlined_call_operand.hbm [shape: f32[2,1,128], index: 12, kind: output, shape index: {}]
  %s13 = sld [smem:[#allocation0]]
  $region81: #{forward.1} parent=0
    _
  %s15 = ssub.s32 1, %s13
  %s16 = scalar_select 0, %s15, %s13
  $region1: #{forward.1} parent=0
    #allocation4 [shape = 'u8[1024]{0}', space=vmem, size = 0x400, scoped, tag = 'output window, operand 0']
    #allocation5 [shape = 's32[2]{0}', space=sflag, size = 0x8, scoped, tag = 'scoped memory for forward.1']
    %17 = vsyncpa [#allocation5], 0
    %s18 = scalar_lea.sflag [#allocation5], 1
    %19 = vsyncpa %s18, 0
    loop: start=0, step=1, limit=4
    $region2: #{forward.1} parent=1 // loop_pre_header
      _
    $region3: #{forward.1} parent=1 // loop_header
      %s21 = sphi 0, %s25
      %p22 = scmp.ge.s32.totalorder %s21, 4
      %s31 = sphi 0, %s33
      %s34 = sphi 0, %s31
      %s35 = sphi 0, %s34
      %s51 = sphi 0, %s35
      %s55 = sphi 0, %s55
      %s57 = sphi 0, %s55
      %s58 = sphi 0, %s57
      %s72 = sphi 0, %s58
      %s76 = sphi 0, %s76
      %s78 = sphi 0, %s76
      %s79 = sphi 0, %s78
      %s93 = sphi 0, %s79
      %s97 = sphi 0, %s97
      %s99 = sphi 0, %s97
      %s100 = sphi 0, %s99
      %s114 = sphi 0, %s100
      %s118 = sphi 0, %s118
      %s120 = sphi 0, %s118
      %s121 = sphi 0, %s120
      %s135 = sphi 0, %s121
      %s139 = sphi 0, %s139
      %s141 = sphi 0, %s139
      %s142 = sphi 0, %s141
      %s156 = sphi 0, %s142
      %s160 = sphi 0, %s160
      %s162 = sphi 0, %s160
      %s163 = sphi 0, %s162
      %s177 = sphi 0, %s163
      %s181 = sphi 0, %s181
      %s183 = sphi 0, %s181
      %s184 = sphi 0, %s183
      %s198 = sphi 0, %s184
      %s202 = sphi 0, %s202
      %s204 = sphi 0, %s202
      %s205 = sphi 0, %s204
      %s219 = sphi 0, %s205
      %s223 = sphi 0, %s223
      %s225 = sphi 0, %s223
      %s226 = sphi 0, %s225
      %s240 = sphi 0, %s226
      %s244 = sphi 0, %s244
      %s246 = sphi 0, %s244
      %s247 = sphi 0, %s246
      %s261 = sphi 0, %s247
      %s267 = sphi 0, %s269
      %s270 = sphi 0, %s267
      %s271 = sphi 0, %s270
      %s287 = sphi 0, %s271
      %s293 = sphi 0, %s295
      %s296 = sphi 0, %s293
      %s297 = sphi 0, %s296
      %s313 = sphi 0, %s297
    $region4: #{forward.1} parent=1 // loop_header_branch
      %24 = sbr.rel (%p22) target = $region8
    $region5: #{forward.1} parent=1 // loop_body
      %s26 = ssub.s32 %s21, 1
      %s27 = ssub.s32 %s21, 2
      %s28 = sadd.s32 %s21, 1
      %s29 = ssub.s32 %s21, %s28
      %p30 = scmp.eq.s32.totalorder %s29, 0
      %s32 = sadd.s32 %s31, 1
      %s33 = scalar_select %p30, %s31, %s32
      %p36 = pneg %p30
      %p37 = scmp.eq.s32.totalorder %s21, 1
      %p38 = por %p36, %p37
      %p39 = scmp.ne.s32.totalorder %s31, %s34
      %p40 = scmp.eq.s32.totalorder %s21, 0
      %p41 = por %p39, %p40
      %p42 = scmp.ne.s32.totalorder %s31, %s34
      %p43 = scmp.eq.s32.totalorder %s26, 1
      %p44 = por %p42, %p43
      %p45 = scmp.ne.s32.totalorder %s34, %s35
      %p46 = scmp.eq.s32.totalorder %s26, 0
      %p47 = por %p45, %p46
      %p48 = scmp.ne.s32.totalorder %s34, %s35
      %p49 = scmp.eq.s32.totalorder %s27, 1
      %p50 = por %p48, %p49
      %p52 = scmp.ne.s32.totalorder %s35, %s51
      %p53 = scmp.eq.s32.totalorder %s27, 0
      %p54 = por %p52, %p53
      %s56 = sadd.s32 %s55, 1
      %p59 = scmp.eq.s32.totalorder %s21, 1
      %p60 = scmp.ne.s32.totalorder %s55, %s57
      %p61 = scmp.eq.s32.totalorder %s21, 0
      %p62 = por %p60, %p61
      %p63 = scmp.ne.s32.totalorder %s55, %s57
      %p64 = scmp.eq.s32.totalorder %s26, 1
      %p65 = por %p63, %p64
      %p66 = scmp.ne.s32.totalorder %s57, %s58
      %p67 = scmp.eq.s32.totalorder %s26, 0
      %p68 = por %p66, %p67
      %p69 = scmp.ne.s32.totalorder %s57, %s58
      %p70 = scmp.eq.s32.totalorder %s27, 1
      %p71 = por %p69, %p70
      %p73 = scmp.ne.s32.totalorder %s58, %s72
      %p74 = scmp.eq.s32.totalorder %s27, 0
      %p75 = por %p73, %p74
      %s77 = sadd.s32 %s76, 1
      %p80 = scmp.eq.s32.totalorder %s21, 1
      %p81 = scmp.ne.s32.totalorder %s76, %s78
      %p82 = scmp.eq.s32.totalorder %s21, 0
      %p83 = por %p81, %p82
      %p84 = scmp.ne.s32.totalorder %s76, %s78
      %p85 = scmp.eq.s32.totalorder %s26, 1
      %p86 = por %p84, %p85
      %p87 = scmp.ne.s32.totalorder %s78, %s79
      %p88 = scmp.eq.s32.totalorder %s26, 0
      %p89 = por %p87, %p88
      %p90 = scmp.ne.s32.totalorder %s78, %s79
      %p91 = scmp.eq.s32.totalorder %s27, 1
      %p92 = por %p90, %p91
      %p94 = scmp.ne.s32.totalorder %s79, %s93
      %p95 = scmp.eq.s32.totalorder %s27, 0
      %p96 = por %p94, %p95
      %s98 = sadd.s32 %s97, 1
      %p101 = scmp.eq.s32.totalorder %s21, 1
      %p102 = scmp.ne.s32.totalorder %s97, %s99
      %p103 = scmp.eq.s32.totalorder %s21, 0
      %p104 = por %p102, %p103
      %p105 = scmp.ne.s32.totalorder %s97, %s99
      %p106 = scmp.eq.s32.totalorder %s26, 1
      %p107 = por %p105, %p106
      %p108 = scmp.ne.s32.totalorder %s99, %s100
      %p109 = scmp.eq.s32.totalorder %s26, 0
      %p110 = por %p108, %p109
      %p111 = scmp.ne.s32.totalorder %s99, %s100
      %p112 = scmp.eq.s32.totalorder %s27, 1
      %p113 = por %p111, %p112
      %p115 = scmp.ne.s32.totalorder %s100, %s114
      %p116 = scmp.eq.s32.totalorder %s27, 0
      %p117 = por %p115, %p116
      %s119 = sadd.s32 %s118, 1
      %p122 = scmp.eq.s32.totalorder %s21, 1
      %p123 = scmp.ne.s32.totalorder %s118, %s120
      %p124 = scmp.eq.s32.totalorder %s21, 0
      %p125 = por %p123, %p124
      %p126 = scmp.ne.s32.totalorder %s118, %s120
      %p127 = scmp.eq.s32.totalorder %s26, 1
      %p128 = por %p126, %p127
      %p129 = scmp.ne.s32.totalorder %s120, %s121
      %p130 = scmp.eq.s32.totalorder %s26, 0
      %p131 = por %p129, %p130
      %p132 = scmp.ne.s32.totalorder %s120, %s121
      %p133 = scmp.eq.s32.totalorder %s27, 1
      %p134 = por %p132, %p133
      %p136 = scmp.ne.s32.totalorder %s121, %s135
      %p137 = scmp.eq.s32.totalorder %s27, 0
      %p138 = por %p136, %p137
      %s140 = sadd.s32 %s139, 1
      %p143 = scmp.eq.s32.totalorder %s21, 1
      %p144 = scmp.ne.s32.totalorder %s139, %s141
      %p145 = scmp.eq.s32.totalorder %s21, 0
      %p146 = por %p144, %p145
      %p147 = scmp.ne.s32.totalorder %s139, %s141
      %p148 = scmp.eq.s32.totalorder %s26, 1
      %p149 = por %p147, %p148
      %p150 = scmp.ne.s32.totalorder %s141, %s142
      %p151 = scmp.eq.s32.totalorder %s26, 0
      %p152 = por %p150, %p151
      %p153 = scmp.ne.s32.totalorder %s141, %s142
      %p154 = scmp.eq.s32.totalorder %s27, 1
      %p155 = por %p153, %p154
      %p157 = scmp.ne.s32.totalorder %s142, %s156
      %p158 = scmp.eq.s32.totalorder %s27, 0
      %p159 = por %p157, %p158
      %s161 = sadd.s32 %s160, 1
      %p164 = scmp.eq.s32.totalorder %s21, 1
      %p165 = scmp.ne.s32.totalorder %s160, %s162
      %p166 = scmp.eq.s32.totalorder %s21, 0
      %p167 = por %p165, %p166
      %p168 = scmp.ne.s32.totalorder %s160, %s162
      %p169 = scmp.eq.s32.totalorder %s26, 1
      %p170 = por %p168, %p169
      %p171 = scmp.ne.s32.totalorder %s162, %s163
      %p172 = scmp.eq.s32.totalorder %s26, 0
      %p173 = por %p171, %p172
      %p174 = scmp.ne.s32.totalorder %s162, %s163
      %p175 = scmp.eq.s32.totalorder %s27, 1
      %p176 = por %p174, %p175
      %p178 = scmp.ne.s32.totalorder %s163, %s177
      %p179 = scmp.eq.s32.totalorder %s27, 0
      %p180 = por %p178, %p179
      %s182 = sadd.s32 %s181, 1
      %p185 = scmp.eq.s32.totalorder %s21, 1
      %p186 = scmp.ne.s32.totalorder %s181, %s183
      %p187 = scmp.eq.s32.totalorder %s21, 0
      %p188 = por %p186, %p187
      %p189 = scmp.ne.s32.totalorder %s181, %s183
      %p190 = scmp.eq.s32.totalorder %s26, 1
      %p191 = por %p189, %p190
      %p192 = scmp.ne.s32.totalorder %s183, %s184
      %p193 = scmp.eq.s32.totalorder %s26, 0
      %p194 = por %p192, %p193
      %p195 = scmp.ne.s32.totalorder %s183, %s184
      %p196 = scmp.eq.s32.totalorder %s27, 1
      %p197 = por %p195, %p196
      %p199 = scmp.ne.s32.totalorder %s184, %s198
      %p200 = scmp.eq.s32.totalorder %s27, 0
      %p201 = por %p199, %p200
      %s203 = sadd.s32 %s202, 1
      %p206 = scmp.eq.s32.totalorder %s21, 1
      %p207 = scmp.ne.s32.totalorder %s202, %s204
      %p208 = scmp.eq.s32.totalorder %s21, 0
      %p209 = por %p207, %p208
      %p210 = scmp.ne.s32.totalorder %s202, %s204
      %p211 = scmp.eq.s32.totalorder %s26, 1
      %p212 = por %p210, %p211
      %p213 = scmp.ne.s32.totalorder %s204, %s205
      %p214 = scmp.eq.s32.totalorder %s26, 0
      %p215 = por %p213, %p214
      %p216 = scmp.ne.s32.totalorder %s204, %s205
      %p217 = scmp.eq.s32.totalorder %s27, 1
      %p218 = por %p216, %p217
      %p220 = scmp.ne.s32.totalorder %s205, %s219
      %p221 = scmp.eq.s32.totalorder %s27, 0
      %p222 = por %p220, %p221
      %s224 = sadd.s32 %s223, 1
      %p227 = scmp.eq.s32.totalorder %s21, 1
      %p228 = scmp.ne.s32.totalorder %s223, %s225
      %p229 = scmp.eq.s32.totalorder %s21, 0
      %p230 = por %p228, %p229
      %p231 = scmp.ne.s32.totalorder %s223, %s225
      %p232 = scmp.eq.s32.totalorder %s26, 1
      %p233 = por %p231, %p232
      %p234 = scmp.ne.s32.totalorder %s225, %s226
      %p235 = scmp.eq.s32.totalorder %s26, 0
      %p236 = por %p234, %p235
      %p237 = scmp.ne.s32.totalorder %s225, %s226
      %p238 = scmp.eq.s32.totalorder %s27, 1
      %p239 = por %p237, %p238
      %p241 = scmp.ne.s32.totalorder %s226, %s240
      %p242 = scmp.eq.s32.totalorder %s27, 0
      %p243 = por %p241, %p242
      %s245 = sadd.s32 %s244, 1
      %p248 = scmp.eq.s32.totalorder %s21, 1
      %p249 = scmp.ne.s32.totalorder %s244, %s246
      %p250 = scmp.eq.s32.totalorder %s21, 0
      %p251 = por %p249, %p250
      %p252 = scmp.ne.s32.totalorder %s244, %s246
      %p253 = scmp.eq.s32.totalorder %s26, 1
      %p254 = por %p252, %p253
      %p255 = scmp.ne.s32.totalorder %s246, %s247
      %p256 = scmp.eq.s32.totalorder %s26, 0
      %p257 = por %p255, %p256
      %p258 = scmp.ne.s32.totalorder %s246, %s247
      %p259 = scmp.eq.s32.totalorder %s27, 1
      %p260 = por %p258, %p259
      %p262 = scmp.ne.s32.totalorder %s247, %s261
      %p263 = scmp.eq.s32.totalorder %s27, 0
      %p264 = por %p262, %p263
      %s265 = ssub.s32 %s21, %s28
      %p266 = scmp.eq.s32.totalorder %s265, 0
      %s268 = sadd.s32 %s267, 1
      %s269 = scalar_select %p266, %s267, %s268
      %p272 = pneg %p266
      %p273 = scmp.eq.s32.totalorder %s21, 1
      %p274 = por %p272, %p273
      %p275 = scmp.ne.s32.totalorder %s267, %s270
      %p276 = scmp.eq.s32.totalorder %s21, 0
      %p277 = por %p275, %p276
      %p278 = scmp.ne.s32.totalorder %s267, %s270
      %p279 = scmp.eq.s32.totalorder %s26, 1
      %p280 = por %p278, %p279
      %p281 = scmp.ne.s32.totalorder %s270, %s271
      %p282 = scmp.eq.s32.totalorder %s26, 0
      %p283 = por %p281, %p282
      %p284 = scmp.ne.s32.totalorder %s270, %s271
      %p285 = scmp.eq.s32.totalorder %s27, 1
      %p286 = por %p284, %p285
      %p288 = scmp.ne.s32.totalorder %s271, %s287
      %p289 = scmp.eq.s32.totalorder %s27, 0
      %p290 = por %p288, %p289
      %s291 = ssub.s32 %s21, %s28
      %p292 = scmp.eq.s32.totalorder %s291, 0
      %s294 = sadd.s32 %s293, 1
      %s295 = scalar_select %p292, %s293, %s294
      %p298 = pneg %p292
      %p299 = scmp.eq.s32.totalorder %s21, 1
      %p300 = por %p298, %p299
      %p301 = scmp.ne.s32.totalorder %s293, %s296
      %p302 = scmp.eq.s32.totalorder %s21, 0
      %p303 = por %p301, %p302
      %p304 = scmp.ne.s32.totalorder %s293, %s296
      %p305 = scmp.eq.s32.totalorder %s26, 1
      %p306 = por %p304, %p305
      %p307 = scmp.ne.s32.totalorder %s296, %s297
      %p308 = scmp.eq.s32.totalorder %s26, 0
      %p309 = por %p307, %p308
      %p310 = scmp.ne.s32.totalorder %s296, %s297
      %p311 = scmp.eq.s32.totalorder %s27, 1
      %p312 = por %p310, %p311
      %p314 = scmp.ne.s32.totalorder %s297, %s313
      %p315 = scmp.eq.s32.totalorder %s27, 0
      %p316 = por %p314, %p315
      %p317 = scmp.le.s32.totalorder 1, %s21
      %p318 = scmp.lt.s32.totalorder %s21, 3
      %p319 = pnand %p317, %p318
      %p320 = pneg %p319
      // Predicated region
      $region9: #{forward.1} parent=5 // pred_check
        _
      $region10: #{forward.1} parent=5 // pred_check_branch
        %322 = sbr.rel (%p319) target = $region12
      $region11: #{forward.1} parent=5 // pred_region
        %s323 = ssub.s32 %s21, 1
        // Predicated region
        $region13: #{forward.1} parent=11 // pred_check
          %p324 = pneg %p68
        $region14: #{forward.1} parent=11 // pred_check_branch
          %326 = sbr.rel (%p324) target = $region16
        $region15: #{forward.1} parent=11 // pred_region
          _
        $region16: #{forward.1} parent=11 // pred_fallthru
          _
        // Predicated region
        $region17: #{forward.1} parent=11 // pred_check
          %p327 = pneg %p89
        $region18: #{forward.1} parent=11 // pred_check_branch
          %329 = sbr.rel (%p327) target = $region20
        $region19: #{forward.1} parent=11 // pred_region
          _
        $region20: #{forward.1} parent=11 // pred_fallthru
          _
        // Predicated region
        $region21: #{forward.1} parent=11 // pred_check
          %p330 = pneg %p110
        $region22: #{forward.1} parent=11 // pred_check_branch
          %332 = sbr.rel (%p330) target = $region24
        $region23: #{forward.1} parent=11 // pred_region
          _
        $region24: #{forward.1} parent=11 // pred_fallthru
          _
        // Predicated region
        $region25: #{forward.1} parent=11 // pred_check
          %p333 = pneg %p131
        $region26: #{forward.1} parent=11 // pred_check_branch
          %335 = sbr.rel (%p333) target = $region28
        $region27: #{forward.1} parent=11 // pred_region
          _
        $region28: #{forward.1} parent=11 // pred_fallthru
          _
        // Predicated region
        $region29: #{forward.1} parent=11 // pred_check
          %p336 = pneg %p152
        $region30: #{forward.1} parent=11 // pred_check_branch
          %338 = sbr.rel (%p336) target = $region32
        $region31: #{forward.1} parent=11 // pred_region
          _
        $region32: #{forward.1} parent=11 // pred_fallthru
          _
        // Predicated region
        $region33: #{forward.1} parent=11 // pred_check
          %p339 = pneg %p173
        $region34: #{forward.1} parent=11 // pred_check_branch
          %341 = sbr.rel (%p339) target = $region36
        $region35: #{forward.1} parent=11 // pred_region
          _
        $region36: #{forward.1} parent=11 // pred_fallthru
          _
        // Predicated region
        $region37: #{forward.1} parent=11 // pred_check
          %p342 = pneg %p194
        $region38: #{forward.1} parent=11 // pred_check_branch
          %344 = sbr.rel (%p342) target = $region40
        $region39: #{forward.1} parent=11 // pred_region
          _
        $region40: #{forward.1} parent=11 // pred_fallthru
          _
        // Predicated region
        $region41: #{forward.1} parent=11 // pred_check
          %p345 = pneg %p215
        $region42: #{forward.1} parent=11 // pred_check_branch
          %347 = sbr.rel (%p345) target = $region44
        $region43: #{forward.1} parent=11 // pred_region
          _
        $region44: #{forward.1} parent=11 // pred_fallthru
          _
        // Predicated region
        $region45: #{forward.1} parent=11 // pred_check
          %p348 = pneg %p236
        $region46: #{forward.1} parent=11 // pred_check_branch
          %350 = sbr.rel (%p348) target = $region48
        $region47: #{forward.1} parent=11 // pred_region
          _
        $region48: #{forward.1} parent=11 // pred_fallthru
          _
        // Predicated region
        $region49: #{forward.1} parent=11 // pred_check
          %p351 = pneg %p257
        $region50: #{forward.1} parent=11 // pred_check_branch
          %353 = sbr.rel (%p351) target = $region52
        $region51: #{forward.1} parent=11 // pred_region
          _
        $region52: #{forward.1} parent=11 // pred_fallthru
          _
      $region12: #{forward.1} parent=5 // pred_fallthru
        _
      %p354 = scmp.lt.s32.totalorder %s21, 2
      // Predicated region
      $region53: #{forward.1} parent=5 // pred_check
        %p355 = pneg %p354
      $region54: #{forward.1} parent=5 // pred_check_branch
        %357 = sbr.rel (%p355) target = $region56
      $region55: #{forward.1} parent=5 // pred_region
        // Predicated region
        $region57: #{forward.1} parent=55 // pred_check
          %p358 = pneg %p41
        $region58: #{forward.1} parent=55 // pred_check_branch
          %360 = sbr.rel (%p358) target = $region60
        $region59: #{forward.1} parent=55 // pred_region
          %s361 = smul.u32 34, %s21
          %p362 = scmp.lt.s32.totalorder %s361, 67
          %s363 = scalar_select %p362, %s361, 67
          %s364 = smul.addr %s363, 4
          %s365 = scalar_lea.vmem %s0, %s364
          %s366 = smul.u32 34, %s21
        $region60: #{forward.1} parent=55 // pred_fallthru
          _
        // Predicated region
        $region61: #{forward.1} parent=55 // pred_check
          %p367 = pneg %p277
        $region62: #{forward.1} parent=55 // pred_check_branch
          %369 = sbr.rel (%p367) target = $region64
        $region63: #{forward.1} parent=55 // pred_region
          %s370 = smul.u32 34, %s21
          %p371 = scmp.lt.s32.totalorder %s370, 67
          %s372 = scalar_select %p371, %s370, 67
          %s373 = smul.addr %s372, 8
          %s374 = scalar_lea.vmem %s11, %s373
          %s375 = smul.u32 34, %s21
        $region64: #{forward.1} parent=55 // pred_fallthru
          _
      $region56: #{forward.1} parent=5 // pred_fallthru
        _
      %p376 = scmp.le.s32.totalorder 1, %s21
      %p377 = scmp.lt.s32.totalorder %s21, 3
      %p378 = pnand %p376, %p377
      %p379 = pneg %p378
      // Predicated region
      $region65: #{forward.1} parent=5 // pred_check
        _
      $region66: #{forward.1} parent=5 // pred_check_branch
        %381 = sbr.rel (%p378) target = $region68
      $region67: #{forward.1} parent=5 // pred_region
        %s382 = ssub.s32 %s21, 1
        %s383 = smul.u32 34, %s26
        %p384 = scmp.lt.s32.totalorder %s383, 67
        %s385 = scalar_select %p384, %s383, 67
        %s386 = smul.addr %s385, 4
        %s387 = scalar_lea.vmem %s0, %s386
        %p388 = pneg %p47
        %p389 = pneg %p44
        %p390 = pneg %p68
        %p391 = pneg %p65
        %p392 = pneg %p89
        %p393 = pneg %p86
        %p394 = pneg %p110
        %p395 = pneg %p107
        %p396 = pneg %p131
        %p397 = pneg %p128
        %p398 = pneg %p152
        %p399 = pneg %p149
        %p400 = pneg %p173
        %p401 = pneg %p170
        %p402 = pneg %p194
        %p403 = pneg %p191
        %p404 = pneg %p215
        %p405 = pneg %p212
        %p406 = pneg %p236
        %p407 = pneg %p233
        %p408 = pneg %p257
        %p409 = pneg %p254
        %s410 = smul.u32 34, %s26
        %p411 = scmp.lt.s32.totalorder %s410, 67
        %s412 = scalar_select %p411, %s410, 67
        %s413 = smul.addr %s412, 8
        %s414 = scalar_lea.vmem %s11, %s413
        %p415 = pneg %p283
        %p416 = pneg %p280
        %p417 = pneg %p309
        %p418 = pneg %p306
        %s419 = sand.u32 %s296, 1
        %s420 = scalar_lea.sflag [#allocation5], %s419
        %s421 = sand.u32 %s296, 1
        %s422 = scalar_lea.vmem [#allocation4], %s421
        %s423 = smul.u32 34, %s26
        %p424 = scmp.lt.s32.totalorder %s423, 67
        %s425 = scalar_select %p424, %s423, 67
        %s426 = smul.addr %s425, 4
        %s427 = scalar_lea.vmem %s0, %s426
        %s428 = smul.u32 34, %s26
        %s429 = smul.u32 34, %s26
        %p430 = scmp.lt.s32.totalorder %s429, 67
        %s431 = scalar_select %p430, %s429, 67
        %s432 = smul.addr %s431, 8
        %s433 = scalar_lea.vmem %s11, %s432
        %s434 = smul.u32 34, %s26
        %vm436 = vcmask 261120
        %437 = vst.msk [vmem:[#allocation2] sm:$0xff] %vm436, 0
        %438 = vst.msk [vmem:[#allocation2 + $0x8] sm:$0xff] %vm436, 0
        %439 = vst.msk [vmem:[#allocation2 + $0x98] sm:$0xff] %vm436, 0
        %440 = vst.msk [vmem:[#allocation2 + $0xa0] sm:$0xff] %vm436, 0
        %vm441 = vcmask 523264
        %442 = vst.msk [vmem:[#allocation3] sm:$0xff] %vm441, 0
        %443 = vst.msk [vmem:[#allocation3 + $0x8] sm:$0xff] %vm441, 0
        %444 = vst.msk [vmem:[#allocation3 + $0x98] sm:$0xff] %vm441, 0
        %445 = vst.msk [vmem:[#allocation3 + $0xa0] sm:$0xff] %vm441, 0
        %v446 = vld [vmem:[%s433] sm:$0xff]
        %v447 = vld [vmem:[%s433 + $0x8] sm:$0xff]
        %v448 = vld [vmem:[%s433 + $0x10] sm:$0xff]
        %v449 = vld [vmem:[%s433 + $0x18] sm:$0xff]
        %v450 = vld [vmem:[%s433 + $0x20] sm:$0xff]
        %v451 = vld [vmem:[%s433 + $0x28] sm:$0xff]
        %v452 = vld [vmem:[%s433 + $0x30] sm:$0xff]
        %v453 = vld [vmem:[%s433 + $0x38] sm:$0xff]
        %v454 = vld [vmem:[%s433 + $0x40] sm:$0xff]
        %v455 = vld [vmem:[%s433 + $0x48] sm:$0xff]
        %v456 = vld [vmem:[%s433 + $0x50] sm:$0xff]
        %v457 = vld [vmem:[%s433 + $0x58] sm:$0xff]
        %v458 = vld [vmem:[%s433 + $0x60] sm:$0xff]
        %v459 = vld [vmem:[%s433 + $0x68] sm:$0xff]
        %v460 = vld [vmem:[%s433 + $0x70] sm:$0xff]
        %v461 = vld [vmem:[%s433 + $0x78] sm:$0xff]
        %v462 = vld [vmem:[%s433 + $0x80] sm:$0xff]
        %v463 = vld [vmem:[%s433 + $0x88] sm:$0xff]
        %v464 = vld [vmem:[%s433 + $0x90] sm:$0xff]
        %v465 = vld [vmem:[%s433 + $0x98] sm:$0xff]
        %v466 = vld [vmem:[%s433 + $0xa0] sm:$0xff]
        %v467 = vld [vmem:[%s433 + $0xa8] sm:$0xff]
        %v468 = vld [vmem:[%s433 + $0xb0] sm:$0xff]
        %v469 = vld [vmem:[%s433 + $0xb8] sm:$0xff]
        %v470 = vld [vmem:[%s433 + $0xc0] sm:$0xff]
        %v471 = vld [vmem:[%s433 + $0xc8] sm:$0xff]
        %v472 = vld [vmem:[%s433 + $0xd0] sm:$0xff]
        %v473 = vld [vmem:[%s433 + $0xd8] sm:$0xff]
        %v474 = vld [vmem:[%s433 + $0xe0] sm:$0xff]
        %v475 = vld [vmem:[%s433 + $0xe8] sm:$0xff]
        %v476 = vld [vmem:[%s433 + $0xf0] sm:$0xff]
        %v477 = vld [vmem:[%s433 + $0xf8] sm:$0xff]
        %v478 = vld [vmem:[%s433 + $0x100] sm:$0xff]
        %v479 = vld [vmem:[%s433 + $0x108] sm:$0xff]
        %v480 = vld [vmem:[%s427] sm:$0xf]
        %v481 = vld [vmem:[%s427 + $0x4] sm:$0xf]
        %v482 = vld [vmem:[%s427 + $0x8] sm:$0xf]
        %v483 = vld [vmem:[%s427 + $0xc] sm:$0xf]
        %v484 = vld [vmem:[%s427 + $0x10] sm:$0xf]
        %v485 = vld [vmem:[%s427 + $0x14] sm:$0xf]
        %v486 = vld [vmem:[%s427 + $0x18] sm:$0xf]
        %v487 = vld [vmem:[%s427 + $0x1c] sm:$0xf]
        %v488 = vld [vmem:[%s427 + $0x20] sm:$0xf]
        %v489 = vld [vmem:[%s427 + $0x24] sm:$0xf]
        %v490 = vld [vmem:[%s427 + $0x28] sm:$0xf]
        %v491 = vld [vmem:[%s427 + $0x2c] sm:$0xf]
        %v492 = vld [vmem:[%s427 + $0x30] sm:$0xf]
        %v493 = vld [vmem:[%s427 + $0x34] sm:$0xf]
        %v494 = vld [vmem:[%s427 + $0x38] sm:$0xf]
        %v495 = vld [vmem:[%s427 + $0x3c] sm:$0xf]
        %v496 = vld [vmem:[%s427 + $0x40] sm:$0xf]
        %v497 = vld [vmem:[%s427 + $0x44] sm:$0xf]
        %v498 = vld [vmem:[%s427 + $0x48] sm:$0xf]
        %v499 = vld [vmem:[%s427 + $0x4c] sm:$0xf]
        %v500 = vld [vmem:[%s427 + $0x50] sm:$0xf]
        %v501 = vld [vmem:[%s427 + $0x54] sm:$0xf]
        %v502 = vld [vmem:[%s427 + $0x58] sm:$0xf]
        %v503 = vld [vmem:[%s427 + $0x5c] sm:$0xf]
        %v504 = vld [vmem:[%s427 + $0x60] sm:$0xf]
        %v505 = vld [vmem:[%s427 + $0x64] sm:$0xf]
        %v506 = vld [vmem:[%s427 + $0x68] sm:$0xf]
        %v507 = vld [vmem:[%s427 + $0x6c] sm:$0xf]
        %v508 = vld [vmem:[%s427 + $0x70] sm:$0xf]
        %v509 = vld [vmem:[%s427 + $0x74] sm:$0xf]
        %v510 = vld [vmem:[%s427 + $0x78] sm:$0xf]
        %v511 = vld [vmem:[%s427 + $0x7c] sm:$0xf]
        %v512 = vld [vmem:[%s427 + $0x80] sm:$0xf]
        %v513 = vld [vmem:[%s427 + $0x84] sm:$0xf]
        %v514 = vld [vmem:[%s1] sm:$0xf]
        %v515 = vld [vmem:[%s1 + $0x4] sm:$0xf]
        %v516 = vld [vmem:[%s1 + $0x8] sm:$0xf]
        %v517 = vld [vmem:[%s1 + $0xc] sm:$0xf]
        %v518 = vld [vmem:[%s2] sm:$0x1]
        %v520 = vlaneseq
        %v521 = vshrl.u32 %v520, 7
        %v522 = vsub.s32 0, %v521
        %v523 = vrot.slane %v518, %v522
        %v559 = vunpack.c.l.b16 %v480
        %v560 = vunpack.c.l.b16 %v481
        %v561 = vunpack.c.l.b16 %v482
        %v562 = vunpack.c.l.b16 %v483
        %v563 = vunpack.c.l.b16 %v484
        %v564 = vunpack.c.l.b16 %v485
        %v565 = vunpack.c.l.b16 %v486
        %v566 = vunpack.c.l.b16 %v487
        %v567 = vunpack.c.l.b16 %v488
        %v568 = vunpack.c.l.b16 %v489
        %v569 = vunpack.c.l.b16 %v490
        %v570 = vunpack.c.l.b16 %v491
        %v571 = vunpack.c.l.b16 %v492
        %v572 = vunpack.c.l.b16 %v493
        %v573 = vunpack.c.l.b16 %v494
        %v574 = vunpack.c.l.b16 %v495
        %v575 = vunpack.c.l.b16 %v496
        %v576 = vunpack.c.l.b16 %v497
        %v577 = vunpack.c.l.b16 %v498
        %v578 = vunpack.c.l.b16 %v499
        %v579 = vunpack.c.l.b16 %v500
        %v580 = vunpack.c.l.b16 %v501
        %v581 = vunpack.c.l.b16 %v502
        %v582 = vunpack.c.l.b16 %v503
        %v583 = vunpack.c.l.b16 %v504
        %v584 = vunpack.c.l.b16 %v505
        %v585 = vunpack.c.l.b16 %v506
        %v586 = vunpack.c.l.b16 %v507
        %v587 = vunpack.c.l.b16 %v508
        %v588 = vunpack.c.l.b16 %v509
        %v589 = vunpack.c.l.b16 %v510
        %v590 = vunpack.c.l.b16 %v511
        %v591 = vunpack.c.l.b16 %v512
        %v592 = vunpack.c.l.b16 %v513
        %v593 = vpack.c.b16 %v560, %v559
        %v594 = vpack.c.b16 %v562, %v561
        %v595 = vpack.c.b16 %v564, %v563
        %v596 = vpack.c.b16 %v566, %v565
        %v597 = vpack.c.b16 %v568, %v567
        %v598 = vpack.c.b16 %v570, %v569
        %v599 = vpack.c.b16 %v572, %v571
        %v600 = vpack.c.b16 %v574, %v573
        %v601 = vpack.c.b16 %v576, %v575
        %v602 = vpack.c.b16 %v578, %v577
        %v603 = vpack.c.b16 %v580, %v579
        %v604 = vpack.c.b16 %v582, %v581
        %v605 = vpack.c.b16 %v584, %v583
        %v606 = vpack.c.b16 %v586, %v585
        %v607 = vpack.c.b16 %v588, %v587
        %v608 = vpack.c.b16 %v590, %v589
        %v609 = vpack.c.b16 %v592, %v591
        %v614 = vunpack.c.l.b16 %v514
        %v615 = vunpack.c.l.b16 %v515
        %v616 = vunpack.c.l.b16 %v516
        %v617 = vunpack.c.l.b16 %v517
        %v618 = vpack.c.b16 %v615, %v614
        %v619 = vpack.c.b16 %v617, %v616
        %v623 = vsel %vm436, %v593, 0
        %v626 = vsel %vm436, %v594, 0
        %v629 = vsel %vm436, %v595, 0
        %v632 = vsel %vm436, %v596, 0
        %v635 = vsel %vm436, %v597, 0
        %v638 = vsel %vm436, %v598, 0
        %v641 = vsel %vm436, %v599, 0
        %v644 = vsel %vm436, %v600, 0
        %v647 = vsel %vm436, %v601, 0
        %v650 = vsel %vm436, %v602, 0
        %v653 = vsel %vm436, %v603, 0
        %v656 = vsel %vm436, %v604, 0
        %v659 = vsel %vm436, %v605, 0
        %v662 = vsel %vm436, %v606, 0
        %v665 = vsel %vm436, %v607, 0
        %v668 = vsel %vm436, %v608, 0
        %v671 = vsel %vm436, %v609, 0
        %673 = vmatprep.subr.bf16.mxu0 0
        %674 = vmatpush1.bf16.msra.mxu0 %v618
        %675 = vmatprep.subr.bf16.mxu0 0
        %676 = vmatpush1.bf16.msra.mxu0 %v619
        %677 = vmatprep.subr.bf16.mxu0 0
        %678 = vmatpush1.bf16.msra.mxu0 0
        %679 = vmatprep.subr.bf16.mxu0 0
        %680 = vmatpush1.bf16.msra.mxu0 0
        %681 = vmatprep.subr.bf16.mxu0 0
        %682 = vmatpush1.bf16.msra.mxu0 0
        %683 = vmatprep.subr.bf16.mxu0 0
        %684 = vmatpush1.bf16.msra.mxu0 0
        %685 = vmatprep.subr.bf16.mxu0 0
        %686 = vmatpush1.bf16.msra.mxu0 0
        %687 = vmatprep.subr.bf16.mxu0 0
        %688 = vmatpush1.bf16.msra.mxu0 0
        %689 = vmatprep.subr.bf16.mxu0 0
        %690 = vmatpush1.bf16.msra.mxu0 0
        %691 = vmatprep.subr.bf16.mxu0 0
        %692 = vmatpush1.bf16.msra.mxu0 0
        %693 = vmatprep.subr.bf16.mxu0 0
        %694 = vmatpush1.bf16.msra.mxu0 0
        %695 = vmatprep.subr.bf16.mxu0 0
        %696 = vmatpush1.bf16.msra.mxu0 0
        %697 = vmatprep.subr.bf16.mxu0 0
        %698 = vmatpush1.bf16.msra.mxu0 0
        %699 = vmatprep.subr.bf16.mxu0 0
        %700 = vmatpush1.bf16.msra.mxu0 0
        %701 = vmatprep.subr.bf16.mxu0 0
        %702 = vmatpush1.bf16.msra.mxu0 0
        %703 = vmatprep.subr.bf16.mxu0 0
        %704 = vmatpush1.bf16.msra.mxu0 0
        %705 = vmatprep.mubr.bf16.mxu0 0
        %706 = vmatmul.mubr.bf16.gmra.mrb[0].mxu0 %v623
        %v707 = vpop.f32.mrb[0].mxu0
        %v708 = vadd.f32 %v523, %v707
        %v709 = vpop.f32.mrb[0].mxu0
        %v710 = vpop.f32.mrb[0].mxu0
        %v711 = vadd.f32 %v523, %v710
        %v712 = vpop.f32.mrb[0].mxu0
        %713 = vmatprep.mubr.bf16.mxu0 0
        %714 = vmatmul.mubr.bf16.gmra.mrb[0].mxu0 %v626
        %v715 = vpop.f32.mrb[0].mxu0
        %v716 = vadd.f32 %v523, %v715
        %v717 = vpop.f32.mrb[0].mxu0
        %v718 = vpop.f32.mrb[0].mxu0
        %v719 = vadd.f32 %v523, %v718
        %v720 = vpop.f32.mrb[0].mxu0
        %721 = vmatprep.mubr.bf16.mxu0 0
        %722 = vmatmul.mubr.bf16.gmra.mrb[0].mxu0 %v629
        %v723 = vpop.f32.mrb[0].mxu0
        %v724 = vadd.f32 %v523, %v723
        %v725 = vpop.f32.mrb[0].mxu0
        %v726 = vpop.f32.mrb[0].mxu0
        %v727 = vadd.f32 %v523, %v726
        %v728 = vpop.f32.mrb[0].mxu0
        %729 = vmatprep.mubr.bf16.mxu0 0
        %730 = vmatmul.mubr.bf16.gmra.mrb[0].mxu0 %v632
        %v731 = vpop.f32.mrb[0].mxu0
        %v732 = vadd.f32 %v523, %v731
        %v733 = vpop.f32.mrb[0].mxu0
        %v734 = vpop.f32.mrb[0].mxu0
        %v735 = vadd.f32 %v523, %v734
        %v736 = vpop.f32.mrb[0].mxu0
        %737 = vmatprep.mubr.bf16.mxu0 0
        %738 = vmatmul.mubr.bf16.gmra.mrb[0].mxu0 %v635
        %v739 = vpop.f32.mrb[0].mxu0
        %v740 = vadd.f32 %v523, %v739
        %v741 = vpop.f32.mrb[0].mxu0
        %v742 = vpop.f32.mrb[0].mxu0
        %v743 = vadd.f32 %v523, %v742
        %v744 = vpop.f32.mrb[0].mxu0
        %745 = vmatprep.mubr.bf16.mxu0 0
        %746 = vmatmul.mubr.bf16.gmra.mrb[0].mxu0 %v638
        %v747 = vpop.f32.mrb[0].mxu0
        %v748 = vadd.f32 %v523, %v747
        %v749 = vpop.f32.mrb[0].mxu0
        %v750 = vpop.f32.mrb[0].mxu0
        %v751 = vadd.f32 %v523, %v750
        %v752 = vpop.f32.mrb[0].mxu0
        %753 = vmatprep.mubr.bf16.mxu0 0
        %754 = vmatmul.mubr.bf16.gmra.mrb[0].mxu0 %v641
        %v755 = vpop.f32.mrb[0].mxu0
        %v756 = vadd.f32 %v523, %v755
        %v757 = vpop.f32.mrb[0].mxu0
        %v758 = vpop.f32.mrb[0].mxu0
        %v759 = vadd.f32 %v523, %v758
        %v760 = vpop.f32.mrb[0].mxu0
        %761 = vmatprep.mubr.bf16.mxu0 0
        %762 = vmatmul.mubr.bf16.gmra.mrb[0].mxu0 %v644
        %v763 = vpop.f32.mrb[0].mxu0
        %v764 = vadd.f32 %v523, %v763
        %v765 = vpop.f32.mrb[0].mxu0
        %v766 = vpop.f32.mrb[0].mxu0
        %v767 = vadd.f32 %v523, %v766
        %v768 = vpop.f32.mrb[0].mxu0
        %769 = vmatprep.mubr.bf16.mxu0 0
        %770 = vmatmul.mubr.bf16.gmra.mrb[0].mxu0 %v647
        %v771 = vpop.f32.mrb[0].mxu0
        %v772 = vadd.f32 %v523, %v771
        %v773 = vpop.f32.mrb[0].mxu0
        %v774 = vpop.f32.mrb[0].mxu0
        %v775 = vadd.f32 %v523, %v774
        %v776 = vpop.f32.mrb[0].mxu0
        %777 = vmatprep.mubr.bf16.mxu0 0
        %778 = vmatmul.mubr.bf16.gmra.mrb[0].mxu0 %v650
        %v779 = vpop.f32.mrb[0].mxu0
        %v780 = vadd.f32 %v523, %v779
        %v781 = vpop.f32.mrb[0].mxu0
        %v782 = vpop.f32.mrb[0].mxu0
        %v783 = vadd.f32 %v523, %v782
        %v784 = vpop.f32.mrb[0].mxu0
        %785 = vmatprep.mubr.bf16.mxu0 0
        %786 = vmatmul.mubr.bf16.gmra.mrb[0].mxu0 %v653
        %v787 = vpop.f32.mrb[0].mxu0
        %v788 = vadd.f32 %v523, %v787
        %v789 = vpop.f32.mrb[0].mxu0
        %v790 = vpop.f32.mrb[0].mxu0
        %v791 = vadd.f32 %v523, %v790
        %v792 = vpop.f32.mrb[0].mxu0
        %793 = vmatprep.mubr.bf16.mxu0 0
        %794 = vmatmul.mubr.bf16.gmra.mrb[0].mxu0 %v656
        %v795 = vpop.f32.mrb[0].mxu0
        %v796 = vadd.f32 %v523, %v795
        %v797 = vpop.f32.mrb[0].mxu0
        %v798 = vpop.f32.mrb[0].mxu0
        %v799 = vadd.f32 %v523, %v798
        %v800 = vpop.f32.mrb[0].mxu0
        %801 = vmatprep.mubr.bf16.mxu0 0
        %802 = vmatmul.mubr.bf16.gmra.mrb[0].mxu0 %v659
        %v803 = vpop.f32.mrb[0].mxu0
        %v804 = vadd.f32 %v523, %v803
        %v805 = vpop.f32.mrb[0].mxu0
        %v806 = vpop.f32.mrb[0].mxu0
        %v807 = vadd.f32 %v523, %v806
        %v808 = vpop.f32.mrb[0].mxu0
        %809 = vmatprep.mubr.bf16.mxu0 0
        %810 = vmatmul.mubr.bf16.gmra.mrb[0].mxu0 %v662
        %v811 = vpop.f32.mrb[0].mxu0
        %v812 = vadd.f32 %v523, %v811
        %v813 = vpop.f32.mrb[0].mxu0
        %v814 = vpop.f32.mrb[0].mxu0
        %v815 = vadd.f32 %v523, %v814
        %v816 = vpop.f32.mrb[0].mxu0
        %817 = vmatprep.mubr.bf16.mxu0 0
        %818 = vmatmul.mubr.bf16.gmra.mrb[0].mxu0 %v665
        %v819 = vpop.f32.mrb[0].mxu0
        %v820 = vadd.f32 %v523, %v819
        %v821 = vpop.f32.mrb[0].mxu0
        %v822 = vpop.f32.mrb[0].mxu0
        %v823 = vadd.f32 %v523, %v822
        %v824 = vpop.f32.mrb[0].mxu0
        %825 = vmatprep.mubr.bf16.mxu0 0
        %826 = vmatmul.mubr.bf16.gmra.mrb[0].mxu0 %v668
        %v827 = vpop.f32.mrb[0].mxu0
        %v828 = vadd.f32 %v523, %v827
        %v829 = vpop.f32.mrb[0].mxu0
        %v830 = vpop.f32.mrb[0].mxu0
        %v831 = vadd.f32 %v523, %v830
        %v832 = vpop.f32.mrb[0].mxu0
        %833 = vmatprep.mubr.bf16.mxu0 0
        %834 = vmatmul.mubr.bf16.gmra.mrb[0].mxu0 %v671
        %v835 = vpop.f32.mrb[0].mxu0
        %v836 = vadd.f32 %v523, %v835
        %v837 = vpop.f32.mrb[0].mxu0
        %v838 = vpop.f32.mrb[0].mxu0
        %v839 = vadd.f32 %v523, %v838
        %v840 = vpop.f32.mrb[0].mxu0
        %841 = vdwg.mxu0
        %v842 = vmax.f32 %v708, 0.0
        %v843 = vmax.f32 %v711, 0.0
        %v844 = vmax.f32 %v716, 0.0
        %v845 = vmax.f32 %v719, 0.0
        %v846 = vmax.f32 %v724, 0.0
        %v847 = vmax.f32 %v727, 0.0
        %v848 = vmax.f32 %v732, 0.0
        %v849 = vmax.f32 %v735, 0.0
        %v850 = vmax.f32 %v740, 0.0
        %v851 = vmax.f32 %v743, 0.0
        %v852 = vmax.f32 %v748, 0.0
        %v853 = vmax.f32 %v751, 0.0
        %v854 = vmax.f32 %v756, 0.0
        %v855 = vmax.f32 %v759, 0.0
        %v856 = vmax.f32 %v764, 0.0
        %v857 = vmax.f32 %v767, 0.0
        %v858 = vmax.f32 %v772, 0.0
        %v859 = vmax.f32 %v775, 0.0
        %v860 = vmax.f32 %v780, 0.0
        %v861 = vmax.f32 %v783, 0.0
        %v862 = vmax.f32 %v788, 0.0
        %v863 = vmax.f32 %v791, 0.0
        %v864 = vmax.f32 %v796, 0.0
        %v865 = vmax.f32 %v799, 0.0
        %v866 = vmax.f32 %v804, 0.0
        %v867 = vmax.f32 %v807, 0.0
        %v868 = vmax.f32 %v812, 0.0
        %v869 = vmax.f32 %v815, 0.0
        %v870 = vmax.f32 %v820, 0.0
        %v871 = vmax.f32 %v823, 0.0
        %v872 = vmax.f32 %v828, 0.0
        %v873 = vmax.f32 %v831, 0.0
        %v874 = vmax.f32 %v836, 0.0
        %v875 = vmax.f32 %v839, 0.0
        %877 = vset.pattern.permute.xlu0 0
        %878 = vperm.xlu0 %877, %v446
        %v879 = vpop.permute.xlu0 %878
        %882 = vset.pattern.permute.xlu0 0
        %883 = vperm.xlu0 %882, %v447
        %v884 = vpop.permute.xlu0 %883
        %887 = vset.pattern.permute.xlu0 0
        %888 = vperm.xlu0 %887, %v448
        %v889 = vpop.permute.xlu0 %888
        %892 = vset.pattern.permute.xlu0 0
        %893 = vperm.xlu0 %892, %v449
        %v894 = vpop.permute.xlu0 %893
        %897 = vset.pattern.permute.xlu0 0
        %898 = vperm.xlu0 %897, %v450
        %v899 = vpop.permute.xlu0 %898
        %902 = vset.pattern.permute.xlu0 0
        %903 = vperm.xlu0 %902, %v451
        %v904 = vpop.permute.xlu0 %903
        %907 = vset.pattern.permute.xlu0 0
        %908 = vperm.xlu0 %907, %v452
        %v909 = vpop.permute.xlu0 %908
        %912 = vset.pattern.permute.xlu0 0
        %913 = vperm.xlu0 %912, %v453
        %v914 = vpop.permute.xlu0 %913
        %917 = vset.pattern.permute.xlu0 0
        %918 = vperm.xlu0 %917, %v454
        %v919 = vpop.permute.xlu0 %918
        %922 = vset.pattern.permute.xlu0 0
        %923 = vperm.xlu0 %922, %v455
        %v924 = vpop.permute.xlu0 %923
        %927 = vset.pattern.permute.xlu0 0
        %928 = vperm.xlu0 %927, %v456
        %v929 = vpop.permute.xlu0 %928
        %932 = vset.pattern.permute.xlu0 0
        %933 = vperm.xlu0 %932, %v457
        %v934 = vpop.permute.xlu0 %933
        %937 = vset.pattern.permute.xlu0 0
        %938 = vperm.xlu0 %937, %v458
        %v939 = vpop.permute.xlu0 %938
        %942 = vset.pattern.permute.xlu0 0
        %943 = vperm.xlu0 %942, %v459
        %v944 = vpop.permute.xlu0 %943
        %947 = vset.pattern.permute.xlu0 0
        %948 = vperm.xlu0 %947, %v460
        %v949 = vpop.permute.xlu0 %948
        %952 = vset.pattern.permute.xlu0 0
        %953 = vperm.xlu0 %952, %v461
        %v954 = vpop.permute.xlu0 %953
        %957 = vset.pattern.permute.xlu0 0
        %958 = vperm.xlu0 %957, %v462
        %v959 = vpop.permute.xlu0 %958
        %962 = vset.pattern.permute.xlu0 0
        %963 = vperm.xlu0 %962, %v463
        %v964 = vpop.permute.xlu0 %963
        %967 = vset.pattern.permute.xlu0 0
        %968 = vperm.xlu0 %967, %v464
        %v969 = vpop.permute.xlu0 %968
        %972 = vset.pattern.permute.xlu0 0
        %973 = vperm.xlu0 %972, %v465
        %v974 = vpop.permute.xlu0 %973
        %977 = vset.pattern.permute.xlu0 0
        %978 = vperm.xlu0 %977, %v466
        %v979 = vpop.permute.xlu0 %978
        %982 = vset.pattern.permute.xlu0 0
        %983 = vperm.xlu0 %982, %v467
        %v984 = vpop.permute.xlu0 %983
        %987 = vset.pattern.permute.xlu0 0
        %988 = vperm.xlu0 %987, %v468
        %v989 = vpop.permute.xlu0 %988
        %992 = vset.pattern.permute.xlu0 0
        %993 = vperm.xlu0 %992, %v469
        %v994 = vpop.permute.xlu0 %993
        %997 = vset.pattern.permute.xlu0 0
        %998 = vperm.xlu0 %997, %v470
        %v999 = vpop.permute.xlu0 %998
        %1002 = vset.pattern.permute.xlu0 0
        %1003 = vperm.xlu0 %1002, %v471
        %v1004 = vpop.permute.xlu0 %1003
        %1007 = vset.pattern.permute.xlu0 0
        %1008 = vperm.xlu0 %1007, %v472
        %v1009 = vpop.permute.xlu0 %1008
        %1012 = vset.pattern.permute.xlu0 0
        %1013 = vperm.xlu0 %1012, %v473
        %v1014 = vpop.permute.xlu0 %1013
        %1017 = vset.pattern.permute.xlu0 0
        %1018 = vperm.xlu0 %1017, %v474
        %v1019 = vpop.permute.xlu0 %1018
        %1022 = vset.pattern.permute.xlu0 0
        %1023 = vperm.xlu0 %1022, %v475
        %v1024 = vpop.permute.xlu0 %1023
        %1027 = vset.pattern.permute.xlu0 0
        %1028 = vperm.xlu0 %1027, %v476
        %v1029 = vpop.permute.xlu0 %1028
        %1032 = vset.pattern.permute.xlu0 0
        %1033 = vperm.xlu0 %1032, %v477
        %v1034 = vpop.permute.xlu0 %1033
        %1037 = vset.pattern.permute.xlu0 0
        %1038 = vperm.xlu0 %1037, %v478
        %v1039 = vpop.permute.xlu0 %1038
        %1042 = vset.pattern.permute.xlu0 0
        %1043 = vperm.xlu0 %1042, %v479
        %v1044 = vpop.permute.xlu0 %1043
        %v1046 = vmul.f32 %v842, %v879
        %v1047 = vmul.f32 %v843, %v884
        %v1048 = vmul.f32 %v844, %v889
        %v1049 = vmul.f32 %v845, %v894
        %v1050 = vmul.f32 %v846, %v899
        %v1051 = vmul.f32 %v847, %v904
        %v1052 = vmul.f32 %v848, %v909
        %v1053 = vmul.f32 %v849, %v914
        %v1054 = vmul.f32 %v850, %v919
        %v1055 = vmul.f32 %v851, %v924
        %v1056 = vmul.f32 %v852, %v929
        %v1057 = vmul.f32 %v853, %v934
        %v1058 = vmul.f32 %v854, %v939
        %v1059 = vmul.f32 %v855, %v944
        %v1060 = vmul.f32 %v856, %v949
        %v1061 = vmul.f32 %v857, %v954
        %v1062 = vmul.f32 %v858, %v959
        %v1063 = vmul.f32 %v859, %v964
        %v1064 = vmul.f32 %v860, %v969
        %v1065 = vmul.f32 %v861, %v974
        %v1066 = vmul.f32 %v862, %v979
        %v1067 = vmul.f32 %v863, %v984
        %v1068 = vmul.f32 %v864, %v989
        %v1069 = vmul.f32 %v865, %v994
        %v1070 = vmul.f32 %v866, %v999
        %v1071 = vmul.f32 %v867, %v1004
        %v1072 = vmul.f32 %v868, %v1009
        %v1073 = vmul.f32 %v869, %v1014
        %v1074 = vmul.f32 %v870, %v1019
        %v1075 = vmul.f32 %v871, %v1024
        %v1076 = vmul.f32 %v872, %v1029
        %v1077 = vmul.f32 %v873, %v1034
        %v1078 = vmul.f32 %v874, %v1039
        %v1079 = vmul.f32 %v875, %v1044
        %v1080 = vpack.c.bf16 %v1047, %v1046
        %v1081 = vpack.c.bf16 %v1049, %v1048
        %v1082 = vpack.c.bf16 %v1051, %v1050
        %v1083 = vpack.c.bf16 %v1053, %v1052
        %v1084 = vpack.c.bf16 %v1055, %v1054
        %v1085 = vpack.c.bf16 %v1057, %v1056
        %v1086 = vpack.c.bf16 %v1059, %v1058
        %v1087 = vpack.c.bf16 %v1061, %v1060
        %v1088 = vpack.c.bf16 %v1063, %v1062
        %v1089 = vpack.c.bf16 %v1065, %v1064
        %v1090 = vpack.c.bf16 %v1067, %v1066
        %v1091 = vpack.c.bf16 %v1069, %v1068
        %v1092 = vpack.c.bf16 %v1071, %v1070
        %v1093 = vpack.c.bf16 %v1073, %v1072
        %v1094 = vpack.c.bf16 %v1075, %v1074
        %v1095 = vpack.c.bf16 %v1077, %v1076
        %v1096 = vpack.c.bf16 %v1079, %v1078
        %1097 = vst.msk [vmem:[#allocation2 + $0x10] sm:$0xff] %vm436, %v1080
        %1098 = vst.msk [vmem:[#allocation2 + $0x18] sm:$0xff] %vm436, %v1081
        %1099 = vst.msk [vmem:[#allocation2 + $0x20] sm:$0xff] %vm436, %v1082
        %1100 = vst.msk [vmem:[#allocation2 + $0x28] sm:$0xff] %vm436, %v1083
        %1101 = vst.msk [vmem:[#allocation2 + $0x30] sm:$0xff] %vm436, %v1084
        %1102 = vst.msk [vmem:[#allocation2 + $0x38] sm:$0xff] %vm436, %v1085
        %1103 = vst.msk [vmem:[#allocation2 + $0x40] sm:$0xff] %vm436, %v1086
        %1104 = vst.msk [vmem:[#allocation2 + $0x48] sm:$0xff] %vm436, %v1087
        %1105 = vst.msk [vmem:[#allocation2 + $0x50] sm:$0xff] %vm436, %v1088
        %1106 = vst.msk [vmem:[#allocation2 + $0x58] sm:$0xff] %vm436, %v1089
        %1107 = vst.msk [vmem:[#allocation2 + $0x60] sm:$0xff] %vm436, %v1090
        %1108 = vst.msk [vmem:[#allocation2 + $0x68] sm:$0xff] %vm436, %v1091
        %1109 = vst.msk [vmem:[#allocation2 + $0x70] sm:$0xff] %vm436, %v1092
        %1110 = vst.msk [vmem:[#allocation2 + $0x78] sm:$0xff] %vm436, %v1093
        %1111 = vst.msk [vmem:[#allocation2 + $0x80] sm:$0xff] %vm436, %v1094
        %1112 = vst.msk [vmem:[#allocation2 + $0x88] sm:$0xff] %vm436, %v1095
        %1113 = vst.msk [vmem:[#allocation2 + $0x90] sm:$0xff] %vm436, %v1096
        %v1114 = vld [vmem:[#allocation2] sm:$0x80]
        %v1115 = vld [vmem:[#allocation2 + $0x8] sm:$0xff]
        %v1116 = vld [vmem:[#allocation2 + $0x10] sm:$0xff]
        %v1117 = vld [vmem:[#allocation2 + $0x18] sm:$0xff]
        %v1118 = vld [vmem:[#allocation2 + $0x20] sm:$0xff]
        %v1119 = vld [vmem:[#allocation2 + $0x28] sm:$0xff]
        %v1120 = vld [vmem:[#allocation2 + $0x30] sm:$0xff]
        %v1121 = vld [vmem:[#allocation2 + $0x38] sm:$0xff]
        %v1122 = vld [vmem:[#allocation2 + $0x40] sm:$0xff]
        %v1123 = vld [vmem:[#allocation2 + $0x48] sm:$0xff]
        %v1124 = vld [vmem:[#allocation2 + $0x50] sm:$0xff]
        %v1125 = vld [vmem:[#allocation2 + $0x58] sm:$0xff]
        %v1126 = vld [vmem:[#allocation2 + $0x60] sm:$0xff]
        %v1127 = vld [vmem:[#allocation2 + $0x68] sm:$0xff]
        %v1128 = vld [vmem:[#allocation2 + $0x70] sm:$0xff]
        %v1129 = vld [vmem:[#allocation2 + $0x78] sm:$0xff]
        %v1130 = vld [vmem:[#allocation2 + $0x80] sm:$0xff]
        %v1131 = vld [vmem:[#allocation2 + $0x88] sm:$0xff]
        %v1132 = vld [vmem:[%s3] sm:$0xf]
        %v1133 = vld [vmem:[%s3 + $0x4] sm:$0xf]
        %v1134 = vld [vmem:[%s3 + $0x8] sm:$0xf]
        %v1135 = vld [vmem:[%s3 + $0xc] sm:$0xf]
        %s1136 = scalar_lea.vmem %s3, 16
        %v1137 = vld [vmem:[%s1136] sm:$0xf]
        %v1138 = vld [vmem:[%s1136 + $0x4] sm:$0xf]
        %v1139 = vld [vmem:[%s1136 + $0x8] sm:$0xf]
        %v1140 = vld [vmem:[%s1136 + $0xc] sm:$0xf]
        %v1145 = vunpack.c.l.b16 %v1137
        %v1146 = vunpack.c.l.b16 %v1138
        %v1147 = vunpack.c.l.b16 %v1139
        %v1148 = vunpack.c.l.b16 %v1140
        %v1149 = vpack.c.b16 %v1146, %v1145
        %v1150 = vpack.c.b16 %v1148, %v1147
        %v1154 = vsel %vm436, %v1115, 0
        %v1157 = vsel %vm436, %v1116, 0
        %v1160 = vsel %vm436, %v1117, 0
        %v1163 = vsel %vm436, %v1118, 0
        %v1166 = vsel %vm436, %v1119, 0
        %v1169 = vsel %vm436, %v1120, 0
        %v1172 = vsel %vm436, %v1121, 0
        %v1175 = vsel %vm436, %v1122, 0
        %v1178 = vsel %vm436, %v1123, 0
        %v1181 = vsel %vm436, %v1124, 0
        %v1184 = vsel %vm436, %v1125, 0
        %v1187 = vsel %vm436, %v1126, 0
        %v1190 = vsel %vm436, %v1127, 0
        %v1193 = vsel %vm436, %v1128, 0
        %v1196 = vsel %vm436, %v1129, 0
        %v1199 = vsel %vm436, %v1130, 0
        %v1202 = vsel %vm436, %v1131, 0
        %1204 = vmatprep.subr.bf16.mxu0 0
        %1205 = vmatpush1.bf16.msra.mxu0 %v1149
        %1206 = vmatprep.subr.bf16.mxu0 0
        %1207 = vmatpush1.bf16.msra.mxu0 %v1150
        %1208 = vmatprep.subr.bf16.mxu0 0
        %1209 = vmatpush1.bf16.msra.mxu0 0
        %1210 = vmatprep.subr.bf16.mxu0 0
        %1211 = vmatpush1.bf16.msra.mxu0 0
        %1212 = vmatprep.subr.bf16.mxu0 0
        %1213 = vmatpush1.bf16.msra.mxu0 0
        %1214 = vmatprep.subr.bf16.mxu0 0
        %1215 = vmatpush1.bf16.msra.mxu0 0
        %1216 = vmatprep.subr.bf16.mxu0 0
        %1217 = vmatpush1.bf16.msra.mxu0 0
        %1218 = vmatprep.subr.bf16.mxu0 0
        %1219 = vmatpush1.bf16.msra.mxu0 0
        %1220 = vmatprep.subr.bf16.mxu0 0
        %1221 = vmatpush1.bf16.msra.mxu0 0
        %1222 = vmatprep.subr.bf16.mxu0 0
        %1223 = vmatpush1.bf16.msra.mxu0 0
        %1224 = vmatprep.subr.bf16.mxu0 0
        %1225 = vmatpush1.bf16.msra.mxu0 0
        %1226 = vmatprep.subr.bf16.mxu0 0
        %1227 = vmatpush1.bf16.msra.mxu0 0
        %1228 = vmatprep.subr.bf16.mxu0 0
        %1229 = vmatpush1.bf16.msra.mxu0 0
        %1230 = vmatprep.subr.bf16.mxu0 0
        %1231 = vmatpush1.bf16.msra.mxu0 0
        %1232 = vmatprep.subr.bf16.mxu0 0
        %1233 = vmatpush1.bf16.msra.mxu0 0
        %1234 = vmatprep.subr.bf16.mxu0 0
        %1235 = vmatpush1.bf16.msra.mxu0 0
        %1236 = vmatprep.mubr.bf16.mxu0 0
        %1237 = vmatmul.mubr.bf16.gmra.mrb[0].mxu0 %v1154
        %v1238 = vpop.f32.mrb[0].mxu0
        %v1239 = vadd.f32 0.0, %v1238
        %v1240 = vpop.f32.mrb[0].mxu0
        %v1241 = vpop.f32.mrb[0].mxu0
        %v1242 = vadd.f32 0.0, %v1241
        %v1243 = vpop.f32.mrb[0].mxu0
        %1244 = vmatprep.mubr.bf16.mxu0 0
        %1245 = vmatmul.mubr.bf16.gmra.mrb[0].mxu0 %v1157
        %v1246 = vpop.f32.mrb[0].mxu0
        %v1247 = vadd.f32 0.0, %v1246
        %v1248 = vpop.f32.mrb[0].mxu0
        %v1249 = vpop.f32.mrb[0].mxu0
        %v1250 = vadd.f32 0.0, %v1249
        %v1251 = vpop.f32.mrb[0].mxu0
        %1252 = vmatprep.mubr.bf16.mxu0 0
        %1253 = vmatmul.mubr.bf16.gmra.mrb[0].mxu0 %v1160
        %v1254 = vpop.f32.mrb[0].mxu0
        %v1255 = vadd.f32 0.0, %v1254
        %v1256 = vpop.f32.mrb[0].mxu0
        %v1257 = vpop.f32.mrb[0].mxu0
        %v1258 = vadd.f32 0.0, %v1257
        %v1259 = vpop.f32.mrb[0].mxu0
        %1260 = vmatprep.mubr.bf16.mxu0 0
        %1261 = vmatmul.mubr.bf16.gmra.mrb[0].mxu0 %v1163
        %v1262 = vpop.f32.mrb[0].mxu0
        %v1263 = vadd.f32 0.0, %v1262
        %v1264 = vpop.f32.mrb[0].mxu0
        %v1265 = vpop.f32.mrb[0].mxu0
        %v1266 = vadd.f32 0.0, %v1265
        %v1267 = vpop.f32.mrb[0].mxu0
        %1268 = vmatprep.mubr.bf16.mxu0 0
        %1269 = vmatmul.mubr.bf16.gmra.mrb[0].mxu0 %v1166
        %v1270 = vpop.f32.mrb[0].mxu0
        %v1271 = vadd.f32 0.0, %v1270
        %v1272 = vpop.f32.mrb[0].mxu0
        %v1273 = vpop.f32.mrb[0].mxu0
        %v1274 = vadd.f32 0.0, %v1273
        %v1275 = vpop.f32.mrb[0].mxu0
        %1276 = vmatprep.mubr.bf16.mxu0 0
        %1277 = vmatmul.mubr.bf16.gmra.mrb[0].mxu0 %v1169
        %v1278 = vpop.f32.mrb[0].mxu0
        %v1279 = vadd.f32 0.0, %v1278
        %v1280 = vpop.f32.mrb[0].mxu0
        %v1281 = vpop.f32.mrb[0].mxu0
        %v1282 = vadd.f32 0.0, %v1281
        %v1283 = vpop.f32.mrb[0].mxu0
        %1284 = vmatprep.mubr.bf16.mxu0 0
        %1285 = vmatmul.mubr.bf16.gmra.mrb[0].mxu0 %v1172
        %v1286 = vpop.f32.mrb[0].mxu0
        %v1287 = vadd.f32 0.0, %v1286
        %v1288 = vpop.f32.mrb[0].mxu0
        %v1289 = vpop.f32.mrb[0].mxu0
        %v1290 = vadd.f32 0.0, %v1289
        %v1291 = vpop.f32.mrb[0].mxu0
        %1292 = vmatprep.mubr.bf16.mxu0 0
        %1293 = vmatmul.mubr.bf16.gmra.mrb[0].mxu0 %v1175
        %v1294 = vpop.f32.mrb[0].mxu0
        %v1295 = vadd.f32 0.0, %v1294
        %v1296 = vpop.f32.mrb[0].mxu0
        %v1297 = vpop.f32.mrb[0].mxu0
        %v1298 = vadd.f32 0.0, %v1297
        %v1299 = vpop.f32.mrb[0].mxu0
        %1300 = vmatprep.mubr.bf16.mxu0 0
        %1301 = vmatmul.mubr.bf16.gmra.mrb[0].mxu0 %v1178
        %v1302 = vpop.f32.mrb[0].mxu0
        %v1303 = vadd.f32 0.0, %v1302
        %v1304 = vpop.f32.mrb[0].mxu0
        %v1305 = vpop.f32.mrb[0].mxu0
        %v1306 = vadd.f32 0.0, %v1305
        %v1307 = vpop.f32.mrb[0].mxu0
        %1308 = vmatprep.mubr.bf16.mxu0 0
        %1309 = vmatmul.mubr.bf16.gmra.mrb[0].mxu0 %v1181
        %v1310 = vpop.f32.mrb[0].mxu0
        %v1311 = vadd.f32 0.0, %v1310
        %v1312 = vpop.f32.mrb[0].mxu0
        %v1313 = vpop.f32.mrb[0].mxu0
        %v1314 = vadd.f32 0.0, %v1313
        %v1315 = vpop.f32.mrb[0].mxu0
        %1316 = vmatprep.mubr.bf16.mxu0 0
        %1317 = vmatmul.mubr.bf16.gmra.mrb[0].mxu0 %v1184
        %v1318 = vpop.f32.mrb[0].mxu0
        %v1319 = vadd.f32 0.0, %v1318
        %v1320 = vpop.f32.mrb[0].mxu0
        %v1321 = vpop.f32.mrb[0].mxu0
        %v1322 = vadd.f32 0.0, %v1321
        %v1323 = vpop.f32.mrb[0].mxu0
        %1324 = vmatprep.mubr.bf16.mxu0 0
        %1325 = vmatmul.mubr.bf16.gmra.mrb[0].mxu0 %v1187
        %v1326 = vpop.f32.mrb[0].mxu0
        %v1327 = vadd.f32 0.0, %v1326
        %v1328 = vpop.f32.mrb[0].mxu0
        %v1329 = vpop.f32.mrb[0].mxu0
        %v1330 = vadd.f32 0.0, %v1329
        %v1331 = vpop.f32.mrb[0].mxu0
        %1332 = vmatprep.mubr.bf16.mxu0 0
        %1333 = vmatmul.mubr.bf16.gmra.mrb[0].mxu0 %v1190
        %v1334 = vpop.f32.mrb[0].mxu0
        %v1335 = vadd.f32 0.0, %v1334
        %v1336 = vpop.f32.mrb[0].mxu0
        %v1337 = vpop.f32.mrb[0].mxu0
        %v1338 = vadd.f32 0.0, %v1337
        %v1339 = vpop.f32.mrb[0].mxu0
        %1340 = vmatprep.mubr.bf16.mxu0 0
        %1341 = vmatmul.mubr.bf16.gmra.mrb[0].mxu0 %v1193
        %v1342 = vpop.f32.mrb[0].mxu0
        %v1343 = vadd.f32 0.0, %v1342
        %v1344 = vpop.f32.mrb[0].mxu0
        %v1345 = vpop.f32.mrb[0].mxu0
        %v1346 = vadd.f32 0.0, %v1345
        %v1347 = vpop.f32.mrb[0].mxu0
        %1348 = vmatprep.mubr.bf16.mxu0 0
        %1349 = vmatmul.mubr.bf16.gmra.mrb[0].mxu0 %v1196
        %v1350 = vpop.f32.mrb[0].mxu0
        %v1351 = vadd.f32 0.0, %v1350
        %v1352 = vpop.f32.mrb[0].mxu0
        %v1353 = vpop.f32.mrb[0].mxu0
        %v1354 = vadd.f32 0.0, %v1353
        %v1355 = vpop.f32.mrb[0].mxu0
        %1356 = vmatprep.mubr.bf16.mxu0 0
        %1357 = vmatmul.mubr.bf16.gmra.mrb[0].mxu0 %v1199
        %v1358 = vpop.f32.mrb[0].mxu0
        %v1359 = vadd.f32 0.0, %v1358
        %v1360 = vpop.f32.mrb[0].mxu0
        %v1361 = vpop.f32.mrb[0].mxu0
        %v1362 = vadd.f32 0.0, %v1361
        %v1363 = vpop.f32.mrb[0].mxu0
        %1364 = vmatprep.mubr.bf16.mxu0 0
        %1365 = vmatmul.mubr.bf16.gmra.mrb[0].mxu0 %v1202
        %v1366 = vpop.f32.mrb[0].mxu0
        %v1367 = vadd.f32 0.0, %v1366
        %v1368 = vpop.f32.mrb[0].mxu0
        %v1369 = vpop.f32.mrb[0].mxu0
        %v1370 = vadd.f32 0.0, %v1369
        %v1371 = vpop.f32.mrb[0].mxu0
        %1372 = vdwg.mxu0
        %vm1373 = vsmask.f32 256
        %v1375 = vshrl.u32 %v1114, 16
        %v1377 = vrot.slane %v1375, 7
        %v1378 = vshrl.u32 %v1115, 16
        %v1380 = vrot.slane %v1378, 7
        %v1381 = vshll.u32 %v1115, 16
        %v1383 = vor.u32 %v1380, %v1381
        %v1384 = vsel %vm1373, %v1377, %v1383
        %v1385 = vshrl.u32 %v1116, 16
        %v1387 = vrot.slane %v1385, 7
        %v1388 = vshll.u32 %v1116, 16
        %v1390 = vor.u32 %v1387, %v1388
        %v1391 = vsel %vm1373, %v1380, %v1390
        %v1392 = vshrl.u32 %v1117, 16
        %v1394 = vrot.slane %v1392, 7
        %v1395 = vshll.u32 %v1117, 16
        %v1397 = vor.u32 %v1394, %v1395
        %v1398 = vsel %vm1373, %v1387, %v1397
        %v1399 = vshrl.u32 %v1118, 16
        %v1401 = vrot.slane %v1399, 7
        %v1402 = vshll.u32 %v1118, 16
        %v1404 = vor.u32 %v1401, %v1402
        %v1405 = vsel %vm1373, %v1394, %v1404
        %v1406 = vshrl.u32 %v1119, 16
        %v1408 = vrot.slane %v1406, 7
        %v1409 = vshll.u32 %v1119, 16
        %v1411 = vor.u32 %v1408, %v1409
        %v1412 = vsel %vm1373, %v1401, %v1411
        %v1413 = vshrl.u32 %v1120, 16
        %v1415 = vrot.slane %v1413, 7
        %v1416 = vshll.u32 %v1120, 16
        %v1418 = vor.u32 %v1415, %v1416
        %v1419 = vsel %vm1373, %v1408, %v1418
        %v1420 = vshrl.u32 %v1121, 16
        %v1422 = vrot.slane %v1420, 7
        %v1423 = vshll.u32 %v1121, 16
        %v1425 = vor.u32 %v1422, %v1423
        %v1426 = vsel %vm1373, %v1415, %v1425
        %v1427 = vshrl.u32 %v1122, 16
        %v1429 = vrot.slane %v1427, 7
        %v1430 = vshll.u32 %v1122, 16
        %v1432 = vor.u32 %v1429, %v1430
        %v1433 = vsel %vm1373, %v1422, %v1432
        %v1434 = vshrl.u32 %v1123, 16
        %v1436 = vrot.slane %v1434, 7
        %v1437 = vshll.u32 %v1123, 16
        %v1439 = vor.u32 %v1436, %v1437
        %v1440 = vsel %vm1373, %v1429, %v1439
        %v1441 = vshrl.u32 %v1124, 16
        %v1443 = vrot.slane %v1441, 7
        %v1444 = vshll.u32 %v1124, 16
        %v1446 = vor.u32 %v1443, %v1444
        %v1447 = vsel %vm1373, %v1436, %v1446
        %v1448 = vshrl.u32 %v1125, 16
        %v1450 = vrot.slane %v1448, 7
        %v1451 = vshll.u32 %v1125, 16
        %v1453 = vor.u32 %v1450, %v1451
        %v1454 = vsel %vm1373, %v1443, %v1453
        %v1455 = vshrl.u32 %v1126, 16
        %v1457 = vrot.slane %v1455, 7
        %v1458 = vshll.u32 %v1126, 16
        %v1460 = vor.u32 %v1457, %v1458
        %v1461 = vsel %vm1373, %v1450, %v1460
        %v1462 = vshrl.u32 %v1127, 16
        %v1464 = vrot.slane %v1462, 7
        %v1465 = vshll.u32 %v1127, 16
        %v1467 = vor.u32 %v1464, %v1465
        %v1468 = vsel %vm1373, %v1457, %v1467
        %v1469 = vshrl.u32 %v1128, 16
        %v1471 = vrot.slane %v1469, 7
        %v1472 = vshll.u32 %v1128, 16
        %v1474 = vor.u32 %v1471, %v1472
        %v1475 = vsel %vm1373, %v1464, %v1474
        %v1476 = vshrl.u32 %v1129, 16
        %v1478 = vrot.slane %v1476, 7
        %v1479 = vshll.u32 %v1129, 16
        %v1481 = vor.u32 %v1478, %v1479
        %v1482 = vsel %vm1373, %v1471, %v1481
        %v1483 = vshrl.u32 %v1130, 16
        %v1485 = vrot.slane %v1483, 7
        %v1486 = vshll.u32 %v1130, 16
        %v1488 = vor.u32 %v1485, %v1486
        %v1489 = vsel %vm1373, %v1478, %v1488
        %v1490 = vshrl.u32 %v1131, 16
        %v1492 = vrot.slane %v1490, 7
        %v1493 = vshll.u32 %v1131, 16
        %v1495 = vor.u32 %v1492, %v1493
        %v1496 = vsel %vm1373, %v1485, %v1495
        %v1501 = vunpack.c.l.b16 %v1132
        %v1502 = vunpack.c.l.b16 %v1133
        %v1503 = vunpack.c.l.b16 %v1134
        %v1504 = vunpack.c.l.b16 %v1135
        %v1505 = vpack.c.b16 %v1502, %v1501
        %v1506 = vpack.c.b16 %v1504, %v1503
        %v1510 = vsel %vm436, %v1384, 0
        %v1513 = vsel %vm436, %v1391, 0
        %v1516 = vsel %vm436, %v1398, 0
        %v1519 = vsel %vm436, %v1405, 0
        %v1522 = vsel %vm436, %v1412, 0
        %v1525 = vsel %vm436, %v1419, 0
        %v1528 = vsel %vm436, %v1426, 0
        %v1531 = vsel %vm436, %v1433, 0
        %v1534 = vsel %vm436, %v1440, 0
        %v1537 = vsel %vm436, %v1447, 0
        %v1540 = vsel %vm436, %v1454, 0
        %v1543 = vsel %vm436, %v1461, 0
        %v1546 = vsel %vm436, %v1468, 0
        %v1549 = vsel %vm436, %v1475, 0
        %v1552 = vsel %vm436, %v1482, 0
        %v1555 = vsel %vm436, %v1489, 0
        %v1558 = vsel %vm436, %v1496, 0
        %1560 = vmatprep.subr.bf16.mxu0 0
        %1561 = vmatpush1.bf16.msra.mxu0 %v1505
        %1562 = vmatprep.subr.bf16.mxu0 0
        %1563 = vmatpush1.bf16.msra.mxu0 %v1506
        %1564 = vmatprep.subr.bf16.mxu0 0
        %1565 = vmatpush1.bf16.msra.mxu0 0
        %1566 = vmatprep.subr.bf16.mxu0 0
        %1567 = vmatpush1.bf16.msra.mxu0 0
        %1568 = vmatprep.subr.bf16.mxu0 0
        %1569 = vmatpush1.bf16.msra.mxu0 0
        %1570 = vmatprep.subr.bf16.mxu0 0
        %1571 = vmatpush1.bf16.msra.mxu0 0
        %1572 = vmatprep.subr.bf16.mxu0 0
        %1573 = vmatpush1.bf16.msra.mxu0 0
        %1574 = vmatprep.subr.bf16.mxu0 0
        %1575 = vmatpush1.bf16.msra.mxu0 0
        %1576 = vmatprep.subr.bf16.mxu0 0
        %1577 = vmatpush1.bf16.msra.mxu0 0
        %1578 = vmatprep.subr.bf16.mxu0 0
        %1579 = vmatpush1.bf16.msra.mxu0 0
        %1580 = vmatprep.subr.bf16.mxu0 0
        %1581 = vmatpush1.bf16.msra.mxu0 0
        %1582 = vmatprep.subr.bf16.mxu0 0
        %1583 = vmatpush1.bf16.msra.mxu0 0
        %1584 = vmatprep.subr.bf16.mxu0 0
        %1585 = vmatpush1.bf16.msra.mxu0 0
        %1586 = vmatprep.subr.bf16.mxu0 0
        %1587 = vmatpush1.bf16.msra.mxu0 0
        %1588 = vmatprep.subr.bf16.mxu0 0
        %1589 = vmatpush1.bf16.msra.mxu0 0
        %1590 = vmatprep.subr.bf16.mxu0 0
        %1591 = vmatpush1.bf16.msra.mxu0 0
        %1592 = vmatprep.mubr.bf16.mxu0 0
        %1593 = vmatmul.mubr.bf16.gmra.mrb[0].mxu0 %v1510
        %v1594 = vpop.f32.mrb[0].mxu0
        %v1595 = vadd.f32 %v1239, %v1594
        %v1596 = vpop.f32.mrb[0].mxu0
        %v1597 = vpop.f32.mrb[0].mxu0
        %v1598 = vadd.f32 %v1242, %v1597
        %v1599 = vpop.f32.mrb[0].mxu0
        %1600 = vmatprep.mubr.bf16.mxu0 0
        %1601 = vmatmul.mubr.bf16.gmra.mrb[0].mxu0 %v1513
        %v1602 = vpop.f32.mrb[0].mxu0
        %v1603 = vadd.f32 %v1247, %v1602
        %v1604 = vpop.f32.mrb[0].mxu0
        %v1605 = vpop.f32.mrb[0].mxu0
        %v1606 = vadd.f32 %v1250, %v1605
        %v1607 = vpop.f32.mrb[0].mxu0
        %1608 = vmatprep.mubr.bf16.mxu0 0
        %1609 = vmatmul.mubr.bf16.gmra.mrb[0].mxu0 %v1516
        %v1610 = vpop.f32.mrb[0].mxu0
        %v1611 = vadd.f32 %v1255, %v1610
        %v1612 = vpop.f32.mrb[0].mxu0
        %v1613 = vpop.f32.mrb[0].mxu0
        %v1614 = vadd.f32 %v1258, %v1613
        %v1615 = vpop.f32.mrb[0].mxu0
        %1616 = vmatprep.mubr.bf16.mxu0 0
        %1617 = vmatmul.mubr.bf16.gmra.mrb[0].mxu0 %v1519
        %v1618 = vpop.f32.mrb[0].mxu0
        %v1619 = vadd.f32 %v1263, %v1618
        %v1620 = vpop.f32.mrb[0].mxu0
        %v1621 = vpop.f32.mrb[0].mxu0
        %v1622 = vadd.f32 %v1266, %v1621
        %v1623 = vpop.f32.mrb[0].mxu0
        %1624 = vmatprep.mubr.bf16.mxu0 0
        %1625 = vmatmul.mubr.bf16.gmra.mrb[0].mxu0 %v1522
        %v1626 = vpop.f32.mrb[0].mxu0
        %v1627 = vadd.f32 %v1271, %v1626
        %v1628 = vpop.f32.mrb[0].mxu0
        %v1629 = vpop.f32.mrb[0].mxu0
        %v1630 = vadd.f32 %v1274, %v1629
        %v1631 = vpop.f32.mrb[0].mxu0
        %1632 = vmatprep.mubr.bf16.mxu0 0
        %1633 = vmatmul.mubr.bf16.gmra.mrb[0].mxu0 %v1525
        %v1634 = vpop.f32.mrb[0].mxu0
        %v1635 = vadd.f32 %v1279, %v1634
        %v1636 = vpop.f32.mrb[0].mxu0
        %v1637 = vpop.f32.mrb[0].mxu0
        %v1638 = vadd.f32 %v1282, %v1637
        %v1639 = vpop.f32.mrb[0].mxu0
        %1640 = vmatprep.mubr.bf16.mxu0 0
        %1641 = vmatmul.mubr.bf16.gmra.mrb[0].mxu0 %v1528
        %v1642 = vpop.f32.mrb[0].mxu0
        %v1643 = vadd.f32 %v1287, %v1642
        %v1644 = vpop.f32.mrb[0].mxu0
        %v1645 = vpop.f32.mrb[0].mxu0
        %v1646 = vadd.f32 %v1290, %v1645
        %v1647 = vpop.f32.mrb[0].mxu0
        %1648 = vmatprep.mubr.bf16.mxu0 0
        %1649 = vmatmul.mubr.bf16.gmra.mrb[0].mxu0 %v1531
        %v1650 = vpop.f32.mrb[0].mxu0
        %v1651 = vadd.f32 %v1295, %v1650
        %v1652 = vpop.f32.mrb[0].mxu0
        %v1653 = vpop.f32.mrb[0].mxu0
        %v1654 = vadd.f32 %v1298, %v1653
        %v1655 = vpop.f32.mrb[0].mxu0
        %1656 = vmatprep.mubr.bf16.mxu0 0
        %1657 = vmatmul.mubr.bf16.gmra.mrb[0].mxu0 %v1534
        %v1658 = vpop.f32.mrb[0].mxu0
        %v1659 = vadd.f32 %v1303, %v1658
        %v1660 = vpop.f32.mrb[0].mxu0
        %v1661 = vpop.f32.mrb[0].mxu0
        %v1662 = vadd.f32 %v1306, %v1661
        %v1663 = vpop.f32.mrb[0].mxu0
        %1664 = vmatprep.mubr.bf16.mxu0 0
        %1665 = vmatmul.mubr.bf16.gmra.mrb[0].mxu0 %v1537
        %v1666 = vpop.f32.mrb[0].mxu0
        %v1667 = vadd.f32 %v1311, %v1666
        %v1668 = vpop.f32.mrb[0].mxu0
        %v1669 = vpop.f32.mrb[0].mxu0
        %v1670 = vadd.f32 %v1314, %v1669
        %v1671 = vpop.f32.mrb[0].mxu0
        %1672 = vmatprep.mubr.bf16.mxu0 0
        %1673 = vmatmul.mubr.bf16.gmra.mrb[0].mxu0 %v1540
        %v1674 = vpop.f32.mrb[0].mxu0
        %v1675 = vadd.f32 %v1319, %v1674
        %v1676 = vpop.f32.mrb[0].mxu0
        %v1677 = vpop.f32.mrb[0].mxu0
        %v1678 = vadd.f32 %v1322, %v1677
        %v1679 = vpop.f32.mrb[0].mxu0
        %1680 = vmatprep.mubr.bf16.mxu0 0
        %1681 = vmatmul.mubr.bf16.gmra.mrb[0].mxu0 %v1543
        %v1682 = vpop.f32.mrb[0].mxu0
        %v1683 = vadd.f32 %v1327, %v1682
        %v1684 = vpop.f32.mrb[0].mxu0
        %v1685 = vpop.f32.mrb[0].mxu0
        %v1686 = vadd.f32 %v1330, %v1685
        %v1687 = vpop.f32.mrb[0].mxu0
        %1688 = vmatprep.mubr.bf16.mxu0 0
        %1689 = vmatmul.mubr.bf16.gmra.mrb[0].mxu0 %v1546
        %v1690 = vpop.f32.mrb[0].mxu0
        %v1691 = vadd.f32 %v1335, %v1690
        %v1692 = vpop.f32.mrb[0].mxu0
        %v1693 = vpop.f32.mrb[0].mxu0
        %v1694 = vadd.f32 %v1338, %v1693
        %v1695 = vpop.f32.mrb[0].mxu0
        %1696 = vmatprep.mubr.bf16.mxu0 0
        %1697 = vmatmul.mubr.bf16.gmra.mrb[0].mxu0 %v1549
        %v1698 = vpop.f32.mrb[0].mxu0
        %v1699 = vadd.f32 %v1343, %v1698
        %v1700 = vpop.f32.mrb[0].mxu0
        %v1701 = vpop.f32.mrb[0].mxu0
        %v1702 = vadd.f32 %v1346, %v1701
        %v1703 = vpop.f32.mrb[0].mxu0
        %1704 = vmatprep.mubr.bf16.mxu0 0
        %1705 = vmatmul.mubr.bf16.gmra.mrb[0].mxu0 %v1552
        %v1706 = vpop.f32.mrb[0].mxu0
        %v1707 = vadd.f32 %v1351, %v1706
        %v1708 = vpop.f32.mrb[0].mxu0
        %v1709 = vpop.f32.mrb[0].mxu0
        %v1710 = vadd.f32 %v1354, %v1709
        %v1711 = vpop.f32.mrb[0].mxu0
        %1712 = vmatprep.mubr.bf16.mxu0 0
        %1713 = vmatmul.mubr.bf16.gmra.mrb[0].mxu0 %v1555
        %v1714 = vpop.f32.mrb[0].mxu0
        %v1715 = vadd.f32 %v1359, %v1714
        %v1716 = vpop.f32.mrb[0].mxu0
        %v1717 = vpop.f32.mrb[0].mxu0
        %v1718 = vadd.f32 %v1362, %v1717
        %v1719 = vpop.f32.mrb[0].mxu0
        %1720 = vmatprep.mubr.bf16.mxu0 0
        %1721 = vmatmul.mubr.bf16.gmra.mrb[0].mxu0 %v1558
        %v1722 = vpop.f32.mrb[0].mxu0
        %v1723 = vadd.f32 %v1367, %v1722
        %v1724 = vpop.f32.mrb[0].mxu0
        %v1725 = vpop.f32.mrb[0].mxu0
        %v1726 = vadd.f32 %v1370, %v1725
        %v1727 = vpop.f32.mrb[0].mxu0
        %1728 = vdwg.mxu0
        %v1729 = vld [vmem:[#allocation2 + $0x8] sm:$0xff]
        %v1730 = vld [vmem:[#allocation2 + $0x10] sm:$0xff]
        %v1731 = vld [vmem:[#allocation2 + $0x18] sm:$0xff]
        %v1732 = vld [vmem:[#allocation2 + $0x20] sm:$0xff]
        %v1733 = vld [vmem:[#allocation2 + $0x28] sm:$0xff]
        %v1734 = vld [vmem:[#allocation2 + $0x30] sm:$0xff]
        %v1735 = vld [vmem:[#allocation2 + $0x38] sm:$0xff]
        %v1736 = vld [vmem:[#allocation2 + $0x40] sm:$0xff]
        %v1737 = vld [vmem:[#allocation2 + $0x48] sm:$0xff]
        %v1738 = vld [vmem:[#allocation2 + $0x50] sm:$0xff]
        %v1739 = vld [vmem:[#allocation2 + $0x58] sm:$0xff]
        %v1740 = vld [vmem:[#allocation2 + $0x60] sm:$0xff]
        %v1741 = vld [vmem:[#allocation2 + $0x68] sm:$0xff]
        %v1742 = vld [vmem:[#allocation2 + $0x70] sm:$0xff]
        %v1743 = vld [vmem:[#allocation2 + $0x78] sm:$0xff]
        %v1744 = vld [vmem:[#allocation2 + $0x80] sm:$0xff]
        %v1745 = vld [vmem:[#allocation2 + $0x88] sm:$0xff]
        %v1746 = vld [vmem:[#allocation2 + $0x90] sm:$0x1]
        %s1747 = scalar_lea.vmem %s3, 32
        %v1748 = vld [vmem:[%s1747] sm:$0xf]
        %v1749 = vld [vmem:[%s1747 + $0x4] sm:$0xf]
        %v1750 = vld [vmem:[%s1747 + $0x8] sm:$0xf]
        %v1751 = vld [vmem:[%s1747 + $0xc] sm:$0xf]
        %vm1752 = vsmask.f32 7424
        %v1754 = vshrl.u32 %v1729, 16
        %v1756 = vshll.u32 %v1729, 16
        %v1758 = vrot.slane %v1756, 1
        %v1759 = vor.u32 %v1754, %v1758
        %v1761 = vshll.u32 %v1730, 16
        %v1763 = vrot.slane %v1761, 1
        %v1764 = vsel %vm1752, %v1759, %v1763
        %v1765 = vshrl.u32 %v1730, 16
        %v1767 = vor.u32 %v1765, %v1763
        %v1769 = vshll.u32 %v1731, 16
        %v1771 = vrot.slane %v1769, 1
        %v1772 = vsel %vm1752, %v1767, %v1771
        %v1773 = vshrl.u32 %v1731, 16
        %v1775 = vor.u32 %v1773, %v1771
        %v1777 = vshll.u32 %v1732, 16
        %v1779 = vrot.slane %v1777, 1
        %v1780 = vsel %vm1752, %v1775, %v1779
        %v1781 = vshrl.u32 %v1732, 16
        %v1783 = vor.u32 %v1781, %v1779
        %v1785 = vshll.u32 %v1733, 16
        %v1787 = vrot.slane %v1785, 1
        %v1788 = vsel %vm1752, %v1783, %v1787
        %v1789 = vshrl.u32 %v1733, 16
        %v1791 = vor.u32 %v1789, %v1787
        %v1793 = vshll.u32 %v1734, 16
        %v1795 = vrot.slane %v1793, 1
        %v1796 = vsel %vm1752, %v1791, %v1795
        %v1797 = vshrl.u32 %v1734, 16
        %v1799 = vor.u32 %v1797, %v1795
        %v1801 = vshll.u32 %v1735, 16
        %v1803 = vrot.slane %v1801, 1
        %v1804 = vsel %vm1752, %v1799, %v1803
        %v1805 = vshrl.u32 %v1735, 16
        %v1807 = vor.u32 %v1805, %v1803
        %v1809 = vshll.u32 %v1736, 16
        %v1811 = vrot.slane %v1809, 1
        %v1812 = vsel %vm1752, %v1807, %v1811
        %v1813 = vshrl.u32 %v1736, 16
        %v1815 = vor.u32 %v1813, %v1811
        %v1817 = vshll.u32 %v1737, 16
        %v1819 = vrot.slane %v1817, 1
        %v1820 = vsel %vm1752, %v1815, %v1819
        %v1821 = vshrl.u32 %v1737, 16
        %v1823 = vor.u32 %v1821, %v1819
        %v1825 = vshll.u32 %v1738, 16
        %v1827 = vrot.slane %v1825, 1
        %v1828 = vsel %vm1752, %v1823, %v1827
        %v1829 = vshrl.u32 %v1738, 16
        %v1831 = vor.u32 %v1829, %v1827
        %v1833 = vshll.u32 %v1739, 16
        %v1835 = vrot.slane %v1833, 1
        %v1836 = vsel %vm1752, %v1831, %v1835
        %v1837 = vshrl.u32 %v1739, 16
        %v1839 = vor.u32 %v1837, %v1835
        %v1841 = vshll.u32 %v1740, 16
        %v1843 = vrot.slane %v1841, 1
        %v1844 = vsel %vm1752, %v1839, %v1843
        %v1845 = vshrl.u32 %v1740, 16
        %v1847 = vor.u32 %v1845, %v1843
        %v1849 = vshll.u32 %v1741, 16
        %v1851 = vrot.slane %v1849, 1
        %v1852 = vsel %vm1752, %v1847, %v1851
        %v1853 = vshrl.u32 %v1741, 16
        %v1855 = vor.u32 %v1853, %v1851
        %v1857 = vshll.u32 %v1742, 16
        %v1859 = vrot.slane %v1857, 1
        %v1860 = vsel %vm1752, %v1855, %v1859
        %v1861 = vshrl.u32 %v1742, 16
        %v1863 = vor.u32 %v1861, %v1859
        %v1865 = vshll.u32 %v1743, 16
        %v1867 = vrot.slane %v1865, 1
        %v1868 = vsel %vm1752, %v1863, %v1867
        %v1869 = vshrl.u32 %v1743, 16
        %v1871 = vor.u32 %v1869, %v1867
        %v1873 = vshll.u32 %v1744, 16
        %v1875 = vrot.slane %v1873, 1
        %v1876 = vsel %vm1752, %v1871, %v1875
        %v1877 = vshrl.u32 %v1744, 16
        %v1879 = vor.u32 %v1877, %v1875
        %v1881 = vshll.u32 %v1745, 16
        %v1883 = vrot.slane %v1881, 1
        %v1884 = vsel %vm1752, %v1879, %v1883
        %v1885 = vshrl.u32 %v1745, 16
        %v1887 = vor.u32 %v1885, %v1883
        %v1889 = vshll.u32 %v1746, 16
        %v1891 = vrot.slane %v1889, 1
        %v1892 = vsel %vm1752, %v1887, %v1891
        %v1897 = vunpack.c.l.b16 %v1748
        %v1898 = vunpack.c.l.b16 %v1749
        %v1899 = vunpack.c.l.b16 %v1750
        %v1900 = vunpack.c.l.b16 %v1751
        %v1901 = vpack.c.b16 %v1898, %v1897
        %v1902 = vpack.c.b16 %v1900, %v1899
        %v1906 = vsel %vm436, %v1764, 0
        %v1909 = vsel %vm436, %v1772, 0
        %v1912 = vsel %vm436, %v1780, 0
        %v1915 = vsel %vm436, %v1788, 0
        %v1918 = vsel %vm436, %v1796, 0
        %v1921 = vsel %vm436, %v1804, 0
        %v1924 = vsel %vm436, %v1812, 0
        %v1927 = vsel %vm436, %v1820, 0
        %v1930 = vsel %vm436, %v1828, 0
        %v1933 = vsel %vm436, %v1836, 0
        %v1936 = vsel %vm436, %v1844, 0
        %v1939 = vsel %vm436, %v1852, 0
        %v1942 = vsel %vm436, %v1860, 0
        %v1945 = vsel %vm436, %v1868, 0
        %v1948 = vsel %vm436, %v1876, 0
        %v1951 = vsel %vm436, %v1884, 0
        %v1954 = vsel %vm436, %v1892, 0
        %1956 = vmatprep.subr.bf16.mxu0 0
        %1957 = vmatpush1.bf16.msra.mxu0 %v1901
        %1958 = vmatprep.subr.bf16.mxu0 0
        %1959 = vmatpush1.bf16.msra.mxu0 %v1902
        %1960 = vmatprep.subr.bf16.mxu0 0
        %1961 = vmatpush1.bf16.msra.mxu0 0
        %1962 = vmatprep.subr.bf16.mxu0 0
        %1963 = vmatpush1.bf16.msra.mxu0 0
        %1964 = vmatprep.subr.bf16.mxu0 0
        %1965 = vmatpush1.bf16.msra.mxu0 0
        %1966 = vmatprep.subr.bf16.mxu0 0
        %1967 = vmatpush1.bf16.msra.mxu0 0
        %1968 = vmatprep.subr.bf16.mxu0 0
        %1969 = vmatpush1.bf16.msra.mxu0 0
        %1970 = vmatprep.subr.bf16.mxu0 0
        %1971 = vmatpush1.bf16.msra.mxu0 0
        %1972 = vmatprep.subr.bf16.mxu0 0
        %1973 = vmatpush1.bf16.msra.mxu0 0
        %1974 = vmatprep.subr.bf16.mxu0 0
        %1975 = vmatpush1.bf16.msra.mxu0 0
        %1976 = vmatprep.subr.bf16.mxu0 0
        %1977 = vmatpush1.bf16.msra.mxu0 0
        %1978 = vmatprep.subr.bf16.mxu0 0
        %1979 = vmatpush1.bf16.msra.mxu0 0
        %1980 = vmatprep.subr.bf16.mxu0 0
        %1981 = vmatpush1.bf16.msra.mxu0 0
        %1982 = vmatprep.subr.bf16.mxu0 0
        %1983 = vmatpush1.bf16.msra.mxu0 0
        %1984 = vmatprep.subr.bf16.mxu0 0
        %1985 = vmatpush1.bf16.msra.mxu0 0
        %1986 = vmatprep.subr.bf16.mxu0 0
        %1987 = vmatpush1.bf16.msra.mxu0 0
        %1988 = vmatprep.mubr.bf16.mxu0 0
        %1989 = vmatmul.mubr.bf16.gmra.mrb[0].mxu0 %v1906
        %v1990 = vpop.f32.mrb[0].mxu0
        %v1991 = vadd.f32 0.0, %v1990
        %v1992 = vpop.f32.mrb[0].mxu0
        %v1993 = vpop.f32.mrb[0].mxu0
        %v1994 = vadd.f32 0.0, %v1993
        %v1995 = vpop.f32.mrb[0].mxu0
        %1996 = vmatprep.mubr.bf16.mxu0 0
        %1997 = vmatmul.mubr.bf16.gmra.mrb[0].mxu0 %v1909
        %v1998 = vpop.f32.mrb[0].mxu0
        %v1999 = vadd.f32 0.0, %v1998
        %v2000 = vpop.f32.mrb[0].mxu0
        %v2001 = vpop.f32.mrb[0].mxu0
        %v2002 = vadd.f32 0.0, %v2001
        %v2003 = vpop.f32.mrb[0].mxu0
        %2004 = vmatprep.mubr.bf16.mxu0 0
        %2005 = vmatmul.mubr.bf16.gmra.mrb[0].mxu0 %v1912
        %v2006 = vpop.f32.mrb[0].mxu0
        %v2007 = vadd.f32 0.0, %v2006
        %v2008 = vpop.f32.mrb[0].mxu0
        %v2009 = vpop.f32.mrb[0].mxu0
        %v2010 = vadd.f32 0.0, %v2009
        %v2011 = vpop.f32.mrb[0].mxu0
        %2012 = vmatprep.mubr.bf16.mxu0 0
        %2013 = vmatmul.mubr.bf16.gmra.mrb[0].mxu0 %v1915
        %v2014 = vpop.f32.mrb[0].mxu0
        %v2015 = vadd.f32 0.0, %v2014
        %v2016 = vpop.f32.mrb[0].mxu0
        %v2017 = vpop.f32.mrb[0].mxu0
        %v2018 = vadd.f32 0.0, %v2017
        %v2019 = vpop.f32.mrb[0].mxu0
        %2020 = vmatprep.mubr.bf16.mxu0 0
        %2021 = vmatmul.mubr.bf16.gmra.mrb[0].mxu0 %v1918
        %v2022 = vpop.f32.mrb[0].mxu0
        %v2023 = vadd.f32 0.0, %v2022
        %v2024 = vpop.f32.mrb[0].mxu0
        %v2025 = vpop.f32.mrb[0].mxu0
        %v2026 = vadd.f32 0.0, %v2025
        %v2027 = vpop.f32.mrb[0].mxu0
        %2028 = vmatprep.mubr.bf16.mxu0 0
        %2029 = vmatmul.mubr.bf16.gmra.mrb[0].mxu0 %v1921
        %v2030 = vpop.f32.mrb[0].mxu0
        %v2031 = vadd.f32 0.0, %v2030
        %v2032 = vpop.f32.mrb[0].mxu0
        %v2033 = vpop.f32.mrb[0].mxu0
        %v2034 = vadd.f32 0.0, %v2033
        %v2035 = vpop.f32.mrb[0].mxu0
        %2036 = vmatprep.mubr.bf16.mxu0 0
        %2037 = vmatmul.mubr.bf16.gmra.mrb[0].mxu0 %v1924
        %v2038 = vpop.f32.mrb[0].mxu0
        %v2039 = vadd.f32 0.0, %v2038
        %v2040 = vpop.f32.mrb[0].mxu0
        %v2041 = vpop.f32.mrb[0].mxu0
        %v2042 = vadd.f32 0.0, %v2041
        %v2043 = vpop.f32.mrb[0].mxu0
        %2044 = vmatprep.mubr.bf16.mxu0 0
        %2045 = vmatmul.mubr.bf16.gmra.mrb[0].mxu0 %v1927
        %v2046 = vpop.f32.mrb[0].mxu0
        %v2047 = vadd.f32 0.0, %v2046
        %v2048 = vpop.f32.mrb[0].mxu0
        %v2049 = vpop.f32.mrb[0].mxu0
        %v2050 = vadd.f32 0.0, %v2049
        %v2051 = vpop.f32.mrb[0].mxu0
        %2052 = vmatprep.mubr.bf16.mxu0 0
        %2053 = vmatmul.mubr.bf16.gmra.mrb[0].mxu0 %v1930
        %v2054 = vpop.f32.mrb[0].mxu0
        %v2055 = vadd.f32 0.0, %v2054
        %v2056 = vpop.f32.mrb[0].mxu0
        %v2057 = vpop.f32.mrb[0].mxu0
        %v2058 = vadd.f32 0.0, %v2057
        %v2059 = vpop.f32.mrb[0].mxu0
        %2060 = vmatprep.mubr.bf16.mxu0 0
        %2061 = vmatmul.mubr.bf16.gmra.mrb[0].mxu0 %v1933
        %v2062 = vpop.f32.mrb[0].mxu0
        %v2063 = vadd.f32 0.0, %v2062
        %v2064 = vpop.f32.mrb[0].mxu0
        %v2065 = vpop.f32.mrb[0].mxu0
        %v2066 = vadd.f32 0.0, %v2065
        %v2067 = vpop.f32.mrb[0].mxu0
        %2068 = vmatprep.mubr.bf16.mxu0 0
        %2069 = vmatmul.mubr.bf16.gmra.mrb[0].mxu0 %v1936
        %v2070 = vpop.f32.mrb[0].mxu0
        %v2071 = vadd.f32 0.0, %v2070
        %v2072 = vpop.f32.mrb[0].mxu0
        %v2073 = vpop.f32.mrb[0].mxu0
        %v2074 = vadd.f32 0.0, %v2073
        %v2075 = vpop.f32.mrb[0].mxu0
        %2076 = vmatprep.mubr.bf16.mxu0 0
        %2077 = vmatmul.mubr.bf16.gmra.mrb[0].mxu0 %v1939
        %v2078 = vpop.f32.mrb[0].mxu0
        %v2079 = vadd.f32 0.0, %v2078
        %v2080 = vpop.f32.mrb[0].mxu0
        %v2081 = vpop.f32.mrb[0].mxu0
        %v2082 = vadd.f32 0.0, %v2081
        %v2083 = vpop.f32.mrb[0].mxu0
        %2084 = vmatprep.mubr.bf16.mxu0 0
        %2085 = vmatmul.mubr.bf16.gmra.mrb[0].mxu0 %v1942
        %v2086 = vpop.f32.mrb[0].mxu0
        %v2087 = vadd.f32 0.0, %v2086
        %v2088 = vpop.f32.mrb[0].mxu0
        %v2089 = vpop.f32.mrb[0].mxu0
        %v2090 = vadd.f32 0.0, %v2089
        %v2091 = vpop.f32.mrb[0].mxu0
        %2092 = vmatprep.mubr.bf16.mxu0 0
        %2093 = vmatmul.mubr.bf16.gmra.mrb[0].mxu0 %v1945
        %v2094 = vpop.f32.mrb[0].mxu0
        %v2095 = vadd.f32 0.0, %v2094
        %v2096 = vpop.f32.mrb[0].mxu0
        %v2097 = vpop.f32.mrb[0].mxu0
        %v2098 = vadd.f32 0.0, %v2097
        %v2099 = vpop.f32.mrb[0].mxu0
        %2100 = vmatprep.mubr.bf16.mxu0 0
        %2101 = vmatmul.mubr.bf16.gmra.mrb[0].mxu0 %v1948
        %v2102 = vpop.f32.mrb[0].mxu0
        %v2103 = vadd.f32 0.0, %v2102
        %v2104 = vpop.f32.mrb[0].mxu0
        %v2105 = vpop.f32.mrb[0].mxu0
        %v2106 = vadd.f32 0.0, %v2105
        %v2107 = vpop.f32.mrb[0].mxu0
        %2108 = vmatprep.mubr.bf16.mxu0 0
        %2109 = vmatmul.mubr.bf16.gmra.mrb[0].mxu0 %v1951
        %v2110 = vpop.f32.mrb[0].mxu0
        %v2111 = vadd.f32 0.0, %v2110
        %v2112 = vpop.f32.mrb[0].mxu0
        %v2113 = vpop.f32.mrb[0].mxu0
        %v2114 = vadd.f32 0.0, %v2113
        %v2115 = vpop.f32.mrb[0].mxu0
        %2116 = vmatprep.mubr.bf16.mxu0 0
        %2117 = vmatmul.mubr.bf16.gmra.mrb[0].mxu0 %v1954
        %v2118 = vpop.f32.mrb[0].mxu0
        %v2119 = vadd.f32 0.0, %v2118
        %v2120 = vpop.f32.mrb[0].mxu0
        %v2121 = vpop.f32.mrb[0].mxu0
        %v2122 = vadd.f32 0.0, %v2121
        %v2123 = vpop.f32.mrb[0].mxu0
        %2124 = vdwg.mxu0
        %v2125 = vadd.f32 %v1595, %v1991
        %v2126 = vadd.f32 %v1598, %v1994
        %v2127 = vadd.f32 %v1603, %v1999
        %v2128 = vadd.f32 %v1606, %v2002
        %v2129 = vadd.f32 %v1611, %v2007
        %v2130 = vadd.f32 %v1614, %v2010
        %v2131 = vadd.f32 %v1619, %v2015
        %v2132 = vadd.f32 %v1622, %v2018
        %v2133 = vadd.f32 %v1627, %v2023
        %v2134 = vadd.f32 %v1630, %v2026
        %v2135 = vadd.f32 %v1635, %v2031
        %v2136 = vadd.f32 %v1638, %v2034
        %v2137 = vadd.f32 %v1643, %v2039
        %v2138 = vadd.f32 %v1646, %v2042
        %v2139 = vadd.f32 %v1651, %v2047
        %v2140 = vadd.f32 %v1654, %v2050
        %v2141 = vadd.f32 %v1659, %v2055
        %v2142 = vadd.f32 %v1662, %v2058
        %v2143 = vadd.f32 %v1667, %v2063
        %v2144 = vadd.f32 %v1670, %v2066
        %v2145 = vadd.f32 %v1675, %v2071
        %v2146 = vadd.f32 %v1678, %v2074
        %v2147 = vadd.f32 %v1683, %v2079
        %v2148 = vadd.f32 %v1686, %v2082
        %v2149 = vadd.f32 %v1691, %v2087
        %v2150 = vadd.f32 %v1694, %v2090
        %v2151 = vadd.f32 %v1699, %v2095
        %v2152 = vadd.f32 %v1702, %v2098
        %v2153 = vadd.f32 %v1707, %v2103
        %v2154 = vadd.f32 %v1710, %v2106
        %v2155 = vadd.f32 %v1715, %v2111
        %v2156 = vadd.f32 %v1718, %v2114
        %v2157 = vadd.f32 %v1723, %v2119
        %v2158 = vadd.f32 %v1726, %v2122
        %v2159 = vld [vmem:[#allocation2 + $0x8] sm:$0x80]
        %v2160 = vld [vmem:[#allocation2 + $0x90] sm:$0xff]
        %s2161 = scalar_lea.vmem %s3, 48
        %v2162 = vld [vmem:[%s2161] sm:$0xf]
        %v2163 = vld [vmem:[%s2161 + $0x4] sm:$0xf]
        %v2164 = vld [vmem:[%s2161 + $0x8] sm:$0xf]
        %v2165 = vld [vmem:[%s2161 + $0xc] sm:$0xf]
        %v2167 = vshrl.u32 %v2159, 16
        %v2169 = vrot.slane %v2167, 7
        %v2170 = vrot.slane %v1765, 7
        %v2171 = vor.u32 %v2170, %v1761
        %v2172 = vsel %vm1373, %v2169, %v2171
        %v2173 = vrot.slane %v1773, 7
        %v2174 = vor.u32 %v2173, %v1769
        %v2175 = vsel %vm1373, %v2170, %v2174
        %v2176 = vrot.slane %v1781, 7
        %v2177 = vor.u32 %v2176, %v1777
        %v2178 = vsel %vm1373, %v2173, %v2177
        %v2179 = vrot.slane %v1789, 7
        %v2180 = vor.u32 %v2179, %v1785
        %v2181 = vsel %vm1373, %v2176, %v2180
        %v2182 = vrot.slane %v1797, 7
        %v2183 = vor.u32 %v2182, %v1793
        %v2184 = vsel %vm1373, %v2179, %v2183
        %v2185 = vrot.slane %v1805, 7
        %v2186 = vor.u32 %v2185, %v1801
        %v2187 = vsel %vm1373, %v2182, %v2186
        %v2188 = vrot.slane %v1813, 7
        %v2189 = vor.u32 %v2188, %v1809
        %v2190 = vsel %vm1373, %v2185, %v2189
        %v2191 = vrot.slane %v1821, 7
        %v2192 = vor.u32 %v2191, %v1817
        %v2193 = vsel %vm1373, %v2188, %v2192
        %v2194 = vrot.slane %v1829, 7
        %v2195 = vor.u32 %v2194, %v1825
        %v2196 = vsel %vm1373, %v2191, %v2195
        %v2197 = vrot.slane %v1837, 7
        %v2198 = vor.u32 %v2197, %v1833
        %v2199 = vsel %vm1373, %v2194, %v2198
        %v2200 = vrot.slane %v1845, 7
        %v2201 = vor.u32 %v2200, %v1841
        %v2202 = vsel %vm1373, %v2197, %v2201
        %v2203 = vrot.slane %v1853, 7
        %v2204 = vor.u32 %v2203, %v1849
        %v2205 = vsel %vm1373, %v2200, %v2204
        %v2206 = vrot.slane %v1861, 7
        %v2207 = vor.u32 %v2206, %v1857
        %v2208 = vsel %vm1373, %v2203, %v2207
        %v2209 = vrot.slane %v1869, 7
        %v2210 = vor.u32 %v2209, %v1865
        %v2211 = vsel %vm1373, %v2206, %v2210
        %v2212 = vrot.slane %v1877, 7
        %v2213 = vor.u32 %v2212, %v1873
        %v2214 = vsel %vm1373, %v2209, %v2213
        %v2215 = vrot.slane %v1885, 7
        %v2216 = vor.u32 %v2215, %v1881
        %v2217 = vsel %vm1373, %v2212, %v2216
        %v2219 = vshrl.u32 %v2160, 16
        %v2221 = vrot.slane %v2219, 7
        %v2222 = vshll.u32 %v2160, 16
        %v2224 = vor.u32 %v2221, %v2222
        %v2225 = vsel %vm1373, %v2215, %v2224
        %v2230 = vunpack.c.l.b16 %v2162
        %v2231 = vunpack.c.l.b16 %v2163
        %v2232 = vunpack.c.l.b16 %v2164
        %v2233 = vunpack.c.l.b16 %v2165
        %v2234 = vpack.c.b16 %v2231, %v2230
        %v2235 = vpack.c.b16 %v2233, %v2232
        %v2239 = vsel %vm436, %v2172, 0
        %v2242 = vsel %vm436, %v2175, 0
        %v2245 = vsel %vm436, %v2178, 0
        %v2248 = vsel %vm436, %v2181, 0
        %v2251 = vsel %vm436, %v2184, 0
        %v2254 = vsel %vm436, %v2187, 0
        %v2257 = vsel %vm436, %v2190, 0
        %v2260 = vsel %vm436, %v2193, 0
        %v2263 = vsel %vm436, %v2196, 0
        %v2266 = vsel %vm436, %v2199, 0
        %v2269 = vsel %vm436, %v2202, 0
        %v2272 = vsel %vm436, %v2205, 0
        %v2275 = vsel %vm436, %v2208, 0
        %v2278 = vsel %vm436, %v2211, 0
        %v2281 = vsel %vm436, %v2214, 0
        %v2284 = vsel %vm436, %v2217, 0
        %v2287 = vsel %vm436, %v2225, 0
        %2289 = vmatprep.subr.bf16.mxu0 0
        %2290 = vmatpush1.bf16.msra.mxu0 %v2234
        %2291 = vmatprep.subr.bf16.mxu0 0
        %2292 = vmatpush1.bf16.msra.mxu0 %v2235
        %2293 = vmatprep.subr.bf16.mxu0 0
        %2294 = vmatpush1.bf16.msra.mxu0 0
        %2295 = vmatprep.subr.bf16.mxu0 0
        %2296 = vmatpush1.bf16.msra.mxu0 0
        %2297 = vmatprep.subr.bf16.mxu0 0
        %2298 = vmatpush1.bf16.msra.mxu0 0
        %2299 = vmatprep.subr.bf16.mxu0 0
        %2300 = vmatpush1.bf16.msra.mxu0 0
        %2301 = vmatprep.subr.bf16.mxu0 0
        %2302 = vmatpush1.bf16.msra.mxu0 0
        %2303 = vmatprep.subr.bf16.mxu0 0
        %2304 = vmatpush1.bf16.msra.mxu0 0
        %2305 = vmatprep.subr.bf16.mxu0 0
        %2306 = vmatpush1.bf16.msra.mxu0 0
        %2307 = vmatprep.subr.bf16.mxu0 0
        %2308 = vmatpush1.bf16.msra.mxu0 0
        %2309 = vmatprep.subr.bf16.mxu0 0
        %2310 = vmatpush1.bf16.msra.mxu0 0
        %2311 = vmatprep.subr.bf16.mxu0 0
        %2312 = vmatpush1.bf16.msra.mxu0 0
        %2313 = vmatprep.subr.bf16.mxu0 0
        %2314 = vmatpush1.bf16.msra.mxu0 0
        %2315 = vmatprep.subr.bf16.mxu0 0
        %2316 = vmatpush1.bf16.msra.mxu0 0
        %2317 = vmatprep.subr.bf16.mxu0 0
        %2318 = vmatpush1.bf16.msra.mxu0 0
        %2319 = vmatprep.subr.bf16.mxu0 0
        %2320 = vmatpush1.bf16.msra.mxu0 0
        %2321 = vmatprep.mubr.bf16.mxu0 0
        %2322 = vmatmul.mubr.bf16.gmra.mrb[0].mxu0 %v2239
        %v2323 = vpop.f32.mrb[0].mxu0
        %v2324 = vadd.f32 0.0, %v2323
        %v2325 = vpop.f32.mrb[0].mxu0
        %v2326 = vpop.f32.mrb[0].mxu0
        %v2327 = vadd.f32 0.0, %v2326
        %v2328 = vpop.f32.mrb[0].mxu0
        %2329 = vmatprep.mubr.bf16.mxu0 0
        %2330 = vmatmul.mubr.bf16.gmra.mrb[0].mxu0 %v2242
        %v2331 = vpop.f32.mrb[0].mxu0
        %v2332 = vadd.f32 0.0, %v2331
        %v2333 = vpop.f32.mrb[0].mxu0
        %v2334 = vpop.f32.mrb[0].mxu0
        %v2335 = vadd.f32 0.0, %v2334
        %v2336 = vpop.f32.mrb[0].mxu0
        %2337 = vmatprep.mubr.bf16.mxu0 0
        %2338 = vmatmul.mubr.bf16.gmra.mrb[0].mxu0 %v2245
        %v2339 = vpop.f32.mrb[0].mxu0
        %v2340 = vadd.f32 0.0, %v2339
        %v2341 = vpop.f32.mrb[0].mxu0
        %v2342 = vpop.f32.mrb[0].mxu0
        %v2343 = vadd.f32 0.0, %v2342
        %v2344 = vpop.f32.mrb[0].mxu0
        %2345 = vmatprep.mubr.bf16.mxu0 0
        %2346 = vmatmul.mubr.bf16.gmra.mrb[0].mxu0 %v2248
        %v2347 = vpop.f32.mrb[0].mxu0
        %v2348 = vadd.f32 0.0, %v2347
        %v2349 = vpop.f32.mrb[0].mxu0
        %v2350 = vpop.f32.mrb[0].mxu0
        %v2351 = vadd.f32 0.0, %v2350
        %v2352 = vpop.f32.mrb[0].mxu0
        %2353 = vmatprep.mubr.bf16.mxu0 0
        %2354 = vmatmul.mubr.bf16.gmra.mrb[0].mxu0 %v2251
        %v2355 = vpop.f32.mrb[0].mxu0
        %v2356 = vadd.f32 0.0, %v2355
        %v2357 = vpop.f32.mrb[0].mxu0
        %v2358 = vpop.f32.mrb[0].mxu0
        %v2359 = vadd.f32 0.0, %v2358
        %v2360 = vpop.f32.mrb[0].mxu0
        %2361 = vmatprep.mubr.bf16.mxu0 0
        %2362 = vmatmul.mubr.bf16.gmra.mrb[0].mxu0 %v2254
        %v2363 = vpop.f32.mrb[0].mxu0
        %v2364 = vadd.f32 0.0, %v2363
        %v2365 = vpop.f32.mrb[0].mxu0
        %v2366 = vpop.f32.mrb[0].mxu0
        %v2367 = vadd.f32 0.0, %v2366
        %v2368 = vpop.f32.mrb[0].mxu0
        %2369 = vmatprep.mubr.bf16.mxu0 0
        %2370 = vmatmul.mubr.bf16.gmra.mrb[0].mxu0 %v2257
        %v2371 = vpop.f32.mrb[0].mxu0
        %v2372 = vadd.f32 0.0, %v2371
        %v2373 = vpop.f32.mrb[0].mxu0
        %v2374 = vpop.f32.mrb[0].mxu0
        %v2375 = vadd.f32 0.0, %v2374
        %v2376 = vpop.f32.mrb[0].mxu0
        %2377 = vmatprep.mubr.bf16.mxu0 0
        %2378 = vmatmul.mubr.bf16.gmra.mrb[0].mxu0 %v2260
        %v2379 = vpop.f32.mrb[0].mxu0
        %v2380 = vadd.f32 0.0, %v2379
        %v2381 = vpop.f32.mrb[0].mxu0
        %v2382 = vpop.f32.mrb[0].mxu0
        %v2383 = vadd.f32 0.0, %v2382
        %v2384 = vpop.f32.mrb[0].mxu0
        %2385 = vmatprep.mubr.bf16.mxu0 0
        %2386 = vmatmul.mubr.bf16.gmra.mrb[0].mxu0 %v2263
        %v2387 = vpop.f32.mrb[0].mxu0
        %v2388 = vadd.f32 0.0, %v2387
        %v2389 = vpop.f32.mrb[0].mxu0
        %v2390 = vpop.f32.mrb[0].mxu0
        %v2391 = vadd.f32 0.0, %v2390
        %v2392 = vpop.f32.mrb[0].mxu0
        %2393 = vmatprep.mubr.bf16.mxu0 0
        %2394 = vmatmul.mubr.bf16.gmra.mrb[0].mxu0 %v2266
        %v2395 = vpop.f32.mrb[0].mxu0
        %v2396 = vadd.f32 0.0, %v2395
        %v2397 = vpop.f32.mrb[0].mxu0
        %v2398 = vpop.f32.mrb[0].mxu0
        %v2399 = vadd.f32 0.0, %v2398
        %v2400 = vpop.f32.mrb[0].mxu0
        %2401 = vmatprep.mubr.bf16.mxu0 0
        %2402 = vmatmul.mubr.bf16.gmra.mrb[0].mxu0 %v2269
        %v2403 = vpop.f32.mrb[0].mxu0
        %v2404 = vadd.f32 0.0, %v2403
        %v2405 = vpop.f32.mrb[0].mxu0
        %v2406 = vpop.f32.mrb[0].mxu0
        %v2407 = vadd.f32 0.0, %v2406
        %v2408 = vpop.f32.mrb[0].mxu0
        %2409 = vmatprep.mubr.bf16.mxu0 0
        %2410 = vmatmul.mubr.bf16.gmra.mrb[0].mxu0 %v2272
        %v2411 = vpop.f32.mrb[0].mxu0
        %v2412 = vadd.f32 0.0, %v2411
        %v2413 = vpop.f32.mrb[0].mxu0
        %v2414 = vpop.f32.mrb[0].mxu0
        %v2415 = vadd.f32 0.0, %v2414
        %v2416 = vpop.f32.mrb[0].mxu0
        %2417 = vmatprep.mubr.bf16.mxu0 0
        %2418 = vmatmul.mubr.bf16.gmra.mrb[0].mxu0 %v2275
        %v2419 = vpop.f32.mrb[0].mxu0
        %v2420 = vadd.f32 0.0, %v2419
        %v2421 = vpop.f32.mrb[0].mxu0
        %v2422 = vpop.f32.mrb[0].mxu0
        %v2423 = vadd.f32 0.0, %v2422
        %v2424 = vpop.f32.mrb[0].mxu0
        %2425 = vmatprep.mubr.bf16.mxu0 0
        %2426 = vmatmul.mubr.bf16.gmra.mrb[0].mxu0 %v2278
        %v2427 = vpop.f32.mrb[0].mxu0
        %v2428 = vadd.f32 0.0, %v2427
        %v2429 = vpop.f32.mrb[0].mxu0
        %v2430 = vpop.f32.mrb[0].mxu0
        %v2431 = vadd.f32 0.0, %v2430
        %v2432 = vpop.f32.mrb[0].mxu0
        %2433 = vmatprep.mubr.bf16.mxu0 0
        %2434 = vmatmul.mubr.bf16.gmra.mrb[0].mxu0 %v2281
        %v2435 = vpop.f32.mrb[0].mxu0
        %v2436 = vadd.f32 0.0, %v2435
        %v2437 = vpop.f32.mrb[0].mxu0
        %v2438 = vpop.f32.mrb[0].mxu0
        %v2439 = vadd.f32 0.0, %v2438
        %v2440 = vpop.f32.mrb[0].mxu0
        %2441 = vmatprep.mubr.bf16.mxu0 0
        %2442 = vmatmul.mubr.bf16.gmra.mrb[0].mxu0 %v2284
        %v2443 = vpop.f32.mrb[0].mxu0
        %v2444 = vadd.f32 0.0, %v2443
        %v2445 = vpop.f32.mrb[0].mxu0
        %v2446 = vpop.f32.mrb[0].mxu0
        %v2447 = vadd.f32 0.0, %v2446
        %v2448 = vpop.f32.mrb[0].mxu0
        %2449 = vmatprep.mubr.bf16.mxu0 0
        %2450 = vmatmul.mubr.bf16.gmra.mrb[0].mxu0 %v2287
        %v2451 = vpop.f32.mrb[0].mxu0
        %v2452 = vadd.f32 0.0, %v2451
        %v2453 = vpop.f32.mrb[0].mxu0
        %v2454 = vpop.f32.mrb[0].mxu0
        %v2455 = vadd.f32 0.0, %v2454
        %v2456 = vpop.f32.mrb[0].mxu0
        %2457 = vdwg.mxu0
        %v2458 = vadd.f32 %v2125, %v2324
        %v2459 = vadd.f32 %v2126, %v2327
        %v2460 = vadd.f32 %v2127, %v2332
        %v2461 = vadd.f32 %v2128, %v2335
        %v2462 = vadd.f32 %v2129, %v2340
        %v2463 = vadd.f32 %v2130, %v2343
        %v2464 = vadd.f32 %v2131, %v2348
        %v2465 = vadd.f32 %v2132, %v2351
        %v2466 = vadd.f32 %v2133, %v2356
        %v2467 = vadd.f32 %v2134, %v2359
        %v2468 = vadd.f32 %v2135, %v2364
        %v2469 = vadd.f32 %v2136, %v2367
        %v2470 = vadd.f32 %v2137, %v2372
        %v2471 = vadd.f32 %v2138, %v2375
        %v2472 = vadd.f32 %v2139, %v2380
        %v2473 = vadd.f32 %v2140, %v2383
        %v2474 = vadd.f32 %v2141, %v2388
        %v2475 = vadd.f32 %v2142, %v2391
        %v2476 = vadd.f32 %v2143, %v2396
        %v2477 = vadd.f32 %v2144, %v2399
        %v2478 = vadd.f32 %v2145, %v2404
        %v2479 = vadd.f32 %v2146, %v2407
        %v2480 = vadd.f32 %v2147, %v2412
        %v2481 = vadd.f32 %v2148, %v2415
        %v2482 = vadd.f32 %v2149, %v2420
        %v2483 = vadd.f32 %v2150, %v2423
        %v2484 = vadd.f32 %v2151, %v2428
        %v2485 = vadd.f32 %v2152, %v2431
        %v2486 = vadd.f32 %v2153, %v2436
        %v2487 = vadd.f32 %v2154, %v2439
        %v2488 = vadd.f32 %v2155, %v2444
        %v2489 = vadd.f32 %v2156, %v2447
        %v2490 = vadd.f32 %v2157, %v2452
        %v2491 = vadd.f32 %v2158, %v2455
        %s2492 = scalar_lea.vmem %s3, 64
        %v2493 = vld [vmem:[%s2492] sm:$0xf]
        %v2494 = vld [vmem:[%s2492 + $0x4] sm:$0xf]
        %v2495 = vld [vmem:[%s2492 + $0x8] sm:$0xf]
        %v2496 = vld [vmem:[%s2492 + $0xc] sm:$0xf]
        %v2501 = vunpack.c.l.b16 %v2493
        %v2502 = vunpack.c.l.b16 %v2494
        %v2503 = vunpack.c.l.b16 %v2495
        %v2504 = vunpack.c.l.b16 %v2496
        %v2505 = vpack.c.b16 %v2502, %v2501
        %v2506 = vpack.c.b16 %v2504, %v2503
        %v2509 = vsel %vm436, %v1730, 0
        %v2511 = vsel %vm436, %v1731, 0
        %v2513 = vsel %vm436, %v1732, 0
        %v2515 = vsel %vm436, %v1733, 0
        %v2517 = vsel %vm436, %v1734, 0
        %v2519 = vsel %vm436, %v1735, 0
        %v2521 = vsel %vm436, %v1736, 0
        %v2523 = vsel %vm436, %v1737, 0
        %v2525 = vsel %vm436, %v1738, 0
        %v2527 = vsel %vm436, %v1739, 0
        %v2529 = vsel %vm436, %v1740, 0
        %v2531 = vsel %vm436, %v1741, 0
        %v2533 = vsel %vm436, %v1742, 0
        %v2535 = vsel %vm436, %v1743, 0
        %v2537 = vsel %vm436, %v1744, 0
        %v2539 = vsel %vm436, %v1745, 0
        %v2541 = vsel %vm436, %v2160, 0
        %2543 = vmatprep.subr.bf16.mxu0 0
        %2544 = vmatpush1.bf16.msra.mxu0 %v2505
        %2545 = vmatprep.subr.bf16.mxu0 0
        %2546 = vmatpush1.bf16.msra.mxu0 %v2506
        %2547 = vmatprep.subr.bf16.mxu0 0
        %2548 = vmatpush1.bf16.msra.mxu0 0
        %2549 = vmatprep.subr.bf16.mxu0 0
        %2550 = vmatpush1.bf16.msra.mxu0 0
        %2551 = vmatprep.subr.bf16.mxu0 0
        %2552 = vmatpush1.bf16.msra.mxu0 0
        %2553 = vmatprep.subr.bf16.mxu0 0
        %2554 = vmatpush1.bf16.msra.mxu0 0
        %2555 = vmatprep.subr.bf16.mxu0 0
        %2556 = vmatpush1.bf16.msra.mxu0 0
        %2557 = vmatprep.subr.bf16.mxu0 0
        %2558 = vmatpush1.bf16.msra.mxu0 0
        %2559 = vmatprep.subr.bf16.mxu0 0
        %2560 = vmatpush1.bf16.msra.mxu0 0
        %2561 = vmatprep.subr.bf16.mxu0 0
        %2562 = vmatpush1.bf16.msra.mxu0 0
        %2563 = vmatprep.subr.bf16.mxu0 0
        %2564 = vmatpush1.bf16.msra.mxu0 0
        %2565 = vmatprep.subr.bf16.mxu0 0
        %2566 = vmatpush1.bf16.msra.mxu0 0
        %2567 = vmatprep.subr.bf16.mxu0 0
        %2568 = vmatpush1.bf16.msra.mxu0 0
        %2569 = vmatprep.subr.bf16.mxu0 0
        %2570 = vmatpush1.bf16.msra.mxu0 0
        %2571 = vmatprep.subr.bf16.mxu0 0
        %2572 = vmatpush1.bf16.msra.mxu0 0
        %2573 = vmatprep.subr.bf16.mxu0 0
        %2574 = vmatpush1.bf16.msra.mxu0 0
        %2575 = vmatprep.mubr.bf16.mxu0 0
        %2576 = vmatmul.mubr.bf16.gmra.mrb[0].mxu0 %v2509
        %v2577 = vpop.f32.mrb[0].mxu0
        %v2578 = vadd.f32 0.0, %v2577
        %v2579 = vpop.f32.mrb[0].mxu0
        %v2580 = vpop.f32.mrb[0].mxu0
        %v2581 = vadd.f32 0.0, %v2580
        %v2582 = vpop.f32.mrb[0].mxu0
        %2583 = vmatprep.mubr.bf16.mxu0 0
        %2584 = vmatmul.mubr.bf16.gmra.mrb[0].mxu0 %v2511
        %v2585 = vpop.f32.mrb[0].mxu0
        %v2586 = vadd.f32 0.0, %v2585
        %v2587 = vpop.f32.mrb[0].mxu0
        %v2588 = vpop.f32.mrb[0].mxu0
        %v2589 = vadd.f32 0.0, %v2588
        %v2590 = vpop.f32.mrb[0].mxu0
        %2591 = vmatprep.mubr.bf16.mxu0 0
        %2592 = vmatmul.mubr.bf16.gmra.mrb[0].mxu0 %v2513
        %v2593 = vpop.f32.mrb[0].mxu0
        %v2594 = vadd.f32 0.0, %v2593
        %v2595 = vpop.f32.mrb[0].mxu0
        %v2596 = vpop.f32.mrb[0].mxu0
        %v2597 = vadd.f32 0.0, %v2596
        %v2598 = vpop.f32.mrb[0].mxu0
        %2599 = vmatprep.mubr.bf16.mxu0 0
        %2600 = vmatmul.mubr.bf16.gmra.mrb[0].mxu0 %v2515
        %v2601 = vpop.f32.mrb[0].mxu0
        %v2602 = vadd.f32 0.0, %v2601
        %v2603 = vpop.f32.mrb[0].mxu0
        %v2604 = vpop.f32.mrb[0].mxu0
        %v2605 = vadd.f32 0.0, %v2604
        %v2606 = vpop.f32.mrb[0].mxu0
        %2607 = vmatprep.mubr.bf16.mxu0 0
        %2608 = vmatmul.mubr.bf16.gmra.mrb[0].mxu0 %v2517
        %v2609 = vpop.f32.mrb[0].mxu0
        %v2610 = vadd.f32 0.0, %v2609
        %v2611 = vpop.f32.mrb[0].mxu0
        %v2612 = vpop.f32.mrb[0].mxu0
        %v2613 = vadd.f32 0.0, %v2612
        %v2614 = vpop.f32.mrb[0].mxu0
        %2615 = vmatprep.mubr.bf16.mxu0 0
        %2616 = vmatmul.mubr.bf16.gmra.mrb[0].mxu0 %v2519
        %v2617 = vpop.f32.mrb[0].mxu0
        %v2618 = vadd.f32 0.0, %v2617
        %v2619 = vpop.f32.mrb[0].mxu0
        %v2620 = vpop.f32.mrb[0].mxu0
        %v2621 = vadd.f32 0.0, %v2620
        %v2622 = vpop.f32.mrb[0].mxu0
        %2623 = vmatprep.mubr.bf16.mxu0 0
        %2624 = vmatmul.mubr.bf16.gmra.mrb[0].mxu0 %v2521
        %v2625 = vpop.f32.mrb[0].mxu0
        %v2626 = vadd.f32 0.0, %v2625
        %v2627 = vpop.f32.mrb[0].mxu0
        %v2628 = vpop.f32.mrb[0].mxu0
        %v2629 = vadd.f32 0.0, %v2628
        %v2630 = vpop.f32.mrb[0].mxu0
        %2631 = vmatprep.mubr.bf16.mxu0 0
        %2632 = vmatmul.mubr.bf16.gmra.mrb[0].mxu0 %v2523
        %v2633 = vpop.f32.mrb[0].mxu0
        %v2634 = vadd.f32 0.0, %v2633
        %v2635 = vpop.f32.mrb[0].mxu0
        %v2636 = vpop.f32.mrb[0].mxu0
        %v2637 = vadd.f32 0.0, %v2636
        %v2638 = vpop.f32.mrb[0].mxu0
        %2639 = vmatprep.mubr.bf16.mxu0 0
        %2640 = vmatmul.mubr.bf16.gmra.mrb[0].mxu0 %v2525
        %v2641 = vpop.f32.mrb[0].mxu0
        %v2642 = vadd.f32 0.0, %v2641
        %v2643 = vpop.f32.mrb[0].mxu0
        %v2644 = vpop.f32.mrb[0].mxu0
        %v2645 = vadd.f32 0.0, %v2644
        %v2646 = vpop.f32.mrb[0].mxu0
        %2647 = vmatprep.mubr.bf16.mxu0 0
        %2648 = vmatmul.mubr.bf16.gmra.mrb[0].mxu0 %v2527
        %v2649 = vpop.f32.mrb[0].mxu0
        %v2650 = vadd.f32 0.0, %v2649
        %v2651 = vpop.f32.mrb[0].mxu0
        %v2652 = vpop.f32.mrb[0].mxu0
        %v2653 = vadd.f32 0.0, %v2652
        %v2654 = vpop.f32.mrb[0].mxu0
        %2655 = vmatprep.mubr.bf16.mxu0 0
        %2656 = vmatmul.mubr.bf16.gmra.mrb[0].mxu0 %v2529
        %v2657 = vpop.f32.mrb[0].mxu0
        %v2658 = vadd.f32 0.0, %v2657
        %v2659 = vpop.f32.mrb[0].mxu0
        %v2660 = vpop.f32.mrb[0].mxu0
        %v2661 = vadd.f32 0.0, %v2660
        %v2662 = vpop.f32.mrb[0].mxu0
        %2663 = vmatprep.mubr.bf16.mxu0 0
        %2664 = vmatmul.mubr.bf16.gmra.mrb[0].mxu0 %v2531
        %v2665 = vpop.f32.mrb[0].mxu0
        %v2666 = vadd.f32 0.0, %v2665
        %v2667 = vpop.f32.mrb[0].mxu0
        %v2668 = vpop.f32.mrb[0].mxu0
        %v2669 = vadd.f32 0.0, %v2668
        %v2670 = vpop.f32.mrb[0].mxu0
        %2671 = vmatprep.mubr.bf16.mxu0 0
        %2672 = vmatmul.mubr.bf16.gmra.mrb[0].mxu0 %v2533
        %v2673 = vpop.f32.mrb[0].mxu0
        %v2674 = vadd.f32 0.0, %v2673
        %v2675 = vpop.f32.mrb[0].mxu0
        %v2676 = vpop.f32.mrb[0].mxu0
        %v2677 = vadd.f32 0.0, %v2676
        %v2678 = vpop.f32.mrb[0].mxu0
        %2679 = vmatprep.mubr.bf16.mxu0 0
        %2680 = vmatmul.mubr.bf16.gmra.mrb[0].mxu0 %v2535
        %v2681 = vpop.f32.mrb[0].mxu0
        %v2682 = vadd.f32 0.0, %v2681
        %v2683 = vpop.f32.mrb[0].mxu0
        %v2684 = vpop.f32.mrb[0].mxu0
        %v2685 = vadd.f32 0.0, %v2684
        %v2686 = vpop.f32.mrb[0].mxu0
        %2687 = vmatprep.mubr.bf16.mxu0 0
        %2688 = vmatmul.mubr.bf16.gmra.mrb[0].mxu0 %v2537
        %v2689 = vpop.f32.mrb[0].mxu0
        %v2690 = vadd.f32 0.0, %v2689
        %v2691 = vpop.f32.mrb[0].mxu0
        %v2692 = vpop.f32.mrb[0].mxu0
        %v2693 = vadd.f32 0.0, %v2692
        %v2694 = vpop.f32.mrb[0].mxu0
        %2695 = vmatprep.mubr.bf16.mxu0 0
        %2696 = vmatmul.mubr.bf16.gmra.mrb[0].mxu0 %v2539
        %v2697 = vpop.f32.mrb[0].mxu0
        %v2698 = vadd.f32 0.0, %v2697
        %v2699 = vpop.f32.mrb[0].mxu0
        %v2700 = vpop.f32.mrb[0].mxu0
        %v2701 = vadd.f32 0.0, %v2700
        %v2702 = vpop.f32.mrb[0].mxu0
        %2703 = vmatprep.mubr.bf16.mxu0 0
        %2704 = vmatmul.mubr.bf16.gmra.mrb[0].mxu0 %v2541
        %v2705 = vpop.f32.mrb[0].mxu0
        %v2706 = vadd.f32 0.0, %v2705
        %v2707 = vpop.f32.mrb[0].mxu0
        %v2708 = vpop.f32.mrb[0].mxu0
        %v2709 = vadd.f32 0.0, %v2708
        %v2710 = vpop.f32.mrb[0].mxu0
        %2711 = vdwg.mxu0
        %v2712 = vadd.f32 %v2458, %v2578
        %v2713 = vadd.f32 %v2459, %v2581
        %v2714 = vadd.f32 %v2460, %v2586
        %v2715 = vadd.f32 %v2461, %v2589
        %v2716 = vadd.f32 %v2462, %v2594
        %v2717 = vadd.f32 %v2463, %v2597
        %v2718 = vadd.f32 %v2464, %v2602
        %v2719 = vadd.f32 %v2465, %v2605
        %v2720 = vadd.f32 %v2466, %v2610
        %v2721 = vadd.f32 %v2467, %v2613
        %v2722 = vadd.f32 %v2468, %v2618
        %v2723 = vadd.f32 %v2469, %v2621
        %v2724 = vadd.f32 %v2470, %v2626
        %v2725 = vadd.f32 %v2471, %v2629
        %v2726 = vadd.f32 %v2472, %v2634
        %v2727 = vadd.f32 %v2473, %v2637
        %v2728 = vadd.f32 %v2474, %v2642
        %v2729 = vadd.f32 %v2475, %v2645
        %v2730 = vadd.f32 %v2476, %v2650
        %v2731 = vadd.f32 %v2477, %v2653
        %v2732 = vadd.f32 %v2478, %v2658
        %v2733 = vadd.f32 %v2479, %v2661
        %v2734 = vadd.f32 %v2480, %v2666
        %v2735 = vadd.f32 %v2481, %v2669
        %v2736 = vadd.f32 %v2482, %v2674
        %v2737 = vadd.f32 %v2483, %v2677
        %v2738 = vadd.f32 %v2484, %v2682
        %v2739 = vadd.f32 %v2485, %v2685
        %v2740 = vadd.f32 %v2486, %v2690
        %v2741 = vadd.f32 %v2487, %v2693
        %v2742 = vadd.f32 %v2488, %v2698
        %v2743 = vadd.f32 %v2489, %v2701
        %v2744 = vadd.f32 %v2490, %v2706
        %v2745 = vadd.f32 %v2491, %v2709
        %v2746 = vld [vmem:[#allocation2 + $0x10] sm:$0xff]
        %v2747 = vld [vmem:[#allocation2 + $0x18] sm:$0xff]
        %v2748 = vld [vmem:[#allocation2 + $0x20] sm:$0xff]
        %v2749 = vld [vmem:[#allocation2 + $0x28] sm:$0xff]
        %v2750 = vld [vmem:[#allocation2 + $0x30] sm:$0xff]
        %v2751 = vld [vmem:[#allocation2 + $0x38] sm:$0xff]
        %v2752 = vld [vmem:[#allocation2 + $0x40] sm:$0xff]
        %v2753 = vld [vmem:[#allocation2 + $0x48] sm:$0xff]
        %v2754 = vld [vmem:[#allocation2 + $0x50] sm:$0xff]
        %v2755 = vld [vmem:[#allocation2 + $0x58] sm:$0xff]
        %v2756 = vld [vmem:[#allocation2 + $0x60] sm:$0xff]
        %v2757 = vld [vmem:[#allocation2 + $0x68] sm:$0xff]
        %v2758 = vld [vmem:[#allocation2 + $0x70] sm:$0xff]
        %v2759 = vld [vmem:[#allocation2 + $0x78] sm:$0xff]
        %v2760 = vld [vmem:[#allocation2 + $0x80] sm:$0xff]
        %v2761 = vld [vmem:[#allocation2 + $0x88] sm:$0xff]
        %v2762 = vld [vmem:[#allocation2 + $0x90] sm:$0xff]
        %v2763 = vld [vmem:[#allocation2 + $0x98] sm:$0x1]
        %s2764 = scalar_lea.vmem %s3, 80
        %v2765 = vld [vmem:[%s2764] sm:$0xf]
        %v2766 = vld [vmem:[%s2764 + $0x4] sm:$0xf]
        %v2767 = vld [vmem:[%s2764 + $0x8] sm:$0xf]
        %v2768 = vld [vmem:[%s2764 + $0xc] sm:$0xf]
        %v2770 = vshrl.u32 %v2746, 16
        %v2772 = vshll.u32 %v2746, 16
        %v2774 = vrot.slane %v2772, 1
        %v2775 = vor.u32 %v2770, %v2774
        %v2777 = vshll.u32 %v2747, 16
        %v2779 = vrot.slane %v2777, 1
        %v2780 = vsel %vm1752, %v2775, %v2779
        %v2781 = vshrl.u32 %v2747, 16
        %v2783 = vor.u32 %v2781, %v2779
        %v2785 = vshll.u32 %v2748, 16
        %v2787 = vrot.slane %v2785, 1
        %v2788 = vsel %vm1752, %v2783, %v2787
        %v2789 = vshrl.u32 %v2748, 16
        %v2791 = vor.u32 %v2789, %v2787
        %v2793 = vshll.u32 %v2749, 16
        %v2795 = vrot.slane %v2793, 1
        %v2796 = vsel %vm1752, %v2791, %v2795
        %v2797 = vshrl.u32 %v2749, 16
        %v2799 = vor.u32 %v2797, %v2795
        %v2801 = vshll.u32 %v2750, 16
        %v2803 = vrot.slane %v2801, 1
        %v2804 = vsel %vm1752, %v2799, %v2803
        %v2805 = vshrl.u32 %v2750, 16
        %v2807 = vor.u32 %v2805, %v2803
        %v2809 = vshll.u32 %v2751, 16
        %v2811 = vrot.slane %v2809, 1
        %v2812 = vsel %vm1752, %v2807, %v2811
        %v2813 = vshrl.u32 %v2751, 16
        %v2815 = vor.u32 %v2813, %v2811
        %v2817 = vshll.u32 %v2752, 16
        %v2819 = vrot.slane %v2817, 1
        %v2820 = vsel %vm1752, %v2815, %v2819
        %v2821 = vshrl.u32 %v2752, 16
        %v2823 = vor.u32 %v2821, %v2819
        %v2825 = vshll.u32 %v2753, 16
        %v2827 = vrot.slane %v2825, 1
        %v2828 = vsel %vm1752, %v2823, %v2827
        %v2829 = vshrl.u32 %v2753, 16
        %v2831 = vor.u32 %v2829, %v2827
        %v2833 = vshll.u32 %v2754, 16
        %v2835 = vrot.slane %v2833, 1
        %v2836 = vsel %vm1752, %v2831, %v2835
        %v2837 = vshrl.u32 %v2754, 16
        %v2839 = vor.u32 %v2837, %v2835
        %v2841 = vshll.u32 %v2755, 16
        %v2843 = vrot.slane %v2841, 1
        %v2844 = vsel %vm1752, %v2839, %v2843
        %v2845 = vshrl.u32 %v2755, 16
        %v2847 = vor.u32 %v2845, %v2843
        %v2849 = vshll.u32 %v2756, 16
        %v2851 = vrot.slane %v2849, 1
        %v2852 = vsel %vm1752, %v2847, %v2851
        %v2853 = vshrl.u32 %v2756, 16
        %v2855 = vor.u32 %v2853, %v2851
        %v2857 = vshll.u32 %v2757, 16
        %v2859 = vrot.slane %v2857, 1
        %v2860 = vsel %vm1752, %v2855, %v2859
        %v2861 = vshrl.u32 %v2757, 16
        %v2863 = vor.u32 %v2861, %v2859
        %v2865 = vshll.u32 %v2758, 16
        %v2867 = vrot.slane %v2865, 1
        %v2868 = vsel %vm1752, %v2863, %v2867
        %v2869 = vshrl.u32 %v2758, 16
        %v2871 = vor.u32 %v2869, %v2867
        %v2873 = vshll.u32 %v2759, 16
        %v2875 = vrot.slane %v2873, 1
        %v2876 = vsel %vm1752, %v2871, %v2875
        %v2877 = vshrl.u32 %v2759, 16
        %v2879 = vor.u32 %v2877, %v2875
        %v2881 = vshll.u32 %v2760, 16
        %v2883 = vrot.slane %v2881, 1
        %v2884 = vsel %vm1752, %v2879, %v2883
        %v2885 = vshrl.u32 %v2760, 16
        %v2887 = vor.u32 %v2885, %v2883
        %v2889 = vshll.u32 %v2761, 16
        %v2891 = vrot.slane %v2889, 1
        %v2892 = vsel %vm1752, %v2887, %v2891
        %v2893 = vshrl.u32 %v2761, 16
        %v2895 = vor.u32 %v2893, %v2891
        %v2897 = vshll.u32 %v2762, 16
        %v2899 = vrot.slane %v2897, 1
        %v2900 = vsel %vm1752, %v2895, %v2899
        %v2901 = vshrl.u32 %v2762, 16
        %v2903 = vor.u32 %v2901, %v2899
        %v2905 = vshll.u32 %v2763, 16
        %v2907 = vrot.slane %v2905, 1
        %v2908 = vsel %vm1752, %v2903, %v2907
        %v2913 = vunpack.c.l.b16 %v2765
        %v2914 = vunpack.c.l.b16 %v2766
        %v2915 = vunpack.c.l.b16 %v2767
        %v2916 = vunpack.c.l.b16 %v2768
        %v2917 = vpack.c.b16 %v2914, %v2913
        %v2918 = vpack.c.b16 %v2916, %v2915
        %v2922 = vsel %vm436, %v2780, 0
        %v2925 = vsel %vm436, %v2788, 0
        %v2928 = vsel %vm436, %v2796, 0
        %v2931 = vsel %vm436, %v2804, 0
        %v2934 = vsel %vm436, %v2812, 0
        %v2937 = vsel %vm436, %v2820, 0
        %v2940 = vsel %vm436, %v2828, 0
        %v2943 = vsel %vm436, %v2836, 0
        %v2946 = vsel %vm436, %v2844, 0
        %v2949 = vsel %vm436, %v2852, 0
        %v2952 = vsel %vm436, %v2860, 0
        %v2955 = vsel %vm436, %v2868, 0
        %v2958 = vsel %vm436, %v2876, 0
        %v2961 = vsel %vm436, %v2884, 0
        %v2964 = vsel %vm436, %v2892, 0
        %v2967 = vsel %vm436, %v2900, 0
        %v2970 = vsel %vm436, %v2908, 0
        %2972 = vmatprep.subr.bf16.mxu0 0
        %2973 = vmatpush1.bf16.msra.mxu0 %v2917
        %2974 = vmatprep.subr.bf16.mxu0 0
        %2975 = vmatpush1.bf16.msra.mxu0 %v2918
        %2976 = vmatprep.subr.bf16.mxu0 0
        %2977 = vmatpush1.bf16.msra.mxu0 0
        %2978 = vmatprep.subr.bf16.mxu0 0
        %2979 = vmatpush1.bf16.msra.mxu0 0
        %2980 = vmatprep.subr.bf16.mxu0 0
        %2981 = vmatpush1.bf16.msra.mxu0 0
        %2982 = vmatprep.subr.bf16.mxu0 0
        %2983 = vmatpush1.bf16.msra.mxu0 0
        %2984 = vmatprep.subr.bf16.mxu0 0
        %2985 = vmatpush1.bf16.msra.mxu0 0
        %2986 = vmatprep.subr.bf16.mxu0 0
        %2987 = vmatpush1.bf16.msra.mxu0 0
        %2988 = vmatprep.subr.bf16.mxu0 0
        %2989 = vmatpush1.bf16.msra.mxu0 0
        %2990 = vmatprep.subr.bf16.mxu0 0
        %2991 = vmatpush1.bf16.msra.mxu0 0
        %2992 = vmatprep.subr.bf16.mxu0 0
        %2993 = vmatpush1.bf16.msra.mxu0 0
        %2994 = vmatprep.subr.bf16.mxu0 0
        %2995 = vmatpush1.bf16.msra.mxu0 0
        %2996 = vmatprep.subr.bf16.mxu0 0
        %2997 = vmatpush1.bf16.msra.mxu0 0
        %2998 = vmatprep.subr.bf16.mxu0 0
        %2999 = vmatpush1.bf16.msra.mxu0 0
        %3000 = vmatprep.subr.bf16.mxu0 0
        %3001 = vmatpush1.bf16.msra.mxu0 0
        %3002 = vmatprep.subr.bf16.mxu0 0
        %3003 = vmatpush1.bf16.msra.mxu0 0
        %3004 = vmatprep.mubr.bf16.mxu0 0
        %3005 = vmatmul.mubr.bf16.gmra.mrb[0].mxu0 %v2922
        %v3006 = vpop.f32.mrb[0].mxu0
        %v3007 = vadd.f32 0.0, %v3006
        %v3008 = vpop.f32.mrb[0].mxu0
        %v3009 = vpop.f32.mrb[0].mxu0
        %v3010 = vadd.f32 0.0, %v3009
        %v3011 = vpop.f32.mrb[0].mxu0
        %3012 = vmatprep.mubr.bf16.mxu0 0
        %3013 = vmatmul.mubr.bf16.gmra.mrb[0].mxu0 %v2925
        %v3014 = vpop.f32.mrb[0].mxu0
        %v3015 = vadd.f32 0.0, %v3014
        %v3016 = vpop.f32.mrb[0].mxu0
        %v3017 = vpop.f32.mrb[0].mxu0
        %v3018 = vadd.f32 0.0, %v3017
        %v3019 = vpop.f32.mrb[0].mxu0
        %3020 = vmatprep.mubr.bf16.mxu0 0
        %3021 = vmatmul.mubr.bf16.gmra.mrb[0].mxu0 %v2928
        %v3022 = vpop.f32.mrb[0].mxu0
        %v3023 = vadd.f32 0.0, %v3022
        %v3024 = vpop.f32.mrb[0].mxu0
        %v3025 = vpop.f32.mrb[0].mxu0
        %v3026 = vadd.f32 0.0, %v3025
        %v3027 = vpop.f32.mrb[0].mxu0
        %3028 = vmatprep.mubr.bf16.mxu0 0
        %3029 = vmatmul.mubr.bf16.gmra.mrb[0].mxu0 %v2931
        %v3030 = vpop.f32.mrb[0].mxu0
        %v3031 = vadd.f32 0.0, %v3030
        %v3032 = vpop.f32.mrb[0].mxu0
        %v3033 = vpop.f32.mrb[0].mxu0
        %v3034 = vadd.f32 0.0, %v3033
        %v3035 = vpop.f32.mrb[0].mxu0
        %3036 = vmatprep.mubr.bf16.mxu0 0
        %3037 = vmatmul.mubr.bf16.gmra.mrb[0].mxu0 %v2934
        %v3038 = vpop.f32.mrb[0].mxu0
        %v3039 = vadd.f32 0.0, %v3038
        %v3040 = vpop.f32.mrb[0].mxu0
        %v3041 = vpop.f32.mrb[0].mxu0
        %v3042 = vadd.f32 0.0, %v3041
        %v3043 = vpop.f32.mrb[0].mxu0
        %3044 = vmatprep.mubr.bf16.mxu0 0
        %3045 = vmatmul.mubr.bf16.gmra.mrb[0].mxu0 %v2937
        %v3046 = vpop.f32.mrb[0].mxu0
        %v3047 = vadd.f32 0.0, %v3046
        %v3048 = vpop.f32.mrb[0].mxu0
        %v3049 = vpop.f32.mrb[0].mxu0
        %v3050 = vadd.f32 0.0, %v3049
        %v3051 = vpop.f32.mrb[0].mxu0
        %3052 = vmatprep.mubr.bf16.mxu0 0
        %3053 = vmatmul.mubr.bf16.gmra.mrb[0].mxu0 %v2940
        %v3054 = vpop.f32.mrb[0].mxu0
        %v3055 = vadd.f32 0.0, %v3054
        %v3056 = vpop.f32.mrb[0].mxu0
        %v3057 = vpop.f32.mrb[0].mxu0
        %v3058 = vadd.f32 0.0, %v3057
        %v3059 = vpop.f32.mrb[0].mxu0
        %3060 = vmatprep.mubr.bf16.mxu0 0
        %3061 = vmatmul.mubr.bf16.gmra.mrb[0].mxu0 %v2943
        %v3062 = vpop.f32.mrb[0].mxu0
        %v3063 = vadd.f32 0.0, %v3062
        %v3064 = vpop.f32.mrb[0].mxu0
        %v3065 = vpop.f32.mrb[0].mxu0
        %v3066 = vadd.f32 0.0, %v3065
        %v3067 = vpop.f32.mrb[0].mxu0
        %3068 = vmatprep.mubr.bf16.mxu0 0
        %3069 = vmatmul.mubr.bf16.gmra.mrb[0].mxu0 %v2946
        %v3070 = vpop.f32.mrb[0].mxu0
        %v3071 = vadd.f32 0.0, %v3070
        %v3072 = vpop.f32.mrb[0].mxu0
        %v3073 = vpop.f32.mrb[0].mxu0
        %v3074 = vadd.f32 0.0, %v3073
        %v3075 = vpop.f32.mrb[0].mxu0
        %3076 = vmatprep.mubr.bf16.mxu0 0
        %3077 = vmatmul.mubr.bf16.gmra.mrb[0].mxu0 %v2949
        %v3078 = vpop.f32.mrb[0].mxu0
        %v3079 = vadd.f32 0.0, %v3078
        %v3080 = vpop.f32.mrb[0].mxu0
        %v3081 = vpop.f32.mrb[0].mxu0
        %v3082 = vadd.f32 0.0, %v3081
        %v3083 = vpop.f32.mrb[0].mxu0
        %3084 = vmatprep.mubr.bf16.mxu0 0
        %3085 = vmatmul.mubr.bf16.gmra.mrb[0].mxu0 %v2952
        %v3086 = vpop.f32.mrb[0].mxu0
        %v3087 = vadd.f32 0.0, %v3086
        %v3088 = vpop.f32.mrb[0].mxu0
        %v3089 = vpop.f32.mrb[0].mxu0
        %v3090 = vadd.f32 0.0, %v3089
        %v3091 = vpop.f32.mrb[0].mxu0
        %3092 = vmatprep.mubr.bf16.mxu0 0
        %3093 = vmatmul.mubr.bf16.gmra.mrb[0].mxu0 %v2955
        %v3094 = vpop.f32.mrb[0].mxu0
        %v3095 = vadd.f32 0.0, %v3094
        %v3096 = vpop.f32.mrb[0].mxu0
        %v3097 = vpop.f32.mrb[0].mxu0
        %v3098 = vadd.f32 0.0, %v3097
        %v3099 = vpop.f32.mrb[0].mxu0
        %3100 = vmatprep.mubr.bf16.mxu0 0
        %3101 = vmatmul.mubr.bf16.gmra.mrb[0].mxu0 %v2958
        %v3102 = vpop.f32.mrb[0].mxu0
        %v3103 = vadd.f32 0.0, %v3102
        %v3104 = vpop.f32.mrb[0].mxu0
        %v3105 = vpop.f32.mrb[0].mxu0
        %v3106 = vadd.f32 0.0, %v3105
        %v3107 = vpop.f32.mrb[0].mxu0
        %3108 = vmatprep.mubr.bf16.mxu0 0
        %3109 = vmatmul.mubr.bf16.gmra.mrb[0].mxu0 %v2961
        %v3110 = vpop.f32.mrb[0].mxu0
        %v3111 = vadd.f32 0.0, %v3110
        %v3112 = vpop.f32.mrb[0].mxu0
        %v3113 = vpop.f32.mrb[0].mxu0
        %v3114 = vadd.f32 0.0, %v3113
        %v3115 = vpop.f32.mrb[0].mxu0
        %3116 = vmatprep.mubr.bf16.mxu0 0
        %3117 = vmatmul.mubr.bf16.gmra.mrb[0].mxu0 %v2964
        %v3118 = vpop.f32.mrb[0].mxu0
        %v3119 = vadd.f32 0.0, %v3118
        %v3120 = vpop.f32.mrb[0].mxu0
        %v3121 = vpop.f32.mrb[0].mxu0
        %v3122 = vadd.f32 0.0, %v3121
        %v3123 = vpop.f32.mrb[0].mxu0
        %3124 = vmatprep.mubr.bf16.mxu0 0
        %3125 = vmatmul.mubr.bf16.gmra.mrb[0].mxu0 %v2967
        %v3126 = vpop.f32.mrb[0].mxu0
        %v3127 = vadd.f32 0.0, %v3126
        %v3128 = vpop.f32.mrb[0].mxu0
        %v3129 = vpop.f32.mrb[0].mxu0
        %v3130 = vadd.f32 0.0, %v3129
        %v3131 = vpop.f32.mrb[0].mxu0
        %3132 = vmatprep.mubr.bf16.mxu0 0
        %3133 = vmatmul.mubr.bf16.gmra.mrb[0].mxu0 %v2970
        %v3134 = vpop.f32.mrb[0].mxu0
        %v3135 = vadd.f32 0.0, %v3134
        %v3136 = vpop.f32.mrb[0].mxu0
        %v3137 = vpop.f32.mrb[0].mxu0
        %v3138 = vadd.f32 0.0, %v3137
        %v3139 = vpop.f32.mrb[0].mxu0
        %3140 = vdwg.mxu0
        %v3141 = vadd.f32 %v2712, %v3007
        %v3142 = vadd.f32 %v2713, %v3010
        %v3143 = vadd.f32 %v2714, %v3015
        %v3144 = vadd.f32 %v2715, %v3018
        %v3145 = vadd.f32 %v2716, %v3023
        %v3146 = vadd.f32 %v2717, %v3026
        %v3147 = vadd.f32 %v2718, %v3031
        %v3148 = vadd.f32 %v2719, %v3034
        %v3149 = vadd.f32 %v2720, %v3039
        %v3150 = vadd.f32 %v2721, %v3042
        %v3151 = vadd.f32 %v2722, %v3047
        %v3152 = vadd.f32 %v2723, %v3050
        %v3153 = vadd.f32 %v2724, %v3055
        %v3154 = vadd.f32 %v2725, %v3058
        %v3155 = vadd.f32 %v2726, %v3063
        %v3156 = vadd.f32 %v2727, %v3066
        %v3157 = vadd.f32 %v2728, %v3071
        %v3158 = vadd.f32 %v2729, %v3074
        %v3159 = vadd.f32 %v2730, %v3079
        %v3160 = vadd.f32 %v2731, %v3082
        %v3161 = vadd.f32 %v2732, %v3087
        %v3162 = vadd.f32 %v2733, %v3090
        %v3163 = vadd.f32 %v2734, %v3095
        %v3164 = vadd.f32 %v2735, %v3098
        %v3165 = vadd.f32 %v2736, %v3103
        %v3166 = vadd.f32 %v2737, %v3106
        %v3167 = vadd.f32 %v2738, %v3111
        %v3168 = vadd.f32 %v2739, %v3114
        %v3169 = vadd.f32 %v2740, %v3119
        %v3170 = vadd.f32 %v2741, %v3122
        %v3171 = vadd.f32 %v2742, %v3127
        %v3172 = vadd.f32 %v2743, %v3130
        %v3173 = vadd.f32 %v2744, %v3135
        %v3174 = vadd.f32 %v2745, %v3138
        %v3175 = vld [vmem:[#allocation2 + $0x10] sm:$0x80]
        %v3176 = vld [vmem:[#allocation2 + $0x98] sm:$0xff]
        %s3177 = scalar_lea.vmem %s3, 96
        %v3178 = vld [vmem:[%s3177] sm:$0xf]
        %v3179 = vld [vmem:[%s3177 + $0x4] sm:$0xf]
        %v3180 = vld [vmem:[%s3177 + $0x8] sm:$0xf]
        %v3181 = vld [vmem:[%s3177 + $0xc] sm:$0xf]
        %v3183 = vshrl.u32 %v3175, 16
        %v3185 = vrot.slane %v3183, 7
        %v3186 = vrot.slane %v2781, 7
        %v3187 = vor.u32 %v3186, %v2777
        %v3188 = vsel %vm1373, %v3185, %v3187
        %v3189 = vrot.slane %v2789, 7
        %v3190 = vor.u32 %v3189, %v2785
        %v3191 = vsel %vm1373, %v3186, %v3190
        %v3192 = vrot.slane %v2797, 7
        %v3193 = vor.u32 %v3192, %v2793
        %v3194 = vsel %vm1373, %v3189, %v3193
        %v3195 = vrot.slane %v2805, 7
        %v3196 = vor.u32 %v3195, %v2801
        %v3197 = vsel %vm1373, %v3192, %v3196
        %v3198 = vrot.slane %v2813, 7
        %v3199 = vor.u32 %v3198, %v2809
        %v3200 = vsel %vm1373, %v3195, %v3199
        %v3201 = vrot.slane %v2821, 7
        %v3202 = vor.u32 %v3201, %v2817
        %v3203 = vsel %vm1373, %v3198, %v3202
        %v3204 = vrot.slane %v2829, 7
        %v3205 = vor.u32 %v3204, %v2825
        %v3206 = vsel %vm1373, %v3201, %v3205
        %v3207 = vrot.slane %v2837, 7
        %v3208 = vor.u32 %v3207, %v2833
        %v3209 = vsel %vm1373, %v3204, %v3208
        %v3210 = vrot.slane %v2845, 7
        %v3211 = vor.u32 %v3210, %v2841
        %v3212 = vsel %vm1373, %v3207, %v3211
        %v3213 = vrot.slane %v2853, 7
        %v3214 = vor.u32 %v3213, %v2849
        %v3215 = vsel %vm1373, %v3210, %v3214
        %v3216 = vrot.slane %v2861, 7
        %v3217 = vor.u32 %v3216, %v2857
        %v3218 = vsel %vm1373, %v3213, %v3217
        %v3219 = vrot.slane %v2869, 7
        %v3220 = vor.u32 %v3219, %v2865
        %v3221 = vsel %vm1373, %v3216, %v3220
        %v3222 = vrot.slane %v2877, 7
        %v3223 = vor.u32 %v3222, %v2873
        %v3224 = vsel %vm1373, %v3219, %v3223
        %v3225 = vrot.slane %v2885, 7
        %v3226 = vor.u32 %v3225, %v2881
        %v3227 = vsel %vm1373, %v3222, %v3226
        %v3228 = vrot.slane %v2893, 7
        %v3229 = vor.u32 %v3228, %v2889
        %v3230 = vsel %vm1373, %v3225, %v3229
        %v3231 = vrot.slane %v2901, 7
        %v3232 = vor.u32 %v3231, %v2897
        %v3233 = vsel %vm1373, %v3228, %v3232
        %v3235 = vshrl.u32 %v3176, 16
        %v3237 = vrot.slane %v3235, 7
        %v3238 = vshll.u32 %v3176, 16
        %v3240 = vor.u32 %v3237, %v3238
        %v3241 = vsel %vm1373, %v3231, %v3240
        %v3246 = vunpack.c.l.b16 %v3178
        %v3247 = vunpack.c.l.b16 %v3179
        %v3248 = vunpack.c.l.b16 %v3180
        %v3249 = vunpack.c.l.b16 %v3181
        %v3250 = vpack.c.b16 %v3247, %v3246
        %v3251 = vpack.c.b16 %v3249, %v3248
        %v3255 = vsel %vm436, %v3188, 0
        %v3258 = vsel %vm436, %v3191, 0
        %v3261 = vsel %vm436, %v3194, 0
        %v3264 = vsel %vm436, %v3197, 0
        %v3267 = vsel %vm436, %v3200, 0
        %v3270 = vsel %vm436, %v3203, 0
        %v3273 = vsel %vm436, %v3206, 0
        %v3276 = vsel %vm436, %v3209, 0
        %v3279 = vsel %vm436, %v3212, 0
        %v3282 = vsel %vm436, %v3215, 0
        %v3285 = vsel %vm436, %v3218, 0
        %v3288 = vsel %vm436, %v3221, 0
        %v3291 = vsel %vm436, %v3224, 0
        %v3294 = vsel %vm436, %v3227, 0
        %v3297 = vsel %vm436, %v3230, 0
        %v3300 = vsel %vm436, %v3233, 0
        %v3303 = vsel %vm436, %v3241, 0
        %3305 = vmatprep.subr.bf16.mxu0 0
        %3306 = vmatpush1.bf16.msra.mxu0 %v3250
        %3307 = vmatprep.subr.bf16.mxu0 0
        %3308 = vmatpush1.bf16.msra.mxu0 %v3251
        %3309 = vmatprep.subr.bf16.mxu0 0
        %3310 = vmatpush1.bf16.msra.mxu0 0
        %3311 = vmatprep.subr.bf16.mxu0 0
        %3312 = vmatpush1.bf16.msra.mxu0 0
        %3313 = vmatprep.subr.bf16.mxu0 0
        %3314 = vmatpush1.bf16.msra.mxu0 0
        %3315 = vmatprep.subr.bf16.mxu0 0
        %3316 = vmatpush1.bf16.msra.mxu0 0
        %3317 = vmatprep.subr.bf16.mxu0 0
        %3318 = vmatpush1.bf16.msra.mxu0 0
        %3319 = vmatprep.subr.bf16.mxu0 0
        %3320 = vmatpush1.bf16.msra.mxu0 0
        %3321 = vmatprep.subr.bf16.mxu0 0
        %3322 = vmatpush1.bf16.msra.mxu0 0
        %3323 = vmatprep.subr.bf16.mxu0 0
        %3324 = vmatpush1.bf16.msra.mxu0 0
        %3325 = vmatprep.subr.bf16.mxu0 0
        %3326 = vmatpush1.bf16.msra.mxu0 0
        %3327 = vmatprep.subr.bf16.mxu0 0
        %3328 = vmatpush1.bf16.msra.mxu0 0
        %3329 = vmatprep.subr.bf16.mxu0 0
        %3330 = vmatpush1.bf16.msra.mxu0 0
        %3331 = vmatprep.subr.bf16.mxu0 0
        %3332 = vmatpush1.bf16.msra.mxu0 0
        %3333 = vmatprep.subr.bf16.mxu0 0
        %3334 = vmatpush1.bf16.msra.mxu0 0
        %3335 = vmatprep.subr.bf16.mxu0 0
        %3336 = vmatpush1.bf16.msra.mxu0 0
        %3337 = vmatprep.mubr.bf16.mxu0 0
        %3338 = vmatmul.mubr.bf16.gmra.mrb[0].mxu0 %v3255
        %v3339 = vpop.f32.mrb[0].mxu0
        %v3340 = vadd.f32 0.0, %v3339
        %v3341 = vpop.f32.mrb[0].mxu0
        %v3342 = vpop.f32.mrb[0].mxu0
        %v3343 = vadd.f32 0.0, %v3342
        %v3344 = vpop.f32.mrb[0].mxu0
        %3345 = vmatprep.mubr.bf16.mxu0 0
        %3346 = vmatmul.mubr.bf16.gmra.mrb[0].mxu0 %v3258
        %v3347 = vpop.f32.mrb[0].mxu0
        %v3348 = vadd.f32 0.0, %v3347
        %v3349 = vpop.f32.mrb[0].mxu0
        %v3350 = vpop.f32.mrb[0].mxu0
        %v3351 = vadd.f32 0.0, %v3350
        %v3352 = vpop.f32.mrb[0].mxu0
        %3353 = vmatprep.mubr.bf16.mxu0 0
        %3354 = vmatmul.mubr.bf16.gmra.mrb[0].mxu0 %v3261
        %v3355 = vpop.f32.mrb[0].mxu0
        %v3356 = vadd.f32 0.0, %v3355
        %v3357 = vpop.f32.mrb[0].mxu0
        %v3358 = vpop.f32.mrb[0].mxu0
        %v3359 = vadd.f32 0.0, %v3358
        %v3360 = vpop.f32.mrb[0].mxu0
        %3361 = vmatprep.mubr.bf16.mxu0 0
        %3362 = vmatmul.mubr.bf16.gmra.mrb[0].mxu0 %v3264
        %v3363 = vpop.f32.mrb[0].mxu0
        %v3364 = vadd.f32 0.0, %v3363
        %v3365 = vpop.f32.mrb[0].mxu0
        %v3366 = vpop.f32.mrb[0].mxu0
        %v3367 = vadd.f32 0.0, %v3366
        %v3368 = vpop.f32.mrb[0].mxu0
        %3369 = vmatprep.mubr.bf16.mxu0 0
        %3370 = vmatmul.mubr.bf16.gmra.mrb[0].mxu0 %v3267
        %v3371 = vpop.f32.mrb[0].mxu0
        %v3372 = vadd.f32 0.0, %v3371
        %v3373 = vpop.f32.mrb[0].mxu0
        %v3374 = vpop.f32.mrb[0].mxu0
        %v3375 = vadd.f32 0.0, %v3374
        %v3376 = vpop.f32.mrb[0].mxu0
        %3377 = vmatprep.mubr.bf16.mxu0 0
        %3378 = vmatmul.mubr.bf16.gmra.mrb[0].mxu0 %v3270
        %v3379 = vpop.f32.mrb[0].mxu0
        %v3380 = vadd.f32 0.0, %v3379
        %v3381 = vpop.f32.mrb[0].mxu0
        %v3382 = vpop.f32.mrb[0].mxu0
        %v3383 = vadd.f32 0.0, %v3382
        %v3384 = vpop.f32.mrb[0].mxu0
        %3385 = vmatprep.mubr.bf16.mxu0 0
        %3386 = vmatmul.mubr.bf16.gmra.mrb[0].mxu0 %v3273
        %v3387 = vpop.f32.mrb[0].mxu0
        %v3388 = vadd.f32 0.0, %v3387
        %v3389 = vpop.f32.mrb[0].mxu0
        %v3390 = vpop.f32.mrb[0].mxu0
        %v3391 = vadd.f32 0.0, %v3390
        %v3392 = vpop.f32.mrb[0].mxu0
        %3393 = vmatprep.mubr.bf16.mxu0 0
        %3394 = vmatmul.mubr.bf16.gmra.mrb[0].mxu0 %v3276
        %v3395 = vpop.f32.mrb[0].mxu0
        %v3396 = vadd.f32 0.0, %v3395
        %v3397 = vpop.f32.mrb[0].mxu0
        %v3398 = vpop.f32.mrb[0].mxu0
        %v3399 = vadd.f32 0.0, %v3398
        %v3400 = vpop.f32.mrb[0].mxu0
        %3401 = vmatprep.mubr.bf16.mxu0 0
        %3402 = vmatmul.mubr.bf16.gmra.mrb[0].mxu0 %v3279
        %v3403 = vpop.f32.mrb[0].mxu0
        %v3404 = vadd.f32 0.0, %v3403
        %v3405 = vpop.f32.mrb[0].mxu0
        %v3406 = vpop.f32.mrb[0].mxu0
        %v3407 = vadd.f32 0.0, %v3406
        %v3408 = vpop.f32.mrb[0].mxu0
        %3409 = vmatprep.mubr.bf16.mxu0 0
        %3410 = vmatmul.mubr.bf16.gmra.mrb[0].mxu0 %v3282
        %v3411 = vpop.f32.mrb[0].mxu0
        %v3412 = vadd.f32 0.0, %v3411
        %v3413 = vpop.f32.mrb[0].mxu0
        %v3414 = vpop.f32.mrb[0].mxu0
        %v3415 = vadd.f32 0.0, %v3414
        %v3416 = vpop.f32.mrb[0].mxu0
        %3417 = vmatprep.mubr.bf16.mxu0 0
        %3418 = vmatmul.mubr.bf16.gmra.mrb[0].mxu0 %v3285
        %v3419 = vpop.f32.mrb[0].mxu0
        %v3420 = vadd.f32 0.0, %v3419
        %v3421 = vpop.f32.mrb[0].mxu0
        %v3422 = vpop.f32.mrb[0].mxu0
        %v3423 = vadd.f32 0.0, %v3422
        %v3424 = vpop.f32.mrb[0].mxu0
        %3425 = vmatprep.mubr.bf16.mxu0 0
        %3426 = vmatmul.mubr.bf16.gmra.mrb[0].mxu0 %v3288
        %v3427 = vpop.f32.mrb[0].mxu0
        %v3428 = vadd.f32 0.0, %v3427
        %v3429 = vpop.f32.mrb[0].mxu0
        %v3430 = vpop.f32.mrb[0].mxu0
        %v3431 = vadd.f32 0.0, %v3430
        %v3432 = vpop.f32.mrb[0].mxu0
        %3433 = vmatprep.mubr.bf16.mxu0 0
        %3434 = vmatmul.mubr.bf16.gmra.mrb[0].mxu0 %v3291
        %v3435 = vpop.f32.mrb[0].mxu0
        %v3436 = vadd.f32 0.0, %v3435
        %v3437 = vpop.f32.mrb[0].mxu0
        %v3438 = vpop.f32.mrb[0].mxu0
        %v3439 = vadd.f32 0.0, %v3438
        %v3440 = vpop.f32.mrb[0].mxu0
        %3441 = vmatprep.mubr.bf16.mxu0 0
        %3442 = vmatmul.mubr.bf16.gmra.mrb[0].mxu0 %v3294
        %v3443 = vpop.f32.mrb[0].mxu0
        %v3444 = vadd.f32 0.0, %v3443
        %v3445 = vpop.f32.mrb[0].mxu0
        %v3446 = vpop.f32.mrb[0].mxu0
        %v3447 = vadd.f32 0.0, %v3446
        %v3448 = vpop.f32.mrb[0].mxu0
        %3449 = vmatprep.mubr.bf16.mxu0 0
        %3450 = vmatmul.mubr.bf16.gmra.mrb[0].mxu0 %v3297
        %v3451 = vpop.f32.mrb[0].mxu0
        %v3452 = vadd.f32 0.0, %v3451
        %v3453 = vpop.f32.mrb[0].mxu0
        %v3454 = vpop.f32.mrb[0].mxu0
        %v3455 = vadd.f32 0.0, %v3454
        %v3456 = vpop.f32.mrb[0].mxu0
        %3457 = vmatprep.mubr.bf16.mxu0 0
        %3458 = vmatmul.mubr.bf16.gmra.mrb[0].mxu0 %v3300
        %v3459 = vpop.f32.mrb[0].mxu0
        %v3460 = vadd.f32 0.0, %v3459
        %v3461 = vpop.f32.mrb[0].mxu0
        %v3462 = vpop.f32.mrb[0].mxu0
        %v3463 = vadd.f32 0.0, %v3462
        %v3464 = vpop.f32.mrb[0].mxu0
        %3465 = vmatprep.mubr.bf16.mxu0 0
        %3466 = vmatmul.mubr.bf16.gmra.mrb[0].mxu0 %v3303
        %v3467 = vpop.f32.mrb[0].mxu0
        %v3468 = vadd.f32 0.0, %v3467
        %v3469 = vpop.f32.mrb[0].mxu0
        %v3470 = vpop.f32.mrb[0].mxu0
        %v3471 = vadd.f32 0.0, %v3470
        %v3472 = vpop.f32.mrb[0].mxu0
        %3473 = vdwg.mxu0
        %v3474 = vadd.f32 %v3141, %v3340
        %v3475 = vadd.f32 %v3142, %v3343
        %v3476 = vadd.f32 %v3143, %v3348
        %v3477 = vadd.f32 %v3144, %v3351
        %v3478 = vadd.f32 %v3145, %v3356
        %v3479 = vadd.f32 %v3146, %v3359
        %v3480 = vadd.f32 %v3147, %v3364
        %v3481 = vadd.f32 %v3148, %v3367
        %v3482 = vadd.f32 %v3149, %v3372
        %v3483 = vadd.f32 %v3150, %v3375
        %v3484 = vadd.f32 %v3151, %v3380
        %v3485 = vadd.f32 %v3152, %v3383
        %v3486 = vadd.f32 %v3153, %v3388
        %v3487 = vadd.f32 %v3154, %v3391
        %v3488 = vadd.f32 %v3155, %v3396
        %v3489 = vadd.f32 %v3156, %v3399
        %v3490 = vadd.f32 %v3157, %v3404
        %v3491 = vadd.f32 %v3158, %v3407
        %v3492 = vadd.f32 %v3159, %v3412
        %v3493 = vadd.f32 %v3160, %v3415
        %v3494 = vadd.f32 %v3161, %v3420
        %v3495 = vadd.f32 %v3162, %v3423
        %v3496 = vadd.f32 %v3163, %v3428
        %v3497 = vadd.f32 %v3164, %v3431
        %v3498 = vadd.f32 %v3165, %v3436
        %v3499 = vadd.f32 %v3166, %v3439
        %v3500 = vadd.f32 %v3167, %v3444
        %v3501 = vadd.f32 %v3168, %v3447
        %v3502 = vadd.f32 %v3169, %v3452
        %v3503 = vadd.f32 %v3170, %v3455
        %v3504 = vadd.f32 %v3171, %v3460
        %v3505 = vadd.f32 %v3172, %v3463
        %v3506 = vadd.f32 %v3173, %v3468
        %v3507 = vadd.f32 %v3174, %v3471
        %s3508 = scalar_lea.vmem %s3, 112
        %v3509 = vld [vmem:[%s3508] sm:$0xf]
        %v3510 = vld [vmem:[%s3508 + $0x4] sm:$0xf]
        %v3511 = vld [vmem:[%s3508 + $0x8] sm:$0xf]
        %v3512 = vld [vmem:[%s3508 + $0xc] sm:$0xf]
        %v3517 = vunpack.c.l.b16 %v3509
        %v3518 = vunpack.c.l.b16 %v3510
        %v3519 = vunpack.c.l.b16 %v3511
        %v3520 = vunpack.c.l.b16 %v3512
        %v3521 = vpack.c.b16 %v3518, %v3517
        %v3522 = vpack.c.b16 %v3520, %v3519
        %v3525 = vsel %vm436, %v2747, 0
        %v3527 = vsel %vm436, %v2748, 0
        %v3529 = vsel %vm436, %v2749, 0
        %v3531 = vsel %vm436, %v2750, 0
        %v3533 = vsel %vm436, %v2751, 0
        %v3535 = vsel %vm436, %v2752, 0
        %v3537 = vsel %vm436, %v2753, 0
        %v3539 = vsel %vm436, %v2754, 0
        %v3541 = vsel %vm436, %v2755, 0
        %v3543 = vsel %vm436, %v2756, 0
        %v3545 = vsel %vm436, %v2757, 0
        %v3547 = vsel %vm436, %v2758, 0
        %v3549 = vsel %vm436, %v2759, 0
        %v3551 = vsel %vm436, %v2760, 0
        %v3553 = vsel %vm436, %v2761, 0
        %v3555 = vsel %vm436, %v2762, 0
        %v3557 = vsel %vm436, %v3176, 0
        %3559 = vmatprep.subr.bf16.mxu0 0
        %3560 = vmatpush1.bf16.msra.mxu0 %v3521
        %3561 = vmatprep.subr.bf16.mxu0 0
        %3562 = vmatpush1.bf16.msra.mxu0 %v3522
        %3563 = vmatprep.subr.bf16.mxu0 0
        %3564 = vmatpush1.bf16.msra.mxu0 0
        %3565 = vmatprep.subr.bf16.mxu0 0
        %3566 = vmatpush1.bf16.msra.mxu0 0
        %3567 = vmatprep.subr.bf16.mxu0 0
        %3568 = vmatpush1.bf16.msra.mxu0 0
        %3569 = vmatprep.subr.bf16.mxu0 0
        %3570 = vmatpush1.bf16.msra.mxu0 0
        %3571 = vmatprep.subr.bf16.mxu0 0
        %3572 = vmatpush1.bf16.msra.mxu0 0
        %3573 = vmatprep.subr.bf16.mxu0 0
        %3574 = vmatpush1.bf16.msra.mxu0 0
        %3575 = vmatprep.subr.bf16.mxu0 0
        %3576 = vmatpush1.bf16.msra.mxu0 0
        %3577 = vmatprep.subr.bf16.mxu0 0
        %3578 = vmatpush1.bf16.msra.mxu0 0
        %3579 = vmatprep.subr.bf16.mxu0 0
        %3580 = vmatpush1.bf16.msra.mxu0 0
        %3581 = vmatprep.subr.bf16.mxu0 0
        %3582 = vmatpush1.bf16.msra.mxu0 0
        %3583 = vmatprep.subr.bf16.mxu0 0
        %3584 = vmatpush1.bf16.msra.mxu0 0
        %3585 = vmatprep.subr.bf16.mxu0 0
        %3586 = vmatpush1.bf16.msra.mxu0 0
        %3587 = vmatprep.subr.bf16.mxu0 0
        %3588 = vmatpush1.bf16.msra.mxu0 0
        %3589 = vmatprep.subr.bf16.mxu0 0
        %3590 = vmatpush1.bf16.msra.mxu0 0
        %3591 = vmatprep.mubr.bf16.mxu0 0
        %3592 = vmatmul.mubr.bf16.gmra.mrb[0].mxu0 %v3525
        %v3593 = vpop.f32.mrb[0].mxu0
        %v3594 = vadd.f32 0.0, %v3593
        %v3595 = vpop.f32.mrb[0].mxu0
        %v3596 = vpop.f32.mrb[0].mxu0
        %v3597 = vadd.f32 0.0, %v3596
        %v3598 = vpop.f32.mrb[0].mxu0
        %3599 = vmatprep.mubr.bf16.mxu0 0
        %3600 = vmatmul.mubr.bf16.gmra.mrb[0].mxu0 %v3527
        %v3601 = vpop.f32.mrb[0].mxu0
        %v3602 = vadd.f32 0.0, %v3601
        %v3603 = vpop.f32.mrb[0].mxu0
        %v3604 = vpop.f32.mrb[0].mxu0
        %v3605 = vadd.f32 0.0, %v3604
        %v3606 = vpop.f32.mrb[0].mxu0
        %3607 = vmatprep.mubr.bf16.mxu0 0
        %3608 = vmatmul.mubr.bf16.gmra.mrb[0].mxu0 %v3529
        %v3609 = vpop.f32.mrb[0].mxu0
        %v3610 = vadd.f32 0.0, %v3609
        %v3611 = vpop.f32.mrb[0].mxu0
        %v3612 = vpop.f32.mrb[0].mxu0
        %v3613 = vadd.f32 0.0, %v3612
        %v3614 = vpop.f32.mrb[0].mxu0
        %3615 = vmatprep.mubr.bf16.mxu0 0
        %3616 = vmatmul.mubr.bf16.gmra.mrb[0].mxu0 %v3531
        %v3617 = vpop.f32.mrb[0].mxu0
        %v3618 = vadd.f32 0.0, %v3617
        %v3619 = vpop.f32.mrb[0].mxu0
        %v3620 = vpop.f32.mrb[0].mxu0
        %v3621 = vadd.f32 0.0, %v3620
        %v3622 = vpop.f32.mrb[0].mxu0
        %3623 = vmatprep.mubr.bf16.mxu0 0
        %3624 = vmatmul.mubr.bf16.gmra.mrb[0].mxu0 %v3533
        %v3625 = vpop.f32.mrb[0].mxu0
        %v3626 = vadd.f32 0.0, %v3625
        %v3627 = vpop.f32.mrb[0].mxu0
        %v3628 = vpop.f32.mrb[0].mxu0
        %v3629 = vadd.f32 0.0, %v3628
        %v3630 = vpop.f32.mrb[0].mxu0
        %3631 = vmatprep.mubr.bf16.mxu0 0
        %3632 = vmatmul.mubr.bf16.gmra.mrb[0].mxu0 %v3535
        %v3633 = vpop.f32.mrb[0].mxu0
        %v3634 = vadd.f32 0.0, %v3633
        %v3635 = vpop.f32.mrb[0].mxu0
        %v3636 = vpop.f32.mrb[0].mxu0
        %v3637 = vadd.f32 0.0, %v3636
        %v3638 = vpop.f32.mrb[0].mxu0
        %3639 = vmatprep.mubr.bf16.mxu0 0
        %3640 = vmatmul.mubr.bf16.gmra.mrb[0].mxu0 %v3537
        %v3641 = vpop.f32.mrb[0].mxu0
        %v3642 = vadd.f32 0.0, %v3641
        %v3643 = vpop.f32.mrb[0].mxu0
        %v3644 = vpop.f32.mrb[0].mxu0
        %v3645 = vadd.f32 0.0, %v3644
        %v3646 = vpop.f32.mrb[0].mxu0
        %3647 = vmatprep.mubr.bf16.mxu0 0
        %3648 = vmatmul.mubr.bf16.gmra.mrb[0].mxu0 %v3539
        %v3649 = vpop.f32.mrb[0].mxu0
        %v3650 = vadd.f32 0.0, %v3649
        %v3651 = vpop.f32.mrb[0].mxu0
        %v3652 = vpop.f32.mrb[0].mxu0
        %v3653 = vadd.f32 0.0, %v3652
        %v3654 = vpop.f32.mrb[0].mxu0
        %3655 = vmatprep.mubr.bf16.mxu0 0
        %3656 = vmatmul.mubr.bf16.gmra.mrb[0].mxu0 %v3541
        %v3657 = vpop.f32.mrb[0].mxu0
        %v3658 = vadd.f32 0.0, %v3657
        %v3659 = vpop.f32.mrb[0].mxu0
        %v3660 = vpop.f32.mrb[0].mxu0
        %v3661 = vadd.f32 0.0, %v3660
        %v3662 = vpop.f32.mrb[0].mxu0
        %3663 = vmatprep.mubr.bf16.mxu0 0
        %3664 = vmatmul.mubr.bf16.gmra.mrb[0].mxu0 %v3543
        %v3665 = vpop.f32.mrb[0].mxu0
        %v3666 = vadd.f32 0.0, %v3665
        %v3667 = vpop.f32.mrb[0].mxu0
        %v3668 = vpop.f32.mrb[0].mxu0
        %v3669 = vadd.f32 0.0, %v3668
        %v3670 = vpop.f32.mrb[0].mxu0
        %3671 = vmatprep.mubr.bf16.mxu0 0
        %3672 = vmatmul.mubr.bf16.gmra.mrb[0].mxu0 %v3545
        %v3673 = vpop.f32.mrb[0].mxu0
        %v3674 = vadd.f32 0.0, %v3673
        %v3675 = vpop.f32.mrb[0].mxu0
        %v3676 = vpop.f32.mrb[0].mxu0
        %v3677 = vadd.f32 0.0, %v3676
        %v3678 = vpop.f32.mrb[0].mxu0
        %3679 = vmatprep.mubr.bf16.mxu0 0
        %3680 = vmatmul.mubr.bf16.gmra.mrb[0].mxu0 %v3547
        %v3681 = vpop.f32.mrb[0].mxu0
        %v3682 = vadd.f32 0.0, %v3681
        %v3683 = vpop.f32.mrb[0].mxu0
        %v3684 = vpop.f32.mrb[0].mxu0
        %v3685 = vadd.f32 0.0, %v3684
        %v3686 = vpop.f32.mrb[0].mxu0
        %3687 = vmatprep.mubr.bf16.mxu0 0
        %3688 = vmatmul.mubr.bf16.gmra.mrb[0].mxu0 %v3549
        %v3689 = vpop.f32.mrb[0].mxu0
        %v3690 = vadd.f32 0.0, %v3689
        %v3691 = vpop.f32.mrb[0].mxu0
        %v3692 = vpop.f32.mrb[0].mxu0
        %v3693 = vadd.f32 0.0, %v3692
        %v3694 = vpop.f32.mrb[0].mxu0
        %3695 = vmatprep.mubr.bf16.mxu0 0
        %3696 = vmatmul.mubr.bf16.gmra.mrb[0].mxu0 %v3551
        %v3697 = vpop.f32.mrb[0].mxu0
        %v3698 = vadd.f32 0.0, %v3697
        %v3699 = vpop.f32.mrb[0].mxu0
        %v3700 = vpop.f32.mrb[0].mxu0
        %v3701 = vadd.f32 0.0, %v3700
        %v3702 = vpop.f32.mrb[0].mxu0
        %3703 = vmatprep.mubr.bf16.mxu0 0
        %3704 = vmatmul.mubr.bf16.gmra.mrb[0].mxu0 %v3553
        %v3705 = vpop.f32.mrb[0].mxu0
        %v3706 = vadd.f32 0.0, %v3705
        %v3707 = vpop.f32.mrb[0].mxu0
        %v3708 = vpop.f32.mrb[0].mxu0
        %v3709 = vadd.f32 0.0, %v3708
        %v3710 = vpop.f32.mrb[0].mxu0
        %3711 = vmatprep.mubr.bf16.mxu0 0
        %3712 = vmatmul.mubr.bf16.gmra.mrb[0].mxu0 %v3555
        %v3713 = vpop.f32.mrb[0].mxu0
        %v3714 = vadd.f32 0.0, %v3713
        %v3715 = vpop.f32.mrb[0].mxu0
        %v3716 = vpop.f32.mrb[0].mxu0
        %v3717 = vadd.f32 0.0, %v3716
        %v3718 = vpop.f32.mrb[0].mxu0
        %3719 = vmatprep.mubr.bf16.mxu0 0
        %3720 = vmatmul.mubr.bf16.gmra.mrb[0].mxu0 %v3557
        %v3721 = vpop.f32.mrb[0].mxu0
        %v3722 = vadd.f32 0.0, %v3721
        %v3723 = vpop.f32.mrb[0].mxu0
        %v3724 = vpop.f32.mrb[0].mxu0
        %v3725 = vadd.f32 0.0, %v3724
        %v3726 = vpop.f32.mrb[0].mxu0
        %3727 = vdwg.mxu0
        %v3728 = vadd.f32 %v3474, %v3594
        %v3729 = vadd.f32 %v3475, %v3597
        %v3730 = vadd.f32 %v3476, %v3602
        %v3731 = vadd.f32 %v3477, %v3605
        %v3732 = vadd.f32 %v3478, %v3610
        %v3733 = vadd.f32 %v3479, %v3613
        %v3734 = vadd.f32 %v3480, %v3618
        %v3735 = vadd.f32 %v3481, %v3621
        %v3736 = vadd.f32 %v3482, %v3626
        %v3737 = vadd.f32 %v3483, %v3629
        %v3738 = vadd.f32 %v3484, %v3634
        %v3739 = vadd.f32 %v3485, %v3637
        %v3740 = vadd.f32 %v3486, %v3642
        %v3741 = vadd.f32 %v3487, %v3645
        %v3742 = vadd.f32 %v3488, %v3650
        %v3743 = vadd.f32 %v3489, %v3653
        %v3744 = vadd.f32 %v3490, %v3658
        %v3745 = vadd.f32 %v3491, %v3661
        %v3746 = vadd.f32 %v3492, %v3666
        %v3747 = vadd.f32 %v3493, %v3669
        %v3748 = vadd.f32 %v3494, %v3674
        %v3749 = vadd.f32 %v3495, %v3677
        %v3750 = vadd.f32 %v3496, %v3682
        %v3751 = vadd.f32 %v3497, %v3685
        %v3752 = vadd.f32 %v3498, %v3690
        %v3753 = vadd.f32 %v3499, %v3693
        %v3754 = vadd.f32 %v3500, %v3698
        %v3755 = vadd.f32 %v3501, %v3701
        %v3756 = vadd.f32 %v3502, %v3706
        %v3757 = vadd.f32 %v3503, %v3709
        %v3758 = vadd.f32 %v3504, %v3714
        %v3759 = vadd.f32 %v3505, %v3717
        %v3760 = vadd.f32 %v3506, %v3722
        %v3761 = vadd.f32 %v3507, %v3725
        %v3762 = vld [vmem:[#allocation2 + $0x18] sm:$0xff]
        %v3763 = vld [vmem:[#allocation2 + $0x20] sm:$0xff]
        %v3764 = vld [vmem:[#allocation2 + $0x28] sm:$0xff]
        %v3765 = vld [vmem:[#allocation2 + $0x30] sm:$0xff]
        %v3766 = vld [vmem:[#allocation2 + $0x38] sm:$0xff]
        %v3767 = vld [vmem:[#allocation2 + $0x40] sm:$0xff]
        %v3768 = vld [vmem:[#allocation2 + $0x48] sm:$0xff]
        %v3769 = vld [vmem:[#allocation2 + $0x50] sm:$0xff]
        %v3770 = vld [vmem:[#allocation2 + $0x58] sm:$0xff]
        %v3771 = vld [vmem:[#allocation2 + $0x60] sm:$0xff]
        %v3772 = vld [vmem:[#allocation2 + $0x68] sm:$0xff]
        %v3773 = vld [vmem:[#allocation2 + $0x70] sm:$0xff]
        %v3774 = vld [vmem:[#allocation2 + $0x78] sm:$0xff]
        %v3775 = vld [vmem:[#allocation2 + $0x80] sm:$0xff]
        %v3776 = vld [vmem:[#allocation2 + $0x88] sm:$0xff]
        %v3777 = vld [vmem:[#allocation2 + $0x90] sm:$0xff]
        %v3778 = vld [vmem:[#allocation2 + $0x98] sm:$0xff]
        %v3779 = vld [vmem:[#allocation2 + $0xa0] sm:$0x1]
        %s3780 = scalar_lea.vmem %s3, 128
        %v3781 = vld [vmem:[%s3780] sm:$0xf]
        %v3782 = vld [vmem:[%s3780 + $0x4] sm:$0xf]
        %v3783 = vld [vmem:[%s3780 + $0x8] sm:$0xf]
        %v3784 = vld [vmem:[%s3780 + $0xc] sm:$0xf]
        %v3786 = vshrl.u32 %v3762, 16
        %v3788 = vshll.u32 %v3762, 16
        %v3790 = vrot.slane %v3788, 1
        %v3791 = vor.u32 %v3786, %v3790
        %v3793 = vshll.u32 %v3763, 16
        %v3795 = vrot.slane %v3793, 1
        %v3796 = vsel %vm1752, %v3791, %v3795
        %v3797 = vshrl.u32 %v3763, 16
        %v3799 = vor.u32 %v3797, %v3795
        %v3801 = vshll.u32 %v3764, 16
        %v3803 = vrot.slane %v3801, 1
        %v3804 = vsel %vm1752, %v3799, %v3803
        %v3805 = vshrl.u32 %v3764, 16
        %v3807 = vor.u32 %v3805, %v3803
        %v3809 = vshll.u32 %v3765, 16
        %v3811 = vrot.slane %v3809, 1
        %v3812 = vsel %vm1752, %v3807, %v3811
        %v3813 = vshrl.u32 %v3765, 16
        %v3815 = vor.u32 %v3813, %v3811
        %v3817 = vshll.u32 %v3766, 16
        %v3819 = vrot.slane %v3817, 1
        %v3820 = vsel %vm1752, %v3815, %v3819
        %v3821 = vshrl.u32 %v3766, 16
        %v3823 = vor.u32 %v3821, %v3819
        %v3825 = vshll.u32 %v3767, 16
        %v3827 = vrot.slane %v3825, 1
        %v3828 = vsel %vm1752, %v3823, %v3827
        %v3829 = vshrl.u32 %v3767, 16
        %v3831 = vor.u32 %v3829, %v3827
        %v3833 = vshll.u32 %v3768, 16
        %v3835 = vrot.slane %v3833, 1
        %v3836 = vsel %vm1752, %v3831, %v3835
        %v3837 = vshrl.u32 %v3768, 16
        %v3839 = vor.u32 %v3837, %v3835
        %v3841 = vshll.u32 %v3769, 16
        %v3843 = vrot.slane %v3841, 1
        %v3844 = vsel %vm1752, %v3839, %v3843
        %v3845 = vshrl.u32 %v3769, 16
        %v3847 = vor.u32 %v3845, %v3843
        %v3849 = vshll.u32 %v3770, 16
        %v3851 = vrot.slane %v3849, 1
        %v3852 = vsel %vm1752, %v3847, %v3851
        %v3853 = vshrl.u32 %v3770, 16
        %v3855 = vor.u32 %v3853, %v3851
        %v3857 = vshll.u32 %v3771, 16
        %v3859 = vrot.slane %v3857, 1
        %v3860 = vsel %vm1752, %v3855, %v3859
        %v3861 = vshrl.u32 %v3771, 16
        %v3863 = vor.u32 %v3861, %v3859
        %v3865 = vshll.u32 %v3772, 16
        %v3867 = vrot.slane %v3865, 1
        %v3868 = vsel %vm1752, %v3863, %v3867
        %v3869 = vshrl.u32 %v3772, 16
        %v3871 = vor.u32 %v3869, %v3867
        %v3873 = vshll.u32 %v3773, 16
        %v3875 = vrot.slane %v3873, 1
        %v3876 = vsel %vm1752, %v3871, %v3875
        %v3877 = vshrl.u32 %v3773, 16
        %v3879 = vor.u32 %v3877, %v3875
        %v3881 = vshll.u32 %v3774, 16
        %v3883 = vrot.slane %v3881, 1
        %v3884 = vsel %vm1752, %v3879, %v3883
        %v3885 = vshrl.u32 %v3774, 16
        %v3887 = vor.u32 %v3885, %v3883
        %v3889 = vshll.u32 %v3775, 16
        %v3891 = vrot.slane %v3889, 1
        %v3892 = vsel %vm1752, %v3887, %v3891
        %v3893 = vshrl.u32 %v3775, 16
        %v3895 = vor.u32 %v3893, %v3891
        %v3897 = vshll.u32 %v3776, 16
        %v3899 = vrot.slane %v3897, 1
        %v3900 = vsel %vm1752, %v3895, %v3899
        %v3901 = vshrl.u32 %v3776, 16
        %v3903 = vor.u32 %v3901, %v3899
        %v3905 = vshll.u32 %v3777, 16
        %v3907 = vrot.slane %v3905, 1
        %v3908 = vsel %vm1752, %v3903, %v3907
        %v3909 = vshrl.u32 %v3777, 16
        %v3911 = vor.u32 %v3909, %v3907
        %v3913 = vshll.u32 %v3778, 16
        %v3915 = vrot.slane %v3913, 1
        %v3916 = vsel %vm1752, %v3911, %v3915
        %v3917 = vshrl.u32 %v3778, 16
        %v3919 = vor.u32 %v3917, %v3915
        %v3921 = vshll.u32 %v3779, 16
        %v3923 = vrot.slane %v3921, 1
        %v3924 = vsel %vm1752, %v3919, %v3923
        %v3929 = vunpack.c.l.b16 %v3781
        %v3930 = vunpack.c.l.b16 %v3782
        %v3931 = vunpack.c.l.b16 %v3783
        %v3932 = vunpack.c.l.b16 %v3784
        %v3933 = vpack.c.b16 %v3930, %v3929
        %v3934 = vpack.c.b16 %v3932, %v3931
        %v3938 = vsel %vm436, %v3796, 0
        %v3941 = vsel %vm436, %v3804, 0
        %v3944 = vsel %vm436, %v3812, 0
        %v3947 = vsel %vm436, %v3820, 0
        %v3950 = vsel %vm436, %v3828, 0
        %v3953 = vsel %vm436, %v3836, 0
        %v3956 = vsel %vm436, %v3844, 0
        %v3959 = vsel %vm436, %v3852, 0
        %v3962 = vsel %vm436, %v3860, 0
        %v3965 = vsel %vm436, %v3868, 0
        %v3968 = vsel %vm436, %v3876, 0
        %v3971 = vsel %vm436, %v3884, 0
        %v3974 = vsel %vm436, %v3892, 0
        %v3977 = vsel %vm436, %v3900, 0
        %v3980 = vsel %vm436, %v3908, 0
        %v3983 = vsel %vm436, %v3916, 0
        %v3986 = vsel %vm436, %v3924, 0
        %3988 = vmatprep.subr.bf16.mxu0 0
        %3989 = vmatpush1.bf16.msra.mxu0 %v3933
        %3990 = vmatprep.subr.bf16.mxu0 0
        %3991 = vmatpush1.bf16.msra.mxu0 %v3934
        %3992 = vmatprep.subr.bf16.mxu0 0
        %3993 = vmatpush1.bf16.msra.mxu0 0
        %3994 = vmatprep.subr.bf16.mxu0 0
        %3995 = vmatpush1.bf16.msra.mxu0 0
        %3996 = vmatprep.subr.bf16.mxu0 0
        %3997 = vmatpush1.bf16.msra.mxu0 0
        %3998 = vmatprep.subr.bf16.mxu0 0
        %3999 = vmatpush1.bf16.msra.mxu0 0
        %4000 = vmatprep.subr.bf16.mxu0 0
        %4001 = vmatpush1.bf16.msra.mxu0 0
        %4002 = vmatprep.subr.bf16.mxu0 0
        %4003 = vmatpush1.bf16.msra.mxu0 0
        %4004 = vmatprep.subr.bf16.mxu0 0
        %4005 = vmatpush1.bf16.msra.mxu0 0
        %4006 = vmatprep.subr.bf16.mxu0 0
        %4007 = vmatpush1.bf16.msra.mxu0 0
        %4008 = vmatprep.subr.bf16.mxu0 0
        %4009 = vmatpush1.bf16.msra.mxu0 0
        %4010 = vmatprep.subr.bf16.mxu0 0
        %4011 = vmatpush1.bf16.msra.mxu0 0
        %4012 = vmatprep.subr.bf16.mxu0 0
        %4013 = vmatpush1.bf16.msra.mxu0 0
        %4014 = vmatprep.subr.bf16.mxu0 0
        %4015 = vmatpush1.bf16.msra.mxu0 0
        %4016 = vmatprep.subr.bf16.mxu0 0
        %4017 = vmatpush1.bf16.msra.mxu0 0
        %4018 = vmatprep.subr.bf16.mxu0 0
        %4019 = vmatpush1.bf16.msra.mxu0 0
        %4020 = vmatprep.mubr.bf16.mxu0 0
        %4021 = vmatmul.mubr.bf16.gmra.mrb[0].mxu0 %v3938
        %v4022 = vpop.f32.mrb[0].mxu0
        %v4023 = vadd.f32 0.0, %v4022
        %v4024 = vpop.f32.mrb[0].mxu0
        %v4025 = vpop.f32.mrb[0].mxu0
        %v4026 = vadd.f32 0.0, %v4025
        %v4027 = vpop.f32.mrb[0].mxu0
        %4028 = vmatprep.mubr.bf16.mxu0 0
        %4029 = vmatmul.mubr.bf16.gmra.mrb[0].mxu0 %v3941
        %v4030 = vpop.f32.mrb[0].mxu0
        %v4031 = vadd.f32 0.0, %v4030
        %v4032 = vpop.f32.mrb[0].mxu0
        %v4033 = vpop.f32.mrb[0].mxu0
        %v4034 = vadd.f32 0.0, %v4033
        %v4035 = vpop.f32.mrb[0].mxu0
        %4036 = vmatprep.mubr.bf16.mxu0 0
        %4037 = vmatmul.mubr.bf16.gmra.mrb[0].mxu0 %v3944
        %v4038 = vpop.f32.mrb[0].mxu0
        %v4039 = vadd.f32 0.0, %v4038
        %v4040 = vpop.f32.mrb[0].mxu0
        %v4041 = vpop.f32.mrb[0].mxu0
        %v4042 = vadd.f32 0.0, %v4041
        %v4043 = vpop.f32.mrb[0].mxu0
        %4044 = vmatprep.mubr.bf16.mxu0 0
        %4045 = vmatmul.mubr.bf16.gmra.mrb[0].mxu0 %v3947
        %v4046 = vpop.f32.mrb[0].mxu0
        %v4047 = vadd.f32 0.0, %v4046
        %v4048 = vpop.f32.mrb[0].mxu0
        %v4049 = vpop.f32.mrb[0].mxu0
        %v4050 = vadd.f32 0.0, %v4049
        %v4051 = vpop.f32.mrb[0].mxu0
        %4052 = vmatprep.mubr.bf16.mxu0 0
        %4053 = vmatmul.mubr.bf16.gmra.mrb[0].mxu0 %v3950
        %v4054 = vpop.f32.mrb[0].mxu0
        %v4055 = vadd.f32 0.0, %v4054
        %v4056 = vpop.f32.mrb[0].mxu0
        %v4057 = vpop.f32.mrb[0].mxu0
        %v4058 = vadd.f32 0.0, %v4057
        %v4059 = vpop.f32.mrb[0].mxu0
        %4060 = vmatprep.mubr.bf16.mxu0 0
        %4061 = vmatmul.mubr.bf16.gmra.mrb[0].mxu0 %v3953
        %v4062 = vpop.f32.mrb[0].mxu0
        %v4063 = vadd.f32 0.0, %v4062
        %v4064 = vpop.f32.mrb[0].mxu0
        %v4065 = vpop.f32.mrb[0].mxu0
        %v4066 = vadd.f32 0.0, %v4065
        %v4067 = vpop.f32.mrb[0].mxu0
        %4068 = vmatprep.mubr.bf16.mxu0 0
        %4069 = vmatmul.mubr.bf16.gmra.mrb[0].mxu0 %v3956
        %v4070 = vpop.f32.mrb[0].mxu0
        %v4071 = vadd.f32 0.0, %v4070
        %v4072 = vpop.f32.mrb[0].mxu0
        %v4073 = vpop.f32.mrb[0].mxu0
        %v4074 = vadd.f32 0.0, %v4073
        %v4075 = vpop.f32.mrb[0].mxu0
        %4076 = vmatprep.mubr.bf16.mxu0 0
        %4077 = vmatmul.mubr.bf16.gmra.mrb[0].mxu0 %v3959
        %v4078 = vpop.f32.mrb[0].mxu0
        %v4079 = vadd.f32 0.0, %v4078
        %v4080 = vpop.f32.mrb[0].mxu0
        %v4081 = vpop.f32.mrb[0].mxu0
        %v4082 = vadd.f32 0.0, %v4081
        %v4083 = vpop.f32.mrb[0].mxu0
        %4084 = vmatprep.mubr.bf16.mxu0 0
        %4085 = vmatmul.mubr.bf16.gmra.mrb[0].mxu0 %v3962
        %v4086 = vpop.f32.mrb[0].mxu0
        %v4087 = vadd.f32 0.0, %v4086
        %v4088 = vpop.f32.mrb[0].mxu0
        %v4089 = vpop.f32.mrb[0].mxu0
        %v4090 = vadd.f32 0.0, %v4089
        %v4091 = vpop.f32.mrb[0].mxu0
        %4092 = vmatprep.mubr.bf16.mxu0 0
        %4093 = vmatmul.mubr.bf16.gmra.mrb[0].mxu0 %v3965
        %v4094 = vpop.f32.mrb[0].mxu0
        %v4095 = vadd.f32 0.0, %v4094
        %v4096 = vpop.f32.mrb[0].mxu0
        %v4097 = vpop.f32.mrb[0].mxu0
        %v4098 = vadd.f32 0.0, %v4097
        %v4099 = vpop.f32.mrb[0].mxu0
        %4100 = vmatprep.mubr.bf16.mxu0 0
        %4101 = vmatmul.mubr.bf16.gmra.mrb[0].mxu0 %v3968
        %v4102 = vpop.f32.mrb[0].mxu0
        %v4103 = vadd.f32 0.0, %v4102
        %v4104 = vpop.f32.mrb[0].mxu0
        %v4105 = vpop.f32.mrb[0].mxu0
        %v4106 = vadd.f32 0.0, %v4105
        %v4107 = vpop.f32.mrb[0].mxu0
        %4108 = vmatprep.mubr.bf16.mxu0 0
        %4109 = vmatmul.mubr.bf16.gmra.mrb[0].mxu0 %v3971
        %v4110 = vpop.f32.mrb[0].mxu0
        %v4111 = vadd.f32 0.0, %v4110
        %v4112 = vpop.f32.mrb[0].mxu0
        %v4113 = vpop.f32.mrb[0].mxu0
        %v4114 = vadd.f32 0.0, %v4113
        %v4115 = vpop.f32.mrb[0].mxu0
        %4116 = vmatprep.mubr.bf16.mxu0 0
        %4117 = vmatmul.mubr.bf16.gmra.mrb[0].mxu0 %v3974
        %v4118 = vpop.f32.mrb[0].mxu0
        %v4119 = vadd.f32 0.0, %v4118
        %v4120 = vpop.f32.mrb[0].mxu0
        %v4121 = vpop.f32.mrb[0].mxu0
        %v4122 = vadd.f32 0.0, %v4121
        %v4123 = vpop.f32.mrb[0].mxu0
        %4124 = vmatprep.mubr.bf16.mxu0 0
        %4125 = vmatmul.mubr.bf16.gmra.mrb[0].mxu0 %v3977
        %v4126 = vpop.f32.mrb[0].mxu0
        %v4127 = vadd.f32 0.0, %v4126
        %v4128 = vpop.f32.mrb[0].mxu0
        %v4129 = vpop.f32.mrb[0].mxu0
        %v4130 = vadd.f32 0.0, %v4129
        %v4131 = vpop.f32.mrb[0].mxu0
        %4132 = vmatprep.mubr.bf16.mxu0 0
        %4133 = vmatmul.mubr.bf16.gmra.mrb[0].mxu0 %v3980
        %v4134 = vpop.f32.mrb[0].mxu0
        %v4135 = vadd.f32 0.0, %v4134
        %v4136 = vpop.f32.mrb[0].mxu0
        %v4137 = vpop.f32.mrb[0].mxu0
        %v4138 = vadd.f32 0.0, %v4137
        %v4139 = vpop.f32.mrb[0].mxu0
        %4140 = vmatprep.mubr.bf16.mxu0 0
        %4141 = vmatmul.mubr.bf16.gmra.mrb[0].mxu0 %v3983
        %v4142 = vpop.f32.mrb[0].mxu0
        %v4143 = vadd.f32 0.0, %v4142
        %v4144 = vpop.f32.mrb[0].mxu0
        %v4145 = vpop.f32.mrb[0].mxu0
        %v4146 = vadd.f32 0.0, %v4145
        %v4147 = vpop.f32.mrb[0].mxu0
        %4148 = vmatprep.mubr.bf16.mxu0 0
        %4149 = vmatmul.mubr.bf16.gmra.mrb[0].mxu0 %v3986
        %v4150 = vpop.f32.mrb[0].mxu0
        %v4151 = vadd.f32 0.0, %v4150
        %v4152 = vpop.f32.mrb[0].mxu0
        %v4153 = vpop.f32.mrb[0].mxu0
        %v4154 = vadd.f32 0.0, %v4153
        %v4155 = vpop.f32.mrb[0].mxu0
        %4156 = vdwg.mxu0
        %v4157 = vadd.f32 %v3728, %v4023
        %v4158 = vadd.f32 %v3729, %v4026
        %v4159 = vadd.f32 %v3730, %v4031
        %v4160 = vadd.f32 %v3731, %v4034
        %v4161 = vadd.f32 %v3732, %v4039
        %v4162 = vadd.f32 %v3733, %v4042
        %v4163 = vadd.f32 %v3734, %v4047
        %v4164 = vadd.f32 %v3735, %v4050
        %v4165 = vadd.f32 %v3736, %v4055
        %v4166 = vadd.f32 %v3737, %v4058
        %v4167 = vadd.f32 %v3738, %v4063
        %v4168 = vadd.f32 %v3739, %v4066
        %v4169 = vadd.f32 %v3740, %v4071
        %v4170 = vadd.f32 %v3741, %v4074
        %v4171 = vadd.f32 %v3742, %v4079
        %v4172 = vadd.f32 %v3743, %v4082
        %v4173 = vadd.f32 %v3744, %v4087
        %v4174 = vadd.f32 %v3745, %v4090
        %v4175 = vadd.f32 %v3746, %v4095
        %v4176 = vadd.f32 %v3747, %v4098
        %v4177 = vadd.f32 %v3748, %v4103
        %v4178 = vadd.f32 %v3749, %v4106
        %v4179 = vadd.f32 %v3750, %v4111
        %v4180 = vadd.f32 %v3751, %v4114
        %v4181 = vadd.f32 %v3752, %v4119
        %v4182 = vadd.f32 %v3753, %v4122
        %v4183 = vadd.f32 %v3754, %v4127
        %v4184 = vadd.f32 %v3755, %v4130
        %v4185 = vadd.f32 %v3756, %v4135
        %v4186 = vadd.f32 %v3757, %v4138
        %v4187 = vadd.f32 %v3758, %v4143
        %v4188 = vadd.f32 %v3759, %v4146
        %v4189 = vadd.f32 %v3760, %v4151
        %v4190 = vadd.f32 %v3761, %v4154
        %v4191 = vld [vmem:[%s4] sm:$0x1]
        %v4193 = vlaneseq
        %v4194 = vshrl.u32 %v4193, 7
        %v4195 = vsub.s32 0, %v4194
        %v4196 = vrot.slane %v4191, %v4195
        %v4198 = vadd.f32 %v4157, %v4196
        %v4199 = vadd.f32 %v4158, %v4196
        %v4200 = vadd.f32 %v4159, %v4196
        %v4201 = vadd.f32 %v4160, %v4196
        %v4202 = vadd.f32 %v4161, %v4196
        %v4203 = vadd.f32 %v4162, %v4196
        %v4204 = vadd.f32 %v4163, %v4196
        %v4205 = vadd.f32 %v4164, %v4196
        %v4206 = vadd.f32 %v4165, %v4196
        %v4207 = vadd.f32 %v4166, %v4196
        %v4208 = vadd.f32 %v4167, %v4196
        %v4209 = vadd.f32 %v4168, %v4196
        %v4210 = vadd.f32 %v4169, %v4196
        %v4211 = vadd.f32 %v4170, %v4196
        %v4212 = vadd.f32 %v4171, %v4196
        %v4213 = vadd.f32 %v4172, %v4196
        %v4214 = vadd.f32 %v4173, %v4196
        %v4215 = vadd.f32 %v4174, %v4196
        %v4216 = vadd.f32 %v4175, %v4196
        %v4217 = vadd.f32 %v4176, %v4196
        %v4218 = vadd.f32 %v4177, %v4196
        %v4219 = vadd.f32 %v4178, %v4196
        %v4220 = vadd.f32 %v4179, %v4196
        %v4221 = vadd.f32 %v4180, %v4196
        %v4222 = vadd.f32 %v4181, %v4196
        %v4223 = vadd.f32 %v4182, %v4196
        %v4224 = vadd.f32 %v4183, %v4196
        %v4225 = vadd.f32 %v4184, %v4196
        %v4226 = vadd.f32 %v4185, %v4196
        %v4227 = vadd.f32 %v4186, %v4196
        %v4228 = vadd.f32 %v4187, %v4196
        %v4229 = vadd.f32 %v4188, %v4196
        %v4230 = vadd.f32 %v4189, %v4196
        %v4231 = vadd.f32 %v4190, %v4196
        %v4232 = vmax.f32 %v4198, 0.0
        %v4233 = vmax.f32 %v4199, 0.0
        %v4234 = vmax.f32 %v4200, 0.0
        %v4235 = vmax.f32 %v4201, 0.0
        %v4236 = vmax.f32 %v4202, 0.0
        %v4237 = vmax.f32 %v4203, 0.0
        %v4238 = vmax.f32 %v4204, 0.0
        %v4239 = vmax.f32 %v4205, 0.0
        %v4240 = vmax.f32 %v4206, 0.0
        %v4241 = vmax.f32 %v4207, 0.0
        %v4242 = vmax.f32 %v4208, 0.0
        %v4243 = vmax.f32 %v4209, 0.0
        %v4244 = vmax.f32 %v4210, 0.0
        %v4245 = vmax.f32 %v4211, 0.0
        %v4246 = vmax.f32 %v4212, 0.0
        %v4247 = vmax.f32 %v4213, 0.0
        %v4248 = vmax.f32 %v4214, 0.0
        %v4249 = vmax.f32 %v4215, 0.0
        %v4250 = vmax.f32 %v4216, 0.0
        %v4251 = vmax.f32 %v4217, 0.0
        %v4252 = vmax.f32 %v4218, 0.0
        %v4253 = vmax.f32 %v4219, 0.0
        %v4254 = vmax.f32 %v4220, 0.0
        %v4255 = vmax.f32 %v4221, 0.0
        %v4256 = vmax.f32 %v4222, 0.0
        %v4257 = vmax.f32 %v4223, 0.0
        %v4258 = vmax.f32 %v4224, 0.0
        %v4259 = vmax.f32 %v4225, 0.0
        %v4260 = vmax.f32 %v4226, 0.0
        %v4261 = vmax.f32 %v4227, 0.0
        %v4262 = vmax.f32 %v4228, 0.0
        %v4263 = vmax.f32 %v4229, 0.0
        %v4264 = vmax.f32 %v4230, 0.0
        %v4265 = vmax.f32 %v4231, 0.0
        %v4266 = vmul.f32 %v4232, %v879
        %v4267 = vmul.f32 %v4233, %v884
        %v4268 = vmul.f32 %v4234, %v889
        %v4269 = vmul.f32 %v4235, %v894
        %v4270 = vmul.f32 %v4236, %v899
        %v4271 = vmul.f32 %v4237, %v904
        %v4272 = vmul.f32 %v4238, %v909
        %v4273 = vmul.f32 %v4239, %v914
        %v4274 = vmul.f32 %v4240, %v919
        %v4275 = vmul.f32 %v4241, %v924
        %v4276 = vmul.f32 %v4242, %v929
        %v4277 = vmul.f32 %v4243, %v934
        %v4278 = vmul.f32 %v4244, %v939
        %v4279 = vmul.f32 %v4245, %v944
        %v4280 = vmul.f32 %v4246, %v949
        %v4281 = vmul.f32 %v4247, %v954
        %v4282 = vmul.f32 %v4248, %v959
        %v4283 = vmul.f32 %v4249, %v964
        %v4284 = vmul.f32 %v4250, %v969
        %v4285 = vmul.f32 %v4251, %v974
        %v4286 = vmul.f32 %v4252, %v979
        %v4287 = vmul.f32 %v4253, %v984
        %v4288 = vmul.f32 %v4254, %v989
        %v4289 = vmul.f32 %v4255, %v994
        %v4290 = vmul.f32 %v4256, %v999
        %v4291 = vmul.f32 %v4257, %v1004
        %v4292 = vmul.f32 %v4258, %v1009
        %v4293 = vmul.f32 %v4259, %v1014
        %v4294 = vmul.f32 %v4260, %v1019
        %v4295 = vmul.f32 %v4261, %v1024
        %v4296 = vmul.f32 %v4262, %v1029
        %v4297 = vmul.f32 %v4263, %v1034
        %v4298 = vmul.f32 %v4264, %v1039
        %v4299 = vmul.f32 %v4265, %v1044
        %v4300 = vpack.c.bf16 %v4267, %v4266
        %v4301 = vpack.c.bf16 %v4269, %v4268
        %v4302 = vpack.c.bf16 %v4271, %v4270
        %v4303 = vpack.c.bf16 %v4273, %v4272
        %v4304 = vpack.c.bf16 %v4275, %v4274
        %v4305 = vpack.c.bf16 %v4277, %v4276
        %v4306 = vpack.c.bf16 %v4279, %v4278
        %v4307 = vpack.c.bf16 %v4281, %v4280
        %v4308 = vpack.c.bf16 %v4283, %v4282
        %v4309 = vpack.c.bf16 %v4285, %v4284
        %v4310 = vpack.c.bf16 %v4287, %v4286
        %v4311 = vpack.c.bf16 %v4289, %v4288
        %v4312 = vpack.c.bf16 %v4291, %v4290
        %v4313 = vpack.c.bf16 %v4293, %v4292
        %v4314 = vpack.c.bf16 %v4295, %v4294
        %v4315 = vpack.c.bf16 %v4297, %v4296
        %v4316 = vpack.c.bf16 %v4299, %v4298
        %4317 = vst.msk [vmem:[#allocation3 + $0x10] sm:$0xff] %vm441, %v4300
        %4318 = vst.msk [vmem:[#allocation3 + $0x18] sm:$0xff] %vm441, %v4301
        %4319 = vst.msk [vmem:[#allocation3 + $0x20] sm:$0xff] %vm441, %v4302
        %4320 = vst.msk [vmem:[#allocation3 + $0x28] sm:$0xff] %vm441, %v4303
        %4321 = vst.msk [vmem:[#allocation3 + $0x30] sm:$0xff] %vm441, %v4304
        %4322 = vst.msk [vmem:[#allocation3 + $0x38] sm:$0xff] %vm441, %v4305
        %4323 = vst.msk [vmem:[#allocation3 + $0x40] sm:$0xff] %vm441, %v4306
        %4324 = vst.msk [vmem:[#allocation3 + $0x48] sm:$0xff] %vm441, %v4307
        %4325 = vst.msk [vmem:[#allocation3 + $0x50] sm:$0xff] %vm441, %v4308
        %4326 = vst.msk [vmem:[#allocation3 + $0x58] sm:$0xff] %vm441, %v4309
        %4327 = vst.msk [vmem:[#allocation3 + $0x60] sm:$0xff] %vm441, %v4310
        %4328 = vst.msk [vmem:[#allocation3 + $0x68] sm:$0xff] %vm441, %v4311
        %4329 = vst.msk [vmem:[#allocation3 + $0x70] sm:$0xff] %vm441, %v4312
        %4330 = vst.msk [vmem:[#allocation3 + $0x78] sm:$0xff] %vm441, %v4313
        %4331 = vst.msk [vmem:[#allocation3 + $0x80] sm:$0xff] %vm441, %v4314
        %4332 = vst.msk [vmem:[#allocation3 + $0x88] sm:$0xff] %vm441, %v4315
        %4333 = vst.msk [vmem:[#allocation3 + $0x90] sm:$0xff] %vm441, %v4316
        %v4334 = vld [vmem:[#allocation3] sm:$0x80]
        %v4335 = vld [vmem:[#allocation3 + $0x8] sm:$0xff]
        %v4336 = vld [vmem:[#allocation3 + $0x10] sm:$0xff]
        %v4337 = vld [vmem:[#allocation3 + $0x18] sm:$0xff]
        %v4338 = vld [vmem:[#allocation3 + $0x20] sm:$0xff]
        %v4339 = vld [vmem:[#allocation3 + $0x28] sm:$0xff]
        %v4340 = vld [vmem:[#allocation3 + $0x30] sm:$0xff]
        %v4341 = vld [vmem:[#allocation3 + $0x38] sm:$0xff]
        %v4342 = vld [vmem:[#allocation3 + $0x40] sm:$0xff]
        %v4343 = vld [vmem:[#allocation3 + $0x48] sm:$0xff]
        %v4344 = vld [vmem:[#allocation3 + $0x50] sm:$0xff]
        %v4345 = vld [vmem:[#allocation3 + $0x58] sm:$0xff]
        %v4346 = vld [vmem:[#allocation3 + $0x60] sm:$0xff]
        %v4347 = vld [vmem:[#allocation3 + $0x68] sm:$0xff]
        %v4348 = vld [vmem:[#allocation3 + $0x70] sm:$0xff]
        %v4349 = vld [vmem:[#allocation3 + $0x78] sm:$0xff]
        %v4350 = vld [vmem:[#allocation3 + $0x80] sm:$0xff]
        %v4351 = vld [vmem:[#allocation3 + $0x88] sm:$0xff]
        %v4352 = vld [vmem:[%s5] sm:$0xf]
        %v4353 = vld [vmem:[%s5 + $0x4] sm:$0xf]
        %v4354 = vld [vmem:[%s5 + $0x8] sm:$0xf]
        %v4355 = vld [vmem:[%s5 + $0xc] sm:$0xf]
        %v4356 = vld [vmem:[%s5 + $0x10] sm:$0xf]
        %v4357 = vld [vmem:[%s5 + $0x14] sm:$0xf]
        %v4358 = vld [vmem:[%s5 + $0x18] sm:$0xf]
        %v4359 = vld [vmem:[%s5 + $0x1c] sm:$0xf]
        %s4360 = scalar_lea.vmem %s5, 32
        %v4361 = vld [vmem:[%s4360] sm:$0xf]
        %v4362 = vld [vmem:[%s4360 + $0x4] sm:$0xf]
        %v4363 = vld [vmem:[%s4360 + $0x8] sm:$0xf]
        %v4364 = vld [vmem:[%s4360 + $0xc] sm:$0xf]
        %v4365 = vld [vmem:[%s4360 + $0x10] sm:$0xf]
        %v4366 = vld [vmem:[%s4360 + $0x14] sm:$0xf]
        %v4367 = vld [vmem:[%s4360 + $0x18] sm:$0xf]
        %v4368 = vld [vmem:[%s4360 + $0x1c] sm:$0xf]
        %v4377 = vunpack.c.l.b16 %v4361
        %v4378 = vunpack.c.l.b16 %v4362
        %v4379 = vunpack.c.l.b16 %v4363
        %v4380 = vunpack.c.l.b16 %v4364
        %v4381 = vunpack.c.l.b16 %v4365
        %v4382 = vunpack.c.l.b16 %v4366
        %v4383 = vunpack.c.l.b16 %v4367
        %v4384 = vunpack.c.l.b16 %v4368
        %v4385 = vpack.c.b16 %v4378, %v4377
        %v4386 = vpack.c.b16 %v4380, %v4379
        %v4387 = vpack.c.b16 %v4382, %v4381
        %v4388 = vpack.c.b16 %v4384, %v4383
        %v4394 = vsel %vm441, %v4335, 0
        %v4397 = vsel %vm441, %v4336, 0
        %v4400 = vsel %vm441, %v4337, 0
        %v4403 = vsel %vm441, %v4338, 0
        %v4406 = vsel %vm441, %v4339, 0
        %v4409 = vsel %vm441, %v4340, 0
        %v4412 = vsel %vm441, %v4341, 0
        %v4415 = vsel %vm441, %v4342, 0
        %v4418 = vsel %vm441, %v4343, 0
        %v4421 = vsel %vm441, %v4344, 0
        %v4424 = vsel %vm441, %v4345, 0
        %v4427 = vsel %vm441, %v4346, 0
        %v4430 = vsel %vm441, %v4347, 0
        %v4433 = vsel %vm441, %v4348, 0
        %v4436 = vsel %vm441, %v4349, 0
        %v4439 = vsel %vm441, %v4350, 0
        %v4442 = vsel %vm441, %v4351, 0
        %4444 = vmatprep.subr.bf16.mxu0 0
        %4445 = vmatpush1.bf16.msra.mxu0 %v4385
        %4446 = vmatprep.subr.bf16.mxu0 0
        %4447 = vmatpush1.bf16.msra.mxu0 %v4386
        %4448 = vmatprep.subr.bf16.mxu0 0
        %4449 = vmatpush1.bf16.msra.mxu0 %v4387
        %4450 = vmatprep.subr.bf16.mxu0 0
        %4451 = vmatpush1.bf16.msra.mxu0 %v4388
        %4452 = vmatprep.subr.bf16.mxu0 0
        %4453 = vmatpush1.bf16.msra.mxu0 0
        %4454 = vmatprep.subr.bf16.mxu0 0
        %4455 = vmatpush1.bf16.msra.mxu0 0
        %4456 = vmatprep.subr.bf16.mxu0 0
        %4457 = vmatpush1.bf16.msra.mxu0 0
        %4458 = vmatprep.subr.bf16.mxu0 0
        %4459 = vmatpush1.bf16.msra.mxu0 0
        %4460 = vmatprep.subr.bf16.mxu0 0
        %4461 = vmatpush1.bf16.msra.mxu0 0
        %4462 = vmatprep.subr.bf16.mxu0 0
        %4463 = vmatpush1.bf16.msra.mxu0 0
        %4464 = vmatprep.subr.bf16.mxu0 0
        %4465 = vmatpush1.bf16.msra.mxu0 0
        %4466 = vmatprep.subr.bf16.mxu0 0
        %4467 = vmatpush1.bf16.msra.mxu0 0
        %4468 = vmatprep.subr.bf16.mxu0 0
        %4469 = vmatpush1.bf16.msra.mxu0 0
        %4470 = vmatprep.subr.bf16.mxu0 0
        %4471 = vmatpush1.bf16.msra.mxu0 0
        %4472 = vmatprep.subr.bf16.mxu0 0
        %4473 = vmatpush1.bf16.msra.mxu0 0
        %4474 = vmatprep.subr.bf16.mxu0 0
        %4475 = vmatpush1.bf16.msra.mxu0 0
        %4476 = vmatprep.mubr.bf16.mxu0 0
        %4477 = vmatmul.mubr.bf16.gmra.mrb[0].mxu0 %v4394
        %v4478 = vpop.f32.mrb[0].mxu0
        %v4479 = vadd.f32 0.0, %v4478
        %v4480 = vpop.f32.mrb[0].mxu0
        %v4481 = vpop.f32.mrb[0].mxu0
        %v4482 = vadd.f32 0.0, %v4481
        %v4483 = vpop.f32.mrb[0].mxu0
        %4484 = vmatprep.mubr.bf16.mxu0 0
        %4485 = vmatmul.mubr.bf16.gmra.mrb[0].mxu0 %v4397
        %v4486 = vpop.f32.mrb[0].mxu0
        %v4487 = vadd.f32 0.0, %v4486
        %v4488 = vpop.f32.mrb[0].mxu0
        %v4489 = vpop.f32.mrb[0].mxu0
        %v4490 = vadd.f32 0.0, %v4489
        %v4491 = vpop.f32.mrb[0].mxu0
        %4492 = vmatprep.mubr.bf16.mxu0 0
        %4493 = vmatmul.mubr.bf16.gmra.mrb[0].mxu0 %v4400
        %v4494 = vpop.f32.mrb[0].mxu0
        %v4495 = vadd.f32 0.0, %v4494
        %v4496 = vpop.f32.mrb[0].mxu0
        %v4497 = vpop.f32.mrb[0].mxu0
        %v4498 = vadd.f32 0.0, %v4497
        %v4499 = vpop.f32.mrb[0].mxu0
        %4500 = vmatprep.mubr.bf16.mxu0 0
        %4501 = vmatmul.mubr.bf16.gmra.mrb[0].mxu0 %v4403
        %v4502 = vpop.f32.mrb[0].mxu0
        %v4503 = vadd.f32 0.0, %v4502
        %v4504 = vpop.f32.mrb[0].mxu0
        %v4505 = vpop.f32.mrb[0].mxu0
        %v4506 = vadd.f32 0.0, %v4505
        %v4507 = vpop.f32.mrb[0].mxu0
        %4508 = vmatprep.mubr.bf16.mxu0 0
        %4509 = vmatmul.mubr.bf16.gmra.mrb[0].mxu0 %v4406
        %v4510 = vpop.f32.mrb[0].mxu0
        %v4511 = vadd.f32 0.0, %v4510
        %v4512 = vpop.f32.mrb[0].mxu0
        %v4513 = vpop.f32.mrb[0].mxu0
        %v4514 = vadd.f32 0.0, %v4513
        %v4515 = vpop.f32.mrb[0].mxu0
        %4516 = vmatprep.mubr.bf16.mxu0 0
        %4517 = vmatmul.mubr.bf16.gmra.mrb[0].mxu0 %v4409
        %v4518 = vpop.f32.mrb[0].mxu0
        %v4519 = vadd.f32 0.0, %v4518
        %v4520 = vpop.f32.mrb[0].mxu0
        %v4521 = vpop.f32.mrb[0].mxu0
        %v4522 = vadd.f32 0.0, %v4521
        %v4523 = vpop.f32.mrb[0].mxu0
        %4524 = vmatprep.mubr.bf16.mxu0 0
        %4525 = vmatmul.mubr.bf16.gmra.mrb[0].mxu0 %v4412
        %v4526 = vpop.f32.mrb[0].mxu0
        %v4527 = vadd.f32 0.0, %v4526
        %v4528 = vpop.f32.mrb[0].mxu0
        %v4529 = vpop.f32.mrb[0].mxu0
        %v4530 = vadd.f32 0.0, %v4529
        %v4531 = vpop.f32.mrb[0].mxu0
        %4532 = vmatprep.mubr.bf16.mxu0 0
        %4533 = vmatmul.mubr.bf16.gmra.mrb[0].mxu0 %v4415
        %v4534 = vpop.f32.mrb[0].mxu0
        %v4535 = vadd.f32 0.0, %v4534
        %v4536 = vpop.f32.mrb[0].mxu0
        %v4537 = vpop.f32.mrb[0].mxu0
        %v4538 = vadd.f32 0.0, %v4537
        %v4539 = vpop.f32.mrb[0].mxu0
        %4540 = vmatprep.mubr.bf16.mxu0 0
        %4541 = vmatmul.mubr.bf16.gmra.mrb[0].mxu0 %v4418
        %v4542 = vpop.f32.mrb[0].mxu0
        %v4543 = vadd.f32 0.0, %v4542
        %v4544 = vpop.f32.mrb[0].mxu0
        %v4545 = vpop.f32.mrb[0].mxu0
        %v4546 = vadd.f32 0.0, %v4545
        %v4547 = vpop.f32.mrb[0].mxu0
        %4548 = vmatprep.mubr.bf16.mxu0 0
        %4549 = vmatmul.mubr.bf16.gmra.mrb[0].mxu0 %v4421
        %v4550 = vpop.f32.mrb[0].mxu0
        %v4551 = vadd.f32 0.0, %v4550
        %v4552 = vpop.f32.mrb[0].mxu0
        %v4553 = vpop.f32.mrb[0].mxu0
        %v4554 = vadd.f32 0.0, %v4553
        %v4555 = vpop.f32.mrb[0].mxu0
        %4556 = vmatprep.mubr.bf16.mxu0 0
        %4557 = vmatmul.mubr.bf16.gmra.mrb[0].mxu0 %v4424
        %v4558 = vpop.f32.mrb[0].mxu0
        %v4559 = vadd.f32 0.0, %v4558
        %v4560 = vpop.f32.mrb[0].mxu0
        %v4561 = vpop.f32.mrb[0].mxu0
        %v4562 = vadd.f32 0.0, %v4561
        %v4563 = vpop.f32.mrb[0].mxu0
        %4564 = vmatprep.mubr.bf16.mxu0 0
        %4565 = vmatmul.mubr.bf16.gmra.mrb[0].mxu0 %v4427
        %v4566 = vpop.f32.mrb[0].mxu0
        %v4567 = vadd.f32 0.0, %v4566
        %v4568 = vpop.f32.mrb[0].mxu0
        %v4569 = vpop.f32.mrb[0].mxu0
        %v4570 = vadd.f32 0.0, %v4569
        %v4571 = vpop.f32.mrb[0].mxu0
        %4572 = vmatprep.mubr.bf16.mxu0 0
        %4573 = vmatmul.mubr.bf16.gmra.mrb[0].mxu0 %v4430
        %v4574 = vpop.f32.mrb[0].mxu0
        %v4575 = vadd.f32 0.0, %v4574
        %v4576 = vpop.f32.mrb[0].mxu0
        %v4577 = vpop.f32.mrb[0].mxu0
        %v4578 = vadd.f32 0.0, %v4577
        %v4579 = vpop.f32.mrb[0].mxu0
        %4580 = vmatprep.mubr.bf16.mxu0 0
        %4581 = vmatmul.mubr.bf16.gmra.mrb[0].mxu0 %v4433
        %v4582 = vpop.f32.mrb[0].mxu0
        %v4583 = vadd.f32 0.0, %v4582
        %v4584 = vpop.f32.mrb[0].mxu0
        %v4585 = vpop.f32.mrb[0].mxu0
        %v4586 = vadd.f32 0.0, %v4585
        %v4587 = vpop.f32.mrb[0].mxu0
        %4588 = vmatprep.mubr.bf16.mxu0 0
        %4589 = vmatmul.mubr.bf16.gmra.mrb[0].mxu0 %v4436
        %v4590 = vpop.f32.mrb[0].mxu0
        %v4591 = vadd.f32 0.0, %v4590
        %v4592 = vpop.f32.mrb[0].mxu0
        %v4593 = vpop.f32.mrb[0].mxu0
        %v4594 = vadd.f32 0.0, %v4593
        %v4595 = vpop.f32.mrb[0].mxu0
        %4596 = vmatprep.mubr.bf16.mxu0 0
        %4597 = vmatmul.mubr.bf16.gmra.mrb[0].mxu0 %v4439
        %v4598 = vpop.f32.mrb[0].mxu0
        %v4599 = vadd.f32 0.0, %v4598
        %v4600 = vpop.f32.mrb[0].mxu0
        %v4601 = vpop.f32.mrb[0].mxu0
        %v4602 = vadd.f32 0.0, %v4601
        %v4603 = vpop.f32.mrb[0].mxu0
        %4604 = vmatprep.mubr.bf16.mxu0 0
        %4605 = vmatmul.mubr.bf16.gmra.mrb[0].mxu0 %v4442
        %v4606 = vpop.f32.mrb[0].mxu0
        %v4607 = vadd.f32 0.0, %v4606
        %v4608 = vpop.f32.mrb[0].mxu0
        %v4609 = vpop.f32.mrb[0].mxu0
        %v4610 = vadd.f32 0.0, %v4609
        %v4611 = vpop.f32.mrb[0].mxu0
        %4612 = vdwg.mxu0
        %v4614 = vshrl.u32 %v4334, 16
        %v4616 = vrot.slane %v4614, 7
        %v4617 = vshrl.u32 %v4335, 16
        %v4619 = vrot.slane %v4617, 7
        %v4620 = vshll.u32 %v4335, 16
        %v4622 = vor.u32 %v4619, %v4620
        %v4623 = vsel %vm1373, %v4616, %v4622
        %v4624 = vshrl.u32 %v4336, 16
        %v4626 = vrot.slane %v4624, 7
        %v4627 = vshll.u32 %v4336, 16
        %v4629 = vor.u32 %v4626, %v4627
        %v4630 = vsel %vm1373, %v4619, %v4629
        %v4631 = vshrl.u32 %v4337, 16
        %v4633 = vrot.slane %v4631, 7
        %v4634 = vshll.u32 %v4337, 16
        %v4636 = vor.u32 %v4633, %v4634
        %v4637 = vsel %vm1373, %v4626, %v4636
        %v4638 = vshrl.u32 %v4338, 16
        %v4640 = vrot.slane %v4638, 7
        %v4641 = vshll.u32 %v4338, 16
        %v4643 = vor.u32 %v4640, %v4641
        %v4644 = vsel %vm1373, %v4633, %v4643
        %v4645 = vshrl.u32 %v4339, 16
        %v4647 = vrot.slane %v4645, 7
        %v4648 = vshll.u32 %v4339, 16
        %v4650 = vor.u32 %v4647, %v4648
        %v4651 = vsel %vm1373, %v4640, %v4650
        %v4652 = vshrl.u32 %v4340, 16
        %v4654 = vrot.slane %v4652, 7
        %v4655 = vshll.u32 %v4340, 16
        %v4657 = vor.u32 %v4654, %v4655
        %v4658 = vsel %vm1373, %v4647, %v4657
        %v4659 = vshrl.u32 %v4341, 16
        %v4661 = vrot.slane %v4659, 7
        %v4662 = vshll.u32 %v4341, 16
        %v4664 = vor.u32 %v4661, %v4662
        %v4665 = vsel %vm1373, %v4654, %v4664
        %v4666 = vshrl.u32 %v4342, 16
        %v4668 = vrot.slane %v4666, 7
        %v4669 = vshll.u32 %v4342, 16
        %v4671 = vor.u32 %v4668, %v4669
        %v4672 = vsel %vm1373, %v4661, %v4671
        %v4673 = vshrl.u32 %v4343, 16
        %v4675 = vrot.slane %v4673, 7
        %v4676 = vshll.u32 %v4343, 16
        %v4678 = vor.u32 %v4675, %v4676
        %v4679 = vsel %vm1373, %v4668, %v4678
        %v4680 = vshrl.u32 %v4344, 16
        %v4682 = vrot.slane %v4680, 7
        %v4683 = vshll.u32 %v4344, 16
        %v4685 = vor.u32 %v4682, %v4683
        %v4686 = vsel %vm1373, %v4675, %v4685
        %v4687 = vshrl.u32 %v4345, 16
        %v4689 = vrot.slane %v4687, 7
        %v4690 = vshll.u32 %v4345, 16
        %v4692 = vor.u32 %v4689, %v4690
        %v4693 = vsel %vm1373, %v4682, %v4692
        %v4694 = vshrl.u32 %v4346, 16
        %v4696 = vrot.slane %v4694, 7
        %v4697 = vshll.u32 %v4346, 16
        %v4699 = vor.u32 %v4696, %v4697
        %v4700 = vsel %vm1373, %v4689, %v4699
        %v4701 = vshrl.u32 %v4347, 16
        %v4703 = vrot.slane %v4701, 7
        %v4704 = vshll.u32 %v4347, 16
        %v4706 = vor.u32 %v4703, %v4704
        %v4707 = vsel %vm1373, %v4696, %v4706
        %v4708 = vshrl.u32 %v4348, 16
        %v4710 = vrot.slane %v4708, 7
        %v4711 = vshll.u32 %v4348, 16
        %v4713 = vor.u32 %v4710, %v4711
        %v4714 = vsel %vm1373, %v4703, %v4713
        %v4715 = vshrl.u32 %v4349, 16
        %v4717 = vrot.slane %v4715, 7
        %v4718 = vshll.u32 %v4349, 16
        %v4720 = vor.u32 %v4717, %v4718
        %v4721 = vsel %vm1373, %v4710, %v4720
        %v4722 = vshrl.u32 %v4350, 16
        %v4724 = vrot.slane %v4722, 7
        %v4725 = vshll.u32 %v4350, 16
        %v4727 = vor.u32 %v4724, %v4725
        %v4728 = vsel %vm1373, %v4717, %v4727
        %v4729 = vshrl.u32 %v4351, 16
        %v4731 = vrot.slane %v4729, 7
        %v4732 = vshll.u32 %v4351, 16
        %v4734 = vor.u32 %v4731, %v4732
        %v4735 = vsel %vm1373, %v4724, %v4734
        %v4744 = vunpack.c.l.b16 %v4352
        %v4745 = vunpack.c.l.b16 %v4353
        %v4746 = vunpack.c.l.b16 %v4354
        %v4747 = vunpack.c.l.b16 %v4355
        %v4748 = vunpack.c.l.b16 %v4356
        %v4749 = vunpack.c.l.b16 %v4357
        %v4750 = vunpack.c.l.b16 %v4358
        %v4751 = vunpack.c.l.b16 %v4359
        %v4752 = vpack.c.b16 %v4745, %v4744
        %v4753 = vpack.c.b16 %v4747, %v4746
        %v4754 = vpack.c.b16 %v4749, %v4748
        %v4755 = vpack.c.b16 %v4751, %v4750
        %v4761 = vsel %vm441, %v4623, 0
        %v4764 = vsel %vm441, %v4630, 0
        %v4767 = vsel %vm441, %v4637, 0
        %v4770 = vsel %vm441, %v4644, 0
        %v4773 = vsel %vm441, %v4651, 0
        %v4776 = vsel %vm441, %v4658, 0
        %v4779 = vsel %vm441, %v4665, 0
        %v4782 = vsel %vm441, %v4672, 0
        %v4785 = vsel %vm441, %v4679, 0
        %v4788 = vsel %vm441, %v4686, 0
        %v4791 = vsel %vm441, %v4693, 0
        %v4794 = vsel %vm441, %v4700, 0
        %v4797 = vsel %vm441, %v4707, 0
        %v4800 = vsel %vm441, %v4714, 0
        %v4803 = vsel %vm441, %v4721, 0
        %v4806 = vsel %vm441, %v4728, 0
        %v4809 = vsel %vm441, %v4735, 0
        %4811 = vmatprep.subr.bf16.mxu0 0
        %4812 = vmatpush1.bf16.msra.mxu0 %v4752
        %4813 = vmatprep.subr.bf16.mxu0 0
        %4814 = vmatpush1.bf16.msra.mxu0 %v4753
        %4815 = vmatprep.subr.bf16.mxu0 0
        %4816 = vmatpush1.bf16.msra.mxu0 %v4754
        %4817 = vmatprep.subr.bf16.mxu0 0
        %4818 = vmatpush1.bf16.msra.mxu0 %v4755
        %4819 = vmatprep.subr.bf16.mxu0 0
        %4820 = vmatpush1.bf16.msra.mxu0 0
        %4821 = vmatprep.subr.bf16.mxu0 0
        %4822 = vmatpush1.bf16.msra.mxu0 0
        %4823 = vmatprep.subr.bf16.mxu0 0
        %4824 = vmatpush1.bf16.msra.mxu0 0
        %4825 = vmatprep.subr.bf16.mxu0 0
        %4826 = vmatpush1.bf16.msra.mxu0 0
        %4827 = vmatprep.subr.bf16.mxu0 0
        %4828 = vmatpush1.bf16.msra.mxu0 0
        %4829 = vmatprep.subr.bf16.mxu0 0
        %4830 = vmatpush1.bf16.msra.mxu0 0
        %4831 = vmatprep.subr.bf16.mxu0 0
        %4832 = vmatpush1.bf16.msra.mxu0 0
        %4833 = vmatprep.subr.bf16.mxu0 0
        %4834 = vmatpush1.bf16.msra.mxu0 0
        %4835 = vmatprep.subr.bf16.mxu0 0
        %4836 = vmatpush1.bf16.msra.mxu0 0
        %4837 = vmatprep.subr.bf16.mxu0 0
        %4838 = vmatpush1.bf16.msra.mxu0 0
        %4839 = vmatprep.subr.bf16.mxu0 0
        %4840 = vmatpush1.bf16.msra.mxu0 0
        %4841 = vmatprep.subr.bf16.mxu0 0
        %4842 = vmatpush1.bf16.msra.mxu0 0
        %4843 = vmatprep.mubr.bf16.mxu0 0
        %4844 = vmatmul.mubr.bf16.gmra.mrb[0].mxu0 %v4761
        %v4845 = vpop.f32.mrb[0].mxu0
        %v4846 = vadd.f32 %v4479, %v4845
        %v4847 = vpop.f32.mrb[0].mxu0
        %v4848 = vpop.f32.mrb[0].mxu0
        %v4849 = vadd.f32 %v4482, %v4848
        %v4850 = vpop.f32.mrb[0].mxu0
        %4851 = vmatprep.mubr.bf16.mxu0 0
        %4852 = vmatmul.mubr.bf16.gmra.mrb[0].mxu0 %v4764
        %v4853 = vpop.f32.mrb[0].mxu0
        %v4854 = vadd.f32 %v4487, %v4853
        %v4855 = vpop.f32.mrb[0].mxu0
        %v4856 = vpop.f32.mrb[0].mxu0
        %v4857 = vadd.f32 %v4490, %v4856
        %v4858 = vpop.f32.mrb[0].mxu0
        %4859 = vmatprep.mubr.bf16.mxu0 0
        %4860 = vmatmul.mubr.bf16.gmra.mrb[0].mxu0 %v4767
        %v4861 = vpop.f32.mrb[0].mxu0
        %v4862 = vadd.f32 %v4495, %v4861
        %v4863 = vpop.f32.mrb[0].mxu0
        %v4864 = vpop.f32.mrb[0].mxu0
        %v4865 = vadd.f32 %v4498, %v4864
        %v4866 = vpop.f32.mrb[0].mxu0
        %4867 = vmatprep.mubr.bf16.mxu0 0
        %4868 = vmatmul.mubr.bf16.gmra.mrb[0].mxu0 %v4770
        %v4869 = vpop.f32.mrb[0].mxu0
        %v4870 = vadd.f32 %v4503, %v4869
        %v4871 = vpop.f32.mrb[0].mxu0
        %v4872 = vpop.f32.mrb[0].mxu0
        %v4873 = vadd.f32 %v4506, %v4872
        %v4874 = vpop.f32.mrb[0].mxu0
        %4875 = vmatprep.mubr.bf16.mxu0 0
        %4876 = vmatmul.mubr.bf16.gmra.mrb[0].mxu0 %v4773
        %v4877 = vpop.f32.mrb[0].mxu0
        %v4878 = vadd.f32 %v4511, %v4877
        %v4879 = vpop.f32.mrb[0].mxu0
        %v4880 = vpop.f32.mrb[0].mxu0
        %v4881 = vadd.f32 %v4514, %v4880
        %v4882 = vpop.f32.mrb[0].mxu0
        %4883 = vmatprep.mubr.bf16.mxu0 0
        %4884 = vmatmul.mubr.bf16.gmra.mrb[0].mxu0 %v4776
        %v4885 = vpop.f32.mrb[0].mxu0
        %v4886 = vadd.f32 %v4519, %v4885
        %v4887 = vpop.f32.mrb[0].mxu0
        %v4888 = vpop.f32.mrb[0].mxu0
        %v4889 = vadd.f32 %v4522, %v4888
        %v4890 = vpop.f32.mrb[0].mxu0
        %4891 = vmatprep.mubr.bf16.mxu0 0
        %4892 = vmatmul.mubr.bf16.gmra.mrb[0].mxu0 %v4779
        %v4893 = vpop.f32.mrb[0].mxu0
        %v4894 = vadd.f32 %v4527, %v4893
        %v4895 = vpop.f32.mrb[0].mxu0
        %v4896 = vpop.f32.mrb[0].mxu0
        %v4897 = vadd.f32 %v4530, %v4896
        %v4898 = vpop.f32.mrb[0].mxu0
        %4899 = vmatprep.mubr.bf16.mxu0 0
        %4900 = vmatmul.mubr.bf16.gmra.mrb[0].mxu0 %v4782
        %v4901 = vpop.f32.mrb[0].mxu0
        %v4902 = vadd.f32 %v4535, %v4901
        %v4903 = vpop.f32.mrb[0].mxu0
        %v4904 = vpop.f32.mrb[0].mxu0
        %v4905 = vadd.f32 %v4538, %v4904
        %v4906 = vpop.f32.mrb[0].mxu0
        %4907 = vmatprep.mubr.bf16.mxu0 0
        %4908 = vmatmul.mubr.bf16.gmra.mrb[0].mxu0 %v4785
        %v4909 = vpop.f32.mrb[0].mxu0
        %v4910 = vadd.f32 %v4543, %v4909
        %v4911 = vpop.f32.mrb[0].mxu0
        %v4912 = vpop.f32.mrb[0].mxu0
        %v4913 = vadd.f32 %v4546, %v4912
        %v4914 = vpop.f32.mrb[0].mxu0
        %4915 = vmatprep.mubr.bf16.mxu0 0
        %4916 = vmatmul.mubr.bf16.gmra.mrb[0].mxu0 %v4788
        %v4917 = vpop.f32.mrb[0].mxu0
        %v4918 = vadd.f32 %v4551, %v4917
        %v4919 = vpop.f32.mrb[0].mxu0
        %v4920 = vpop.f32.mrb[0].mxu0
        %v4921 = vadd.f32 %v4554, %v4920
        %v4922 = vpop.f32.mrb[0].mxu0
        %4923 = vmatprep.mubr.bf16.mxu0 0
        %4924 = vmatmul.mubr.bf16.gmra.mrb[0].mxu0 %v4791
        %v4925 = vpop.f32.mrb[0].mxu0
        %v4926 = vadd.f32 %v4559, %v4925
        %v4927 = vpop.f32.mrb[0].mxu0
        %v4928 = vpop.f32.mrb[0].mxu0
        %v4929 = vadd.f32 %v4562, %v4928
        %v4930 = vpop.f32.mrb[0].mxu0
        %4931 = vmatprep.mubr.bf16.mxu0 0
        %4932 = vmatmul.mubr.bf16.gmra.mrb[0].mxu0 %v4794
        %v4933 = vpop.f32.mrb[0].mxu0
        %v4934 = vadd.f32 %v4567, %v4933
        %v4935 = vpop.f32.mrb[0].mxu0
        %v4936 = vpop.f32.mrb[0].mxu0
        %v4937 = vadd.f32 %v4570, %v4936
        %v4938 = vpop.f32.mrb[0].mxu0
        %4939 = vmatprep.mubr.bf16.mxu0 0
        %4940 = vmatmul.mubr.bf16.gmra.mrb[0].mxu0 %v4797
        %v4941 = vpop.f32.mrb[0].mxu0
        %v4942 = vadd.f32 %v4575, %v4941
        %v4943 = vpop.f32.mrb[0].mxu0
        %v4944 = vpop.f32.mrb[0].mxu0
        %v4945 = vadd.f32 %v4578, %v4944
        %v4946 = vpop.f32.mrb[0].mxu0
        %4947 = vmatprep.mubr.bf16.mxu0 0
        %4948 = vmatmul.mubr.bf16.gmra.mrb[0].mxu0 %v4800
        %v4949 = vpop.f32.mrb[0].mxu0
        %v4950 = vadd.f32 %v4583, %v4949
        %v4951 = vpop.f32.mrb[0].mxu0
        %v4952 = vpop.f32.mrb[0].mxu0
        %v4953 = vadd.f32 %v4586, %v4952
        %v4954 = vpop.f32.mrb[0].mxu0
        %4955 = vmatprep.mubr.bf16.mxu0 0
        %4956 = vmatmul.mubr.bf16.gmra.mrb[0].mxu0 %v4803
        %v4957 = vpop.f32.mrb[0].mxu0
        %v4958 = vadd.f32 %v4591, %v4957
        %v4959 = vpop.f32.mrb[0].mxu0
        %v4960 = vpop.f32.mrb[0].mxu0
        %v4961 = vadd.f32 %v4594, %v4960
        %v4962 = vpop.f32.mrb[0].mxu0
        %4963 = vmatprep.mubr.bf16.mxu0 0
        %4964 = vmatmul.mubr.bf16.gmra.mrb[0].mxu0 %v4806
        %v4965 = vpop.f32.mrb[0].mxu0
        %v4966 = vadd.f32 %v4599, %v4965
        %v4967 = vpop.f32.mrb[0].mxu0
        %v4968 = vpop.f32.mrb[0].mxu0
        %v4969 = vadd.f32 %v4602, %v4968
        %v4970 = vpop.f32.mrb[0].mxu0
        %4971 = vmatprep.mubr.bf16.mxu0 0
        %4972 = vmatmul.mubr.bf16.gmra.mrb[0].mxu0 %v4809
        %v4973 = vpop.f32.mrb[0].mxu0
        %v4974 = vadd.f32 %v4607, %v4973
        %v4975 = vpop.f32.mrb[0].mxu0
        %v4976 = vpop.f32.mrb[0].mxu0
        %v4977 = vadd.f32 %v4610, %v4976
        %v4978 = vpop.f32.mrb[0].mxu0
        %4979 = vdwg.mxu0
        %v4980 = vld [vmem:[#allocation3 + $0x8] sm:$0xff]
        %v4981 = vld [vmem:[#allocation3 + $0x10] sm:$0xff]
        %v4982 = vld [vmem:[#allocation3 + $0x18] sm:$0xff]
        %v4983 = vld [vmem:[#allocation3 + $0x20] sm:$0xff]
        %v4984 = vld [vmem:[#allocation3 + $0x28] sm:$0xff]
        %v4985 = vld [vmem:[#allocation3 + $0x30] sm:$0xff]
        %v4986 = vld [vmem:[#allocation3 + $0x38] sm:$0xff]
        %v4987 = vld [vmem:[#allocation3 + $0x40] sm:$0xff]
        %v4988 = vld [vmem:[#allocation3 + $0x48] sm:$0xff]
        %v4989 = vld [vmem:[#allocation3 + $0x50] sm:$0xff]
        %v4990 = vld [vmem:[#allocation3 + $0x58] sm:$0xff]
        %v4991 = vld [vmem:[#allocation3 + $0x60] sm:$0xff]
        %v4992 = vld [vmem:[#allocation3 + $0x68] sm:$0xff]
        %v4993 = vld [vmem:[#allocation3 + $0x70] sm:$0xff]
        %v4994 = vld [vmem:[#allocation3 + $0x78] sm:$0xff]
        %v4995 = vld [vmem:[#allocation3 + $0x80] sm:$0xff]
        %v4996 = vld [vmem:[#allocation3 + $0x88] sm:$0xff]
        %v4997 = vld [vmem:[#allocation3 + $0x90] sm:$0x1]
        %s4998 = scalar_lea.vmem %s5, 64
        %v4999 = vld [vmem:[%s4998] sm:$0xf]
        %v5000 = vld [vmem:[%s4998 + $0x4] sm:$0xf]
        %v5001 = vld [vmem:[%s4998 + $0x8] sm:$0xf]
        %v5002 = vld [vmem:[%s4998 + $0xc] sm:$0xf]
        %v5003 = vld [vmem:[%s4998 + $0x10] sm:$0xf]
        %v5004 = vld [vmem:[%s4998 + $0x14] sm:$0xf]
        %v5005 = vld [vmem:[%s4998 + $0x18] sm:$0xf]
        %v5006 = vld [vmem:[%s4998 + $0x1c] sm:$0xf]
        %v5008 = vshrl.u32 %v4980, 16
        %v5010 = vshll.u32 %v4980, 16
        %v5012 = vrot.slane %v5010, 1
        %v5013 = vor.u32 %v5008, %v5012
        %v5015 = vshll.u32 %v4981, 16
        %v5017 = vrot.slane %v5015, 1
        %v5018 = vsel %vm1752, %v5013, %v5017
        %v5019 = vshrl.u32 %v4981, 16
        %v5021 = vor.u32 %v5019, %v5017
        %v5023 = vshll.u32 %v4982, 16
        %v5025 = vrot.slane %v5023, 1
        %v5026 = vsel %vm1752, %v5021, %v5025
        %v5027 = vshrl.u32 %v4982, 16
        %v5029 = vor.u32 %v5027, %v5025
        %v5031 = vshll.u32 %v4983, 16
        %v5033 = vrot.slane %v5031, 1
        %v5034 = vsel %vm1752, %v5029, %v5033
        %v5035 = vshrl.u32 %v4983, 16
        %v5037 = vor.u32 %v5035, %v5033
        %v5039 = vshll.u32 %v4984, 16
        %v5041 = vrot.slane %v5039, 1
        %v5042 = vsel %vm1752, %v5037, %v5041
        %v5043 = vshrl.u32 %v4984, 16
        %v5045 = vor.u32 %v5043, %v5041
        %v5047 = vshll.u32 %v4985, 16
        %v5049 = vrot.slane %v5047, 1
        %v5050 = vsel %vm1752, %v5045, %v5049
        %v5051 = vshrl.u32 %v4985, 16
        %v5053 = vor.u32 %v5051, %v5049
        %v5055 = vshll.u32 %v4986, 16
        %v5057 = vrot.slane %v5055, 1
        %v5058 = vsel %vm1752, %v5053, %v5057
        %v5059 = vshrl.u32 %v4986, 16
        %v5061 = vor.u32 %v5059, %v5057
        %v5063 = vshll.u32 %v4987, 16
        %v5065 = vrot.slane %v5063, 1
        %v5066 = vsel %vm1752, %v5061, %v5065
        %v5067 = vshrl.u32 %v4987, 16
        %v5069 = vor.u32 %v5067, %v5065
        %v5071 = vshll.u32 %v4988, 16
        %v5073 = vrot.slane %v5071, 1
        %v5074 = vsel %vm1752, %v5069, %v5073
        %v5075 = vshrl.u32 %v4988, 16
        %v5077 = vor.u32 %v5075, %v5073
        %v5079 = vshll.u32 %v4989, 16
        %v5081 = vrot.slane %v5079, 1
        %v5082 = vsel %vm1752, %v5077, %v5081
        %v5083 = vshrl.u32 %v4989, 16
        %v5085 = vor.u32 %v5083, %v5081
        %v5087 = vshll.u32 %v4990, 16
        %v5089 = vrot.slane %v5087, 1
        %v5090 = vsel %vm1752, %v5085, %v5089
        %v5091 = vshrl.u32 %v4990, 16
        %v5093 = vor.u32 %v5091, %v5089
        %v5095 = vshll.u32 %v4991, 16
        %v5097 = vrot.slane %v5095, 1
        %v5098 = vsel %vm1752, %v5093, %v5097
        %v5099 = vshrl.u32 %v4991, 16
        %v5101 = vor.u32 %v5099, %v5097
        %v5103 = vshll.u32 %v4992, 16
        %v5105 = vrot.slane %v5103, 1
        %v5106 = vsel %vm1752, %v5101, %v5105
        %v5107 = vshrl.u32 %v4992, 16
        %v5109 = vor.u32 %v5107, %v5105
        %v5111 = vshll.u32 %v4993, 16
        %v5113 = vrot.slane %v5111, 1
        %v5114 = vsel %vm1752, %v5109, %v5113
        %v5115 = vshrl.u32 %v4993, 16
        %v5117 = vor.u32 %v5115, %v5113
        %v5119 = vshll.u32 %v4994, 16
        %v5121 = vrot.slane %v5119, 1
        %v5122 = vsel %vm1752, %v5117, %v5121
        %v5123 = vshrl.u32 %v4994, 16
        %v5125 = vor.u32 %v5123, %v5121
        %v5127 = vshll.u32 %v4995, 16
        %v5129 = vrot.slane %v5127, 1
        %v5130 = vsel %vm1752, %v5125, %v5129
        %v5131 = vshrl.u32 %v4995, 16
        %v5133 = vor.u32 %v5131, %v5129
        %v5135 = vshll.u32 %v4996, 16
        %v5137 = vrot.slane %v5135, 1
        %v5138 = vsel %vm1752, %v5133, %v5137
        %v5139 = vshrl.u32 %v4996, 16
        %v5141 = vor.u32 %v5139, %v5137
        %v5143 = vshll.u32 %v4997, 16
        %v5145 = vrot.slane %v5143, 1
        %v5146 = vsel %vm1752, %v5141, %v5145
        %v5155 = vunpack.c.l.b16 %v4999
        %v5156 = vunpack.c.l.b16 %v5000
        %v5157 = vunpack.c.l.b16 %v5001
        %v5158 = vunpack.c.l.b16 %v5002
        %v5159 = vunpack.c.l.b16 %v5003
        %v5160 = vunpack.c.l.b16 %v5004
        %v5161 = vunpack.c.l.b16 %v5005
        %v5162 = vunpack.c.l.b16 %v5006
        %v5163 = vpack.c.b16 %v5156, %v5155
        %v5164 = vpack.c.b16 %v5158, %v5157
        %v5165 = vpack.c.b16 %v5160, %v5159
        %v5166 = vpack.c.b16 %v5162, %v5161
        %v5172 = vsel %vm441, %v5018, 0
        %v5175 = vsel %vm441, %v5026, 0
        %v5178 = vsel %vm441, %v5034, 0
        %v5181 = vsel %vm441, %v5042, 0
        %v5184 = vsel %vm441, %v5050, 0
        %v5187 = vsel %vm441, %v5058, 0
        %v5190 = vsel %vm441, %v5066, 0
        %v5193 = vsel %vm441, %v5074, 0
        %v5196 = vsel %vm441, %v5082, 0
        %v5199 = vsel %vm441, %v5090, 0
        %v5202 = vsel %vm441, %v5098, 0
        %v5205 = vsel %vm441, %v5106, 0
        %v5208 = vsel %vm441, %v5114, 0
        %v5211 = vsel %vm441, %v5122, 0
        %v5214 = vsel %vm441, %v5130, 0
        %v5217 = vsel %vm441, %v5138, 0
        %v5220 = vsel %vm441, %v5146, 0
        %5222 = vmatprep.subr.bf16.mxu0 0
        %5223 = vmatpush1.bf16.msra.mxu0 %v5163
        %5224 = vmatprep.subr.bf16.mxu0 0
        %5225 = vmatpush1.bf16.msra.mxu0 %v5164
        %5226 = vmatprep.subr.bf16.mxu0 0
        %5227 = vmatpush1.bf16.msra.mxu0 %v5165
        %5228 = vmatprep.subr.bf16.mxu0 0
        %5229 = vmatpush1.bf16.msra.mxu0 %v5166
        %5230 = vmatprep.subr.bf16.mxu0 0
        %5231 = vmatpush1.bf16.msra.mxu0 0
        %5232 = vmatprep.subr.bf16.mxu0 0
        %5233 = vmatpush1.bf16.msra.mxu0 0
        %5234 = vmatprep.subr.bf16.mxu0 0
        %5235 = vmatpush1.bf16.msra.mxu0 0
        %5236 = vmatprep.subr.bf16.mxu0 0
        %5237 = vmatpush1.bf16.msra.mxu0 0
        %5238 = vmatprep.subr.bf16.mxu0 0
        %5239 = vmatpush1.bf16.msra.mxu0 0
        %5240 = vmatprep.subr.bf16.mxu0 0
        %5241 = vmatpush1.bf16.msra.mxu0 0
        %5242 = vmatprep.subr.bf16.mxu0 0
        %5243 = vmatpush1.bf16.msra.mxu0 0
        %5244 = vmatprep.subr.bf16.mxu0 0
        %5245 = vmatpush1.bf16.msra.mxu0 0
        %5246 = vmatprep.subr.bf16.mxu0 0
        %5247 = vmatpush1.bf16.msra.mxu0 0
        %5248 = vmatprep.subr.bf16.mxu0 0
        %5249 = vmatpush1.bf16.msra.mxu0 0
        %5250 = vmatprep.subr.bf16.mxu0 0
        %5251 = vmatpush1.bf16.msra.mxu0 0
        %5252 = vmatprep.subr.bf16.mxu0 0
        %5253 = vmatpush1.bf16.msra.mxu0 0
        %5254 = vmatprep.mubr.bf16.mxu0 0
        %5255 = vmatmul.mubr.bf16.gmra.mrb[0].mxu0 %v5172
        %v5256 = vpop.f32.mrb[0].mxu0
        %v5257 = vadd.f32 0.0, %v5256
        %v5258 = vpop.f32.mrb[0].mxu0
        %v5259 = vpop.f32.mrb[0].mxu0
        %v5260 = vadd.f32 0.0, %v5259
        %v5261 = vpop.f32.mrb[0].mxu0
        %5262 = vmatprep.mubr.bf16.mxu0 0
        %5263 = vmatmul.mubr.bf16.gmra.mrb[0].mxu0 %v5175
        %v5264 = vpop.f32.mrb[0].mxu0
        %v5265 = vadd.f32 0.0, %v5264
        %v5266 = vpop.f32.mrb[0].mxu0
        %v5267 = vpop.f32.mrb[0].mxu0
        %v5268 = vadd.f32 0.0, %v5267
        %v5269 = vpop.f32.mrb[0].mxu0
        %5270 = vmatprep.mubr.bf16.mxu0 0
        %5271 = vmatmul.mubr.bf16.gmra.mrb[0].mxu0 %v5178
        %v5272 = vpop.f32.mrb[0].mxu0
        %v5273 = vadd.f32 0.0, %v5272
        %v5274 = vpop.f32.mrb[0].mxu0
        %v5275 = vpop.f32.mrb[0].mxu0
        %v5276 = vadd.f32 0.0, %v5275
        %v5277 = vpop.f32.mrb[0].mxu0
        %5278 = vmatprep.mubr.bf16.mxu0 0
        %5279 = vmatmul.mubr.bf16.gmra.mrb[0].mxu0 %v5181
        %v5280 = vpop.f32.mrb[0].mxu0
        %v5281 = vadd.f32 0.0, %v5280
        %v5282 = vpop.f32.mrb[0].mxu0
        %v5283 = vpop.f32.mrb[0].mxu0
        %v5284 = vadd.f32 0.0, %v5283
        %v5285 = vpop.f32.mrb[0].mxu0
        %5286 = vmatprep.mubr.bf16.mxu0 0
        %5287 = vmatmul.mubr.bf16.gmra.mrb[0].mxu0 %v5184
        %v5288 = vpop.f32.mrb[0].mxu0
        %v5289 = vadd.f32 0.0, %v5288
        %v5290 = vpop.f32.mrb[0].mxu0
        %v5291 = vpop.f32.mrb[0].mxu0
        %v5292 = vadd.f32 0.0, %v5291
        %v5293 = vpop.f32.mrb[0].mxu0
        %5294 = vmatprep.mubr.bf16.mxu0 0
        %5295 = vmatmul.mubr.bf16.gmra.mrb[0].mxu0 %v5187
        %v5296 = vpop.f32.mrb[0].mxu0
        %v5297 = vadd.f32 0.0, %v5296
        %v5298 = vpop.f32.mrb[0].mxu0
        %v5299 = vpop.f32.mrb[0].mxu0
        %v5300 = vadd.f32 0.0, %v5299
        %v5301 = vpop.f32.mrb[0].mxu0
        %5302 = vmatprep.mubr.bf16.mxu0 0
        %5303 = vmatmul.mubr.bf16.gmra.mrb[0].mxu0 %v5190
        %v5304 = vpop.f32.mrb[0].mxu0
        %v5305 = vadd.f32 0.0, %v5304
        %v5306 = vpop.f32.mrb[0].mxu0
        %v5307 = vpop.f32.mrb[0].mxu0
        %v5308 = vadd.f32 0.0, %v5307
        %v5309 = vpop.f32.mrb[0].mxu0
        %5310 = vmatprep.mubr.bf16.mxu0 0
        %5311 = vmatmul.mubr.bf16.gmra.mrb[0].mxu0 %v5193
        %v5312 = vpop.f32.mrb[0].mxu0
        %v5313 = vadd.f32 0.0, %v5312
        %v5314 = vpop.f32.mrb[0].mxu0
        %v5315 = vpop.f32.mrb[0].mxu0
        %v5316 = vadd.f32 0.0, %v5315
        %v5317 = vpop.f32.mrb[0].mxu0
        %5318 = vmatprep.mubr.bf16.mxu0 0
        %5319 = vmatmul.mubr.bf16.gmra.mrb[0].mxu0 %v5196
        %v5320 = vpop.f32.mrb[0].mxu0
        %v5321 = vadd.f32 0.0, %v5320
        %v5322 = vpop.f32.mrb[0].mxu0
        %v5323 = vpop.f32.mrb[0].mxu0
        %v5324 = vadd.f32 0.0, %v5323
        %v5325 = vpop.f32.mrb[0].mxu0
        %5326 = vmatprep.mubr.bf16.mxu0 0
        %5327 = vmatmul.mubr.bf16.gmra.mrb[0].mxu0 %v5199
        %v5328 = vpop.f32.mrb[0].mxu0
        %v5329 = vadd.f32 0.0, %v5328
        %v5330 = vpop.f32.mrb[0].mxu0
        %v5331 = vpop.f32.mrb[0].mxu0
        %v5332 = vadd.f32 0.0, %v5331
        %v5333 = vpop.f32.mrb[0].mxu0
        %5334 = vmatprep.mubr.bf16.mxu0 0
        %5335 = vmatmul.mubr.bf16.gmra.mrb[0].mxu0 %v5202
        %v5336 = vpop.f32.mrb[0].mxu0
        %v5337 = vadd.f32 0.0, %v5336
        %v5338 = vpop.f32.mrb[0].mxu0
        %v5339 = vpop.f32.mrb[0].mxu0
        %v5340 = vadd.f32 0.0, %v5339
        %v5341 = vpop.f32.mrb[0].mxu0
        %5342 = vmatprep.mubr.bf16.mxu0 0
        %5343 = vmatmul.mubr.bf16.gmra.mrb[0].mxu0 %v5205
        %v5344 = vpop.f32.mrb[0].mxu0
        %v5345 = vadd.f32 0.0, %v5344
        %v5346 = vpop.f32.mrb[0].mxu0
        %v5347 = vpop.f32.mrb[0].mxu0
        %v5348 = vadd.f32 0.0, %v5347
        %v5349 = vpop.f32.mrb[0].mxu0
        %5350 = vmatprep.mubr.bf16.mxu0 0
        %5351 = vmatmul.mubr.bf16.gmra.mrb[0].mxu0 %v5208
        %v5352 = vpop.f32.mrb[0].mxu0
        %v5353 = vadd.f32 0.0, %v5352
        %v5354 = vpop.f32.mrb[0].mxu0
        %v5355 = vpop.f32.mrb[0].mxu0
        %v5356 = vadd.f32 0.0, %v5355
        %v5357 = vpop.f32.mrb[0].mxu0
        %5358 = vmatprep.mubr.bf16.mxu0 0
        %5359 = vmatmul.mubr.bf16.gmra.mrb[0].mxu0 %v5211
        %v5360 = vpop.f32.mrb[0].mxu0
        %v5361 = vadd.f32 0.0, %v5360
        %v5362 = vpop.f32.mrb[0].mxu0
        %v5363 = vpop.f32.mrb[0].mxu0
        %v5364 = vadd.f32 0.0, %v5363
        %v5365 = vpop.f32.mrb[0].mxu0
        %5366 = vmatprep.mubr.bf16.mxu0 0
        %5367 = vmatmul.mubr.bf16.gmra.mrb[0].mxu0 %v5214
        %v5368 = vpop.f32.mrb[0].mxu0
        %v5369 = vadd.f32 0.0, %v5368
        %v5370 = vpop.f32.mrb[0].mxu0
        %v5371 = vpop.f32.mrb[0].mxu0
        %v5372 = vadd.f32 0.0, %v5371
        %v5373 = vpop.f32.mrb[0].mxu0
        %5374 = vmatprep.mubr.bf16.mxu0 0
        %5375 = vmatmul.mubr.bf16.gmra.mrb[0].mxu0 %v5217
        %v5376 = vpop.f32.mrb[0].mxu0
        %v5377 = vadd.f32 0.0, %v5376
        %v5378 = vpop.f32.mrb[0].mxu0
        %v5379 = vpop.f32.mrb[0].mxu0
        %v5380 = vadd.f32 0.0, %v5379
        %v5381 = vpop.f32.mrb[0].mxu0
        %5382 = vmatprep.mubr.bf16.mxu0 0
        %5383 = vmatmul.mubr.bf16.gmra.mrb[0].mxu0 %v5220
        %v5384 = vpop.f32.mrb[0].mxu0
        %v5385 = vadd.f32 0.0, %v5384
        %v5386 = vpop.f32.mrb[0].mxu0
        %v5387 = vpop.f32.mrb[0].mxu0
        %v5388 = vadd.f32 0.0, %v5387
        %v5389 = vpop.f32.mrb[0].mxu0
        %5390 = vdwg.mxu0
        %v5391 = vadd.f32 %v4846, %v5257
        %v5392 = vadd.f32 %v4849, %v5260
        %v5393 = vadd.f32 %v4854, %v5265
        %v5394 = vadd.f32 %v4857, %v5268
        %v5395 = vadd.f32 %v4862, %v5273
        %v5396 = vadd.f32 %v4865, %v5276
        %v5397 = vadd.f32 %v4870, %v5281
        %v5398 = vadd.f32 %v4873, %v5284
        %v5399 = vadd.f32 %v4878, %v5289
        %v5400 = vadd.f32 %v4881, %v5292
        %v5401 = vadd.f32 %v4886, %v5297
        %v5402 = vadd.f32 %v4889, %v5300
        %v5403 = vadd.f32 %v4894, %v5305
        %v5404 = vadd.f32 %v4897, %v5308
        %v5405 = vadd.f32 %v4902, %v5313
        %v5406 = vadd.f32 %v4905, %v5316
        %v5407 = vadd.f32 %v4910, %v5321
        %v5408 = vadd.f32 %v4913, %v5324
        %v5409 = vadd.f32 %v4918, %v5329
        %v5410 = vadd.f32 %v4921, %v5332
        %v5411 = vadd.f32 %v4926, %v5337
        %v5412 = vadd.f32 %v4929, %v5340
        %v5413 = vadd.f32 %v4934, %v5345
        %v5414 = vadd.f32 %v4937, %v5348
        %v5415 = vadd.f32 %v4942, %v5353
        %v5416 = vadd.f32 %v4945, %v5356
        %v5417 = vadd.f32 %v4950, %v5361
        %v5418 = vadd.f32 %v4953, %v5364
        %v5419 = vadd.f32 %v4958, %v5369
        %v5420 = vadd.f32 %v4961, %v5372
        %v5421 = vadd.f32 %v4966, %v5377
        %v5422 = vadd.f32 %v4969, %v5380
        %v5423 = vadd.f32 %v4974, %v5385
        %v5424 = vadd.f32 %v4977, %v5388
        %v5425 = vld [vmem:[#allocation3 + $0x8] sm:$0x80]
        %v5426 = vld [vmem:[#allocation3 + $0x90] sm:$0xff]
        %s5427 = scalar_lea.vmem %s5, 96
        %v5428 = vld [vmem:[%s5427] sm:$0xf]
        %v5429 = vld [vmem:[%s5427 + $0x4] sm:$0xf]
        %v5430 = vld [vmem:[%s5427 + $0x8] sm:$0xf]
        %v5431 = vld [vmem:[%s5427 + $0xc] sm:$0xf]
        %v5432 = vld [vmem:[%s5427 + $0x10] sm:$0xf]
        %v5433 = vld [vmem:[%s5427 + $0x14] sm:$0xf]
        %v5434 = vld [vmem:[%s5427 + $0x18] sm:$0xf]
        %v5435 = vld [vmem:[%s5427 + $0x1c] sm:$0xf]
        %v5437 = vshrl.u32 %v5425, 16
        %v5439 = vrot.slane %v5437, 7
        %v5440 = vrot.slane %v5019, 7
        %v5441 = vor.u32 %v5440, %v5015
        %v5442 = vsel %vm1373, %v5439, %v5441
        %v5443 = vrot.slane %v5027, 7
        %v5444 = vor.u32 %v5443, %v5023
        %v5445 = vsel %vm1373, %v5440, %v5444
        %v5446 = vrot.slane %v5035, 7
        %v5447 = vor.u32 %v5446, %v5031
        %v5448 = vsel %vm1373, %v5443, %v5447
        %v5449 = vrot.slane %v5043, 7
        %v5450 = vor.u32 %v5449, %v5039
        %v5451 = vsel %vm1373, %v5446, %v5450
        %v5452 = vrot.slane %v5051, 7
        %v5453 = vor.u32 %v5452, %v5047
        %v5454 = vsel %vm1373, %v5449, %v5453
        %v5455 = vrot.slane %v5059, 7
        %v5456 = vor.u32 %v5455, %v5055
        %v5457 = vsel %vm1373, %v5452, %v5456
        %v5458 = vrot.slane %v5067, 7
        %v5459 = vor.u32 %v5458, %v5063
        %v5460 = vsel %vm1373, %v5455, %v5459
        %v5461 = vrot.slane %v5075, 7
        %v5462 = vor.u32 %v5461, %v5071
        %v5463 = vsel %vm1373, %v5458, %v5462
        %v5464 = vrot.slane %v5083, 7
        %v5465 = vor.u32 %v5464, %v5079
        %v5466 = vsel %vm1373, %v5461, %v5465
        %v5467 = vrot.slane %v5091, 7
        %v5468 = vor.u32 %v5467, %v5087
        %v5469 = vsel %vm1373, %v5464, %v5468
        %v5470 = vrot.slane %v5099, 7
        %v5471 = vor.u32 %v5470, %v5095
        %v5472 = vsel %vm1373, %v5467, %v5471
        %v5473 = vrot.slane %v5107, 7
        %v5474 = vor.u32 %v5473, %v5103
        %v5475 = vsel %vm1373, %v5470, %v5474
        %v5476 = vrot.slane %v5115, 7
        %v5477 = vor.u32 %v5476, %v5111
        %v5478 = vsel %vm1373, %v5473, %v5477
        %v5479 = vrot.slane %v5123, 7
        %v5480 = vor.u32 %v5479, %v5119
        %v5481 = vsel %vm1373, %v5476, %v5480
        %v5482 = vrot.slane %v5131, 7
        %v5483 = vor.u32 %v5482, %v5127
        %v5484 = vsel %vm1373, %v5479, %v5483
        %v5485 = vrot.slane %v5139, 7
        %v5486 = vor.u32 %v5485, %v5135
        %v5487 = vsel %vm1373, %v5482, %v5486
        %v5489 = vshrl.u32 %v5426, 16
        %v5491 = vrot.slane %v5489, 7
        %v5492 = vshll.u32 %v5426, 16
        %v5494 = vor.u32 %v5491, %v5492
        %v5495 = vsel %vm1373, %v5485, %v5494
        %v5504 = vunpack.c.l.b16 %v5428
        %v5505 = vunpack.c.l.b16 %v5429
        %v5506 = vunpack.c.l.b16 %v5430
        %v5507 = vunpack.c.l.b16 %v5431
        %v5508 = vunpack.c.l.b16 %v5432
        %v5509 = vunpack.c.l.b16 %v5433
        %v5510 = vunpack.c.l.b16 %v5434
        %v5511 = vunpack.c.l.b16 %v5435
        %v5512 = vpack.c.b16 %v5505, %v5504
        %v5513 = vpack.c.b16 %v5507, %v5506
        %v5514 = vpack.c.b16 %v5509, %v5508
        %v5515 = vpack.c.b16 %v5511, %v5510
        %v5521 = vsel %vm441, %v5442, 0
        %v5524 = vsel %vm441, %v5445, 0
        %v5527 = vsel %vm441, %v5448, 0
        %v5530 = vsel %vm441, %v5451, 0
        %v5533 = vsel %vm441, %v5454, 0
        %v5536 = vsel %vm441, %v5457, 0
        %v5539 = vsel %vm441, %v5460, 0
        %v5542 = vsel %vm441, %v5463, 0
        %v5545 = vsel %vm441, %v5466, 0
        %v5548 = vsel %vm441, %v5469, 0
        %v5551 = vsel %vm441, %v5472, 0
        %v5554 = vsel %vm441, %v5475, 0
        %v5557 = vsel %vm441, %v5478, 0
        %v5560 = vsel %vm441, %v5481, 0
        %v5563 = vsel %vm441, %v5484, 0
        %v5566 = vsel %vm441, %v5487, 0
        %v5569 = vsel %vm441, %v5495, 0
        %5571 = vmatprep.subr.bf16.mxu0 0
        %5572 = vmatpush1.bf16.msra.mxu0 %v5512
        %5573 = vmatprep.subr.bf16.mxu0 0
        %5574 = vmatpush1.bf16.msra.mxu0 %v5513
        %5575 = vmatprep.subr.bf16.mxu0 0
        %5576 = vmatpush1.bf16.msra.mxu0 %v5514
        %5577 = vmatprep.subr.bf16.mxu0 0
        %5578 = vmatpush1.bf16.msra.mxu0 %v5515
        %5579 = vmatprep.subr.bf16.mxu0 0
        %5580 = vmatpush1.bf16.msra.mxu0 0
        %5581 = vmatprep.subr.bf16.mxu0 0
        %5582 = vmatpush1.bf16.msra.mxu0 0
        %5583 = vmatprep.subr.bf16.mxu0 0
        %5584 = vmatpush1.bf16.msra.mxu0 0
        %5585 = vmatprep.subr.bf16.mxu0 0
        %5586 = vmatpush1.bf16.msra.mxu0 0
        %5587 = vmatprep.subr.bf16.mxu0 0
        %5588 = vmatpush1.bf16.msra.mxu0 0
        %5589 = vmatprep.subr.bf16.mxu0 0
        %5590 = vmatpush1.bf16.msra.mxu0 0
        %5591 = vmatprep.subr.bf16.mxu0 0
        %5592 = vmatpush1.bf16.msra.mxu0 0
        %5593 = vmatprep.subr.bf16.mxu0 0
        %5594 = vmatpush1.bf16.msra.mxu0 0
        %5595 = vmatprep.subr.bf16.mxu0 0
        %5596 = vmatpush1.bf16.msra.mxu0 0
        %5597 = vmatprep.subr.bf16.mxu0 0
        %5598 = vmatpush1.bf16.msra.mxu0 0
        %5599 = vmatprep.subr.bf16.mxu0 0
        %5600 = vmatpush1.bf16.msra.mxu0 0
        %5601 = vmatprep.subr.bf16.mxu0 0
        %5602 = vmatpush1.bf16.msra.mxu0 0
        %5603 = vmatprep.mubr.bf16.mxu0 0
        %5604 = vmatmul.mubr.bf16.gmra.mrb[0].mxu0 %v5521
        %v5605 = vpop.f32.mrb[0].mxu0
        %v5606 = vadd.f32 0.0, %v5605
        %v5607 = vpop.f32.mrb[0].mxu0
        %v5608 = vpop.f32.mrb[0].mxu0
        %v5609 = vadd.f32 0.0, %v5608
        %v5610 = vpop.f32.mrb[0].mxu0
        %5611 = vmatprep.mubr.bf16.mxu0 0
        %5612 = vmatmul.mubr.bf16.gmra.mrb[0].mxu0 %v5524
        %v5613 = vpop.f32.mrb[0].mxu0
        %v5614 = vadd.f32 0.0, %v5613
        %v5615 = vpop.f32.mrb[0].mxu0
        %v5616 = vpop.f32.mrb[0].mxu0
        %v5617 = vadd.f32 0.0, %v5616
        %v5618 = vpop.f32.mrb[0].mxu0
        %5619 = vmatprep.mubr.bf16.mxu0 0
        %5620 = vmatmul.mubr.bf16.gmra.mrb[0].mxu0 %v5527
        %v5621 = vpop.f32.mrb[0].mxu0
        %v5622 = vadd.f32 0.0, %v5621
        %v5623 = vpop.f32.mrb[0].mxu0
        %v5624 = vpop.f32.mrb[0].mxu0
        %v5625 = vadd.f32 0.0, %v5624
        %v5626 = vpop.f32.mrb[0].mxu0
        %5627 = vmatprep.mubr.bf16.mxu0 0
        %5628 = vmatmul.mubr.bf16.gmra.mrb[0].mxu0 %v5530
        %v5629 = vpop.f32.mrb[0].mxu0
        %v5630 = vadd.f32 0.0, %v5629
        %v5631 = vpop.f32.mrb[0].mxu0
        %v5632 = vpop.f32.mrb[0].mxu0
        %v5633 = vadd.f32 0.0, %v5632
        %v5634 = vpop.f32.mrb[0].mxu0
        %5635 = vmatprep.mubr.bf16.mxu0 0
        %5636 = vmatmul.mubr.bf16.gmra.mrb[0].mxu0 %v5533
        %v5637 = vpop.f32.mrb[0].mxu0
        %v5638 = vadd.f32 0.0, %v5637
        %v5639 = vpop.f32.mrb[0].mxu0
        %v5640 = vpop.f32.mrb[0].mxu0
        %v5641 = vadd.f32 0.0, %v5640
        %v5642 = vpop.f32.mrb[0].mxu0
        %5643 = vmatprep.mubr.bf16.mxu0 0
        %5644 = vmatmul.mubr.bf16.gmra.mrb[0].mxu0 %v5536
        %v5645 = vpop.f32.mrb[0].mxu0
        %v5646 = vadd.f32 0.0, %v5645
        %v5647 = vpop.f32.mrb[0].mxu0
        %v5648 = vpop.f32.mrb[0].mxu0
        %v5649 = vadd.f32 0.0, %v5648
        %v5650 = vpop.f32.mrb[0].mxu0
        %5651 = vmatprep.mubr.bf16.mxu0 0
        %5652 = vmatmul.mubr.bf16.gmra.mrb[0].mxu0 %v5539
        %v5653 = vpop.f32.mrb[0].mxu0
        %v5654 = vadd.f32 0.0, %v5653
        %v5655 = vpop.f32.mrb[0].mxu0
        %v5656 = vpop.f32.mrb[0].mxu0
        %v5657 = vadd.f32 0.0, %v5656
        %v5658 = vpop.f32.mrb[0].mxu0
        %5659 = vmatprep.mubr.bf16.mxu0 0
        %5660 = vmatmul.mubr.bf16.gmra.mrb[0].mxu0 %v5542
        %v5661 = vpop.f32.mrb[0].mxu0
        %v5662 = vadd.f32 0.0, %v5661
        %v5663 = vpop.f32.mrb[0].mxu0
        %v5664 = vpop.f32.mrb[0].mxu0
        %v5665 = vadd.f32 0.0, %v5664
        %v5666 = vpop.f32.mrb[0].mxu0
        %5667 = vmatprep.mubr.bf16.mxu0 0
        %5668 = vmatmul.mubr.bf16.gmra.mrb[0].mxu0 %v5545
        %v5669 = vpop.f32.mrb[0].mxu0
        %v5670 = vadd.f32 0.0, %v5669
        %v5671 = vpop.f32.mrb[0].mxu0
        %v5672 = vpop.f32.mrb[0].mxu0
        %v5673 = vadd.f32 0.0, %v5672
        %v5674 = vpop.f32.mrb[0].mxu0
        %5675 = vmatprep.mubr.bf16.mxu0 0
        %5676 = vmatmul.mubr.bf16.gmra.mrb[0].mxu0 %v5548
        %v5677 = vpop.f32.mrb[0].mxu0
        %v5678 = vadd.f32 0.0, %v5677
        %v5679 = vpop.f32.mrb[0].mxu0
        %v5680 = vpop.f32.mrb[0].mxu0
        %v5681 = vadd.f32 0.0, %v5680
        %v5682 = vpop.f32.mrb[0].mxu0
        %5683 = vmatprep.mubr.bf16.mxu0 0
        %5684 = vmatmul.mubr.bf16.gmra.mrb[0].mxu0 %v5551
        %v5685 = vpop.f32.mrb[0].mxu0
        %v5686 = vadd.f32 0.0, %v5685
        %v5687 = vpop.f32.mrb[0].mxu0
        %v5688 = vpop.f32.mrb[0].mxu0
        %v5689 = vadd.f32 0.0, %v5688
        %v5690 = vpop.f32.mrb[0].mxu0
        %5691 = vmatprep.mubr.bf16.mxu0 0
        %5692 = vmatmul.mubr.bf16.gmra.mrb[0].mxu0 %v5554
        %v5693 = vpop.f32.mrb[0].mxu0
        %v5694 = vadd.f32 0.0, %v5693
        %v5695 = vpop.f32.mrb[0].mxu0
        %v5696 = vpop.f32.mrb[0].mxu0
        %v5697 = vadd.f32 0.0, %v5696
        %v5698 = vpop.f32.mrb[0].mxu0
        %5699 = vmatprep.mubr.bf16.mxu0 0
        %5700 = vmatmul.mubr.bf16.gmra.mrb[0].mxu0 %v5557
        %v5701 = vpop.f32.mrb[0].mxu0
        %v5702 = vadd.f32 0.0, %v5701
        %v5703 = vpop.f32.mrb[0].mxu0
        %v5704 = vpop.f32.mrb[0].mxu0
        %v5705 = vadd.f32 0.0, %v5704
        %v5706 = vpop.f32.mrb[0].mxu0
        %5707 = vmatprep.mubr.bf16.mxu0 0
        %5708 = vmatmul.mubr.bf16.gmra.mrb[0].mxu0 %v5560
        %v5709 = vpop.f32.mrb[0].mxu0
        %v5710 = vadd.f32 0.0, %v5709
        %v5711 = vpop.f32.mrb[0].mxu0
        %v5712 = vpop.f32.mrb[0].mxu0
        %v5713 = vadd.f32 0.0, %v5712
        %v5714 = vpop.f32.mrb[0].mxu0
        %5715 = vmatprep.mubr.bf16.mxu0 0
        %5716 = vmatmul.mubr.bf16.gmra.mrb[0].mxu0 %v5563
        %v5717 = vpop.f32.mrb[0].mxu0
        %v5718 = vadd.f32 0.0, %v5717
        %v5719 = vpop.f32.mrb[0].mxu0
        %v5720 = vpop.f32.mrb[0].mxu0
        %v5721 = vadd.f32 0.0, %v5720
        %v5722 = vpop.f32.mrb[0].mxu0
        %5723 = vmatprep.mubr.bf16.mxu0 0
        %5724 = vmatmul.mubr.bf16.gmra.mrb[0].mxu0 %v5566
        %v5725 = vpop.f32.mrb[0].mxu0
        %v5726 = vadd.f32 0.0, %v5725
        %v5727 = vpop.f32.mrb[0].mxu0
        %v5728 = vpop.f32.mrb[0].mxu0
        %v5729 = vadd.f32 0.0, %v5728
        %v5730 = vpop.f32.mrb[0].mxu0
        %5731 = vmatprep.mubr.bf16.mxu0 0
        %5732 = vmatmul.mubr.bf16.gmra.mrb[0].mxu0 %v5569
        %v5733 = vpop.f32.mrb[0].mxu0
        %v5734 = vadd.f32 0.0, %v5733
        %v5735 = vpop.f32.mrb[0].mxu0
        %v5736 = vpop.f32.mrb[0].mxu0
        %v5737 = vadd.f32 0.0, %v5736
        %v5738 = vpop.f32.mrb[0].mxu0
        %5739 = vdwg.mxu0
        %v5740 = vadd.f32 %v5391, %v5606
        %v5741 = vadd.f32 %v5392, %v5609
        %v5742 = vadd.f32 %v5393, %v5614
        %v5743 = vadd.f32 %v5394, %v5617
        %v5744 = vadd.f32 %v5395, %v5622
        %v5745 = vadd.f32 %v5396, %v5625
        %v5746 = vadd.f32 %v5397, %v5630
        %v5747 = vadd.f32 %v5398, %v5633
        %v5748 = vadd.f32 %v5399, %v5638
        %v5749 = vadd.f32 %v5400, %v5641
        %v5750 = vadd.f32 %v5401, %v5646
        %v5751 = vadd.f32 %v5402, %v5649
        %v5752 = vadd.f32 %v5403, %v5654
        %v5753 = vadd.f32 %v5404, %v5657
        %v5754 = vadd.f32 %v5405, %v5662
        %v5755 = vadd.f32 %v5406, %v5665
        %v5756 = vadd.f32 %v5407, %v5670
        %v5757 = vadd.f32 %v5408, %v5673
        %v5758 = vadd.f32 %v5409, %v5678
        %v5759 = vadd.f32 %v5410, %v5681
        %v5760 = vadd.f32 %v5411, %v5686
        %v5761 = vadd.f32 %v5412, %v5689
        %v5762 = vadd.f32 %v5413, %v5694
        %v5763 = vadd.f32 %v5414, %v5697
        %v5764 = vadd.f32 %v5415, %v5702
        %v5765 = vadd.f32 %v5416, %v5705
        %v5766 = vadd.f32 %v5417, %v5710
        %v5767 = vadd.f32 %v5418, %v5713
        %v5768 = vadd.f32 %v5419, %v5718
        %v5769 = vadd.f32 %v5420, %v5721
        %v5770 = vadd.f32 %v5421, %v5726
        %v5771 = vadd.f32 %v5422, %v5729
        %v5772 = vadd.f32 %v5423, %v5734
        %v5773 = vadd.f32 %v5424, %v5737
        %s5774 = scalar_lea.vmem %s5, 128
        %v5775 = vld [vmem:[%s5774] sm:$0xf]
        %v5776 = vld [vmem:[%s5774 + $0x4] sm:$0xf]
        %v5777 = vld [vmem:[%s5774 + $0x8] sm:$0xf]
        %v5778 = vld [vmem:[%s5774 + $0xc] sm:$0xf]
        %v5779 = vld [vmem:[%s5774 + $0x10] sm:$0xf]
        %v5780 = vld [vmem:[%s5774 + $0x14] sm:$0xf]
        %v5781 = vld [vmem:[%s5774 + $0x18] sm:$0xf]
        %v5782 = vld [vmem:[%s5774 + $0x1c] sm:$0xf]
        %v5791 = vunpack.c.l.b16 %v5775
        %v5792 = vunpack.c.l.b16 %v5776
        %v5793 = vunpack.c.l.b16 %v5777
        %v5794 = vunpack.c.l.b16 %v5778
        %v5795 = vunpack.c.l.b16 %v5779
        %v5796 = vunpack.c.l.b16 %v5780
        %v5797 = vunpack.c.l.b16 %v5781
        %v5798 = vunpack.c.l.b16 %v5782
        %v5799 = vpack.c.b16 %v5792, %v5791
        %v5800 = vpack.c.b16 %v5794, %v5793
        %v5801 = vpack.c.b16 %v5796, %v5795
        %v5802 = vpack.c.b16 %v5798, %v5797
        %v5807 = vsel %vm441, %v4981, 0
        %v5809 = vsel %vm441, %v4982, 0
        %v5811 = vsel %vm441, %v4983, 0
        %v5813 = vsel %vm441, %v4984, 0
        %v5815 = vsel %vm441, %v4985, 0
        %v5817 = vsel %vm441, %v4986, 0
        %v5819 = vsel %vm441, %v4987, 0
        %v5821 = vsel %vm441, %v4988, 0
        %v5823 = vsel %vm441, %v4989, 0
        %v5825 = vsel %vm441, %v4990, 0
        %v5827 = vsel %vm441, %v4991, 0
        %v5829 = vsel %vm441, %v4992, 0
        %v5831 = vsel %vm441, %v4993, 0
        %v5833 = vsel %vm441, %v4994, 0
        %v5835 = vsel %vm441, %v4995, 0
        %v5837 = vsel %vm441, %v4996, 0
        %v5839 = vsel %vm441, %v5426, 0
        %5841 = vmatprep.subr.bf16.mxu0 0
        %5842 = vmatpush1.bf16.msra.mxu0 %v5799
        %5843 = vmatprep.subr.bf16.mxu0 0
        %5844 = vmatpush1.bf16.msra.mxu0 %v5800
        %5845 = vmatprep.subr.bf16.mxu0 0
        %5846 = vmatpush1.bf16.msra.mxu0 %v5801
        %5847 = vmatprep.subr.bf16.mxu0 0
        %5848 = vmatpush1.bf16.msra.mxu0 %v5802
        %5849 = vmatprep.subr.bf16.mxu0 0
        %5850 = vmatpush1.bf16.msra.mxu0 0
        %5851 = vmatprep.subr.bf16.mxu0 0
        %5852 = vmatpush1.bf16.msra.mxu0 0
        %5853 = vmatprep.subr.bf16.mxu0 0
        %5854 = vmatpush1.bf16.msra.mxu0 0
        %5855 = vmatprep.subr.bf16.mxu0 0
        %5856 = vmatpush1.bf16.msra.mxu0 0
        %5857 = vmatprep.subr.bf16.mxu0 0
        %5858 = vmatpush1.bf16.msra.mxu0 0
        %5859 = vmatprep.subr.bf16.mxu0 0
        %5860 = vmatpush1.bf16.msra.mxu0 0
        %5861 = vmatprep.subr.bf16.mxu0 0
        %5862 = vmatpush1.bf16.msra.mxu0 0
        %5863 = vmatprep.subr.bf16.mxu0 0
        %5864 = vmatpush1.bf16.msra.mxu0 0
        %5865 = vmatprep.subr.bf16.mxu0 0
        %5866 = vmatpush1.bf16.msra.mxu0 0
        %5867 = vmatprep.subr.bf16.mxu0 0
        %5868 = vmatpush1.bf16.msra.mxu0 0
        %5869 = vmatprep.subr.bf16.mxu0 0
        %5870 = vmatpush1.bf16.msra.mxu0 0
        %5871 = vmatprep.subr.bf16.mxu0 0
        %5872 = vmatpush1.bf16.msra.mxu0 0
        %5873 = vmatprep.mubr.bf16.mxu0 0
        %5874 = vmatmul.mubr.bf16.gmra.mrb[0].mxu0 %v5807
        %v5875 = vpop.f32.mrb[0].mxu0
        %v5876 = vadd.f32 0.0, %v5875
        %v5877 = vpop.f32.mrb[0].mxu0
        %v5878 = vpop.f32.mrb[0].mxu0
        %v5879 = vadd.f32 0.0, %v5878
        %v5880 = vpop.f32.mrb[0].mxu0
        %5881 = vmatprep.mubr.bf16.mxu0 0
        %5882 = vmatmul.mubr.bf16.gmra.mrb[0].mxu0 %v5809
        %v5883 = vpop.f32.mrb[0].mxu0
        %v5884 = vadd.f32 0.0, %v5883
        %v5885 = vpop.f32.mrb[0].mxu0
        %v5886 = vpop.f32.mrb[0].mxu0
        %v5887 = vadd.f32 0.0, %v5886
        %v5888 = vpop.f32.mrb[0].mxu0
        %5889 = vmatprep.mubr.bf16.mxu0 0
        %5890 = vmatmul.mubr.bf16.gmra.mrb[0].mxu0 %v5811
        %v5891 = vpop.f32.mrb[0].mxu0
        %v5892 = vadd.f32 0.0, %v5891
        %v5893 = vpop.f32.mrb[0].mxu0
        %v5894 = vpop.f32.mrb[0].mxu0
        %v5895 = vadd.f32 0.0, %v5894
        %v5896 = vpop.f32.mrb[0].mxu0
        %5897 = vmatprep.mubr.bf16.mxu0 0
        %5898 = vmatmul.mubr.bf16.gmra.mrb[0].mxu0 %v5813
        %v5899 = vpop.f32.mrb[0].mxu0
        %v5900 = vadd.f32 0.0, %v5899
        %v5901 = vpop.f32.mrb[0].mxu0
        %v5902 = vpop.f32.mrb[0].mxu0
        %v5903 = vadd.f32 0.0, %v5902
        %v5904 = vpop.f32.mrb[0].mxu0
        %5905 = vmatprep.mubr.bf16.mxu0 0
        %5906 = vmatmul.mubr.bf16.gmra.mrb[0].mxu0 %v5815
        %v5907 = vpop.f32.mrb[0].mxu0
        %v5908 = vadd.f32 0.0, %v5907
        %v5909 = vpop.f32.mrb[0].mxu0
        %v5910 = vpop.f32.mrb[0].mxu0
        %v5911 = vadd.f32 0.0, %v5910
        %v5912 = vpop.f32.mrb[0].mxu0
        %5913 = vmatprep.mubr.bf16.mxu0 0
        %5914 = vmatmul.mubr.bf16.gmra.mrb[0].mxu0 %v5817
        %v5915 = vpop.f32.mrb[0].mxu0
        %v5916 = vadd.f32 0.0, %v5915
        %v5917 = vpop.f32.mrb[0].mxu0
        %v5918 = vpop.f32.mrb[0].mxu0
        %v5919 = vadd.f32 0.0, %v5918
        %v5920 = vpop.f32.mrb[0].mxu0
        %5921 = vmatprep.mubr.bf16.mxu0 0
        %5922 = vmatmul.mubr.bf16.gmra.mrb[0].mxu0 %v5819
        %v5923 = vpop.f32.mrb[0].mxu0
        %v5924 = vadd.f32 0.0, %v5923
        %v5925 = vpop.f32.mrb[0].mxu0
        %v5926 = vpop.f32.mrb[0].mxu0
        %v5927 = vadd.f32 0.0, %v5926
        %v5928 = vpop.f32.mrb[0].mxu0
        %5929 = vmatprep.mubr.bf16.mxu0 0
        %5930 = vmatmul.mubr.bf16.gmra.mrb[0].mxu0 %v5821
        %v5931 = vpop.f32.mrb[0].mxu0
        %v5932 = vadd.f32 0.0, %v5931
        %v5933 = vpop.f32.mrb[0].mxu0
        %v5934 = vpop.f32.mrb[0].mxu0
        %v5935 = vadd.f32 0.0, %v5934
        %v5936 = vpop.f32.mrb[0].mxu0
        %5937 = vmatprep.mubr.bf16.mxu0 0
        %5938 = vmatmul.mubr.bf16.gmra.mrb[0].mxu0 %v5823
        %v5939 = vpop.f32.mrb[0].mxu0
        %v5940 = vadd.f32 0.0, %v5939
        %v5941 = vpop.f32.mrb[0].mxu0
        %v5942 = vpop.f32.mrb[0].mxu0
        %v5943 = vadd.f32 0.0, %v5942
        %v5944 = vpop.f32.mrb[0].mxu0
        %5945 = vmatprep.mubr.bf16.mxu0 0
        %5946 = vmatmul.mubr.bf16.gmra.mrb[0].mxu0 %v5825
        %v5947 = vpop.f32.mrb[0].mxu0
        %v5948 = vadd.f32 0.0, %v5947
        %v5949 = vpop.f32.mrb[0].mxu0
        %v5950 = vpop.f32.mrb[0].mxu0
        %v5951 = vadd.f32 0.0, %v5950
        %v5952 = vpop.f32.mrb[0].mxu0
        %5953 = vmatprep.mubr.bf16.mxu0 0
        %5954 = vmatmul.mubr.bf16.gmra.mrb[0].mxu0 %v5827
        %v5955 = vpop.f32.mrb[0].mxu0
        %v5956 = vadd.f32 0.0, %v5955
        %v5957 = vpop.f32.mrb[0].mxu0
        %v5958 = vpop.f32.mrb[0].mxu0
        %v5959 = vadd.f32 0.0, %v5958
        %v5960 = vpop.f32.mrb[0].mxu0
        %5961 = vmatprep.mubr.bf16.mxu0 0
        %5962 = vmatmul.mubr.bf16.gmra.mrb[0].mxu0 %v5829
        %v5963 = vpop.f32.mrb[0].mxu0
        %v5964 = vadd.f32 0.0, %v5963
        %v5965 = vpop.f32.mrb[0].mxu0
        %v5966 = vpop.f32.mrb[0].mxu0
        %v5967 = vadd.f32 0.0, %v5966
        %v5968 = vpop.f32.mrb[0].mxu0
        %5969 = vmatprep.mubr.bf16.mxu0 0
        %5970 = vmatmul.mubr.bf16.gmra.mrb[0].mxu0 %v5831
        %v5971 = vpop.f32.mrb[0].mxu0
        %v5972 = vadd.f32 0.0, %v5971
        %v5973 = vpop.f32.mrb[0].mxu0
        %v5974 = vpop.f32.mrb[0].mxu0
        %v5975 = vadd.f32 0.0, %v5974
        %v5976 = vpop.f32.mrb[0].mxu0
        %5977 = vmatprep.mubr.bf16.mxu0 0
        %5978 = vmatmul.mubr.bf16.gmra.mrb[0].mxu0 %v5833
        %v5979 = vpop.f32.mrb[0].mxu0
        %v5980 = vadd.f32 0.0, %v5979
        %v5981 = vpop.f32.mrb[0].mxu0
        %v5982 = vpop.f32.mrb[0].mxu0
        %v5983 = vadd.f32 0.0, %v5982
        %v5984 = vpop.f32.mrb[0].mxu0
        %5985 = vmatprep.mubr.bf16.mxu0 0
        %5986 = vmatmul.mubr.bf16.gmra.mrb[0].mxu0 %v5835
        %v5987 = vpop.f32.mrb[0].mxu0
        %v5988 = vadd.f32 0.0, %v5987
        %v5989 = vpop.f32.mrb[0].mxu0
        %v5990 = vpop.f32.mrb[0].mxu0
        %v5991 = vadd.f32 0.0, %v5990
        %v5992 = vpop.f32.mrb[0].mxu0
        %5993 = vmatprep.mubr.bf16.mxu0 0
        %5994 = vmatmul.mubr.bf16.gmra.mrb[0].mxu0 %v5837
        %v5995 = vpop.f32.mrb[0].mxu0
        %v5996 = vadd.f32 0.0, %v5995
        %v5997 = vpop.f32.mrb[0].mxu0
        %v5998 = vpop.f32.mrb[0].mxu0
        %v5999 = vadd.f32 0.0, %v5998
        %v6000 = vpop.f32.mrb[0].mxu0
        %6001 = vmatprep.mubr.bf16.mxu0 0
        %6002 = vmatmul.mubr.bf16.gmra.mrb[0].mxu0 %v5839
        %v6003 = vpop.f32.mrb[0].mxu0
        %v6004 = vadd.f32 0.0, %v6003
        %v6005 = vpop.f32.mrb[0].mxu0
        %v6006 = vpop.f32.mrb[0].mxu0
        %v6007 = vadd.f32 0.0, %v6006
        %v6008 = vpop.f32.mrb[0].mxu0
        %6009 = vdwg.mxu0
        %v6010 = vadd.f32 %v5740, %v5876
        %v6011 = vadd.f32 %v5741, %v5879
        %v6012 = vadd.f32 %v5742, %v5884
        %v6013 = vadd.f32 %v5743, %v5887
        %v6014 = vadd.f32 %v5744, %v5892
        %v6015 = vadd.f32 %v5745, %v5895
        %v6016 = vadd.f32 %v5746, %v5900
        %v6017 = vadd.f32 %v5747, %v5903
        %v6018 = vadd.f32 %v5748, %v5908
        %v6019 = vadd.f32 %v5749, %v5911
        %v6020 = vadd.f32 %v5750, %v5916
        %v6021 = vadd.f32 %v5751, %v5919
        %v6022 = vadd.f32 %v5752, %v5924
        %v6023 = vadd.f32 %v5753, %v5927
        %v6024 = vadd.f32 %v5754, %v5932
        %v6025 = vadd.f32 %v5755, %v5935
        %v6026 = vadd.f32 %v5756, %v5940
        %v6027 = vadd.f32 %v5757, %v5943
        %v6028 = vadd.f32 %v5758, %v5948
        %v6029 = vadd.f32 %v5759, %v5951
        %v6030 = vadd.f32 %v5760, %v5956
        %v6031 = vadd.f32 %v5761, %v5959
        %v6032 = vadd.f32 %v5762, %v5964
        %v6033 = vadd.f32 %v5763, %v5967
        %v6034 = vadd.f32 %v5764, %v5972
        %v6035 = vadd.f32 %v5765, %v5975
        %v6036 = vadd.f32 %v5766, %v5980
        %v6037 = vadd.f32 %v5767, %v5983
        %v6038 = vadd.f32 %v5768, %v5988
        %v6039 = vadd.f32 %v5769, %v5991
        %v6040 = vadd.f32 %v5770, %v5996
        %v6041 = vadd.f32 %v5771, %v5999
        %v6042 = vadd.f32 %v5772, %v6004
        %v6043 = vadd.f32 %v5773, %v6007
        %v6044 = vld [vmem:[#allocation3 + $0x10] sm:$0xff]
        %v6045 = vld [vmem:[#allocation3 + $0x18] sm:$0xff]
        %v6046 = vld [vmem:[#allocation3 + $0x20] sm:$0xff]
        %v6047 = vld [vmem:[#allocation3 + $0x28] sm:$0xff]
        %v6048 = vld [vmem:[#allocation3 + $0x30] sm:$0xff]
        %v6049 = vld [vmem:[#allocation3 + $0x38] sm:$0xff]
        %v6050 = vld [vmem:[#allocation3 + $0x40] sm:$0xff]
        %v6051 = vld [vmem:[#allocation3 + $0x48] sm:$0xff]
        %v6052 = vld [vmem:[#allocation3 + $0x50] sm:$0xff]
        %v6053 = vld [vmem:[#allocation3 + $0x58] sm:$0xff]
        %v6054 = vld [vmem:[#allocation3 + $0x60] sm:$0xff]
        %v6055 = vld [vmem:[#allocation3 + $0x68] sm:$0xff]
        %v6056 = vld [vmem:[#allocation3 + $0x70] sm:$0xff]
        %v6057 = vld [vmem:[#allocation3 + $0x78] sm:$0xff]
        %v6058 = vld [vmem:[#allocation3 + $0x80] sm:$0xff]
        %v6059 = vld [vmem:[#allocation3 + $0x88] sm:$0xff]
        %v6060 = vld [vmem:[#allocation3 + $0x90] sm:$0xff]
        %v6061 = vld [vmem:[#allocation3 + $0x98] sm:$0x1]
        %s6062 = scalar_lea.vmem %s5, 160
        %v6063 = vld [vmem:[%s6062] sm:$0xf]
        %v6064 = vld [vmem:[%s6062 + $0x4] sm:$0xf]
        %v6065 = vld [vmem:[%s6062 + $0x8] sm:$0xf]
        %v6066 = vld [vmem:[%s6062 + $0xc] sm:$0xf]
        %v6067 = vld [vmem:[%s6062 + $0x10] sm:$0xf]
        %v6068 = vld [vmem:[%s6062 + $0x14] sm:$0xf]
        %v6069 = vld [vmem:[%s6062 + $0x18] sm:$0xf]
        %v6070 = vld [vmem:[%s6062 + $0x1c] sm:$0xf]
        %v6072 = vshrl.u32 %v6044, 16
        %v6074 = vshll.u32 %v6044, 16
        %v6076 = vrot.slane %v6074, 1
        %v6077 = vor.u32 %v6072, %v6076
        %v6079 = vshll.u32 %v6045, 16
        %v6081 = vrot.slane %v6079, 1
        %v6082 = vsel %vm1752, %v6077, %v6081
        %v6083 = vshrl.u32 %v6045, 16
        %v6085 = vor.u32 %v6083, %v6081
        %v6087 = vshll.u32 %v6046, 16
        %v6089 = vrot.slane %v6087, 1
        %v6090 = vsel %vm1752, %v6085, %v6089
        %v6091 = vshrl.u32 %v6046, 16
        %v6093 = vor.u32 %v6091, %v6089
        %v6095 = vshll.u32 %v6047, 16
        %v6097 = vrot.slane %v6095, 1
        %v6098 = vsel %vm1752, %v6093, %v6097
        %v6099 = vshrl.u32 %v6047, 16
        %v6101 = vor.u32 %v6099, %v6097
        %v6103 = vshll.u32 %v6048, 16
        %v6105 = vrot.slane %v6103, 1
        %v6106 = vsel %vm1752, %v6101, %v6105
        %v6107 = vshrl.u32 %v6048, 16
        %v6109 = vor.u32 %v6107, %v6105
        %v6111 = vshll.u32 %v6049, 16
        %v6113 = vrot.slane %v6111, 1
        %v6114 = vsel %vm1752, %v6109, %v6113
        %v6115 = vshrl.u32 %v6049, 16
        %v6117 = vor.u32 %v6115, %v6113
        %v6119 = vshll.u32 %v6050, 16
        %v6121 = vrot.slane %v6119, 1
        %v6122 = vsel %vm1752, %v6117, %v6121
        %v6123 = vshrl.u32 %v6050, 16
        %v6125 = vor.u32 %v6123, %v6121
        %v6127 = vshll.u32 %v6051, 16
        %v6129 = vrot.slane %v6127, 1
        %v6130 = vsel %vm1752, %v6125, %v6129
        %v6131 = vshrl.u32 %v6051, 16
        %v6133 = vor.u32 %v6131, %v6129
        %v6135 = vshll.u32 %v6052, 16
        %v6137 = vrot.slane %v6135, 1
        %v6138 = vsel %vm1752, %v6133, %v6137
        %v6139 = vshrl.u32 %v6052, 16
        %v6141 = vor.u32 %v6139, %v6137
        %v6143 = vshll.u32 %v6053, 16
        %v6145 = vrot.slane %v6143, 1
        %v6146 = vsel %vm1752, %v6141, %v6145
        %v6147 = vshrl.u32 %v6053, 16
        %v6149 = vor.u32 %v6147, %v6145
        %v6151 = vshll.u32 %v6054, 16
        %v6153 = vrot.slane %v6151, 1
        %v6154 = vsel %vm1752, %v6149, %v6153
        %v6155 = vshrl.u32 %v6054, 16
        %v6157 = vor.u32 %v6155, %v6153
        %v6159 = vshll.u32 %v6055, 16
        %v6161 = vrot.slane %v6159, 1
        %v6162 = vsel %vm1752, %v6157, %v6161
        %v6163 = vshrl.u32 %v6055, 16
        %v6165 = vor.u32 %v6163, %v6161
        %v6167 = vshll.u32 %v6056, 16
        %v6169 = vrot.slane %v6167, 1
        %v6170 = vsel %vm1752, %v6165, %v6169
        %v6171 = vshrl.u32 %v6056, 16
        %v6173 = vor.u32 %v6171, %v6169
        %v6175 = vshll.u32 %v6057, 16
        %v6177 = vrot.slane %v6175, 1
        %v6178 = vsel %vm1752, %v6173, %v6177
        %v6179 = vshrl.u32 %v6057, 16
        %v6181 = vor.u32 %v6179, %v6177
        %v6183 = vshll.u32 %v6058, 16
        %v6185 = vrot.slane %v6183, 1
        %v6186 = vsel %vm1752, %v6181, %v6185
        %v6187 = vshrl.u32 %v6058, 16
        %v6189 = vor.u32 %v6187, %v6185
        %v6191 = vshll.u32 %v6059, 16
        %v6193 = vrot.slane %v6191, 1
        %v6194 = vsel %vm1752, %v6189, %v6193
        %v6195 = vshrl.u32 %v6059, 16
        %v6197 = vor.u32 %v6195, %v6193
        %v6199 = vshll.u32 %v6060, 16
        %v6201 = vrot.slane %v6199, 1
        %v6202 = vsel %vm1752, %v6197, %v6201
        %v6203 = vshrl.u32 %v6060, 16
        %v6205 = vor.u32 %v6203, %v6201
        %v6207 = vshll.u32 %v6061, 16
        %v6209 = vrot.slane %v6207, 1
        %v6210 = vsel %vm1752, %v6205, %v6209
        %v6219 = vunpack.c.l.b16 %v6063
        %v6220 = vunpack.c.l.b16 %v6064
        %v6221 = vunpack.c.l.b16 %v6065
        %v6222 = vunpack.c.l.b16 %v6066
        %v6223 = vunpack.c.l.b16 %v6067
        %v6224 = vunpack.c.l.b16 %v6068
        %v6225 = vunpack.c.l.b16 %v6069
        %v6226 = vunpack.c.l.b16 %v6070
        %v6227 = vpack.c.b16 %v6220, %v6219
        %v6228 = vpack.c.b16 %v6222, %v6221
        %v6229 = vpack.c.b16 %v6224, %v6223
        %v6230 = vpack.c.b16 %v6226, %v6225
        %v6236 = vsel %vm441, %v6082, 0
        %v6239 = vsel %vm441, %v6090, 0
        %v6242 = vsel %vm441, %v6098, 0
        %v6245 = vsel %vm441, %v6106, 0
        %v6248 = vsel %vm441, %v6114, 0
        %v6251 = vsel %vm441, %v6122, 0
        %v6254 = vsel %vm441, %v6130, 0
        %v6257 = vsel %vm441, %v6138, 0
        %v6260 = vsel %vm441, %v6146, 0
        %v6263 = vsel %vm441, %v6154, 0
        %v6266 = vsel %vm441, %v6162, 0
        %v6269 = vsel %vm441, %v6170, 0
        %v6272 = vsel %vm441, %v6178, 0
        %v6275 = vsel %vm441, %v6186, 0
        %v6278 = vsel %vm441, %v6194, 0
        %v6281 = vsel %vm441, %v6202, 0
        %v6284 = vsel %vm441, %v6210, 0
        %6286 = vmatprep.subr.bf16.mxu0 0
        %6287 = vmatpush1.bf16.msra.mxu0 %v6227
        %6288 = vmatprep.subr.bf16.mxu0 0
        %6289 = vmatpush1.bf16.msra.mxu0 %v6228
        %6290 = vmatprep.subr.bf16.mxu0 0
        %6291 = vmatpush1.bf16.msra.mxu0 %v6229
        %6292 = vmatprep.subr.bf16.mxu0 0
        %6293 = vmatpush1.bf16.msra.mxu0 %v6230
        %6294 = vmatprep.subr.bf16.mxu0 0
        %6295 = vmatpush1.bf16.msra.mxu0 0
        %6296 = vmatprep.subr.bf16.mxu0 0
        %6297 = vmatpush1.bf16.msra.mxu0 0
        %6298 = vmatprep.subr.bf16.mxu0 0
        %6299 = vmatpush1.bf16.msra.mxu0 0
        %6300 = vmatprep.subr.bf16.mxu0 0
        %6301 = vmatpush1.bf16.msra.mxu0 0
        %6302 = vmatprep.subr.bf16.mxu0 0
        %6303 = vmatpush1.bf16.msra.mxu0 0
        %6304 = vmatprep.subr.bf16.mxu0 0
        %6305 = vmatpush1.bf16.msra.mxu0 0
        %6306 = vmatprep.subr.bf16.mxu0 0
        %6307 = vmatpush1.bf16.msra.mxu0 0
        %6308 = vmatprep.subr.bf16.mxu0 0
        %6309 = vmatpush1.bf16.msra.mxu0 0
        %6310 = vmatprep.subr.bf16.mxu0 0
        %6311 = vmatpush1.bf16.msra.mxu0 0
        %6312 = vmatprep.subr.bf16.mxu0 0
        %6313 = vmatpush1.bf16.msra.mxu0 0
        %6314 = vmatprep.subr.bf16.mxu0 0
        %6315 = vmatpush1.bf16.msra.mxu0 0
        %6316 = vmatprep.subr.bf16.mxu0 0
        %6317 = vmatpush1.bf16.msra.mxu0 0
        %6318 = vmatprep.mubr.bf16.mxu0 0
        %6319 = vmatmul.mubr.bf16.gmra.mrb[0].mxu0 %v6236
        %v6320 = vpop.f32.mrb[0].mxu0
        %v6321 = vadd.f32 0.0, %v6320
        %v6322 = vpop.f32.mrb[0].mxu0
        %v6323 = vpop.f32.mrb[0].mxu0
        %v6324 = vadd.f32 0.0, %v6323
        %v6325 = vpop.f32.mrb[0].mxu0
        %6326 = vmatprep.mubr.bf16.mxu0 0
        %6327 = vmatmul.mubr.bf16.gmra.mrb[0].mxu0 %v6239
        %v6328 = vpop.f32.mrb[0].mxu0
        %v6329 = vadd.f32 0.0, %v6328
        %v6330 = vpop.f32.mrb[0].mxu0
        %v6331 = vpop.f32.mrb[0].mxu0
        %v6332 = vadd.f32 0.0, %v6331
        %v6333 = vpop.f32.mrb[0].mxu0
        %6334 = vmatprep.mubr.bf16.mxu0 0
        %6335 = vmatmul.mubr.bf16.gmra.mrb[0].mxu0 %v6242
        %v6336 = vpop.f32.mrb[0].mxu0
        %v6337 = vadd.f32 0.0, %v6336
        %v6338 = vpop.f32.mrb[0].mxu0
        %v6339 = vpop.f32.mrb[0].mxu0
        %v6340 = vadd.f32 0.0, %v6339
        %v6341 = vpop.f32.mrb[0].mxu0
        %6342 = vmatprep.mubr.bf16.mxu0 0
        %6343 = vmatmul.mubr.bf16.gmra.mrb[0].mxu0 %v6245
        %v6344 = vpop.f32.mrb[0].mxu0
        %v6345 = vadd.f32 0.0, %v6344
        %v6346 = vpop.f32.mrb[0].mxu0
        %v6347 = vpop.f32.mrb[0].mxu0
        %v6348 = vadd.f32 0.0, %v6347
        %v6349 = vpop.f32.mrb[0].mxu0
        %6350 = vmatprep.mubr.bf16.mxu0 0
        %6351 = vmatmul.mubr.bf16.gmra.mrb[0].mxu0 %v6248
        %v6352 = vpop.f32.mrb[0].mxu0
        %v6353 = vadd.f32 0.0, %v6352
        %v6354 = vpop.f32.mrb[0].mxu0
        %v6355 = vpop.f32.mrb[0].mxu0
        %v6356 = vadd.f32 0.0, %v6355
        %v6357 = vpop.f32.mrb[0].mxu0
        %6358 = vmatprep.mubr.bf16.mxu0 0
        %6359 = vmatmul.mubr.bf16.gmra.mrb[0].mxu0 %v6251
        %v6360 = vpop.f32.mrb[0].mxu0
        %v6361 = vadd.f32 0.0, %v6360
        %v6362 = vpop.f32.mrb[0].mxu0
        %v6363 = vpop.f32.mrb[0].mxu0
        %v6364 = vadd.f32 0.0, %v6363
        %v6365 = vpop.f32.mrb[0].mxu0
        %6366 = vmatprep.mubr.bf16.mxu0 0
        %6367 = vmatmul.mubr.bf16.gmra.mrb[0].mxu0 %v6254
        %v6368 = vpop.f32.mrb[0].mxu0
        %v6369 = vadd.f32 0.0, %v6368
        %v6370 = vpop.f32.mrb[0].mxu0
        %v6371 = vpop.f32.mrb[0].mxu0
        %v6372 = vadd.f32 0.0, %v6371
        %v6373 = vpop.f32.mrb[0].mxu0
        %6374 = vmatprep.mubr.bf16.mxu0 0
        %6375 = vmatmul.mubr.bf16.gmra.mrb[0].mxu0 %v6257
        %v6376 = vpop.f32.mrb[0].mxu0
        %v6377 = vadd.f32 0.0, %v6376
        %v6378 = vpop.f32.mrb[0].mxu0
        %v6379 = vpop.f32.mrb[0].mxu0
        %v6380 = vadd.f32 0.0, %v6379
        %v6381 = vpop.f32.mrb[0].mxu0
        %6382 = vmatprep.mubr.bf16.mxu0 0
        %6383 = vmatmul.mubr.bf16.gmra.mrb[0].mxu0 %v6260
        %v6384 = vpop.f32.mrb[0].mxu0
        %v6385 = vadd.f32 0.0, %v6384
        %v6386 = vpop.f32.mrb[0].mxu0
        %v6387 = vpop.f32.mrb[0].mxu0
        %v6388 = vadd.f32 0.0, %v6387
        %v6389 = vpop.f32.mrb[0].mxu0
        %6390 = vmatprep.mubr.bf16.mxu0 0
        %6391 = vmatmul.mubr.bf16.gmra.mrb[0].mxu0 %v6263
        %v6392 = vpop.f32.mrb[0].mxu0
        %v6393 = vadd.f32 0.0, %v6392
        %v6394 = vpop.f32.mrb[0].mxu0
        %v6395 = vpop.f32.mrb[0].mxu0
        %v6396 = vadd.f32 0.0, %v6395
        %v6397 = vpop.f32.mrb[0].mxu0
        %6398 = vmatprep.mubr.bf16.mxu0 0
        %6399 = vmatmul.mubr.bf16.gmra.mrb[0].mxu0 %v6266
        %v6400 = vpop.f32.mrb[0].mxu0
        %v6401 = vadd.f32 0.0, %v6400
        %v6402 = vpop.f32.mrb[0].mxu0
        %v6403 = vpop.f32.mrb[0].mxu0
        %v6404 = vadd.f32 0.0, %v6403
        %v6405 = vpop.f32.mrb[0].mxu0
        %6406 = vmatprep.mubr.bf16.mxu0 0
        %6407 = vmatmul.mubr.bf16.gmra.mrb[0].mxu0 %v6269
        %v6408 = vpop.f32.mrb[0].mxu0
        %v6409 = vadd.f32 0.0, %v6408
        %v6410 = vpop.f32.mrb[0].mxu0
        %v6411 = vpop.f32.mrb[0].mxu0
        %v6412 = vadd.f32 0.0, %v6411
        %v6413 = vpop.f32.mrb[0].mxu0
        %6414 = vmatprep.mubr.bf16.mxu0 0
        %6415 = vmatmul.mubr.bf16.gmra.mrb[0].mxu0 %v6272
        %v6416 = vpop.f32.mrb[0].mxu0
        %v6417 = vadd.f32 0.0, %v6416
        %v6418 = vpop.f32.mrb[0].mxu0
        %v6419 = vpop.f32.mrb[0].mxu0
        %v6420 = vadd.f32 0.0, %v6419
        %v6421 = vpop.f32.mrb[0].mxu0
        %6422 = vmatprep.mubr.bf16.mxu0 0
        %6423 = vmatmul.mubr.bf16.gmra.mrb[0].mxu0 %v6275
        %v6424 = vpop.f32.mrb[0].mxu0
        %v6425 = vadd.f32 0.0, %v6424
        %v6426 = vpop.f32.mrb[0].mxu0
        %v6427 = vpop.f32.mrb[0].mxu0
        %v6428 = vadd.f32 0.0, %v6427
        %v6429 = vpop.f32.mrb[0].mxu0
        %6430 = vmatprep.mubr.bf16.mxu0 0
        %6431 = vmatmul.mubr.bf16.gmra.mrb[0].mxu0 %v6278
        %v6432 = vpop.f32.mrb[0].mxu0
        %v6433 = vadd.f32 0.0, %v6432
        %v6434 = vpop.f32.mrb[0].mxu0
        %v6435 = vpop.f32.mrb[0].mxu0
        %v6436 = vadd.f32 0.0, %v6435
        %v6437 = vpop.f32.mrb[0].mxu0
        %6438 = vmatprep.mubr.bf16.mxu0 0
        %6439 = vmatmul.mubr.bf16.gmra.mrb[0].mxu0 %v6281
        %v6440 = vpop.f32.mrb[0].mxu0
        %v6441 = vadd.f32 0.0, %v6440
        %v6442 = vpop.f32.mrb[0].mxu0
        %v6443 = vpop.f32.mrb[0].mxu0
        %v6444 = vadd.f32 0.0, %v6443
        %v6445 = vpop.f32.mrb[0].mxu0
        %6446 = vmatprep.mubr.bf16.mxu0 0
        %6447 = vmatmul.mubr.bf16.gmra.mrb[0].mxu0 %v6284
        %v6448 = vpop.f32.mrb[0].mxu0
        %v6449 = vadd.f32 0.0, %v6448
        %v6450 = vpop.f32.mrb[0].mxu0
        %v6451 = vpop.f32.mrb[0].mxu0
        %v6452 = vadd.f32 0.0, %v6451
        %v6453 = vpop.f32.mrb[0].mxu0
        %6454 = vdwg.mxu0
        %v6455 = vadd.f32 %v6010, %v6321
        %v6456 = vadd.f32 %v6011, %v6324
        %v6457 = vadd.f32 %v6012, %v6329
        %v6458 = vadd.f32 %v6013, %v6332
        %v6459 = vadd.f32 %v6014, %v6337
        %v6460 = vadd.f32 %v6015, %v6340
        %v6461 = vadd.f32 %v6016, %v6345
        %v6462 = vadd.f32 %v6017, %v6348
        %v6463 = vadd.f32 %v6018, %v6353
        %v6464 = vadd.f32 %v6019, %v6356
        %v6465 = vadd.f32 %v6020, %v6361
        %v6466 = vadd.f32 %v6021, %v6364
        %v6467 = vadd.f32 %v6022, %v6369
        %v6468 = vadd.f32 %v6023, %v6372
        %v6469 = vadd.f32 %v6024, %v6377
        %v6470 = vadd.f32 %v6025, %v6380
        %v6471 = vadd.f32 %v6026, %v6385
        %v6472 = vadd.f32 %v6027, %v6388
        %v6473 = vadd.f32 %v6028, %v6393
        %v6474 = vadd.f32 %v6029, %v6396
        %v6475 = vadd.f32 %v6030, %v6401
        %v6476 = vadd.f32 %v6031, %v6404
        %v6477 = vadd.f32 %v6032, %v6409
        %v6478 = vadd.f32 %v6033, %v6412
        %v6479 = vadd.f32 %v6034, %v6417
        %v6480 = vadd.f32 %v6035, %v6420
        %v6481 = vadd.f32 %v6036, %v6425
        %v6482 = vadd.f32 %v6037, %v6428
        %v6483 = vadd.f32 %v6038, %v6433
        %v6484 = vadd.f32 %v6039, %v6436
        %v6485 = vadd.f32 %v6040, %v6441
        %v6486 = vadd.f32 %v6041, %v6444
        %v6487 = vadd.f32 %v6042, %v6449
        %v6488 = vadd.f32 %v6043, %v6452
        %v6489 = vld [vmem:[#allocation3 + $0x10] sm:$0x80]
        %v6490 = vld [vmem:[#allocation3 + $0x98] sm:$0xff]
        %s6491 = scalar_lea.vmem %s5, 192
        %v6492 = vld [vmem:[%s6491] sm:$0xf]
        %v6493 = vld [vmem:[%s6491 + $0x4] sm:$0xf]
        %v6494 = vld [vmem:[%s6491 + $0x8] sm:$0xf]
        %v6495 = vld [vmem:[%s6491 + $0xc] sm:$0xf]
        %v6496 = vld [vmem:[%s6491 + $0x10] sm:$0xf]
        %v6497 = vld [vmem:[%s6491 + $0x14] sm:$0xf]
        %v6498 = vld [vmem:[%s6491 + $0x18] sm:$0xf]
        %v6499 = vld [vmem:[%s6491 + $0x1c] sm:$0xf]
        %v6501 = vshrl.u32 %v6489, 16
        %v6503 = vrot.slane %v6501, 7
        %v6504 = vrot.slane %v6083, 7
        %v6505 = vor.u32 %v6504, %v6079
        %v6506 = vsel %vm1373, %v6503, %v6505
        %v6507 = vrot.slane %v6091, 7
        %v6508 = vor.u32 %v6507, %v6087
        %v6509 = vsel %vm1373, %v6504, %v6508
        %v6510 = vrot.slane %v6099, 7
        %v6511 = vor.u32 %v6510, %v6095
        %v6512 = vsel %vm1373, %v6507, %v6511
        %v6513 = vrot.slane %v6107, 7
        %v6514 = vor.u32 %v6513, %v6103
        %v6515 = vsel %vm1373, %v6510, %v6514
        %v6516 = vrot.slane %v6115, 7
        %v6517 = vor.u32 %v6516, %v6111
        %v6518 = vsel %vm1373, %v6513, %v6517
        %v6519 = vrot.slane %v6123, 7
        %v6520 = vor.u32 %v6519, %v6119
        %v6521 = vsel %vm1373, %v6516, %v6520
        %v6522 = vrot.slane %v6131, 7
        %v6523 = vor.u32 %v6522, %v6127
        %v6524 = vsel %vm1373, %v6519, %v6523
        %v6525 = vrot.slane %v6139, 7
        %v6526 = vor.u32 %v6525, %v6135
        %v6527 = vsel %vm1373, %v6522, %v6526
        %v6528 = vrot.slane %v6147, 7
        %v6529 = vor.u32 %v6528, %v6143
        %v6530 = vsel %vm1373, %v6525, %v6529
        %v6531 = vrot.slane %v6155, 7
        %v6532 = vor.u32 %v6531, %v6151
        %v6533 = vsel %vm1373, %v6528, %v6532
        %v6534 = vrot.slane %v6163, 7
        %v6535 = vor.u32 %v6534, %v6159
        %v6536 = vsel %vm1373, %v6531, %v6535
        %v6537 = vrot.slane %v6171, 7
        %v6538 = vor.u32 %v6537, %v6167
        %v6539 = vsel %vm1373, %v6534, %v6538
        %v6540 = vrot.slane %v6179, 7
        %v6541 = vor.u32 %v6540, %v6175
        %v6542 = vsel %vm1373, %v6537, %v6541
        %v6543 = vrot.slane %v6187, 7
        %v6544 = vor.u32 %v6543, %v6183
        %v6545 = vsel %vm1373, %v6540, %v6544
        %v6546 = vrot.slane %v6195, 7
        %v6547 = vor.u32 %v6546, %v6191
        %v6548 = vsel %vm1373, %v6543, %v6547
        %v6549 = vrot.slane %v6203, 7
        %v6550 = vor.u32 %v6549, %v6199
        %v6551 = vsel %vm1373, %v6546, %v6550
        %v6553 = vshrl.u32 %v6490, 16
        %v6555 = vrot.slane %v6553, 7
        %v6556 = vshll.u32 %v6490, 16
        %v6558 = vor.u32 %v6555, %v6556
        %v6559 = vsel %vm1373, %v6549, %v6558
        %v6568 = vunpack.c.l.b16 %v6492
        %v6569 = vunpack.c.l.b16 %v6493
        %v6570 = vunpack.c.l.b16 %v6494
        %v6571 = vunpack.c.l.b16 %v6495
        %v6572 = vunpack.c.l.b16 %v6496
        %v6573 = vunpack.c.l.b16 %v6497
        %v6574 = vunpack.c.l.b16 %v6498
        %v6575 = vunpack.c.l.b16 %v6499
        %v6576 = vpack.c.b16 %v6569, %v6568
        %v6577 = vpack.c.b16 %v6571, %v6570
        %v6578 = vpack.c.b16 %v6573, %v6572
        %v6579 = vpack.c.b16 %v6575, %v6574
        %v6585 = vsel %vm441, %v6506, 0
        %v6588 = vsel %vm441, %v6509, 0
        %v6591 = vsel %vm441, %v6512, 0
        %v6594 = vsel %vm441, %v6515, 0
        %v6597 = vsel %vm441, %v6518, 0
        %v6600 = vsel %vm441, %v6521, 0
        %v6603 = vsel %vm441, %v6524, 0
        %v6606 = vsel %vm441, %v6527, 0
        %v6609 = vsel %vm441, %v6530, 0
        %v6612 = vsel %vm441, %v6533, 0
        %v6615 = vsel %vm441, %v6536, 0
        %v6618 = vsel %vm441, %v6539, 0
        %v6621 = vsel %vm441, %v6542, 0
        %v6624 = vsel %vm441, %v6545, 0
        %v6627 = vsel %vm441, %v6548, 0
        %v6630 = vsel %vm441, %v6551, 0
        %v6633 = vsel %vm441, %v6559, 0
        %6635 = vmatprep.subr.bf16.mxu0 0
        %6636 = vmatpush1.bf16.msra.mxu0 %v6576
        %6637 = vmatprep.subr.bf16.mxu0 0
        %6638 = vmatpush1.bf16.msra.mxu0 %v6577
        %6639 = vmatprep.subr.bf16.mxu0 0
        %6640 = vmatpush1.bf16.msra.mxu0 %v6578
        %6641 = vmatprep.subr.bf16.mxu0 0
        %6642 = vmatpush1.bf16.msra.mxu0 %v6579
        %6643 = vmatprep.subr.bf16.mxu0 0
        %6644 = vmatpush1.bf16.msra.mxu0 0
        %6645 = vmatprep.subr.bf16.mxu0 0
        %6646 = vmatpush1.bf16.msra.mxu0 0
        %6647 = vmatprep.subr.bf16.mxu0 0
        %6648 = vmatpush1.bf16.msra.mxu0 0
        %6649 = vmatprep.subr.bf16.mxu0 0
        %6650 = vmatpush1.bf16.msra.mxu0 0
        %6651 = vmatprep.subr.bf16.mxu0 0
        %6652 = vmatpush1.bf16.msra.mxu0 0
        %6653 = vmatprep.subr.bf16.mxu0 0
        %6654 = vmatpush1.bf16.msra.mxu0 0
        %6655 = vmatprep.subr.bf16.mxu0 0
        %6656 = vmatpush1.bf16.msra.mxu0 0
        %6657 = vmatprep.subr.bf16.mxu0 0
        %6658 = vmatpush1.bf16.msra.mxu0 0
        %6659 = vmatprep.subr.bf16.mxu0 0
        %6660 = vmatpush1.bf16.msra.mxu0 0
        %6661 = vmatprep.subr.bf16.mxu0 0
        %6662 = vmatpush1.bf16.msra.mxu0 0
        %6663 = vmatprep.subr.bf16.mxu0 0
        %6664 = vmatpush1.bf16.msra.mxu0 0
        %6665 = vmatprep.subr.bf16.mxu0 0
        %6666 = vmatpush1.bf16.msra.mxu0 0
        %6667 = vmatprep.mubr.bf16.mxu0 0
        %6668 = vmatmul.mubr.bf16.gmra.mrb[0].mxu0 %v6585
        %v6669 = vpop.f32.mrb[0].mxu0
        %v6670 = vadd.f32 0.0, %v6669
        %v6671 = vpop.f32.mrb[0].mxu0
        %v6672 = vpop.f32.mrb[0].mxu0
        %v6673 = vadd.f32 0.0, %v6672
        %v6674 = vpop.f32.mrb[0].mxu0
        %6675 = vmatprep.mubr.bf16.mxu0 0
        %6676 = vmatmul.mubr.bf16.gmra.mrb[0].mxu0 %v6588
        %v6677 = vpop.f32.mrb[0].mxu0
        %v6678 = vadd.f32 0.0, %v6677
        %v6679 = vpop.f32.mrb[0].mxu0
        %v6680 = vpop.f32.mrb[0].mxu0
        %v6681 = vadd.f32 0.0, %v6680
        %v6682 = vpop.f32.mrb[0].mxu0
        %6683 = vmatprep.mubr.bf16.mxu0 0
        %6684 = vmatmul.mubr.bf16.gmra.mrb[0].mxu0 %v6591
        %v6685 = vpop.f32.mrb[0].mxu0
        %v6686 = vadd.f32 0.0, %v6685
        %v6687 = vpop.f32.mrb[0].mxu0
        %v6688 = vpop.f32.mrb[0].mxu0
        %v6689 = vadd.f32 0.0, %v6688
        %v6690 = vpop.f32.mrb[0].mxu0
        %6691 = vmatprep.mubr.bf16.mxu0 0
        %6692 = vmatmul.mubr.bf16.gmra.mrb[0].mxu0 %v6594
        %v6693 = vpop.f32.mrb[0].mxu0
        %v6694 = vadd.f32 0.0, %v6693
        %v6695 = vpop.f32.mrb[0].mxu0
        %v6696 = vpop.f32.mrb[0].mxu0
        %v6697 = vadd.f32 0.0, %v6696
        %v6698 = vpop.f32.mrb[0].mxu0
        %6699 = vmatprep.mubr.bf16.mxu0 0
        %6700 = vmatmul.mubr.bf16.gmra.mrb[0].mxu0 %v6597
        %v6701 = vpop.f32.mrb[0].mxu0
        %v6702 = vadd.f32 0.0, %v6701
        %v6703 = vpop.f32.mrb[0].mxu0
        %v6704 = vpop.f32.mrb[0].mxu0
        %v6705 = vadd.f32 0.0, %v6704
        %v6706 = vpop.f32.mrb[0].mxu0
        %6707 = vmatprep.mubr.bf16.mxu0 0
        %6708 = vmatmul.mubr.bf16.gmra.mrb[0].mxu0 %v6600
        %v6709 = vpop.f32.mrb[0].mxu0
        %v6710 = vadd.f32 0.0, %v6709
        %v6711 = vpop.f32.mrb[0].mxu0
        %v6712 = vpop.f32.mrb[0].mxu0
        %v6713 = vadd.f32 0.0, %v6712
        %v6714 = vpop.f32.mrb[0].mxu0
        %6715 = vmatprep.mubr.bf16.mxu0 0
        %6716 = vmatmul.mubr.bf16.gmra.mrb[0].mxu0 %v6603
        %v6717 = vpop.f32.mrb[0].mxu0
        %v6718 = vadd.f32 0.0, %v6717
        %v6719 = vpop.f32.mrb[0].mxu0
        %v6720 = vpop.f32.mrb[0].mxu0
        %v6721 = vadd.f32 0.0, %v6720
        %v6722 = vpop.f32.mrb[0].mxu0
        %6723 = vmatprep.mubr.bf16.mxu0 0
        %6724 = vmatmul.mubr.bf16.gmra.mrb[0].mxu0 %v6606
        %v6725 = vpop.f32.mrb[0].mxu0
        %v6726 = vadd.f32 0.0, %v6725
        %v6727 = vpop.f32.mrb[0].mxu0
        %v6728 = vpop.f32.mrb[0].mxu0
        %v6729 = vadd.f32 0.0, %v6728
        %v6730 = vpop.f32.mrb[0].mxu0
        %6731 = vmatprep.mubr.bf16.mxu0 0
        %6732 = vmatmul.mubr.bf16.gmra.mrb[0].mxu0 %v6609
        %v6733 = vpop.f32.mrb[0].mxu0
        %v6734 = vadd.f32 0.0, %v6733
        %v6735 = vpop.f32.mrb[0].mxu0
        %v6736 = vpop.f32.mrb[0].mxu0
        %v6737 = vadd.f32 0.0, %v6736
        %v6738 = vpop.f32.mrb[0].mxu0
        %6739 = vmatprep.mubr.bf16.mxu0 0
        %6740 = vmatmul.mubr.bf16.gmra.mrb[0].mxu0 %v6612
        %v6741 = vpop.f32.mrb[0].mxu0
        %v6742 = vadd.f32 0.0, %v6741
        %v6743 = vpop.f32.mrb[0].mxu0
        %v6744 = vpop.f32.mrb[0].mxu0
        %v6745 = vadd.f32 0.0, %v6744
        %v6746 = vpop.f32.mrb[0].mxu0
        %6747 = vmatprep.mubr.bf16.mxu0 0
        %6748 = vmatmul.mubr.bf16.gmra.mrb[0].mxu0 %v6615
        %v6749 = vpop.f32.mrb[0].mxu0
        %v6750 = vadd.f32 0.0, %v6749
        %v6751 = vpop.f32.mrb[0].mxu0
        %v6752 = vpop.f32.mrb[0].mxu0
        %v6753 = vadd.f32 0.0, %v6752
        %v6754 = vpop.f32.mrb[0].mxu0
        %6755 = vmatprep.mubr.bf16.mxu0 0
        %6756 = vmatmul.mubr.bf16.gmra.mrb[0].mxu0 %v6618
        %v6757 = vpop.f32.mrb[0].mxu0
        %v6758 = vadd.f32 0.0, %v6757
        %v6759 = vpop.f32.mrb[0].mxu0
        %v6760 = vpop.f32.mrb[0].mxu0
        %v6761 = vadd.f32 0.0, %v6760
        %v6762 = vpop.f32.mrb[0].mxu0
        %6763 = vmatprep.mubr.bf16.mxu0 0
        %6764 = vmatmul.mubr.bf16.gmra.mrb[0].mxu0 %v6621
        %v6765 = vpop.f32.mrb[0].mxu0
        %v6766 = vadd.f32 0.0, %v6765
        %v6767 = vpop.f32.mrb[0].mxu0
        %v6768 = vpop.f32.mrb[0].mxu0
        %v6769 = vadd.f32 0.0, %v6768
        %v6770 = vpop.f32.mrb[0].mxu0
        %6771 = vmatprep.mubr.bf16.mxu0 0
        %6772 = vmatmul.mubr.bf16.gmra.mrb[0].mxu0 %v6624
        %v6773 = vpop.f32.mrb[0].mxu0
        %v6774 = vadd.f32 0.0, %v6773
        %v6775 = vpop.f32.mrb[0].mxu0
        %v6776 = vpop.f32.mrb[0].mxu0
        %v6777 = vadd.f32 0.0, %v6776
        %v6778 = vpop.f32.mrb[0].mxu0
        %6779 = vmatprep.mubr.bf16.mxu0 0
        %6780 = vmatmul.mubr.bf16.gmra.mrb[0].mxu0 %v6627
        %v6781 = vpop.f32.mrb[0].mxu0
        %v6782 = vadd.f32 0.0, %v6781
        %v6783 = vpop.f32.mrb[0].mxu0
        %v6784 = vpop.f32.mrb[0].mxu0
        %v6785 = vadd.f32 0.0, %v6784
        %v6786 = vpop.f32.mrb[0].mxu0
        %6787 = vmatprep.mubr.bf16.mxu0 0
        %6788 = vmatmul.mubr.bf16.gmra.mrb[0].mxu0 %v6630
        %v6789 = vpop.f32.mrb[0].mxu0
        %v6790 = vadd.f32 0.0, %v6789
        %v6791 = vpop.f32.mrb[0].mxu0
        %v6792 = vpop.f32.mrb[0].mxu0
        %v6793 = vadd.f32 0.0, %v6792
        %v6794 = vpop.f32.mrb[0].mxu0
        %6795 = vmatprep.mubr.bf16.mxu0 0
        %6796 = vmatmul.mubr.bf16.gmra.mrb[0].mxu0 %v6633
        %v6797 = vpop.f32.mrb[0].mxu0
        %v6798 = vadd.f32 0.0, %v6797
        %v6799 = vpop.f32.mrb[0].mxu0
        %v6800 = vpop.f32.mrb[0].mxu0
        %v6801 = vadd.f32 0.0, %v6800
        %v6802 = vpop.f32.mrb[0].mxu0
        %6803 = vdwg.mxu0
        %v6804 = vadd.f32 %v6455, %v6670
        %v6805 = vadd.f32 %v6456, %v6673
        %v6806 = vadd.f32 %v6457, %v6678
        %v6807 = vadd.f32 %v6458, %v6681
        %v6808 = vadd.f32 %v6459, %v6686
        %v6809 = vadd.f32 %v6460, %v6689
        %v6810 = vadd.f32 %v6461, %v6694
        %v6811 = vadd.f32 %v6462, %v6697
        %v6812 = vadd.f32 %v6463, %v6702
        %v6813 = vadd.f32 %v6464, %v6705
        %v6814 = vadd.f32 %v6465, %v6710
        %v6815 = vadd.f32 %v6466, %v6713
        %v6816 = vadd.f32 %v6467, %v6718
        %v6817 = vadd.f32 %v6468, %v6721
        %v6818 = vadd.f32 %v6469, %v6726
        %v6819 = vadd.f32 %v6470, %v6729
        %v6820 = vadd.f32 %v6471, %v6734
        %v6821 = vadd.f32 %v6472, %v6737
        %v6822 = vadd.f32 %v6473, %v6742
        %v6823 = vadd.f32 %v6474, %v6745
        %v6824 = vadd.f32 %v6475, %v6750
        %v6825 = vadd.f32 %v6476, %v6753
        %v6826 = vadd.f32 %v6477, %v6758
        %v6827 = vadd.f32 %v6478, %v6761
        %v6828 = vadd.f32 %v6479, %v6766
        %v6829 = vadd.f32 %v6480, %v6769
        %v6830 = vadd.f32 %v6481, %v6774
        %v6831 = vadd.f32 %v6482, %v6777
        %v6832 = vadd.f32 %v6483, %v6782
        %v6833 = vadd.f32 %v6484, %v6785
        %v6834 = vadd.f32 %v6485, %v6790
        %v6835 = vadd.f32 %v6486, %v6793
        %v6836 = vadd.f32 %v6487, %v6798
        %v6837 = vadd.f32 %v6488, %v6801
        %s6838 = scalar_lea.vmem %s5, 224
        %v6839 = vld [vmem:[%s6838] sm:$0xf]
        %v6840 = vld [vmem:[%s6838 + $0x4] sm:$0xf]
        %v6841 = vld [vmem:[%s6838 + $0x8] sm:$0xf]
        %v6842 = vld [vmem:[%s6838 + $0xc] sm:$0xf]
        %v6843 = vld [vmem:[%s6838 + $0x10] sm:$0xf]
        %v6844 = vld [vmem:[%s6838 + $0x14] sm:$0xf]
        %v6845 = vld [vmem:[%s6838 + $0x18] sm:$0xf]
        %v6846 = vld [vmem:[%s6838 + $0x1c] sm:$0xf]
        %v6855 = vunpack.c.l.b16 %v6839
        %v6856 = vunpack.c.l.b16 %v6840
        %v6857 = vunpack.c.l.b16 %v6841
        %v6858 = vunpack.c.l.b16 %v6842
        %v6859 = vunpack.c.l.b16 %v6843
        %v6860 = vunpack.c.l.b16 %v6844
        %v6861 = vunpack.c.l.b16 %v6845
        %v6862 = vunpack.c.l.b16 %v6846
        %v6863 = vpack.c.b16 %v6856, %v6855
        %v6864 = vpack.c.b16 %v6858, %v6857
        %v6865 = vpack.c.b16 %v6860, %v6859
        %v6866 = vpack.c.b16 %v6862, %v6861
        %v6871 = vsel %vm441, %v6045, 0
        %v6873 = vsel %vm441, %v6046, 0
        %v6875 = vsel %vm441, %v6047, 0
        %v6877 = vsel %vm441, %v6048, 0
        %v6879 = vsel %vm441, %v6049, 0
        %v6881 = vsel %vm441, %v6050, 0
        %v6883 = vsel %vm441, %v6051, 0
        %v6885 = vsel %vm441, %v6052, 0
        %v6887 = vsel %vm441, %v6053, 0
        %v6889 = vsel %vm441, %v6054, 0
        %v6891 = vsel %vm441, %v6055, 0
        %v6893 = vsel %vm441, %v6056, 0
        %v6895 = vsel %vm441, %v6057, 0
        %v6897 = vsel %vm441, %v6058, 0
        %v6899 = vsel %vm441, %v6059, 0
        %v6901 = vsel %vm441, %v6060, 0
        %v6903 = vsel %vm441, %v6490, 0
        %6905 = vmatprep.subr.bf16.mxu0 0
        %6906 = vmatpush1.bf16.msra.mxu0 %v6863
        %6907 = vmatprep.subr.bf16.mxu0 0
        %6908 = vmatpush1.bf16.msra.mxu0 %v6864
        %6909 = vmatprep.subr.bf16.mxu0 0
        %6910 = vmatpush1.bf16.msra.mxu0 %v6865
        %6911 = vmatprep.subr.bf16.mxu0 0
        %6912 = vmatpush1.bf16.msra.mxu0 %v6866
        %6913 = vmatprep.subr.bf16.mxu0 0
        %6914 = vmatpush1.bf16.msra.mxu0 0
        %6915 = vmatprep.subr.bf16.mxu0 0
        %6916 = vmatpush1.bf16.msra.mxu0 0
        %6917 = vmatprep.subr.bf16.mxu0 0
        %6918 = vmatpush1.bf16.msra.mxu0 0
        %6919 = vmatprep.subr.bf16.mxu0 0
        %6920 = vmatpush1.bf16.msra.mxu0 0
        %6921 = vmatprep.subr.bf16.mxu0 0
        %6922 = vmatpush1.bf16.msra.mxu0 0
        %6923 = vmatprep.subr.bf16.mxu0 0
        %6924 = vmatpush1.bf16.msra.mxu0 0
        %6925 = vmatprep.subr.bf16.mxu0 0
        %6926 = vmatpush1.bf16.msra.mxu0 0
        %6927 = vmatprep.subr.bf16.mxu0 0
        %6928 = vmatpush1.bf16.msra.mxu0 0
        %6929 = vmatprep.subr.bf16.mxu0 0
        %6930 = vmatpush1.bf16.msra.mxu0 0
        %6931 = vmatprep.subr.bf16.mxu0 0
        %6932 = vmatpush1.bf16.msra.mxu0 0
        %6933 = vmatprep.subr.bf16.mxu0 0
        %6934 = vmatpush1.bf16.msra.mxu0 0
        %6935 = vmatprep.subr.bf16.mxu0 0
        %6936 = vmatpush1.bf16.msra.mxu0 0
        %6937 = vmatprep.mubr.bf16.mxu0 0
        %6938 = vmatmul.mubr.bf16.gmra.mrb[0].mxu0 %v6871
        %v6939 = vpop.f32.mrb[0].mxu0
        %v6940 = vadd.f32 0.0, %v6939
        %v6941 = vpop.f32.mrb[0].mxu0
        %v6942 = vpop.f32.mrb[0].mxu0
        %v6943 = vadd.f32 0.0, %v6942
        %v6944 = vpop.f32.mrb[0].mxu0
        %6945 = vmatprep.mubr.bf16.mxu0 0
        %6946 = vmatmul.mubr.bf16.gmra.mrb[0].mxu0 %v6873
        %v6947 = vpop.f32.mrb[0].mxu0
        %v6948 = vadd.f32 0.0, %v6947
        %v6949 = vpop.f32.mrb[0].mxu0
        %v6950 = vpop.f32.mrb[0].mxu0
        %v6951 = vadd.f32 0.0, %v6950
        %v6952 = vpop.f32.mrb[0].mxu0
        %6953 = vmatprep.mubr.bf16.mxu0 0
        %6954 = vmatmul.mubr.bf16.gmra.mrb[0].mxu0 %v6875
        %v6955 = vpop.f32.mrb[0].mxu0
        %v6956 = vadd.f32 0.0, %v6955
        %v6957 = vpop.f32.mrb[0].mxu0
        %v6958 = vpop.f32.mrb[0].mxu0
        %v6959 = vadd.f32 0.0, %v6958
        %v6960 = vpop.f32.mrb[0].mxu0
        %6961 = vmatprep.mubr.bf16.mxu0 0
        %6962 = vmatmul.mubr.bf16.gmra.mrb[0].mxu0 %v6877
        %v6963 = vpop.f32.mrb[0].mxu0
        %v6964 = vadd.f32 0.0, %v6963
        %v6965 = vpop.f32.mrb[0].mxu0
        %v6966 = vpop.f32.mrb[0].mxu0
        %v6967 = vadd.f32 0.0, %v6966
        %v6968 = vpop.f32.mrb[0].mxu0
        %6969 = vmatprep.mubr.bf16.mxu0 0
        %6970 = vmatmul.mubr.bf16.gmra.mrb[0].mxu0 %v6879
        %v6971 = vpop.f32.mrb[0].mxu0
        %v6972 = vadd.f32 0.0, %v6971
        %v6973 = vpop.f32.mrb[0].mxu0
        %v6974 = vpop.f32.mrb[0].mxu0
        %v6975 = vadd.f32 0.0, %v6974
        %v6976 = vpop.f32.mrb[0].mxu0
        %6977 = vmatprep.mubr.bf16.mxu0 0
        %6978 = vmatmul.mubr.bf16.gmra.mrb[0].mxu0 %v6881
        %v6979 = vpop.f32.mrb[0].mxu0
        %v6980 = vadd.f32 0.0, %v6979
        %v6981 = vpop.f32.mrb[0].mxu0
        %v6982 = vpop.f32.mrb[0].mxu0
        %v6983 = vadd.f32 0.0, %v6982
        %v6984 = vpop.f32.mrb[0].mxu0
        %6985 = vmatprep.mubr.bf16.mxu0 0
        %6986 = vmatmul.mubr.bf16.gmra.mrb[0].mxu0 %v6883
        %v6987 = vpop.f32.mrb[0].mxu0
        %v6988 = vadd.f32 0.0, %v6987
        %v6989 = vpop.f32.mrb[0].mxu0
        %v6990 = vpop.f32.mrb[0].mxu0
        %v6991 = vadd.f32 0.0, %v6990
        %v6992 = vpop.f32.mrb[0].mxu0
        %6993 = vmatprep.mubr.bf16.mxu0 0
        %6994 = vmatmul.mubr.bf16.gmra.mrb[0].mxu0 %v6885
        %v6995 = vpop.f32.mrb[0].mxu0
        %v6996 = vadd.f32 0.0, %v6995
        %v6997 = vpop.f32.mrb[0].mxu0
        %v6998 = vpop.f32.mrb[0].mxu0
        %v6999 = vadd.f32 0.0, %v6998
        %v7000 = vpop.f32.mrb[0].mxu0
        %7001 = vmatprep.mubr.bf16.mxu0 0
        %7002 = vmatmul.mubr.bf16.gmra.mrb[0].mxu0 %v6887
        %v7003 = vpop.f32.mrb[0].mxu0
        %v7004 = vadd.f32 0.0, %v7003
        %v7005 = vpop.f32.mrb[0].mxu0
        %v7006 = vpop.f32.mrb[0].mxu0
        %v7007 = vadd.f32 0.0, %v7006
        %v7008 = vpop.f32.mrb[0].mxu0
        %7009 = vmatprep.mubr.bf16.mxu0 0
        %7010 = vmatmul.mubr.bf16.gmra.mrb[0].mxu0 %v6889
        %v7011 = vpop.f32.mrb[0].mxu0
        %v7012 = vadd.f32 0.0, %v7011
        %v7013 = vpop.f32.mrb[0].mxu0
        %v7014 = vpop.f32.mrb[0].mxu0
        %v7015 = vadd.f32 0.0, %v7014
        %v7016 = vpop.f32.mrb[0].mxu0
        %7017 = vmatprep.mubr.bf16.mxu0 0
        %7018 = vmatmul.mubr.bf16.gmra.mrb[0].mxu0 %v6891
        %v7019 = vpop.f32.mrb[0].mxu0
        %v7020 = vadd.f32 0.0, %v7019
        %v7021 = vpop.f32.mrb[0].mxu0
        %v7022 = vpop.f32.mrb[0].mxu0
        %v7023 = vadd.f32 0.0, %v7022
        %v7024 = vpop.f32.mrb[0].mxu0
        %7025 = vmatprep.mubr.bf16.mxu0 0
        %7026 = vmatmul.mubr.bf16.gmra.mrb[0].mxu0 %v6893
        %v7027 = vpop.f32.mrb[0].mxu0
        %v7028 = vadd.f32 0.0, %v7027
        %v7029 = vpop.f32.mrb[0].mxu0
        %v7030 = vpop.f32.mrb[0].mxu0
        %v7031 = vadd.f32 0.0, %v7030
        %v7032 = vpop.f32.mrb[0].mxu0
        %7033 = vmatprep.mubr.bf16.mxu0 0
        %7034 = vmatmul.mubr.bf16.gmra.mrb[0].mxu0 %v6895
        %v7035 = vpop.f32.mrb[0].mxu0
        %v7036 = vadd.f32 0.0, %v7035
        %v7037 = vpop.f32.mrb[0].mxu0
        %v7038 = vpop.f32.mrb[0].mxu0
        %v7039 = vadd.f32 0.0, %v7038
        %v7040 = vpop.f32.mrb[0].mxu0
        %7041 = vmatprep.mubr.bf16.mxu0 0
        %7042 = vmatmul.mubr.bf16.gmra.mrb[0].mxu0 %v6897
        %v7043 = vpop.f32.mrb[0].mxu0
        %v7044 = vadd.f32 0.0, %v7043
        %v7045 = vpop.f32.mrb[0].mxu0
        %v7046 = vpop.f32.mrb[0].mxu0
        %v7047 = vadd.f32 0.0, %v7046
        %v7048 = vpop.f32.mrb[0].mxu0
        %7049 = vmatprep.mubr.bf16.mxu0 0
        %7050 = vmatmul.mubr.bf16.gmra.mrb[0].mxu0 %v6899
        %v7051 = vpop.f32.mrb[0].mxu0
        %v7052 = vadd.f32 0.0, %v7051
        %v7053 = vpop.f32.mrb[0].mxu0
        %v7054 = vpop.f32.mrb[0].mxu0
        %v7055 = vadd.f32 0.0, %v7054
        %v7056 = vpop.f32.mrb[0].mxu0
        %7057 = vmatprep.mubr.bf16.mxu0 0
        %7058 = vmatmul.mubr.bf16.gmra.mrb[0].mxu0 %v6901
        %v7059 = vpop.f32.mrb[0].mxu0
        %v7060 = vadd.f32 0.0, %v7059
        %v7061 = vpop.f32.mrb[0].mxu0
        %v7062 = vpop.f32.mrb[0].mxu0
        %v7063 = vadd.f32 0.0, %v7062
        %v7064 = vpop.f32.mrb[0].mxu0
        %7065 = vmatprep.mubr.bf16.mxu0 0
        %7066 = vmatmul.mubr.bf16.gmra.mrb[0].mxu0 %v6903
        %v7067 = vpop.f32.mrb[0].mxu0
        %v7068 = vadd.f32 0.0, %v7067
        %v7069 = vpop.f32.mrb[0].mxu0
        %v7070 = vpop.f32.mrb[0].mxu0
        %v7071 = vadd.f32 0.0, %v7070
        %v7072 = vpop.f32.mrb[0].mxu0
        %7073 = vdwg.mxu0
        %v7074 = vadd.f32 %v6804, %v6940
        %v7075 = vadd.f32 %v6805, %v6943
        %v7076 = vadd.f32 %v6806, %v6948
        %v7077 = vadd.f32 %v6807, %v6951
        %v7078 = vadd.f32 %v6808, %v6956
        %v7079 = vadd.f32 %v6809, %v6959
        %v7080 = vadd.f32 %v6810, %v6964
        %v7081 = vadd.f32 %v6811, %v6967
        %v7082 = vadd.f32 %v6812, %v6972
        %v7083 = vadd.f32 %v6813, %v6975
        %v7084 = vadd.f32 %v6814, %v6980
        %v7085 = vadd.f32 %v6815, %v6983
        %v7086 = vadd.f32 %v6816, %v6988
        %v7087 = vadd.f32 %v6817, %v6991
        %v7088 = vadd.f32 %v6818, %v6996
        %v7089 = vadd.f32 %v6819, %v6999
        %v7090 = vadd.f32 %v6820, %v7004
        %v7091 = vadd.f32 %v6821, %v7007
        %v7092 = vadd.f32 %v6822, %v7012
        %v7093 = vadd.f32 %v6823, %v7015
        %v7094 = vadd.f32 %v6824, %v7020
        %v7095 = vadd.f32 %v6825, %v7023
        %v7096 = vadd.f32 %v6826, %v7028
        %v7097 = vadd.f32 %v6827, %v7031
        %v7098 = vadd.f32 %v6828, %v7036
        %v7099 = vadd.f32 %v6829, %v7039
        %v7100 = vadd.f32 %v6830, %v7044
        %v7101 = vadd.f32 %v6831, %v7047
        %v7102 = vadd.f32 %v6832, %v7052
        %v7103 = vadd.f32 %v6833, %v7055
        %v7104 = vadd.f32 %v6834, %v7060
        %v7105 = vadd.f32 %v6835, %v7063
        %v7106 = vadd.f32 %v6836, %v7068
        %v7107 = vadd.f32 %v6837, %v7071
        %v7108 = vld [vmem:[#allocation3 + $0x18] sm:$0xff]
        %v7109 = vld [vmem:[#allocation3 + $0x20] sm:$0xff]
        %v7110 = vld [vmem:[#allocation3 + $0x28] sm:$0xff]
        %v7111 = vld [vmem:[#allocation3 + $0x30] sm:$0xff]
        %v7112 = vld [vmem:[#allocation3 + $0x38] sm:$0xff]
        %v7113 = vld [vmem:[#allocation3 + $0x40] sm:$0xff]
        %v7114 = vld [vmem:[#allocation3 + $0x48] sm:$0xff]
        %v7115 = vld [vmem:[#allocation3 + $0x50] sm:$0xff]
        %v7116 = vld [vmem:[#allocation3 + $0x58] sm:$0xff]
        %v7117 = vld [vmem:[#allocation3 + $0x60] sm:$0xff]
        %v7118 = vld [vmem:[#allocation3 + $0x68] sm:$0xff]
        %v7119 = vld [vmem:[#allocation3 + $0x70] sm:$0xff]
        %v7120 = vld [vmem:[#allocation3 + $0x78] sm:$0xff]
        %v7121 = vld [vmem:[#allocation3 + $0x80] sm:$0xff]
        %v7122 = vld [vmem:[#allocation3 + $0x88] sm:$0xff]
        %v7123 = vld [vmem:[#allocation3 + $0x90] sm:$0xff]
        %v7124 = vld [vmem:[#allocation3 + $0x98] sm:$0xff]
        %v7125 = vld [vmem:[#allocation3 + $0xa0] sm:$0x1]
        %s7126 = scalar_lea.vmem %s5, 256
        %v7127 = vld [vmem:[%s7126] sm:$0xf]
        %v7128 = vld [vmem:[%s7126 + $0x4] sm:$0xf]
        %v7129 = vld [vmem:[%s7126 + $0x8] sm:$0xf]
        %v7130 = vld [vmem:[%s7126 + $0xc] sm:$0xf]
        %v7131 = vld [vmem:[%s7126 + $0x10] sm:$0xf]
        %v7132 = vld [vmem:[%s7126 + $0x14] sm:$0xf]
        %v7133 = vld [vmem:[%s7126 + $0x18] sm:$0xf]
        %v7134 = vld [vmem:[%s7126 + $0x1c] sm:$0xf]
        %v7136 = vshrl.u32 %v7108, 16
        %v7138 = vshll.u32 %v7108, 16
        %v7140 = vrot.slane %v7138, 1
        %v7141 = vor.u32 %v7136, %v7140
        %v7143 = vshll.u32 %v7109, 16
        %v7145 = vrot.slane %v7143, 1
        %v7146 = vsel %vm1752, %v7141, %v7145
        %v7147 = vshrl.u32 %v7109, 16
        %v7149 = vor.u32 %v7147, %v7145
        %v7151 = vshll.u32 %v7110, 16
        %v7153 = vrot.slane %v7151, 1
        %v7154 = vsel %vm1752, %v7149, %v7153
        %v7155 = vshrl.u32 %v7110, 16
        %v7157 = vor.u32 %v7155, %v7153
        %v7159 = vshll.u32 %v7111, 16
        %v7161 = vrot.slane %v7159, 1
        %v7162 = vsel %vm1752, %v7157, %v7161
        %v7163 = vshrl.u32 %v7111, 16
        %v7165 = vor.u32 %v7163, %v7161
        %v7167 = vshll.u32 %v7112, 16
        %v7169 = vrot.slane %v7167, 1
        %v7170 = vsel %vm1752, %v7165, %v7169
        %v7171 = vshrl.u32 %v7112, 16
        %v7173 = vor.u32 %v7171, %v7169
        %v7175 = vshll.u32 %v7113, 16
        %v7177 = vrot.slane %v7175, 1
        %v7178 = vsel %vm1752, %v7173, %v7177
        %v7179 = vshrl.u32 %v7113, 16
        %v7181 = vor.u32 %v7179, %v7177
        %v7183 = vshll.u32 %v7114, 16
        %v7185 = vrot.slane %v7183, 1
        %v7186 = vsel %vm1752, %v7181, %v7185
        %v7187 = vshrl.u32 %v7114, 16
        %v7189 = vor.u32 %v7187, %v7185
        %v7191 = vshll.u32 %v7115, 16
        %v7193 = vrot.slane %v7191, 1
        %v7194 = vsel %vm1752, %v7189, %v7193
        %v7195 = vshrl.u32 %v7115, 16
        %v7197 = vor.u32 %v7195, %v7193
        %v7199 = vshll.u32 %v7116, 16
        %v7201 = vrot.slane %v7199, 1
        %v7202 = vsel %vm1752, %v7197, %v7201
        %v7203 = vshrl.u32 %v7116, 16
        %v7205 = vor.u32 %v7203, %v7201
        %v7207 = vshll.u32 %v7117, 16
        %v7209 = vrot.slane %v7207, 1
        %v7210 = vsel %vm1752, %v7205, %v7209
        %v7211 = vshrl.u32 %v7117, 16
        %v7213 = vor.u32 %v7211, %v7209
        %v7215 = vshll.u32 %v7118, 16
        %v7217 = vrot.slane %v7215, 1
        %v7218 = vsel %vm1752, %v7213, %v7217
        %v7219 = vshrl.u32 %v7118, 16
        %v7221 = vor.u32 %v7219, %v7217
        %v7223 = vshll.u32 %v7119, 16
        %v7225 = vrot.slane %v7223, 1
        %v7226 = vsel %vm1752, %v7221, %v7225
        %v7227 = vshrl.u32 %v7119, 16
        %v7229 = vor.u32 %v7227, %v7225
        %v7231 = vshll.u32 %v7120, 16
        %v7233 = vrot.slane %v7231, 1
        %v7234 = vsel %vm1752, %v7229, %v7233
        %v7235 = vshrl.u32 %v7120, 16
        %v7237 = vor.u32 %v7235, %v7233
        %v7239 = vshll.u32 %v7121, 16
        %v7241 = vrot.slane %v7239, 1
        %v7242 = vsel %vm1752, %v7237, %v7241
        %v7243 = vshrl.u32 %v7121, 16
        %v7245 = vor.u32 %v7243, %v7241
        %v7247 = vshll.u32 %v7122, 16
        %v7249 = vrot.slane %v7247, 1
        %v7250 = vsel %vm1752, %v7245, %v7249
        %v7251 = vshrl.u32 %v7122, 16
        %v7253 = vor.u32 %v7251, %v7249
        %v7255 = vshll.u32 %v7123, 16
        %v7257 = vrot.slane %v7255, 1
        %v7258 = vsel %vm1752, %v7253, %v7257
        %v7259 = vshrl.u32 %v7123, 16
        %v7261 = vor.u32 %v7259, %v7257
        %v7263 = vshll.u32 %v7124, 16
        %v7265 = vrot.slane %v7263, 1
        %v7266 = vsel %vm1752, %v7261, %v7265
        %v7267 = vshrl.u32 %v7124, 16
        %v7269 = vor.u32 %v7267, %v7265
        %v7271 = vshll.u32 %v7125, 16
        %v7273 = vrot.slane %v7271, 1
        %v7274 = vsel %vm1752, %v7269, %v7273
        %v7283 = vunpack.c.l.b16 %v7127
        %v7284 = vunpack.c.l.b16 %v7128
        %v7285 = vunpack.c.l.b16 %v7129
        %v7286 = vunpack.c.l.b16 %v7130
        %v7287 = vunpack.c.l.b16 %v7131
        %v7288 = vunpack.c.l.b16 %v7132
        %v7289 = vunpack.c.l.b16 %v7133
        %v7290 = vunpack.c.l.b16 %v7134
        %v7291 = vpack.c.b16 %v7284, %v7283
        %v7292 = vpack.c.b16 %v7286, %v7285
        %v7293 = vpack.c.b16 %v7288, %v7287
        %v7294 = vpack.c.b16 %v7290, %v7289
        %v7300 = vsel %vm441, %v7146, 0
        %v7303 = vsel %vm441, %v7154, 0
        %v7306 = vsel %vm441, %v7162, 0
        %v7309 = vsel %vm441, %v7170, 0
        %v7312 = vsel %vm441, %v7178, 0
        %v7315 = vsel %vm441, %v7186, 0
        %v7318 = vsel %vm441, %v7194, 0
        %v7321 = vsel %vm441, %v7202, 0
        %v7324 = vsel %vm441, %v7210, 0
        %v7327 = vsel %vm441, %v7218, 0
        %v7330 = vsel %vm441, %v7226, 0
        %v7333 = vsel %vm441, %v7234, 0
        %v7336 = vsel %vm441, %v7242, 0
        %v7339 = vsel %vm441, %v7250, 0
        %v7342 = vsel %vm441, %v7258, 0
        %v7345 = vsel %vm441, %v7266, 0
        %v7348 = vsel %vm441, %v7274, 0
        %7350 = vmatprep.subr.bf16.mxu0 0
        %7351 = vmatpush1.bf16.msra.mxu0 %v7291
        %7352 = vmatprep.subr.bf16.mxu0 0
        %7353 = vmatpush1.bf16.msra.mxu0 %v7292
        %7354 = vmatprep.subr.bf16.mxu0 0
        %7355 = vmatpush1.bf16.msra.mxu0 %v7293
        %7356 = vmatprep.subr.bf16.mxu0 0
        %7357 = vmatpush1.bf16.msra.mxu0 %v7294
        %7358 = vmatprep.subr.bf16.mxu0 0
        %7359 = vmatpush1.bf16.msra.mxu0 0
        %7360 = vmatprep.subr.bf16.mxu0 0
        %7361 = vmatpush1.bf16.msra.mxu0 0
        %7362 = vmatprep.subr.bf16.mxu0 0
        %7363 = vmatpush1.bf16.msra.mxu0 0
        %7364 = vmatprep.subr.bf16.mxu0 0
        %7365 = vmatpush1.bf16.msra.mxu0 0
        %7366 = vmatprep.subr.bf16.mxu0 0
        %7367 = vmatpush1.bf16.msra.mxu0 0
        %7368 = vmatprep.subr.bf16.mxu0 0
        %7369 = vmatpush1.bf16.msra.mxu0 0
        %7370 = vmatprep.subr.bf16.mxu0 0
        %7371 = vmatpush1.bf16.msra.mxu0 0
        %7372 = vmatprep.subr.bf16.mxu0 0
        %7373 = vmatpush1.bf16.msra.mxu0 0
        %7374 = vmatprep.subr.bf16.mxu0 0
        %7375 = vmatpush1.bf16.msra.mxu0 0
        %7376 = vmatprep.subr.bf16.mxu0 0
        %7377 = vmatpush1.bf16.msra.mxu0 0
        %7378 = vmatprep.subr.bf16.mxu0 0
        %7379 = vmatpush1.bf16.msra.mxu0 0
        %7380 = vmatprep.subr.bf16.mxu0 0
        %7381 = vmatpush1.bf16.msra.mxu0 0
        %7382 = vmatprep.mubr.bf16.mxu0 0
        %7383 = vmatmul.mubr.bf16.gmra.mrb[0].mxu0 %v7300
        %v7384 = vpop.f32.mrb[0].mxu0
        %v7385 = vadd.f32 0.0, %v7384
        %v7386 = vpop.f32.mrb[0].mxu0
        %v7387 = vpop.f32.mrb[0].mxu0
        %v7388 = vadd.f32 0.0, %v7387
        %v7389 = vpop.f32.mrb[0].mxu0
        %7390 = vmatprep.mubr.bf16.mxu0 0
        %7391 = vmatmul.mubr.bf16.gmra.mrb[0].mxu0 %v7303
        %v7392 = vpop.f32.mrb[0].mxu0
        %v7393 = vadd.f32 0.0, %v7392
        %v7394 = vpop.f32.mrb[0].mxu0
        %v7395 = vpop.f32.mrb[0].mxu0
        %v7396 = vadd.f32 0.0, %v7395
        %v7397 = vpop.f32.mrb[0].mxu0
        %7398 = vmatprep.mubr.bf16.mxu0 0
        %7399 = vmatmul.mubr.bf16.gmra.mrb[0].mxu0 %v7306
        %v7400 = vpop.f32.mrb[0].mxu0
        %v7401 = vadd.f32 0.0, %v7400
        %v7402 = vpop.f32.mrb[0].mxu0
        %v7403 = vpop.f32.mrb[0].mxu0
        %v7404 = vadd.f32 0.0, %v7403
        %v7405 = vpop.f32.mrb[0].mxu0
        %7406 = vmatprep.mubr.bf16.mxu0 0
        %7407 = vmatmul.mubr.bf16.gmra.mrb[0].mxu0 %v7309
        %v7408 = vpop.f32.mrb[0].mxu0
        %v7409 = vadd.f32 0.0, %v7408
        %v7410 = vpop.f32.mrb[0].mxu0
        %v7411 = vpop.f32.mrb[0].mxu0
        %v7412 = vadd.f32 0.0, %v7411
        %v7413 = vpop.f32.mrb[0].mxu0
        %7414 = vmatprep.mubr.bf16.mxu0 0
        %7415 = vmatmul.mubr.bf16.gmra.mrb[0].mxu0 %v7312
        %v7416 = vpop.f32.mrb[0].mxu0
        %v7417 = vadd.f32 0.0, %v7416
        %v7418 = vpop.f32.mrb[0].mxu0
        %v7419 = vpop.f32.mrb[0].mxu0
        %v7420 = vadd.f32 0.0, %v7419
        %v7421 = vpop.f32.mrb[0].mxu0
        %7422 = vmatprep.mubr.bf16.mxu0 0
        %7423 = vmatmul.mubr.bf16.gmra.mrb[0].mxu0 %v7315
        %v7424 = vpop.f32.mrb[0].mxu0
        %v7425 = vadd.f32 0.0, %v7424
        %v7426 = vpop.f32.mrb[0].mxu0
        %v7427 = vpop.f32.mrb[0].mxu0
        %v7428 = vadd.f32 0.0, %v7427
        %v7429 = vpop.f32.mrb[0].mxu0
        %7430 = vmatprep.mubr.bf16.mxu0 0
        %7431 = vmatmul.mubr.bf16.gmra.mrb[0].mxu0 %v7318
        %v7432 = vpop.f32.mrb[0].mxu0
        %v7433 = vadd.f32 0.0, %v7432
        %v7434 = vpop.f32.mrb[0].mxu0
        %v7435 = vpop.f32.mrb[0].mxu0
        %v7436 = vadd.f32 0.0, %v7435
        %v7437 = vpop.f32.mrb[0].mxu0
        %7438 = vmatprep.mubr.bf16.mxu0 0
        %7439 = vmatmul.mubr.bf16.gmra.mrb[0].mxu0 %v7321
        %v7440 = vpop.f32.mrb[0].mxu0
        %v7441 = vadd.f32 0.0, %v7440
        %v7442 = vpop.f32.mrb[0].mxu0
        %v7443 = vpop.f32.mrb[0].mxu0
        %v7444 = vadd.f32 0.0, %v7443
        %v7445 = vpop.f32.mrb[0].mxu0
        %7446 = vmatprep.mubr.bf16.mxu0 0
        %7447 = vmatmul.mubr.bf16.gmra.mrb[0].mxu0 %v7324
        %v7448 = vpop.f32.mrb[0].mxu0
        %v7449 = vadd.f32 0.0, %v7448
        %v7450 = vpop.f32.mrb[0].mxu0
        %v7451 = vpop.f32.mrb[0].mxu0
        %v7452 = vadd.f32 0.0, %v7451
        %v7453 = vpop.f32.mrb[0].mxu0
        %7454 = vmatprep.mubr.bf16.mxu0 0
        %7455 = vmatmul.mubr.bf16.gmra.mrb[0].mxu0 %v7327
        %v7456 = vpop.f32.mrb[0].mxu0
        %v7457 = vadd.f32 0.0, %v7456
        %v7458 = vpop.f32.mrb[0].mxu0
        %v7459 = vpop.f32.mrb[0].mxu0
        %v7460 = vadd.f32 0.0, %v7459
        %v7461 = vpop.f32.mrb[0].mxu0
        %7462 = vmatprep.mubr.bf16.mxu0 0
        %7463 = vmatmul.mubr.bf16.gmra.mrb[0].mxu0 %v7330
        %v7464 = vpop.f32.mrb[0].mxu0
        %v7465 = vadd.f32 0.0, %v7464
        %v7466 = vpop.f32.mrb[0].mxu0
        %v7467 = vpop.f32.mrb[0].mxu0
        %v7468 = vadd.f32 0.0, %v7467
        %v7469 = vpop.f32.mrb[0].mxu0
        %7470 = vmatprep.mubr.bf16.mxu0 0
        %7471 = vmatmul.mubr.bf16.gmra.mrb[0].mxu0 %v7333
        %v7472 = vpop.f32.mrb[0].mxu0
        %v7473 = vadd.f32 0.0, %v7472
        %v7474 = vpop.f32.mrb[0].mxu0
        %v7475 = vpop.f32.mrb[0].mxu0
        %v7476 = vadd.f32 0.0, %v7475
        %v7477 = vpop.f32.mrb[0].mxu0
        %7478 = vmatprep.mubr.bf16.mxu0 0
        %7479 = vmatmul.mubr.bf16.gmra.mrb[0].mxu0 %v7336
        %v7480 = vpop.f32.mrb[0].mxu0
        %v7481 = vadd.f32 0.0, %v7480
        %v7482 = vpop.f32.mrb[0].mxu0
        %v7483 = vpop.f32.mrb[0].mxu0
        %v7484 = vadd.f32 0.0, %v7483
        %v7485 = vpop.f32.mrb[0].mxu0
        %7486 = vmatprep.mubr.bf16.mxu0 0
        %7487 = vmatmul.mubr.bf16.gmra.mrb[0].mxu0 %v7339
        %v7488 = vpop.f32.mrb[0].mxu0
        %v7489 = vadd.f32 0.0, %v7488
        %v7490 = vpop.f32.mrb[0].mxu0
        %v7491 = vpop.f32.mrb[0].mxu0
        %v7492 = vadd.f32 0.0, %v7491
        %v7493 = vpop.f32.mrb[0].mxu0
        %7494 = vmatprep.mubr.bf16.mxu0 0
        %7495 = vmatmul.mubr.bf16.gmra.mrb[0].mxu0 %v7342
        %v7496 = vpop.f32.mrb[0].mxu0
        %v7497 = vadd.f32 0.0, %v7496
        %v7498 = vpop.f32.mrb[0].mxu0
        %v7499 = vpop.f32.mrb[0].mxu0
        %v7500 = vadd.f32 0.0, %v7499
        %v7501 = vpop.f32.mrb[0].mxu0
        %7502 = vmatprep.mubr.bf16.mxu0 0
        %7503 = vmatmul.mubr.bf16.gmra.mrb[0].mxu0 %v7345
        %v7504 = vpop.f32.mrb[0].mxu0
        %v7505 = vadd.f32 0.0, %v7504
        %v7506 = vpop.f32.mrb[0].mxu0
        %v7507 = vpop.f32.mrb[0].mxu0
        %v7508 = vadd.f32 0.0, %v7507
        %v7509 = vpop.f32.mrb[0].mxu0
        %7510 = vmatprep.mubr.bf16.mxu0 0
        %7511 = vmatmul.mubr.bf16.gmra.mrb[0].mxu0 %v7348
        %v7512 = vpop.f32.mrb[0].mxu0
        %v7513 = vadd.f32 0.0, %v7512
        %v7514 = vpop.f32.mrb[0].mxu0
        %v7515 = vpop.f32.mrb[0].mxu0
        %v7516 = vadd.f32 0.0, %v7515
        %v7517 = vpop.f32.mrb[0].mxu0
        %7518 = vdwg.mxu0
        %v7519 = vadd.f32 %v7074, %v7385
        %v7520 = vadd.f32 %v7075, %v7388
        %v7521 = vadd.f32 %v7076, %v7393
        %v7522 = vadd.f32 %v7077, %v7396
        %v7523 = vadd.f32 %v7078, %v7401
        %v7524 = vadd.f32 %v7079, %v7404
        %v7525 = vadd.f32 %v7080, %v7409
        %v7526 = vadd.f32 %v7081, %v7412
        %v7527 = vadd.f32 %v7082, %v7417
        %v7528 = vadd.f32 %v7083, %v7420
        %v7529 = vadd.f32 %v7084, %v7425
        %v7530 = vadd.f32 %v7085, %v7428
        %v7531 = vadd.f32 %v7086, %v7433
        %v7532 = vadd.f32 %v7087, %v7436
        %v7533 = vadd.f32 %v7088, %v7441
        %v7534 = vadd.f32 %v7089, %v7444
        %v7535 = vadd.f32 %v7090, %v7449
        %v7536 = vadd.f32 %v7091, %v7452
        %v7537 = vadd.f32 %v7092, %v7457
        %v7538 = vadd.f32 %v7093, %v7460
        %v7539 = vadd.f32 %v7094, %v7465
        %v7540 = vadd.f32 %v7095, %v7468
        %v7541 = vadd.f32 %v7096, %v7473
        %v7542 = vadd.f32 %v7097, %v7476
        %v7543 = vadd.f32 %v7098, %v7481
        %v7544 = vadd.f32 %v7099, %v7484
        %v7545 = vadd.f32 %v7100, %v7489
        %v7546 = vadd.f32 %v7101, %v7492
        %v7547 = vadd.f32 %v7102, %v7497
        %v7548 = vadd.f32 %v7103, %v7500
        %v7549 = vadd.f32 %v7104, %v7505
        %v7550 = vadd.f32 %v7105, %v7508
        %v7551 = vadd.f32 %v7106, %v7513
        %v7552 = vadd.f32 %v7107, %v7516
        %v7553 = vld [vmem:[%s6] sm:$0x1]
        %v7555 = vlaneseq
        %v7556 = vshrl.u32 %v7555, 7
        %v7557 = vsub.s32 0, %v7556
        %v7558 = vrot.slane %v7553, %v7557
        %v7560 = vadd.f32 %v7519, %v7558
        %v7561 = vadd.f32 %v7520, %v7558
        %v7562 = vadd.f32 %v7521, %v7558
        %v7563 = vadd.f32 %v7522, %v7558
        %v7564 = vadd.f32 %v7523, %v7558
        %v7565 = vadd.f32 %v7524, %v7558
        %v7566 = vadd.f32 %v7525, %v7558
        %v7567 = vadd.f32 %v7526, %v7558
        %v7568 = vadd.f32 %v7527, %v7558
        %v7569 = vadd.f32 %v7528, %v7558
        %v7570 = vadd.f32 %v7529, %v7558
        %v7571 = vadd.f32 %v7530, %v7558
        %v7572 = vadd.f32 %v7531, %v7558
        %v7573 = vadd.f32 %v7532, %v7558
        %v7574 = vadd.f32 %v7533, %v7558
        %v7575 = vadd.f32 %v7534, %v7558
        %v7576 = vadd.f32 %v7535, %v7558
        %v7577 = vadd.f32 %v7536, %v7558
        %v7578 = vadd.f32 %v7537, %v7558
        %v7579 = vadd.f32 %v7538, %v7558
        %v7580 = vadd.f32 %v7539, %v7558
        %v7581 = vadd.f32 %v7540, %v7558
        %v7582 = vadd.f32 %v7541, %v7558
        %v7583 = vadd.f32 %v7542, %v7558
        %v7584 = vadd.f32 %v7543, %v7558
        %v7585 = vadd.f32 %v7544, %v7558
        %v7586 = vadd.f32 %v7545, %v7558
        %v7587 = vadd.f32 %v7546, %v7558
        %v7588 = vadd.f32 %v7547, %v7558
        %v7589 = vadd.f32 %v7548, %v7558
        %v7590 = vadd.f32 %v7549, %v7558
        %v7591 = vadd.f32 %v7550, %v7558
        %v7592 = vadd.f32 %v7551, %v7558
        %v7593 = vadd.f32 %v7552, %v7558
        %v7594 = vld [vmem:[%s7] sm:$0xf]
        %v7595 = vld [vmem:[%s7 + $0x4] sm:$0xf]
        %v7596 = vld [vmem:[%s7 + $0x8] sm:$0xf]
        %v7597 = vld [vmem:[%s7 + $0xc] sm:$0xf]
        %v7598 = vld [vmem:[%s8] sm:$0x1]
        %v7600 = vlaneseq
        %v7601 = vshrl.u32 %v7600, 7
        %v7602 = vsub.s32 0, %v7601
        %v7603 = vrot.slane %v7598, %v7602
        %v7609 = vunpack.c.l.b16 %v7594
        %v7610 = vunpack.c.l.b16 %v7595
        %v7611 = vunpack.c.l.b16 %v7596
        %v7612 = vunpack.c.l.b16 %v7597
        %v7613 = vpack.c.b16 %v7610, %v7609
        %v7614 = vpack.c.b16 %v7612, %v7611
        %v7618 = vsel %vm436, %v1080, 0
        %v7621 = vsel %vm436, %v1081, 0
        %v7624 = vsel %vm436, %v1082, 0
        %v7627 = vsel %vm436, %v1083, 0
        %v7630 = vsel %vm436, %v1084, 0
        %v7633 = vsel %vm436, %v1085, 0
        %v7636 = vsel %vm436, %v1086, 0
        %v7639 = vsel %vm436, %v1087, 0
        %v7642 = vsel %vm436, %v1088, 0
        %v7645 = vsel %vm436, %v1089, 0
        %v7648 = vsel %vm436, %v1090, 0
        %v7651 = vsel %vm436, %v1091, 0
        %v7654 = vsel %vm436, %v1092, 0
        %v7657 = vsel %vm436, %v1093, 0
        %v7660 = vsel %vm436, %v1094, 0
        %v7663 = vsel %vm436, %v1095, 0
        %v7666 = vsel %vm436, %v1096, 0
        %7668 = vmatprep.subr.bf16.mxu0 0
        %7669 = vmatpush1.bf16.msra.mxu0 %v7613
        %7670 = vmatprep.subr.bf16.mxu0 0
        %7671 = vmatpush1.bf16.msra.mxu0 %v7614
        %7672 = vmatprep.subr.bf16.mxu0 0
        %7673 = vmatpush1.bf16.msra.mxu0 0
        %7674 = vmatprep.subr.bf16.mxu0 0
        %7675 = vmatpush1.bf16.msra.mxu0 0
        %7676 = vmatprep.subr.bf16.mxu0 0
        %7677 = vmatpush1.bf16.msra.mxu0 0
        %7678 = vmatprep.subr.bf16.mxu0 0
        %7679 = vmatpush1.bf16.msra.mxu0 0
        %7680 = vmatprep.subr.bf16.mxu0 0
        %7681 = vmatpush1.bf16.msra.mxu0 0
        %7682 = vmatprep.subr.bf16.mxu0 0
        %7683 = vmatpush1.bf16.msra.mxu0 0
        %7684 = vmatprep.subr.bf16.mxu0 0
        %7685 = vmatpush1.bf16.msra.mxu0 0
        %7686 = vmatprep.subr.bf16.mxu0 0
        %7687 = vmatpush1.bf16.msra.mxu0 0
        %7688 = vmatprep.subr.bf16.mxu0 0
        %7689 = vmatpush1.bf16.msra.mxu0 0
        %7690 = vmatprep.subr.bf16.mxu0 0
        %7691 = vmatpush1.bf16.msra.mxu0 0
        %7692 = vmatprep.subr.bf16.mxu0 0
        %7693 = vmatpush1.bf16.msra.mxu0 0
        %7694 = vmatprep.subr.bf16.mxu0 0
        %7695 = vmatpush1.bf16.msra.mxu0 0
        %7696 = vmatprep.subr.bf16.mxu0 0
        %7697 = vmatpush1.bf16.msra.mxu0 0
        %7698 = vmatprep.subr.bf16.mxu0 0
        %7699 = vmatpush1.bf16.msra.mxu0 0
        %7700 = vmatprep.mubr.bf16.mxu0 0
        %7701 = vmatmul.mubr.bf16.gmra.mrb[0].mxu0 %v7618
        %v7702 = vpop.f32.mrb[0].mxu0
        %v7703 = vadd.f32 %v7603, %v7702
        %v7704 = vpop.f32.mrb[0].mxu0
        %v7705 = vpop.f32.mrb[0].mxu0
        %v7706 = vadd.f32 %v7603, %v7705
        %v7707 = vpop.f32.mrb[0].mxu0
        %7708 = vmatprep.mubr.bf16.mxu0 0
        %7709 = vmatmul.mubr.bf16.gmra.mrb[0].mxu0 %v7621
        %v7710 = vpop.f32.mrb[0].mxu0
        %v7711 = vadd.f32 %v7603, %v7710
        %v7712 = vpop.f32.mrb[0].mxu0
        %v7713 = vpop.f32.mrb[0].mxu0
        %v7714 = vadd.f32 %v7603, %v7713
        %v7715 = vpop.f32.mrb[0].mxu0
        %7716 = vmatprep.mubr.bf16.mxu0 0
        %7717 = vmatmul.mubr.bf16.gmra.mrb[0].mxu0 %v7624
        %v7718 = vpop.f32.mrb[0].mxu0
        %v7719 = vadd.f32 %v7603, %v7718
        %v7720 = vpop.f32.mrb[0].mxu0
        %v7721 = vpop.f32.mrb[0].mxu0
        %v7722 = vadd.f32 %v7603, %v7721
        %v7723 = vpop.f32.mrb[0].mxu0
        %7724 = vmatprep.mubr.bf16.mxu0 0
        %7725 = vmatmul.mubr.bf16.gmra.mrb[0].mxu0 %v7627
        %v7726 = vpop.f32.mrb[0].mxu0
        %v7727 = vadd.f32 %v7603, %v7726
        %v7728 = vpop.f32.mrb[0].mxu0
        %v7729 = vpop.f32.mrb[0].mxu0
        %v7730 = vadd.f32 %v7603, %v7729
        %v7731 = vpop.f32.mrb[0].mxu0
        %7732 = vmatprep.mubr.bf16.mxu0 0
        %7733 = vmatmul.mubr.bf16.gmra.mrb[0].mxu0 %v7630
        %v7734 = vpop.f32.mrb[0].mxu0
        %v7735 = vadd.f32 %v7603, %v7734
        %v7736 = vpop.f32.mrb[0].mxu0
        %v7737 = vpop.f32.mrb[0].mxu0
        %v7738 = vadd.f32 %v7603, %v7737
        %v7739 = vpop.f32.mrb[0].mxu0
        %7740 = vmatprep.mubr.bf16.mxu0 0
        %7741 = vmatmul.mubr.bf16.gmra.mrb[0].mxu0 %v7633
        %v7742 = vpop.f32.mrb[0].mxu0
        %v7743 = vadd.f32 %v7603, %v7742
        %v7744 = vpop.f32.mrb[0].mxu0
        %v7745 = vpop.f32.mrb[0].mxu0
        %v7746 = vadd.f32 %v7603, %v7745
        %v7747 = vpop.f32.mrb[0].mxu0
        %7748 = vmatprep.mubr.bf16.mxu0 0
        %7749 = vmatmul.mubr.bf16.gmra.mrb[0].mxu0 %v7636
        %v7750 = vpop.f32.mrb[0].mxu0
        %v7751 = vadd.f32 %v7603, %v7750
        %v7752 = vpop.f32.mrb[0].mxu0
        %v7753 = vpop.f32.mrb[0].mxu0
        %v7754 = vadd.f32 %v7603, %v7753
        %v7755 = vpop.f32.mrb[0].mxu0
        %7756 = vmatprep.mubr.bf16.mxu0 0
        %7757 = vmatmul.mubr.bf16.gmra.mrb[0].mxu0 %v7639
        %v7758 = vpop.f32.mrb[0].mxu0
        %v7759 = vadd.f32 %v7603, %v7758
        %v7760 = vpop.f32.mrb[0].mxu0
        %v7761 = vpop.f32.mrb[0].mxu0
        %v7762 = vadd.f32 %v7603, %v7761
        %v7763 = vpop.f32.mrb[0].mxu0
        %7764 = vmatprep.mubr.bf16.mxu0 0
        %7765 = vmatmul.mubr.bf16.gmra.mrb[0].mxu0 %v7642
        %v7766 = vpop.f32.mrb[0].mxu0
        %v7767 = vadd.f32 %v7603, %v7766
        %v7768 = vpop.f32.mrb[0].mxu0
        %v7769 = vpop.f32.mrb[0].mxu0
        %v7770 = vadd.f32 %v7603, %v7769
        %v7771 = vpop.f32.mrb[0].mxu0
        %7772 = vmatprep.mubr.bf16.mxu0 0
        %7773 = vmatmul.mubr.bf16.gmra.mrb[0].mxu0 %v7645
        %v7774 = vpop.f32.mrb[0].mxu0
        %v7775 = vadd.f32 %v7603, %v7774
        %v7776 = vpop.f32.mrb[0].mxu0
        %v7777 = vpop.f32.mrb[0].mxu0
        %v7778 = vadd.f32 %v7603, %v7777
        %v7779 = vpop.f32.mrb[0].mxu0
        %7780 = vmatprep.mubr.bf16.mxu0 0
        %7781 = vmatmul.mubr.bf16.gmra.mrb[0].mxu0 %v7648
        %v7782 = vpop.f32.mrb[0].mxu0
        %v7783 = vadd.f32 %v7603, %v7782
        %v7784 = vpop.f32.mrb[0].mxu0
        %v7785 = vpop.f32.mrb[0].mxu0
        %v7786 = vadd.f32 %v7603, %v7785
        %v7787 = vpop.f32.mrb[0].mxu0
        %7788 = vmatprep.mubr.bf16.mxu0 0
        %7789 = vmatmul.mubr.bf16.gmra.mrb[0].mxu0 %v7651
        %v7790 = vpop.f32.mrb[0].mxu0
        %v7791 = vadd.f32 %v7603, %v7790
        %v7792 = vpop.f32.mrb[0].mxu0
        %v7793 = vpop.f32.mrb[0].mxu0
        %v7794 = vadd.f32 %v7603, %v7793
        %v7795 = vpop.f32.mrb[0].mxu0
        %7796 = vmatprep.mubr.bf16.mxu0 0
        %7797 = vmatmul.mubr.bf16.gmra.mrb[0].mxu0 %v7654
        %v7798 = vpop.f32.mrb[0].mxu0
        %v7799 = vadd.f32 %v7603, %v7798
        %v7800 = vpop.f32.mrb[0].mxu0
        %v7801 = vpop.f32.mrb[0].mxu0
        %v7802 = vadd.f32 %v7603, %v7801
        %v7803 = vpop.f32.mrb[0].mxu0
        %7804 = vmatprep.mubr.bf16.mxu0 0
        %7805 = vmatmul.mubr.bf16.gmra.mrb[0].mxu0 %v7657
        %v7806 = vpop.f32.mrb[0].mxu0
        %v7807 = vadd.f32 %v7603, %v7806
        %v7808 = vpop.f32.mrb[0].mxu0
        %v7809 = vpop.f32.mrb[0].mxu0
        %v7810 = vadd.f32 %v7603, %v7809
        %v7811 = vpop.f32.mrb[0].mxu0
        %7812 = vmatprep.mubr.bf16.mxu0 0
        %7813 = vmatmul.mubr.bf16.gmra.mrb[0].mxu0 %v7660
        %v7814 = vpop.f32.mrb[0].mxu0
        %v7815 = vadd.f32 %v7603, %v7814
        %v7816 = vpop.f32.mrb[0].mxu0
        %v7817 = vpop.f32.mrb[0].mxu0
        %v7818 = vadd.f32 %v7603, %v7817
        %v7819 = vpop.f32.mrb[0].mxu0
        %7820 = vmatprep.mubr.bf16.mxu0 0
        %7821 = vmatmul.mubr.bf16.gmra.mrb[0].mxu0 %v7663
        %v7822 = vpop.f32.mrb[0].mxu0
        %v7823 = vadd.f32 %v7603, %v7822
        %v7824 = vpop.f32.mrb[0].mxu0
        %v7825 = vpop.f32.mrb[0].mxu0
        %v7826 = vadd.f32 %v7603, %v7825
        %v7827 = vpop.f32.mrb[0].mxu0
        %7828 = vmatprep.mubr.bf16.mxu0 0
        %7829 = vmatmul.mubr.bf16.gmra.mrb[0].mxu0 %v7666
        %v7830 = vpop.f32.mrb[0].mxu0
        %v7831 = vadd.f32 %v7603, %v7830
        %v7832 = vpop.f32.mrb[0].mxu0
        %v7833 = vpop.f32.mrb[0].mxu0
        %v7834 = vadd.f32 %v7603, %v7833
        %v7835 = vpop.f32.mrb[0].mxu0
        %7836 = vdwg.mxu0
        %v7837 = vadd.f32 %v7560, %v7703
        %v7838 = vadd.f32 %v7561, %v7706
        %v7839 = vadd.f32 %v7562, %v7711
        %v7840 = vadd.f32 %v7563, %v7714
        %v7841 = vadd.f32 %v7564, %v7719
        %v7842 = vadd.f32 %v7565, %v7722
        %v7843 = vadd.f32 %v7566, %v7727
        %v7844 = vadd.f32 %v7567, %v7730
        %v7845 = vadd.f32 %v7568, %v7735
        %v7846 = vadd.f32 %v7569, %v7738
        %v7847 = vadd.f32 %v7570, %v7743
        %v7848 = vadd.f32 %v7571, %v7746
        %v7849 = vadd.f32 %v7572, %v7751
        %v7850 = vadd.f32 %v7573, %v7754
        %v7851 = vadd.f32 %v7574, %v7759
        %v7852 = vadd.f32 %v7575, %v7762
        %v7853 = vadd.f32 %v7576, %v7767
        %v7854 = vadd.f32 %v7577, %v7770
        %v7855 = vadd.f32 %v7578, %v7775
        %v7856 = vadd.f32 %v7579, %v7778
        %v7857 = vadd.f32 %v7580, %v7783
        %v7858 = vadd.f32 %v7581, %v7786
        %v7859 = vadd.f32 %v7582, %v7791
        %v7860 = vadd.f32 %v7583, %v7794
        %v7861 = vadd.f32 %v7584, %v7799
        %v7862 = vadd.f32 %v7585, %v7802
        %v7863 = vadd.f32 %v7586, %v7807
        %v7864 = vadd.f32 %v7587, %v7810
        %v7865 = vadd.f32 %v7588, %v7815
        %v7866 = vadd.f32 %v7589, %v7818
        %v7867 = vadd.f32 %v7590, %v7823
        %v7868 = vadd.f32 %v7591, %v7826
        %v7869 = vadd.f32 %v7592, %v7831
        %v7870 = vadd.f32 %v7593, %v7834
        %v7871 = vmax.f32 %v7837, 0.0
        %v7872 = vmax.f32 %v7838, 0.0
        %v7873 = vmax.f32 %v7839, 0.0
        %v7874 = vmax.f32 %v7840, 0.0
        %v7875 = vmax.f32 %v7841, 0.0
        %v7876 = vmax.f32 %v7842, 0.0
        %v7877 = vmax.f32 %v7843, 0.0
        %v7878 = vmax.f32 %v7844, 0.0
        %v7879 = vmax.f32 %v7845, 0.0
        %v7880 = vmax.f32 %v7846, 0.0
        %v7881 = vmax.f32 %v7847, 0.0
        %v7882 = vmax.f32 %v7848, 0.0
        %v7883 = vmax.f32 %v7849, 0.0
        %v7884 = vmax.f32 %v7850, 0.0
        %v7885 = vmax.f32 %v7851, 0.0
        %v7886 = vmax.f32 %v7852, 0.0
        %v7887 = vmax.f32 %v7853, 0.0
        %v7888 = vmax.f32 %v7854, 0.0
        %v7889 = vmax.f32 %v7855, 0.0
        %v7890 = vmax.f32 %v7856, 0.0
        %v7891 = vmax.f32 %v7857, 0.0
        %v7892 = vmax.f32 %v7858, 0.0
        %v7893 = vmax.f32 %v7859, 0.0
        %v7894 = vmax.f32 %v7860, 0.0
        %v7895 = vmax.f32 %v7861, 0.0
        %v7896 = vmax.f32 %v7862, 0.0
        %v7897 = vmax.f32 %v7863, 0.0
        %v7898 = vmax.f32 %v7864, 0.0
        %v7899 = vmax.f32 %v7865, 0.0
        %v7900 = vmax.f32 %v7866, 0.0
        %v7901 = vmax.f32 %v7867, 0.0
        %v7902 = vmax.f32 %v7868, 0.0
        %v7903 = vmax.f32 %v7869, 0.0
        %v7904 = vmax.f32 %v7870, 0.0
        %v7905 = vmul.f32 %v7871, %v879
        %v7906 = vmul.f32 %v7872, %v884
        %v7907 = vmul.f32 %v7873, %v889
        %v7908 = vmul.f32 %v7874, %v894
        %v7909 = vmul.f32 %v7875, %v899
        %v7910 = vmul.f32 %v7876, %v904
        %v7911 = vmul.f32 %v7877, %v909
        %v7912 = vmul.f32 %v7878, %v914
        %v7913 = vmul.f32 %v7879, %v919
        %v7914 = vmul.f32 %v7880, %v924
        %v7915 = vmul.f32 %v7881, %v929
        %v7916 = vmul.f32 %v7882, %v934
        %v7917 = vmul.f32 %v7883, %v939
        %v7918 = vmul.f32 %v7884, %v944
        %v7919 = vmul.f32 %v7885, %v949
        %v7920 = vmul.f32 %v7886, %v954
        %v7921 = vmul.f32 %v7887, %v959
        %v7922 = vmul.f32 %v7888, %v964
        %v7923 = vmul.f32 %v7889, %v969
        %v7924 = vmul.f32 %v7890, %v974
        %v7925 = vmul.f32 %v7891, %v979
        %v7926 = vmul.f32 %v7892, %v984
        %v7927 = vmul.f32 %v7893, %v989
        %v7928 = vmul.f32 %v7894, %v994
        %v7929 = vmul.f32 %v7895, %v999
        %v7930 = vmul.f32 %v7896, %v1004
        %v7931 = vmul.f32 %v7897, %v1009
        %v7932 = vmul.f32 %v7898, %v1014
        %v7933 = vmul.f32 %v7899, %v1019
        %v7934 = vmul.f32 %v7900, %v1024
        %v7935 = vmul.f32 %v7901, %v1029
        %v7936 = vmul.f32 %v7902, %v1034
        %v7937 = vmul.f32 %v7903, %v1039
        %v7938 = vmul.f32 %v7904, %v1044
        %v7939 = vsel %vm441, %v7905, 0.0
        %v7940 = vsel %vm441, %v7906, 0.0
        %v7941 = vadd.f32 %v7939, %v7940
        %v7942 = vsel %vm441, %v7907, 0.0
        %v7943 = vadd.f32 %v7941, %v7942
        %v7944 = vsel %vm441, %v7908, 0.0
        %v7945 = vadd.f32 %v7943, %v7944
        %v7946 = vsel %vm441, %v7909, 0.0
        %v7947 = vadd.f32 %v7945, %v7946
        %v7948 = vsel %vm441, %v7910, 0.0
        %v7949 = vadd.f32 %v7947, %v7948
        %v7950 = vsel %vm441, %v7911, 0.0
        %v7951 = vadd.f32 %v7949, %v7950
        %v7952 = vsel %vm441, %v7912, 0.0
        %v7953 = vadd.f32 %v7951, %v7952
        %v7954 = vsel %vm441, %v7913, 0.0
        %v7955 = vadd.f32 %v7953, %v7954
        %v7956 = vsel %vm441, %v7914, 0.0
        %v7957 = vadd.f32 %v7955, %v7956
        %v7958 = vsel %vm441, %v7915, 0.0
        %v7959 = vadd.f32 %v7957, %v7958
        %v7960 = vsel %vm441, %v7916, 0.0
        %v7961 = vadd.f32 %v7959, %v7960
        %v7962 = vsel %vm441, %v7917, 0.0
        %v7963 = vadd.f32 %v7961, %v7962
        %v7964 = vsel %vm441, %v7918, 0.0
        %v7965 = vadd.f32 %v7963, %v7964
        %v7966 = vsel %vm441, %v7919, 0.0
        %v7967 = vadd.f32 %v7965, %v7966
        %v7968 = vsel %vm441, %v7920, 0.0
        %v7969 = vadd.f32 %v7967, %v7968
        %v7970 = vsel %vm441, %v7921, 0.0
        %v7971 = vadd.f32 %v7969, %v7970
        %v7972 = vsel %vm441, %v7922, 0.0
        %v7973 = vadd.f32 %v7971, %v7972
        %v7974 = vsel %vm441, %v7923, 0.0
        %v7975 = vadd.f32 %v7973, %v7974
        %v7976 = vsel %vm441, %v7924, 0.0
        %v7977 = vadd.f32 %v7975, %v7976
        %v7978 = vsel %vm441, %v7925, 0.0
        %v7979 = vadd.f32 %v7977, %v7978
        %v7980 = vsel %vm441, %v7926, 0.0
        %v7981 = vadd.f32 %v7979, %v7980
        %v7982 = vsel %vm441, %v7927, 0.0
        %v7983 = vadd.f32 %v7981, %v7982
        %v7984 = vsel %vm441, %v7928, 0.0
        %v7985 = vadd.f32 %v7983, %v7984
        %v7986 = vsel %vm441, %v7929, 0.0
        %v7987 = vadd.f32 %v7985, %v7986
        %v7988 = vsel %vm441, %v7930, 0.0
        %v7989 = vadd.f32 %v7987, %v7988
        %v7990 = vsel %vm441, %v7931, 0.0
        %v7991 = vadd.f32 %v7989, %v7990
        %v7992 = vsel %vm441, %v7932, 0.0
        %v7993 = vadd.f32 %v7991, %v7992
        %v7994 = vsel %vm441, %v7933, 0.0
        %v7995 = vadd.f32 %v7993, %v7994
        %v7996 = vsel %vm441, %v7934, 0.0
        %v7997 = vadd.f32 %v7995, %v7996
        %v7998 = vsel %vm441, %v7935, 0.0
        %v7999 = vadd.f32 %v7997, %v7998
        %v8000 = vsel %vm441, %v7936, 0.0
        %v8001 = vadd.f32 %v7999, %v8000
        %v8002 = vsel %vm441, %v7937, 0.0
        %v8003 = vadd.f32 %v8001, %v8002
        %v8004 = vsel %vm441, %v7938, 0.0
        %v8005 = vadd.f32 %v8003, %v8004
        %v8006 = vrot.slane %v8005, 4
        %v8007 = vadd.f32 %v8005, %v8006
        %v8008 = vrot.slane %v8007, 2
        %v8009 = vadd.f32 %v8007, %v8008
        %v8010 = vrot.slane %v8009, 1
        %v8011 = vadd.f32 %v8009, %v8010
        %v8012 = vmul.f32 %v8011, 0.0044444446
        %v8013 = vld [vmem:[%s9] sm:$0xff]
        %v8014 = vld [vmem:[%s9 + $0x8] sm:$0xff]
        %v8015 = vld [vmem:[%s9 + $0x10] sm:$0xff]
        %v8016 = vld [vmem:[%s9 + $0x18] sm:$0xff]
        %v8017 = vld [vmem:[%s9 + $0x20] sm:$0xff]
        %v8018 = vld [vmem:[%s9 + $0x28] sm:$0xff]
        %v8019 = vld [vmem:[%s9 + $0x30] sm:$0xff]
        %v8020 = vld [vmem:[%s9 + $0x38] sm:$0xff]
        %v8021 = vld [vmem:[%s10] sm:$0x1]
        %v8023 = vsel %vm441, %v8012, 0
        %8025 = vmatprep.subr.mxu0 0.0
        %8026 = vmatpush1.msra.mxu0 %v8013
        %8027 = vmatprep.subr.mxu0 0.0
        %8028 = vmatpush1.msra.mxu0 %v8014
        %8029 = vmatprep.subr.mxu0 0.0
        %8030 = vmatpush1.msra.mxu0 %v8015
        %8031 = vmatprep.subr.mxu0 0.0
        %8032 = vmatpush1.msra.mxu0 %v8016
        %8033 = vmatprep.subr.mxu0 0.0
        %8034 = vmatpush1.msra.mxu0 %v8017
        %8035 = vmatprep.subr.mxu0 0.0
        %8036 = vmatpush1.msra.mxu0 %v8018
        %8037 = vmatprep.subr.mxu0 0.0
        %8038 = vmatpush1.msra.mxu0 %v8019
        %8039 = vmatprep.subr.mxu0 0.0
        %8040 = vmatpush1.msra.mxu0 %v8020
        %8041 = vmatprep.subr.mxu0 0.0
        %8042 = vmatpush1.msra.mxu0 0.0
        %8043 = vmatprep.subr.mxu0 0.0
        %8044 = vmatpush1.msra.mxu0 0.0
        %8045 = vmatprep.subr.mxu0 0.0
        %8046 = vmatpush1.msra.mxu0 0.0
        %8047 = vmatprep.subr.mxu0 0.0
        %8048 = vmatpush1.msra.mxu0 0.0
        %8049 = vmatprep.subr.mxu0 0.0
        %8050 = vmatpush1.msra.mxu0 0.0
        %8051 = vmatprep.subr.mxu0 0.0
        %8052 = vmatpush1.msra.mxu0 0.0
        %8053 = vmatprep.subr.mxu0 0.0
        %8054 = vmatpush1.msra.mxu0 0.0
        %8055 = vmatprep.subr.mxu0 0.0
        %8056 = vmatpush1.msra.mxu0 0.0
        %8057 = vmatprep.subr.mxu0 0.0
        %8058 = vmatpush1.msra.mxu0 0.0
        %8059 = vmatprep.subr.mxu0 0.0
        %8060 = vmatpush1.msra.mxu0 0.0
        %8061 = vmatprep.subr.mxu0 0.0
        %8062 = vmatpush1.msra.mxu0 0.0
        %8063 = vmatprep.subr.mxu0 0.0
        %8064 = vmatpush1.msra.mxu0 0.0
        %8065 = vmatprep.subr.mxu0 0.0
        %8066 = vmatpush1.msra.mxu0 0.0
        %8067 = vmatprep.subr.mxu0 0.0
        %8068 = vmatpush1.msra.mxu0 0.0
        %8069 = vmatprep.subr.mxu0 0.0
        %8070 = vmatpush1.msra.mxu0 0.0
        %8071 = vmatprep.subr.mxu0 0.0
        %8072 = vmatpush1.msra.mxu0 0.0
        %8073 = vmatprep.subr.mxu0 0.0
        %8074 = vmatpush1.msra.mxu0 0.0
        %8075 = vmatprep.subr.mxu0 0.0
        %8076 = vmatpush1.msra.mxu0 0.0
        %8077 = vmatprep.subr.mxu0 0.0
        %8078 = vmatpush1.msra.mxu0 0.0
        %8079 = vmatprep.subr.mxu0 0.0
        %8080 = vmatpush1.msra.mxu0 0.0
        %8081 = vmatprep.subr.mxu0 0.0
        %8082 = vmatpush1.msra.mxu0 0.0
        %8083 = vmatprep.subr.mxu0 0.0
        %8084 = vmatpush1.msra.mxu0 0.0
        %8085 = vmatprep.subr.mxu0 0.0
        %8086 = vmatpush1.msra.mxu0 0.0
        %8087 = vmatprep.subr.mxu0 0.0
        %8088 = vmatpush1.msra.mxu0 0.0
        %8089 = vmatprep.mubr.f32.mxu0 0.0
        %8090 = vmatmul.mubr.f32.gmra.mrb[0].mxu0 %v8023
        %v8091 = vpop.f32.mrb[0].mxu0
        %v8092 = vadd.f32 %v8021, %v8091
        %v8093 = vpop.f32.mrb[0].mxu0
        %8094 = vdwg.mxu0
        %8095 = vst [vmem:[%s422] sm:$0x1] %v8092
        %s8096 = sand.u32 %s296, 1
        %s8097 = scalar_lea.sflag [#allocation5], %s8096
        %s8098 = sand.u32 %s296, 1
        %s8099 = scalar_lea.vmem [#allocation4], %s8098
        // Predicated region
        $region69: #{forward.1} parent=67 // pred_check
          %p8100 = pneg %p306
        $region70: #{forward.1} parent=67 // pred_check_branch
          %8102 = sbr.rel (%p8100) target = $region72
        $region71: #{forward.1} parent=67 // pred_region
          %s8104 = ssub.s32 16, 16
          %8105 = vsyncadd %s8097, %s8104
          %s8106 = smul.addr %s26, 16
          %s8107 = scalar_lea.hbm %s12, %s8106
          %s8109 = sshll.u32 %s8099, 4
          %s8110 = int_to_ptr.vmem [resolvable:$true] %s8109
          %8112 = dma.vmem_to_hbm [thread:$0]  %s8110, 16, %s8107, %s8097
        $region72: #{forward.1} parent=67 // pred_fallthru
          _
      $region68: #{forward.1} parent=5 // pred_fallthru
        _
      %p8113 = scmp.le.s32.totalorder 2, %s21
      // Predicated region
      $region73: #{forward.1} parent=5 // pred_check
        %p8114 = pneg %p8113
      $region74: #{forward.1} parent=5 // pred_check_branch
        %8116 = sbr.rel (%p8114) target = $region76
      $region75: #{forward.1} parent=5 // pred_region
        %s8117 = ssub.s32 %s21, 2
        // Predicated region
        $region77: #{forward.1} parent=75 // pred_check
          %p8118 = pneg %p312
        $region78: #{forward.1} parent=75 // pred_check_branch
          %8120 = sbr.rel (%p8118) target = $region80
        $region79: #{forward.1} parent=75 // pred_region
          %s8121 = sand.u32 %s297, 1
          %s8122 = scalar_lea.sflag [#allocation5], %s8121
          %s8123 = sand.u32 %s297, 1
          %s8124 = scalar_lea.vmem [#allocation4], %s8123
          %8125 = dma.done %s8122, 16
        $region80: #{forward.1} parent=75 // pred_fallthru
          _
      $region76: #{forward.1} parent=5 // pred_fallthru
        _
    $region6: #{forward.1} parent=1 // loop_footer
      %s25 = sadd.s32 1, %s21
    $region7: #{forward.1} parent=1 // loop_footer_branch
      %20 = sbr.rel target = $region3
    $region8: #{forward.1} parent=1 // loop_exit
      _
    %8126 = vsyncpa [#allocation5], 1
    %s8127 = scalar_lea.sflag [#allocation5], 1
    %8128 = vsyncpa %s8127, 1

</llo_original>
